<compile_context>
chip_gen: v7x
topology: tpu7x:2x2x1
jax: 0.10.0
libtpu: 0.0.40
codegen_flags: <defaults>
</compile_context>

<pallas_src>
import functools
import math

import jax
import jax.numpy as jnp
from jax.experimental import pallas as pl
from jax.experimental.pallas import tpu as pltpu


# ----------------------------------------------------------------------------
# In-kernel helpers (channel-major layout: activation = (C, H*W))
# ----------------------------------------------------------------------------
def _shift_flat(a, s):
    """t[c, p] = a[c, p + s], zero-filled outside [0, P).  s is a static int."""
    if s == 0:
        return a
    c, p = a.shape
    z = jnp.zeros((c, abs(s)), a.dtype)
    if s > 0:
        return jnp.concatenate([a[:, s:], z], axis=1)
    return jnp.concatenate([z, a[:, :p + s]], axis=1)


def _conv3x3_flat(a, w2, b, relu, wdim, mask_l, mask_r):
    """3x3 'same' conv in channel-major layout as a single K=9*Cin MXU matmul.

    a   : (Cin, P) f32 activation, P = H*W row-major (p = h*W + w)
    w2  : (Cout, 9*Cin) weight, columns ordered (dy, dx, cin)
    b   : (Cout, 1) f32 bias or None
    """
    taps = []
    for sy in (-1, 0, 1):
        for sx in (-1, 0, 1):
            t = _shift_flat(a, sy * wdim + sx)
            if sx == 1:        # reads column w+1: invalid at w == W-1
                t = jnp.where(mask_r, t, 0.0)
            elif sx == -1:     # reads column w-1: invalid at w == 0
                t = jnp.where(mask_l, t, 0.0)
            taps.append(t)
    patches = jnp.concatenate(taps, axis=0)                    # (9*Cin, P)
    y = jax.lax.dot_general(
        w2, patches.astype(w2.dtype),
        dimension_numbers=(((1,), (0,)), ((), ())),
        preferred_element_type=jnp.float32)                    # (Cout, P) f32
    if b is not None:
        y = y + b
    if relu:
        y = jnp.maximum(y, 0.0)
    return y


def _conv_stack_kernel(*refs, hdim, wdim, relus, has_bias):
    # refs = (x_ref, w_0, [b_0], w_1, [b_1], ..., o_ref)
    x_ref, o_ref = refs[0], refs[-1]
    prefs = refs[1:-1]

    p = hdim * wdim
    # Border masks (hoisted: reused by every layer of the stack).
    col = jax.lax.broadcasted_iota(jnp.int32, (1, p), 1) % wdim
    mask_l = col != 0
    mask_r = col != wdim - 1

    a = x_ref[0].astype(jnp.float32)                           # (Cin0, P)
    pi = 0
    for li in range(len(relus)):
        w2 = prefs[pi][...]
        pi += 1
        b = None
        if has_bias[li]:
            b = prefs[pi][...].astype(jnp.float32)
            pi += 1
        a = _conv3x3_flat(a, w2, b, relus[li], wdim, mask_l, mask_r)
    o_ref[0] = a.astype(o_ref.dtype)


# ----------------------------------------------------------------------------
# Wrapper: a whole stack of 3x3 convs in ONE pallas_call
# ----------------------------------------------------------------------------
def conv_stack(x_flat, hdim, wdim, layers, mxu_dtype=jnp.bfloat16):
    """Apply a list of 3x3 'same' convs as one fused, VMEM-resident kernel.

    x_flat : (N, Cin, H*W) channel-major activations (NCHW with H*W flattened)
    layers : list of (w, b, relu); w: (3,3,Cin,Cout) HWIO, b: (Cout,) or None
    """
    n, cin0, p = x_flat.shape
    assert p == hdim * wdim

    # Pad the stack-input channel dim to a multiple of 8 so the in-kernel
    # im2col concat along sublanes stays tile-aligned.
    cin_pad = -(-cin0 // 8) * 8
    if cin_pad != cin0:
        x_flat = jnp.pad(x_flat, ((0, 0), (0, cin_pad - cin0), (0, 0)))

    operands = [x_flat]
    in_specs = [pl.BlockSpec((1, cin_pad, p), lambda i: (i, 0, 0))]
    relus, has_bias = [], []
    for li, (w, b, relu) in enumerate(layers):
        kh, kw, cin, cout = w.shape
        assert (kh, kw) == (3, 3)
        if li == 0 and cin != cin_pad:
            w = jnp.pad(w, ((0, 0), (0, 0), (0, cin_pad - cin), (0, 0)))
            cin = cin_pad
        else:
            assert li == 0 or cin % 8 == 0
        # HWIO (3,3,Cin,Cout) -> (Cout, 9*Cin), columns ordered (dy, dx, cin).
        w2 = jnp.transpose(w, (3, 0, 1, 2)).reshape(cout, 9 * cin)
        operands.append(w2.astype(mxu_dtype))
        in_specs.append(pl.BlockSpec((cout, 9 * cin), lambda i: (0, 0)))
        if b is not None:
            operands.append(b.reshape(cout, 1).astype(jnp.float32))
            in_specs.append(pl.BlockSpec((cout, 1), lambda i: (0, 0)))
        relus.append(relu)
        has_bias.append(b is not None)

    cout_final = layers[-1][0].shape[-1]
    kern = functools.partial(_conv_stack_kernel, hdim=hdim, wdim=wdim,
                             relus=tuple(relus), has_bias=tuple(has_bias))
    return pl.pallas_call(
        kern,
        out_shape=jax.ShapeDtypeStruct((n, cout_final, p), jnp.float32),
        grid=(n,),
        in_specs=in_specs,
        out_specs=pl.BlockSpec((1, cout_final, p), lambda i: (i, 0, 0)),
        compiler_params=pltpu.CompilerParams(dimension_semantics=("parallel",)),
    )(*operands)


# ----------------------------------------------------------------------------
# PixelShuffle on channel-major flat activations (XLA layout glue)
# ----------------------------------------------------------------------------
def pixel_shuffle_flat(x, hdim, wdim, r):
    # TODO(synk): no robust in-kernel Mosaic lowering for this interleave
    # (would need a 5-D transpose or strided sublane scatter); it is a tiny
    # pure-layout op kept as XLA glue between the two fused Pallas stages.
    n, crr, p = x.shape
    c = crr // (r * r)
    x = x.reshape(n, c, r, r, hdim, wdim)        # (n, c, i, j, h, w)
    x = jnp.transpose(x, (0, 1, 4, 2, 5, 3))     # (n, c, h, i, w, j)
    return x.reshape(n, c, hdim * r * wdim * r)


# ----------------------------------------------------------------------------
# DecreaseVDSR parameters + forward
# ----------------------------------------------------------------------------
def _up_factors(scale):
    if scale & (scale - 1) == 0:
        return [2] * int(round(math.log2(scale)))
    if scale == 3:
        return [3]
    raise NotImplementedError(scale)


def init_params(key, scale, n_colors, d=32, m=4):
    def conv_w(k, cin, cout):
        return jax.random.normal(k, (3, 3, cin, cout), jnp.float32) * 0.05

    def conv_b(k, cout):
        return jax.random.normal(k, (cout,), jnp.float32) * 0.01

    factors = _up_factors(scale)
    keys = iter(jax.random.split(key, 2 * len(factors) + 2 * m + 8))
    params = {"up_ws": [], "up_bs": []}
    for r in factors:
        params["up_ws"].append(conv_w(next(keys), n_colors, r * r * n_colors))
        params["up_bs"].append(conv_b(next(keys), r * r * n_colors))
    params["input_w"] = conv_w(next(keys), n_colors, d)   # bias=True (default)
    params["input_b"] = conv_b(next(keys), d)
    params["res_ws"] = [conv_w(next(keys), d, d) for _ in range(m)]  # bias=False
    params["output_w"] = conv_w(next(keys), d, n_colors)  # bias=True (default)
    params["output_b"] = conv_b(next(keys), n_colors)
    return params


def decrease_vdsr_forward(params, x_nchw, scale, mxu_dtype=jnp.bfloat16):
    n, c0, hdim, wdim = x_nchw.shape
    x = x_nchw.reshape(n, c0, hdim * wdim).astype(jnp.float32)
    # Upsampler: per stage, conv n_colors -> r*r*n_colors, then PixelShuffle(r).
    for w, b, r in zip(params["up_ws"], params["up_bs"], _up_factors(scale)):
        x = conv_stack(x, hdim, wdim, [(w, b, False)], mxu_dtype)
        x = pixel_shuffle_flat(x, hdim, wdim, r)
        hdim, wdim = hdim * r, wdim * r
    # input conv -> m ConvReLU blocks (bias=False) -> output conv, fully fused.
    layers = [(params["input_w"], params["input_b"], False)]
    layers += [(w, None, True) for w in params["res_ws"]]
    layers += [(params["output_w"], params["output_b"], False)]
    y = conv_stack(x, hdim, wdim, layers, mxu_dtype)
    return y.reshape(n, c0, hdim, wdim)                     # NCHW, like PyTorch


# ----------------------------------------------------------------------------
# Pure-JAX reference (lax.conv, NHWC) for correctness checking
# ----------------------------------------------------------------------------
def _conv3x3_ref(x, w, b=None, relu=False):
    y = jax.lax.conv_general_dilated(
        x, w, window_strides=(1, 1), padding="SAME",
        dimension_numbers=("NHWC", "HWIO", "NHWC"))
    if b is not None:
        y = y + b
    return jnp.maximum(y, 0.0) if relu else y


def pixel_shuffle_nhwc(x, r):
    n, hdim, wdim, c = x.shape
    co = c // (r * r)
    x = x.reshape(n, hdim, wdim, co, r, r)
    x = jnp.transpose(x, (0, 1, 4, 2, 5, 3))
    return x.reshape(n, hdim * r, wdim * r, co)


def decrease_vdsr_ref(params, x_nchw, scale):
    x = jnp.transpose(x_nchw, (0, 2, 3, 1))
    for w, b, r in zip(params["up_ws"], params["up_bs"], _up_factors(scale)):
        x = _conv3x3_ref(x, w, b)
        x = pixel_shuffle_nhwc(x, r)
    x = _conv3x3_ref(x, params["input_w"], params["input_b"])
    for w in params["res_ws"]:
        x = _conv3x3_ref(x, w, None, relu=True)
    x = _conv3x3_ref(x, params["output_w"], params["output_b"])
    return jnp.transpose(x, (0, 3, 1, 2))


if __name__ == "__main__":
    key = jax.random.PRNGKey(0)
    k_param, k_x = jax.random.split(key)

    scale, n_colors, d, m = 2, 4, 32, 4
    n, hdim, wdim = 2, 16, 16
    x = jax.random.normal(k_x, (n, n_colors, hdim, wdim), jnp.float32)  # NCHW

    params = init_params(k_param, scale, n_colors, d=d, m=m)

    fwd_f32 = jax.jit(functools.partial(
        decrease_vdsr_forward, scale=scale, mxu_dtype=jnp.float32))
    fwd_bf16 = jax.jit(functools.partial(
        decrease_vdsr_forward, scale=scale, mxu_dtype=jnp.bfloat16))
    ref_fn = jax.jit(functools.partial(decrease_vdsr_ref, scale=scale))

    out = jax.block_until_ready(fwd_f32(params, x))
    assert out.shape == (n, n_colors, hdim * scale, wdim * scale), out.shape

    ref = jax.block_until_ready(ref_fn(params, x))
    err = float(jnp.max(jnp.abs(out - ref)))
    assert jnp.allclose(out, ref, atol=2e-3, rtol=2e-3), err

    # bf16 MXU operands (f32 accumulation): looser tolerance.
    out_bf16 = jax.block_until_ready(fwd_bf16(params, x))
    err_bf16 = float(jnp.max(jnp.abs(out_bf16 - ref)))
    assert jnp.allclose(out_bf16, ref, atol=5e-2, rtol=5e-2), err_bf16

    print("KERNEL_OK")
</pallas_src>

<mosaic_0001>
module attributes {stable_mosaic.version = 11 : i64} {
  func.func @_conv_stack_kernel(%arg0: i32, %arg1: memref<1x8x256xf32, #tpu.memory_space<vmem>>, %arg2: memref<16x72xf32, #tpu.memory_space<vmem>>, %arg3: memref<16x1xf32, #tpu.memory_space<vmem>>, %arg4: memref<1x16x256xf32, #tpu.memory_space<vmem>>) attributes {dimension_semantics = [#tpu.dimension_semantics<parallel>], iteration_bounds = array<i64: 2>, scalar_prefetch = 0 : i64, scratch_operands = 0 : i64, tpu.core_type = #tpu.core_type<tc>, window_params = [{transform_indices = @transform_0, window_bounds = array<i64: 1, 8, 256>}, {pipeline_mode = #tpu.pipeline_mode<synchronous>, transform_indices = @transform_1, window_bounds = array<i64: 16, 72>}, {pipeline_mode = #tpu.pipeline_mode<synchronous>, transform_indices = @transform_2, window_bounds = array<i64: 16, 1>}, {transform_indices = @transform_3, window_bounds = array<i64: 1, 16, 256>}]} {
    %0 = tpu.iota {dimensions = array<i32: 1>} : vector<1x256xi32>
    %c16_i32 = arith.constant 16 : i32
    %c0_i32 = arith.constant 0 : i32
    %1 = arith.cmpi eq, %c16_i32, %c0_i32 : i32
    %c1_i32 = arith.constant 1 : i32
    %2 = arith.select %1, %c1_i32, %c16_i32 : i32
    %3 = vector.broadcast %2 : i32 to vector<1x256xi32>
    %4 = arith.remsi %0, %3 : vector<1x256xi32>
    %c0_i32_0 = arith.constant 0 : i32
    %5 = vector.broadcast %c0_i32_0 : i32 to vector<1x256xi32>
    %6 = arith.cmpi ne, %4, %5 : vector<1x256xi32>
    %c0_i32_1 = arith.constant 0 : i32
    %7 = vector.broadcast %c0_i32_1 : i32 to vector<1x256xi32>
    %8 = arith.cmpi slt, %4, %7 : vector<1x256xi32>
    %c0_i32_2 = arith.constant 0 : i32
    %9 = arith.cmpi slt, %2, %c0_i32_2 : i32
    %10 = vector.broadcast %9 : i1 to vector<1x256xi1>
    %11 = vector.broadcast %10 : vector<1x256xi1> to vector<1x256xi1>
    %12 = arith.xori %8, %11 : vector<1x256xi1>
    %13 = arith.andi %12, %6 : vector<1x256xi1>
    %14 = vector.broadcast %2 : i32 to vector<1x256xi32>
    %15 = arith.addi %4, %14 : vector<1x256xi32>
    %16 = arith.select %13, %15, %4 : vector<1x256xi1>, vector<1x256xi32>
    %c0_i32_3 = arith.constant 0 : i32
    %17 = vector.broadcast %c0_i32_3 : i32 to vector<1x256xi32>
    %18 = arith.cmpi ne, %16, %17 : vector<1x256xi32>
    %c15_i32 = arith.constant 15 : i32
    %19 = vector.broadcast %c15_i32 : i32 to vector<1x256xi32>
    %20 = arith.cmpi ne, %16, %19 : vector<1x256xi32>
    %c0 = arith.constant 0 : index
    %c0_4 = arith.constant 0 : index
    %c0_5 = arith.constant 0 : index
    %21 = vector.load %arg1[%c0, %c0_4, %c0_5] : memref<1x8x256xf32, #tpu.memory_space<vmem>>, vector<1x8x256xf32>
    %22 = vector.shape_cast %21 : vector<1x8x256xf32> to vector<8x256xf32>
    %c0_6 = arith.constant 0 : index
    %c0_7 = arith.constant 0 : index
    %23 = vector.load %arg2[%c0_6, %c0_7] : memref<16x72xf32, #tpu.memory_space<vmem>>, vector<16x72xf32>
    %c0_8 = arith.constant 0 : index
    %c0_9 = arith.constant 0 : index
    %24 = vector.load %arg3[%c0_8, %c0_9] : memref<16x1xf32, #tpu.memory_space<vmem>>, vector<16x1xf32>
    %cst = arith.constant 0.000000e+00 : f32
    %25 = vector.broadcast %cst : f32 to vector<8x17xf32>
    %26 = vector.extract_strided_slice %22 {offsets = [0, 0], sizes = [8, 239], strides = [1, 1]} : vector<8x256xf32> to vector<8x239xf32>
    %27 = tpu.concatenate %25, %26 in 1 : vector<8x17xf32>, vector<8x239xf32> -> vector<8x256xf32>
    %cst_10 = arith.constant 0.000000e+00 : f32
    %28 = vector.shape_cast %18 : vector<1x256xi1> to vector<1x256xi1>
    %29 = vector.broadcast %28 : vector<1x256xi1> to vector<8x256xi1>
    %30 = vector.broadcast %cst_10 : f32 to vector<8x256xf32>
    %31 = arith.select %29, %27, %30 : vector<8x256xi1>, vector<8x256xf32>
    %cst_11 = arith.constant 0.000000e+00 : f32
    %32 = vector.broadcast %cst_11 : f32 to vector<8x16xf32>
    %33 = vector.extract_strided_slice %22 {offsets = [0, 0], sizes = [8, 240], strides = [1, 1]} : vector<8x256xf32> to vector<8x240xf32>
    %34 = tpu.concatenate %32, %33 in 1 : vector<8x16xf32>, vector<8x240xf32> -> vector<8x256xf32>
    %cst_12 = arith.constant 0.000000e+00 : f32
    %35 = vector.broadcast %cst_12 : f32 to vector<8x15xf32>
    %36 = vector.extract_strided_slice %22 {offsets = [0, 0], sizes = [8, 241], strides = [1, 1]} : vector<8x256xf32> to vector<8x241xf32>
    %37 = tpu.concatenate %35, %36 in 1 : vector<8x15xf32>, vector<8x241xf32> -> vector<8x256xf32>
    %cst_13 = arith.constant 0.000000e+00 : f32
    %38 = vector.shape_cast %20 : vector<1x256xi1> to vector<1x256xi1>
    %39 = vector.broadcast %38 : vector<1x256xi1> to vector<8x256xi1>
    %40 = vector.broadcast %cst_13 : f32 to vector<8x256xf32>
    %41 = arith.select %39, %37, %40 : vector<8x256xi1>, vector<8x256xf32>
    %cst_14 = arith.constant 0.000000e+00 : f32
    %42 = vector.broadcast %cst_14 : f32 to vector<8x1xf32>
    %43 = vector.extract_strided_slice %22 {offsets = [0, 0], sizes = [8, 255], strides = [1, 1]} : vector<8x256xf32> to vector<8x255xf32>
    %44 = tpu.concatenate %42, %43 in 1 : vector<8x1xf32>, vector<8x255xf32> -> vector<8x256xf32>
    %cst_15 = arith.constant 0.000000e+00 : f32
    %45 = vector.shape_cast %18 : vector<1x256xi1> to vector<1x256xi1>
    %46 = vector.broadcast %45 : vector<1x256xi1> to vector<8x256xi1>
    %47 = vector.broadcast %cst_15 : f32 to vector<8x256xf32>
    %48 = arith.select %46, %44, %47 : vector<8x256xi1>, vector<8x256xf32>
    %cst_16 = arith.constant 0.000000e+00 : f32
    %49 = vector.broadcast %cst_16 : f32 to vector<8x1xf32>
    %50 = vector.extract_strided_slice %22 {offsets = [0, 1], sizes = [8, 255], strides = [1, 1]} : vector<8x256xf32> to vector<8x255xf32>
    %51 = tpu.concatenate %50, %49 in 1 : vector<8x255xf32>, vector<8x1xf32> -> vector<8x256xf32>
    %cst_17 = arith.constant 0.000000e+00 : f32
    %52 = vector.shape_cast %20 : vector<1x256xi1> to vector<1x256xi1>
    %53 = vector.broadcast %52 : vector<1x256xi1> to vector<8x256xi1>
    %54 = vector.broadcast %cst_17 : f32 to vector<8x256xf32>
    %55 = arith.select %53, %51, %54 : vector<8x256xi1>, vector<8x256xf32>
    %cst_18 = arith.constant 0.000000e+00 : f32
    %56 = vector.broadcast %cst_18 : f32 to vector<8x15xf32>
    %57 = vector.extract_strided_slice %22 {offsets = [0, 15], sizes = [8, 241], strides = [1, 1]} : vector<8x256xf32> to vector<8x241xf32>
    %58 = tpu.concatenate %57, %56 in 1 : vector<8x241xf32>, vector<8x15xf32> -> vector<8x256xf32>
    %cst_19 = arith.constant 0.000000e+00 : f32
    %59 = vector.shape_cast %18 : vector<1x256xi1> to vector<1x256xi1>
    %60 = vector.broadcast %59 : vector<1x256xi1> to vector<8x256xi1>
    %61 = vector.broadcast %cst_19 : f32 to vector<8x256xf32>
    %62 = arith.select %60, %58, %61 : vector<8x256xi1>, vector<8x256xf32>
    %cst_20 = arith.constant 0.000000e+00 : f32
    %63 = vector.broadcast %cst_20 : f32 to vector<8x16xf32>
    %64 = vector.extract_strided_slice %22 {offsets = [0, 16], sizes = [8, 240], strides = [1, 1]} : vector<8x256xf32> to vector<8x240xf32>
    %65 = tpu.concatenate %64, %63 in 1 : vector<8x240xf32>, vector<8x16xf32> -> vector<8x256xf32>
    %cst_21 = arith.constant 0.000000e+00 : f32
    %66 = vector.broadcast %cst_21 : f32 to vector<8x17xf32>
    %67 = vector.extract_strided_slice %22 {offsets = [0, 17], sizes = [8, 239], strides = [1, 1]} : vector<8x256xf32> to vector<8x239xf32>
    %68 = tpu.concatenate %67, %66 in 1 : vector<8x239xf32>, vector<8x17xf32> -> vector<8x256xf32>
    %cst_22 = arith.constant 0.000000e+00 : f32
    %69 = vector.shape_cast %20 : vector<1x256xi1> to vector<1x256xi1>
    %70 = vector.broadcast %69 : vector<1x256xi1> to vector<8x256xi1>
    %71 = vector.broadcast %cst_22 : f32 to vector<8x256xf32>
    %72 = arith.select %70, %68, %71 : vector<8x256xi1>, vector<8x256xf32>
    %73 = tpu.concatenate %31, %34, %41, %48, %22, %55, %62, %65, %72 in 0 : vector<8x256xf32>, vector<8x256xf32>, vector<8x256xf32>, vector<8x256xf32>, vector<8x256xf32>, vector<8x256xf32>, vector<8x256xf32>, vector<8x256xf32>, vector<8x256xf32> -> vector<72x256xf32>
    %cst_23 = arith.constant dense<0.000000e+00> : vector<16x256xf32>
    %74 = tpu.matmul %23, %73, %cst_23 {dimension_numbers = #tpu.dot_dimension_numbers<[1], [0], [0], [1], [0, 0, 1, 1], [], []>} : vector<16x72xf32>, vector<72x256xf32>, vector<16x256xf32> -> vector<16x256xf32>
    %75 = vector.broadcast %24 : vector<16x1xf32> to vector<16x256xf32>
    %76 = arith.addf %74, %75 : vector<16x256xf32>
    %c0_24 = arith.constant 0 : index
    %c0_25 = arith.constant 0 : index
    %c0_26 = arith.constant 0 : index
    %77 = vector.load %arg4[%c0_24, %c0_25, %c0_26] : memref<1x16x256xf32, #tpu.memory_space<vmem>>, vector<1x16x256xf32>
    %78 = vector.shape_cast %77 : vector<1x16x256xf32> to vector<16x256xf32>
    %79 = vector.shape_cast %76 : vector<16x256xf32> to vector<1x16x256xf32>
    tpu.vector_store %arg4[%c0_24, %c0_25, %c0_26], %79 {strides = array<i32>} : memref<1x16x256xf32, #tpu.memory_space<vmem>>, vector<1x16x256xf32>,
    return
  }
  func.func @transform_0(%arg0: i32) -> (i32, i32, i32) {
    %c0_i32 = arith.constant 0 : i32
    %c0_i32_0 = arith.constant 0 : i32
    %c0_i32_1 = arith.constant 0 : i32
    return %arg0, %c0_i32, %c0_i32_0 : i32, i32, i32
  }
  func.func @transform_1(%arg0: i32) -> (i32, i32) {
    %c0_i32 = arith.constant 0 : i32
    %c0_i32_0 = arith.constant 0 : i32
    %c0_i32_1 = arith.constant 0 : i32
    return %c0_i32, %c0_i32_0 : i32, i32
  }
  func.func @transform_2(%arg0: i32) -> (i32, i32) {
    %c0_i32 = arith.constant 0 : i32
    %c0_i32_0 = arith.constant 0 : i32
    %c0_i32_1 = arith.constant 0 : i32
    return %c0_i32, %c0_i32_0 : i32, i32
  }
  func.func @transform_3(%arg0: i32) -> (i32, i32, i32) {
    %c0_i32 = arith.constant 0 : i32
    %c0_i32_0 = arith.constant 0 : i32
    %c0_i32_1 = arith.constant 0 : i32
    return %arg0, %c0_i32, %c0_i32_0 : i32, i32, i32
  }
}

module attributes {stable_mosaic.version = 11 : i64} {
  func.func @_conv_stack_kernel(%arg0: i32, %arg1: memref<1x8x1024xf32, #tpu.memory_space<vmem>>, %arg2: memref<32x72xf32, #tpu.memory_space<vmem>>, %arg3: memref<32x1xf32, #tpu.memory_space<vmem>>, %arg4: memref<32x288xf32, #tpu.memory_space<vmem>>, %arg5: memref<32x288xf32, #tpu.memory_space<vmem>>, %arg6: memref<32x288xf32, #tpu.memory_space<vmem>>, %arg7: memref<32x288xf32, #tpu.memory_space<vmem>>, %arg8: memref<4x288xf32, #tpu.memory_space<vmem>>, %arg9: memref<4x1xf32, #tpu.memory_space<vmem>>, %arg10: memref<1x4x1024xf32, #tpu.memory_space<vmem>>) attributes {dimension_semantics = [#tpu.dimension_semantics<parallel>], iteration_bounds = array<i64: 2>, scalar_prefetch = 0 : i64, scratch_operands = 0 : i64, tpu.core_type = #tpu.core_type<tc>, window_params = [{transform_indices = @transform_0, window_bounds = array<i64: 1, 8, 1024>}, {pipeline_mode = #tpu.pipeline_mode<synchronous>, transform_indices = @transform_1, window_bounds = array<i64: 32, 72>}, {pipeline_mode = #tpu.pipeline_mode<synchronous>, transform_indices = @transform_2, window_bounds = array<i64: 32, 1>}, {pipeline_mode = #tpu.pipeline_mode<synchronous>, transform_indices = @transform_3, window_bounds = array<i64: 32, 288>}, {pipeline_mode = #tpu.pipeline_mode<synchronous>, transform_indices = @transform_4, window_bounds = array<i64: 32, 288>}, {pipeline_mode = #tpu.pipeline_mode<synchronous>, transform_indices = @transform_5, window_bounds = array<i64: 32, 288>}, {pipeline_mode = #tpu.pipeline_mode<synchronous>, transform_indices = @transform_6, window_bounds = array<i64: 32, 288>}, {pipeline_mode = #tpu.pipeline_mode<synchronous>, transform_indices = @transform_7, window_bounds = array<i64: 4, 288>}, {pipeline_mode = #tpu.pipeline_mode<synchronous>, transform_indices = @transform_8, window_bounds = array<i64: 4, 1>}, {transform_indices = @transform_9, window_bounds = array<i64: 1, 4, 1024>}]} {
    %0 = tpu.iota {dimensions = array<i32: 1>} : vector<1x1024xi32>
    %c32_i32 = arith.constant 32 : i32
    %c0_i32 = arith.constant 0 : i32
    %1 = arith.cmpi eq, %c32_i32, %c0_i32 : i32
    %c1_i32 = arith.constant 1 : i32
    %2 = arith.select %1, %c1_i32, %c32_i32 : i32
    %3 = vector.broadcast %2 : i32 to vector<1x1024xi32>
    %4 = arith.remsi %0, %3 : vector<1x1024xi32>
    %c0_i32_0 = arith.constant 0 : i32
    %5 = vector.broadcast %c0_i32_0 : i32 to vector<1x1024xi32>
    %6 = arith.cmpi ne, %4, %5 : vector<1x1024xi32>
    %c0_i32_1 = arith.constant 0 : i32
    %7 = vector.broadcast %c0_i32_1 : i32 to vector<1x1024xi32>
    %8 = arith.cmpi slt, %4, %7 : vector<1x1024xi32>
    %c0_i32_2 = arith.constant 0 : i32
    %9 = arith.cmpi slt, %2, %c0_i32_2 : i32
    %10 = vector.broadcast %9 : i1 to vector<1x1024xi1>
    %11 = vector.broadcast %10 : vector<1x1024xi1> to vector<1x1024xi1>
    %12 = arith.xori %8, %11 : vector<1x1024xi1>
    %13 = arith.andi %12, %6 : vector<1x1024xi1>
    %14 = vector.broadcast %2 : i32 to vector<1x1024xi32>
    %15 = arith.addi %4, %14 : vector<1x1024xi32>
    %16 = arith.select %13, %15, %4 : vector<1x1024xi1>, vector<1x1024xi32>
    %c0_i32_3 = arith.constant 0 : i32
    %17 = vector.broadcast %c0_i32_3 : i32 to vector<1x1024xi32>
    %18 = arith.cmpi ne, %16, %17 : vector<1x1024xi32>
    %c31_i32 = arith.constant 31 : i32
    %19 = vector.broadcast %c31_i32 : i32 to vector<1x1024xi32>
    %20 = arith.cmpi ne, %16, %19 : vector<1x1024xi32>
    %c0 = arith.constant 0 : index
    %c0_4 = arith.constant 0 : index
    %c0_5 = arith.constant 0 : index
    %21 = vector.load %arg1[%c0, %c0_4, %c0_5] : memref<1x8x1024xf32, #tpu.memory_space<vmem>>, vector<1x8x1024xf32>
    %22 = vector.shape_cast %21 : vector<1x8x1024xf32> to vector<8x1024xf32>
    %c0_6 = arith.constant 0 : index
    %c0_7 = arith.constant 0 : index
    %23 = vector.load %arg2[%c0_6, %c0_7] : memref<32x72xf32, #tpu.memory_space<vmem>>, vector<32x72xf32>
    %c0_8 = arith.constant 0 : index
    %c0_9 = arith.constant 0 : index
    %24 = vector.load %arg3[%c0_8, %c0_9] : memref<32x1xf32, #tpu.memory_space<vmem>>, vector<32x1xf32>
    %cst = arith.constant 0.000000e+00 : f32
    %25 = vector.broadcast %cst : f32 to vector<8x33xf32>
    %26 = vector.extract_strided_slice %22 {offsets = [0, 0], sizes = [8, 991], strides = [1, 1]} : vector<8x1024xf32> to vector<8x991xf32>
    %27 = tpu.concatenate %25, %26 in 1 : vector<8x33xf32>, vector<8x991xf32> -> vector<8x1024xf32>
    %cst_10 = arith.constant 0.000000e+00 : f32
    %28 = vector.shape_cast %18 : vector<1x1024xi1> to vector<1x1024xi1>
    %29 = vector.broadcast %28 : vector<1x1024xi1> to vector<8x1024xi1>
    %30 = vector.broadcast %cst_10 : f32 to vector<8x1024xf32>
    %31 = arith.select %29, %27, %30 : vector<8x1024xi1>, vector<8x1024xf32>
    %cst_11 = arith.constant 0.000000e+00 : f32
    %32 = vector.broadcast %cst_11 : f32 to vector<8x32xf32>
    %33 = vector.extract_strided_slice %22 {offsets = [0, 0], sizes = [8, 992], strides = [1, 1]} : vector<8x1024xf32> to vector<8x992xf32>
    %34 = tpu.concatenate %32, %33 in 1 : vector<8x32xf32>, vector<8x992xf32> -> vector<8x1024xf32>
    %cst_12 = arith.constant 0.000000e+00 : f32
    %35 = vector.broadcast %cst_12 : f32 to vector<8x31xf32>
    %36 = vector.extract_strided_slice %22 {offsets = [0, 0], sizes = [8, 993], strides = [1, 1]} : vector<8x1024xf32> to vector<8x993xf32>
    %37 = tpu.concatenate %35, %36 in 1 : vector<8x31xf32>, vector<8x993xf32> -> vector<8x1024xf32>
    %cst_13 = arith.constant 0.000000e+00 : f32
    %38 = vector.shape_cast %20 : vector<1x1024xi1> to vector<1x1024xi1>
    %39 = vector.broadcast %38 : vector<1x1024xi1> to vector<8x1024xi1>
    %40 = vector.broadcast %cst_13 : f32 to vector<8x1024xf32>
    %41 = arith.select %39, %37, %40 : vector<8x1024xi1>, vector<8x1024xf32>
    %cst_14 = arith.constant 0.000000e+00 : f32
    %42 = vector.broadcast %cst_14 : f32 to vector<8x1xf32>
    %43 = vector.extract_strided_slice %22 {offsets = [0, 0], sizes = [8, 1023], strides = [1, 1]} : vector<8x1024xf32> to vector<8x1023xf32>
    %44 = tpu.concatenate %42, %43 in 1 : vector<8x1xf32>, vector<8x1023xf32> -> vector<8x1024xf32>
    %cst_15 = arith.constant 0.000000e+00 : f32
    %45 = vector.shape_cast %18 : vector<1x1024xi1> to vector<1x1024xi1>
    %46 = vector.broadcast %45 : vector<1x1024xi1> to vector<8x1024xi1>
    %47 = vector.broadcast %cst_15 : f32 to vector<8x1024xf32>
    %48 = arith.select %46, %44, %47 : vector<8x1024xi1>, vector<8x1024xf32>
    %cst_16 = arith.constant 0.000000e+00 : f32
    %49 = vector.broadcast %cst_16 : f32 to vector<8x1xf32>
    %50 = vector.extract_strided_slice %22 {offsets = [0, 1], sizes = [8, 1023], strides = [1, 1]} : vector<8x1024xf32> to vector<8x1023xf32>
    %51 = tpu.concatenate %50, %49 in 1 : vector<8x1023xf32>, vector<8x1xf32> -> vector<8x1024xf32>
    %cst_17 = arith.constant 0.000000e+00 : f32
    %52 = vector.shape_cast %20 : vector<1x1024xi1> to vector<1x1024xi1>
    %53 = vector.broadcast %52 : vector<1x1024xi1> to vector<8x1024xi1>
    %54 = vector.broadcast %cst_17 : f32 to vector<8x1024xf32>
    %55 = arith.select %53, %51, %54 : vector<8x1024xi1>, vector<8x1024xf32>
    %cst_18 = arith.constant 0.000000e+00 : f32
    %56 = vector.broadcast %cst_18 : f32 to vector<8x31xf32>
    %57 = vector.extract_strided_slice %22 {offsets = [0, 31], sizes = [8, 993], strides = [1, 1]} : vector<8x1024xf32> to vector<8x993xf32>
    %58 = tpu.concatenate %57, %56 in 1 : vector<8x993xf32>, vector<8x31xf32> -> vector<8x1024xf32>
    %cst_19 = arith.constant 0.000000e+00 : f32
    %59 = vector.shape_cast %18 : vector<1x1024xi1> to vector<1x1024xi1>
    %60 = vector.broadcast %59 : vector<1x1024xi1> to vector<8x1024xi1>
    %61 = vector.broadcast %cst_19 : f32 to vector<8x1024xf32>
    %62 = arith.select %60, %58, %61 : vector<8x1024xi1>, vector<8x1024xf32>
    %cst_20 = arith.constant 0.000000e+00 : f32
    %63 = vector.broadcast %cst_20 : f32 to vector<8x32xf32>
    %64 = vector.extract_strided_slice %22 {offsets = [0, 32], sizes = [8, 992], strides = [1, 1]} : vector<8x1024xf32> to vector<8x992xf32>
    %65 = tpu.concatenate %64, %63 in 1 : vector<8x992xf32>, vector<8x32xf32> -> vector<8x1024xf32>
    %cst_21 = arith.constant 0.000000e+00 : f32
    %66 = vector.broadcast %cst_21 : f32 to vector<8x33xf32>
    %67 = vector.extract_strided_slice %22 {offsets = [0, 33], sizes = [8, 991], strides = [1, 1]} : vector<8x1024xf32> to vector<8x991xf32>
    %68 = tpu.concatenate %67, %66 in 1 : vector<8x991xf32>, vector<8x33xf32> -> vector<8x1024xf32>
    %cst_22 = arith.constant 0.000000e+00 : f32
    %69 = vector.shape_cast %20 : vector<1x1024xi1> to vector<1x1024xi1>
    %70 = vector.broadcast %69 : vector<1x1024xi1> to vector<8x1024xi1>
    %71 = vector.broadcast %cst_22 : f32 to vector<8x1024xf32>
    %72 = arith.select %70, %68, %71 : vector<8x1024xi1>, vector<8x1024xf32>
    %73 = tpu.concatenate %31, %34, %41, %48, %22, %55, %62, %65, %72 in 0 : vector<8x1024xf32>, vector<8x1024xf32>, vector<8x1024xf32>, vector<8x1024xf32>, vector<8x1024xf32>, vector<8x1024xf32>, vector<8x1024xf32>, vector<8x1024xf32>, vector<8x1024xf32> -> vector<72x1024xf32>
    %cst_23 = arith.constant dense<0.000000e+00> : vector<32x1024xf32>
    %74 = tpu.matmul %23, %73, %cst_23 {dimension_numbers = #tpu.dot_dimension_numbers<[1], [0], [0], [1], [0, 0, 1, 1], [], []>} : vector<32x72xf32>, vector<72x1024xf32>, vector<32x1024xf32> -> vector<32x1024xf32>
    %75 = vector.broadcast %24 : vector<32x1xf32> to vector<32x1024xf32>
    %76 = arith.addf %74, %75 : vector<32x1024xf32>
    %c0_24 = arith.constant 0 : index
    %c0_25 = arith.constant 0 : index
    %77 = vector.load %arg4[%c0_24, %c0_25] : memref<32x288xf32, #tpu.memory_space<vmem>>, vector<32x288xf32>
    %cst_26 = arith.constant 0.000000e+00 : f32
    %78 = vector.broadcast %cst_26 : f32 to vector<32x33xf32>
    %79 = vector.extract_strided_slice %76 {offsets = [0, 0], sizes = [32, 991], strides = [1, 1]} : vector<32x1024xf32> to vector<32x991xf32>
    %80 = tpu.concatenate %78, %79 in 1 : vector<32x33xf32>, vector<32x991xf32> -> vector<32x1024xf32>
    %cst_27 = arith.constant 0.000000e+00 : f32
    %81 = vector.shape_cast %18 : vector<1x1024xi1> to vector<1x1024xi1>
    %82 = vector.broadcast %81 : vector<1x1024xi1> to vector<32x1024xi1>
    %83 = vector.broadcast %cst_27 : f32 to vector<32x1024xf32>
    %84 = arith.select %82, %80, %83 : vector<32x1024xi1>, vector<32x1024xf32>
    %cst_28 = arith.constant 0.000000e+00 : f32
    %85 = vector.broadcast %cst_28 : f32 to vector<32x32xf32>
    %86 = vector.extract_strided_slice %76 {offsets = [0, 0], sizes = [32, 992], strides = [1, 1]} : vector<32x1024xf32> to vector<32x992xf32>
    %87 = tpu.concatenate %85, %86 in 1 : vector<32x32xf32>, vector<32x992xf32> -> vector<32x1024xf32>
    %cst_29 = arith.constant 0.000000e+00 : f32
    %88 = vector.broadcast %cst_29 : f32 to vector<32x31xf32>
    %89 = vector.extract_strided_slice %76 {offsets = [0, 0], sizes = [32, 993], strides = [1, 1]} : vector<32x1024xf32> to vector<32x993xf32>
    %90 = tpu.concatenate %88, %89 in 1 : vector<32x31xf32>, vector<32x993xf32> -> vector<32x1024xf32>
    %cst_30 = arith.constant 0.000000e+00 : f32
    %91 = vector.shape_cast %20 : vector<1x1024xi1> to vector<1x1024xi1>
    %92 = vector.broadcast %91 : vector<1x1024xi1> to vector<32x1024xi1>
    %93 = vector.broadcast %cst_30 : f32 to vector<32x1024xf32>
    %94 = arith.select %92, %90, %93 : vector<32x1024xi1>, vector<32x1024xf32>
    %cst_31 = arith.constant 0.000000e+00 : f32
    %95 = vector.broadcast %cst_31 : f32 to vector<32x1xf32>
    %96 = vector.extract_strided_slice %76 {offsets = [0, 0], sizes = [32, 1023], strides = [1, 1]} : vector<32x1024xf32> to vector<32x1023xf32>
    %97 = tpu.concatenate %95, %96 in 1 : vector<32x1xf32>, vector<32x1023xf32> -> vector<32x1024xf32>
    %cst_32 = arith.constant 0.000000e+00 : f32
    %98 = vector.shape_cast %18 : vector<1x1024xi1> to vector<1x1024xi1>
    %99 = vector.broadcast %98 : vector<1x1024xi1> to vector<32x1024xi1>
    %100 = vector.broadcast %cst_32 : f32 to vector<32x1024xf32>
    %101 = arith.select %99, %97, %100 : vector<32x1024xi1>, vector<32x1024xf32>
    %cst_33 = arith.constant 0.000000e+00 : f32
    %102 = vector.broadcast %cst_33 : f32 to vector<32x1xf32>
    %103 = vector.extract_strided_slice %76 {offsets = [0, 1], sizes = [32, 1023], strides = [1, 1]} : vector<32x1024xf32> to vector<32x1023xf32>
    %104 = tpu.concatenate %103, %102 in 1 : vector<32x1023xf32>, vector<32x1xf32> -> vector<32x1024xf32>
    %cst_34 = arith.constant 0.000000e+00 : f32
    %105 = vector.shape_cast %20 : vector<1x1024xi1> to vector<1x1024xi1>
    %106 = vector.broadcast %105 : vector<1x1024xi1> to vector<32x1024xi1>
    %107 = vector.broadcast %cst_34 : f32 to vector<32x1024xf32>
    %108 = arith.select %106, %104, %107 : vector<32x1024xi1>, vector<32x1024xf32>
    %cst_35 = arith.constant 0.000000e+00 : f32
    %109 = vector.broadcast %cst_35 : f32 to vector<32x31xf32>
    %110 = vector.extract_strided_slice %76 {offsets = [0, 31], sizes = [32, 993], strides = [1, 1]} : vector<32x1024xf32> to vector<32x993xf32>
    %111 = tpu.concatenate %110, %109 in 1 : vector<32x993xf32>, vector<32x31xf32> -> vector<32x1024xf32>
    %cst_36 = arith.constant 0.000000e+00 : f32
    %112 = vector.shape_cast %18 : vector<1x1024xi1> to vector<1x1024xi1>
    %113 = vector.broadcast %112 : vector<1x1024xi1> to vector<32x1024xi1>
    %114 = vector.broadcast %cst_36 : f32 to vector<32x1024xf32>
    %115 = arith.select %113, %111, %114 : vector<32x1024xi1>, vector<32x1024xf32>
    %cst_37 = arith.constant 0.000000e+00 : f32
    %116 = vector.broadcast %cst_37 : f32 to vector<32x32xf32>
    %117 = vector.extract_strided_slice %76 {offsets = [0, 32], sizes = [32, 992], strides = [1, 1]} : vector<32x1024xf32> to vector<32x992xf32>
    %118 = tpu.concatenate %117, %116 in 1 : vector<32x992xf32>, vector<32x32xf32> -> vector<32x1024xf32>
    %cst_38 = arith.constant 0.000000e+00 : f32
    %119 = vector.broadcast %cst_38 : f32 to vector<32x33xf32>
    %120 = vector.extract_strided_slice %76 {offsets = [0, 33], sizes = [32, 991], strides = [1, 1]} : vector<32x1024xf32> to vector<32x991xf32>
    %121 = tpu.concatenate %120, %119 in 1 : vector<32x991xf32>, vector<32x33xf32> -> vector<32x1024xf32>
    %cst_39 = arith.constant 0.000000e+00 : f32
    %122 = vector.shape_cast %20 : vector<1x1024xi1> to vector<1x1024xi1>
    %123 = vector.broadcast %122 : vector<1x1024xi1> to vector<32x1024xi1>
    %124 = vector.broadcast %cst_39 : f32 to vector<32x1024xf32>
    %125 = arith.select %123, %121, %124 : vector<32x1024xi1>, vector<32x1024xf32>
    %126 = tpu.concatenate %84, %87, %94, %101, %76, %108, %115, %118, %125 in 0 : vector<32x1024xf32>, vector<32x1024xf32>, vector<32x1024xf32>, vector<32x1024xf32>, vector<32x1024xf32>, vector<32x1024xf32>, vector<32x1024xf32>, vector<32x1024xf32>, vector<32x1024xf32> -> vector<288x1024xf32>
    %cst_40 = arith.constant dense<0.000000e+00> : vector<32x1024xf32>
    %127 = tpu.matmul %77, %126, %cst_40 {dimension_numbers = #tpu.dot_dimension_numbers<[1], [0], [0], [1], [0, 0, 1, 1], [], []>} : vector<32x288xf32>, vector<288x1024xf32>, vector<32x1024xf32> -> vector<32x1024xf32>
    %cst_41 = arith.constant 0.000000e+00 : f32
    %128 = vector.broadcast %cst_41 : f32 to vector<32x1024xf32>
    %129 = arith.maximumf %127, %128 : vector<32x1024xf32>
    %c0_42 = arith.constant 0 : index
    %c0_43 = arith.constant 0 : index
    %130 = vector.load %arg5[%c0_42, %c0_43] : memref<32x288xf32, #tpu.memory_space<vmem>>, vector<32x288xf32>
    %cst_44 = arith.constant 0.000000e+00 : f32
    %131 = vector.broadcast %cst_44 : f32 to vector<32x33xf32>
    %132 = vector.extract_strided_slice %129 {offsets = [0, 0], sizes = [32, 991], strides = [1, 1]} : vector<32x1024xf32> to vector<32x991xf32>
    %133 = tpu.concatenate %131, %132 in 1 : vector<32x33xf32>, vector<32x991xf32> -> vector<32x1024xf32>
    %cst_45 = arith.constant 0.000000e+00 : f32
    %134 = vector.shape_cast %18 : vector<1x1024xi1> to vector<1x1024xi1>
    %135 = vector.broadcast %134 : vector<1x1024xi1> to vector<32x1024xi1>
    %136 = vector.broadcast %cst_45 : f32 to vector<32x1024xf32>
    %137 = arith.select %135, %133, %136 : vector<32x1024xi1>, vector<32x1024xf32>
    %cst_46 = arith.constant 0.000000e+00 : f32
    %138 = vector.broadcast %cst_46 : f32 to vector<32x32xf32>
    %139 = vector.extract_strided_slice %129 {offsets = [0, 0], sizes = [32, 992], strides = [1, 1]} : vector<32x1024xf32> to vector<32x992xf32>
    %140 = tpu.concatenate %138, %139 in 1 : vector<32x32xf32>, vector<32x992xf32> -> vector<32x1024xf32>
    %cst_47 = arith.constant 0.000000e+00 : f32
    %141 = vector.broadcast %cst_47 : f32 to vector<32x31xf32>
    %142 = vector.extract_strided_slice %129 {offsets = [0, 0], sizes = [32, 993], strides = [1, 1]} : vector<32x1024xf32> to vector<32x993xf32>
    %143 = tpu.concatenate %141, %142 in 1 : vector<32x31xf32>, vector<32x993xf32> -> vector<32x1024xf32>
    %cst_48 = arith.constant 0.000000e+00 : f32
    %144 = vector.shape_cast %20 : vector<1x1024xi1> to vector<1x1024xi1>
    %145 = vector.broadcast %144 : vector<1x1024xi1> to vector<32x1024xi1>
    %146 = vector.broadcast %cst_48 : f32 to vector<32x1024xf32>
    %147 = arith.select %145, %143, %146 : vector<32x1024xi1>, vector<32x1024xf32>
    %cst_49 = arith.constant 0.000000e+00 : f32
    %148 = vector.broadcast %cst_49 : f32 to vector<32x1xf32>
    %149 = vector.extract_strided_slice %129 {offsets = [0, 0], sizes = [32, 1023], strides = [1, 1]} : vector<32x1024xf32> to vector<32x1023xf32>
    %150 = tpu.concatenate %148, %149 in 1 : vector<32x1xf32>, vector<32x1023xf32> -> vector<32x1024xf32>
    %cst_50 = arith.constant 0.000000e+00 : f32
    %151 = vector.shape_cast %18 : vector<1x1024xi1> to vector<1x1024xi1>
    %152 = vector.broadcast %151 : vector<1x1024xi1> to vector<32x1024xi1>
    %153 = vector.broadcast %cst_50 : f32 to vector<32x1024xf32>
    %154 = arith.select %152, %150, %153 : vector<32x1024xi1>, vector<32x1024xf32>
    %cst_51 = arith.constant 0.000000e+00 : f32
    %155 = vector.broadcast %cst_51 : f32 to vector<32x1xf32>
    %156 = vector.extract_strided_slice %129 {offsets = [0, 1], sizes = [32, 1023], strides = [1, 1]} : vector<32x1024xf32> to vector<32x1023xf32>
    %157 = tpu.concatenate %156, %155 in 1 : vector<32x1023xf32>, vector<32x1xf32> -> vector<32x1024xf32>
    %cst_52 = arith.constant 0.000000e+00 : f32
    %158 = vector.shape_cast %20 : vector<1x1024xi1> to vector<1x1024xi1>
    %159 = vector.broadcast %158 : vector<1x1024xi1> to vector<32x1024xi1>
    %160 = vector.broadcast %cst_52 : f32 to vector<32x1024xf32>
    %161 = arith.select %159, %157, %160 : vector<32x1024xi1>, vector<32x1024xf32>
    %cst_53 = arith.constant 0.000000e+00 : f32
    %162 = vector.broadcast %cst_53 : f32 to vector<32x31xf32>
    %163 = vector.extract_strided_slice %129 {offsets = [0, 31], sizes = [32, 993], strides = [1, 1]} : vector<32x1024xf32> to vector<32x993xf32>
    %164 = tpu.concatenate %163, %162 in 1 : vector<32x993xf32>, vector<32x31xf32> -> vector<32x1024xf32>
    %cst_54 = arith.constant 0.000000e+00 : f32
    %165 = vector.shape_cast %18 : vector<1x1024xi1> to vector<1x1024xi1>
    %166 = vector.broadcast %165 : vector<1x1024xi1> to vector<32x1024xi1>
    %167 = vector.broadcast %cst_54 : f32 to vector<32x1024xf32>
    %168 = arith.select %166, %164, %167 : vector<32x1024xi1>, vector<32x1024xf32>
    %cst_55 = arith.constant 0.000000e+00 : f32
    %169 = vector.broadcast %cst_55 : f32 to vector<32x32xf32>
    %170 = vector.extract_strided_slice %129 {offsets = [0, 32], sizes = [32, 992], strides = [1, 1]} : vector<32x1024xf32> to vector<32x992xf32>
    %171 = tpu.concatenate %170, %169 in 1 : vector<32x992xf32>, vector<32x32xf32> -> vector<32x1024xf32>
    %cst_56 = arith.constant 0.000000e+00 : f32
    %172 = vector.broadcast %cst_56 : f32 to vector<32x33xf32>
    %173 = vector.extract_strided_slice %129 {offsets = [0, 33], sizes = [32, 991], strides = [1, 1]} : vector<32x1024xf32> to vector<32x991xf32>
    %174 = tpu.concatenate %173, %172 in 1 : vector<32x991xf32>, vector<32x33xf32> -> vector<32x1024xf32>
    %cst_57 = arith.constant 0.000000e+00 : f32
    %175 = vector.shape_cast %20 : vector<1x1024xi1> to vector<1x1024xi1>
    %176 = vector.broadcast %175 : vector<1x1024xi1> to vector<32x1024xi1>
    %177 = vector.broadcast %cst_57 : f32 to vector<32x1024xf32>
    %178 = arith.select %176, %174, %177 : vector<32x1024xi1>, vector<32x1024xf32>
    %179 = tpu.concatenate %137, %140, %147, %154, %129, %161, %168, %171, %178 in 0 : vector<32x1024xf32>, vector<32x1024xf32>, vector<32x1024xf32>, vector<32x1024xf32>, vector<32x1024xf32>, vector<32x1024xf32>, vector<32x1024xf32>, vector<32x1024xf32>, vector<32x1024xf32> -> vector<288x1024xf32>
    %cst_58 = arith.constant dense<0.000000e+00> : vector<32x1024xf32>
    %180 = tpu.matmul %130, %179, %cst_58 {dimension_numbers = #tpu.dot_dimension_numbers<[1], [0], [0], [1], [0, 0, 1, 1], [], []>} : vector<32x288xf32>, vector<288x1024xf32>, vector<32x1024xf32> -> vector<32x1024xf32>
    %cst_59 = arith.constant 0.000000e+00 : f32
    %181 = vector.broadcast %cst_59 : f32 to vector<32x1024xf32>
    %182 = arith.maximumf %180, %181 : vector<32x1024xf32>
    %c0_60 = arith.constant 0 : index
    %c0_61 = arith.constant 0 : index
    %183 = vector.load %arg6[%c0_60, %c0_61] : memref<32x288xf32, #tpu.memory_space<vmem>>, vector<32x288xf32>
    %cst_62 = arith.constant 0.000000e+00 : f32
    %184 = vector.broadcast %cst_62 : f32 to vector<32x33xf32>
    %185 = vector.extract_strided_slice %182 {offsets = [0, 0], sizes = [32, 991], strides = [1, 1]} : vector<32x1024xf32> to vector<32x991xf32>
    %186 = tpu.concatenate %184, %185 in 1 : vector<32x33xf32>, vector<32x991xf32> -> vector<32x1024xf32>
    %cst_63 = arith.constant 0.000000e+00 : f32
    %187 = vector.shape_cast %18 : vector<1x1024xi1> to vector<1x1024xi1>
    %188 = vector.broadcast %187 : vector<1x1024xi1> to vector<32x1024xi1>
    %189 = vector.broadcast %cst_63 : f32 to vector<32x1024xf32>
    %190 = arith.select %188, %186, %189 : vector<32x1024xi1>, vector<32x1024xf32>
    %cst_64 = arith.constant 0.000000e+00 : f32
    %191 = vector.broadcast %cst_64 : f32 to vector<32x32xf32>
    %192 = vector.extract_strided_slice %182 {offsets = [0, 0], sizes = [32, 992], strides = [1, 1]} : vector<32x1024xf32> to vector<32x992xf32>
    %193 = tpu.concatenate %191, %192 in 1 : vector<32x32xf32>, vector<32x992xf32> -> vector<32x1024xf32>
    %cst_65 = arith.constant 0.000000e+00 : f32
    %194 = vector.broadcast %cst_65 : f32 to vector<32x31xf32>
    %195 = vector.extract_strided_slice %182 {offsets = [0, 0], sizes = [32, 993], strides = [1, 1]} : vector<32x1024xf32> to vector<32x993xf32>
    %196 = tpu.concatenate %194, %195 in 1 : vector<32x31xf32>, vector<32x993xf32> -> vector<32x1024xf32>
    %cst_66 = arith.constant 0.000000e+00 : f32
    %197 = vector.shape_cast %20 : vector<1x1024xi1> to vector<1x1024xi1>
    %198 = vector.broadcast %197 : vector<1x1024xi1> to vector<32x1024xi1>
    %199 = vector.broadcast %cst_66 : f32 to vector<32x1024xf32>
    %200 = arith.select %198, %196, %199 : vector<32x1024xi1>, vector<32x1024xf32>
    %cst_67 = arith.constant 0.000000e+00 : f32
    %201 = vector.broadcast %cst_67 : f32 to vector<32x1xf32>
    %202 = vector.extract_strided_slice %182 {offsets = [0, 0], sizes = [32, 1023], strides = [1, 1]} : vector<32x1024xf32> to vector<32x1023xf32>
    %203 = tpu.concatenate %201, %202 in 1 : vector<32x1xf32>, vector<32x1023xf32> -> vector<32x1024xf32>
    %cst_68 = arith.constant 0.000000e+00 : f32
    %204 = vector.shape_cast %18 : vector<1x1024xi1> to vector<1x1024xi1>
    %205 = vector.broadcast %204 : vector<1x1024xi1> to vector<32x1024xi1>
    %206 = vector.broadcast %cst_68 : f32 to vector<32x1024xf32>
    %207 = arith.select %205, %203, %206 : vector<32x1024xi1>, vector<32x1024xf32>
    %cst_69 = arith.constant 0.000000e+00 : f32
    %208 = vector.broadcast %cst_69 : f32 to vector<32x1xf32>
    %209 = vector.extract_strided_slice %182 {offsets = [0, 1], sizes = [32, 1023], strides = [1, 1]} : vector<32x1024xf32> to vector<32x1023xf32>
    %210 = tpu.concatenate %209, %208 in 1 : vector<32x1023xf32>, vector<32x1xf32> -> vector<32x1024xf32>
    %cst_70 = arith.constant 0.000000e+00 : f32
    %211 = vector.shape_cast %20 : vector<1x1024xi1> to vector<1x1024xi1>
    %212 = vector.broadcast %211 : vector<1x1024xi1> to vector<32x1024xi1>
    %213 = vector.broadcast %cst_70 : f32 to vector<32x1024xf32>
    %214 = arith.select %212, %210, %213 : vector<32x1024xi1>, vector<32x1024xf32>
    %cst_71 = arith.constant 0.000000e+00 : f32
    %215 = vector.broadcast %cst_71 : f32 to vector<32x31xf32>
    %216 = vector.extract_strided_slice %182 {offsets = [0, 31], sizes = [32, 993], strides = [1, 1]} : vector<32x1024xf32> to vector<32x993xf32>
    %217 = tpu.concatenate %216, %215 in 1 : vector<32x993xf32>, vector<32x31xf32> -> vector<32x1024xf32>
    %cst_72 = arith.constant 0.000000e+00 : f32
    %218 = vector.shape_cast %18 : vector<1x1024xi1> to vector<1x1024xi1>
    %219 = vector.broadcast %218 : vector<1x1024xi1> to vector<32x1024xi1>
    %220 = vector.broadcast %cst_72 : f32 to vector<32x1024xf32>
    %221 = arith.select %219, %217, %220 : vector<32x1024xi1>, vector<32x1024xf32>
    %cst_73 = arith.constant 0.000000e+00 : f32
    %222 = vector.broadcast %cst_73 : f32 to vector<32x32xf32>
    %223 = vector.extract_strided_slice %182 {offsets = [0, 32], sizes = [32, 992], strides = [1, 1]} : vector<32x1024xf32> to vector<32x992xf32>
    %224 = tpu.concatenate %223, %222 in 1 : vector<32x992xf32>, vector<32x32xf32> -> vector<32x1024xf32>
    %cst_74 = arith.constant 0.000000e+00 : f32
    %225 = vector.broadcast %cst_74 : f32 to vector<32x33xf32>
    %226 = vector.extract_strided_slice %182 {offsets = [0, 33], sizes = [32, 991], strides = [1, 1]} : vector<32x1024xf32> to vector<32x991xf32>
    %227 = tpu.concatenate %226, %225 in 1 : vector<32x991xf32>, vector<32x33xf32> -> vector<32x1024xf32>
    %cst_75 = arith.constant 0.000000e+00 : f32
    %228 = vector.shape_cast %20 : vector<1x1024xi1> to vector<1x1024xi1>
    %229 = vector.broadcast %228 : vector<1x1024xi1> to vector<32x1024xi1>
    %230 = vector.broadcast %cst_75 : f32 to vector<32x1024xf32>
    %231 = arith.select %229, %227, %230 : vector<32x1024xi1>, vector<32x1024xf32>
    %232 = tpu.concatenate %190, %193, %200, %207, %182, %214, %221, %224, %231 in 0 : vector<32x1024xf32>, vector<32x1024xf32>, vector<32x1024xf32>, vector<32x1024xf32>, vector<32x1024xf32>, vector<32x1024xf32>, vector<32x1024xf32>, vector<32x1024xf32>, vector<32x1024xf32> -> vector<288x1024xf32>
    %cst_76 = arith.constant dense<0.000000e+00> : vector<32x1024xf32>
    %233 = tpu.matmul %183, %232, %cst_76 {dimension_numbers = #tpu.dot_dimension_numbers<[1], [0], [0], [1], [0, 0, 1, 1], [], []>} : vector<32x288xf32>, vector<288x1024xf32>, vector<32x1024xf32> -> vector<32x1024xf32>
    %cst_77 = arith.constant 0.000000e+00 : f32
    %234 = vector.broadcast %cst_77 : f32 to vector<32x1024xf32>
    %235 = arith.maximumf %233, %234 : vector<32x1024xf32>
    %c0_78 = arith.constant 0 : index
    %c0_79 = arith.constant 0 : index
    %236 = vector.load %arg7[%c0_78, %c0_79] : memref<32x288xf32, #tpu.memory_space<vmem>>, vector<32x288xf32>
    %cst_80 = arith.constant 0.000000e+00 : f32
    %237 = vector.broadcast %cst_80 : f32 to vector<32x33xf32>
    %238 = vector.extract_strided_slice %235 {offsets = [0, 0], sizes = [32, 991], strides = [1, 1]} : vector<32x1024xf32> to vector<32x991xf32>
    %239 = tpu.concatenate %237, %238 in 1 : vector<32x33xf32>, vector<32x991xf32> -> vector<32x1024xf32>
    %cst_81 = arith.constant 0.000000e+00 : f32
    %240 = vector.shape_cast %18 : vector<1x1024xi1> to vector<1x1024xi1>
    %241 = vector.broadcast %240 : vector<1x1024xi1> to vector<32x1024xi1>
    %242 = vector.broadcast %cst_81 : f32 to vector<32x1024xf32>
    %243 = arith.select %241, %239, %242 : vector<32x1024xi1>, vector<32x1024xf32>
    %cst_82 = arith.constant 0.000000e+00 : f32
    %244 = vector.broadcast %cst_82 : f32 to vector<32x32xf32>
    %245 = vector.extract_strided_slice %235 {offsets = [0, 0], sizes = [32, 992], strides = [1, 1]} : vector<32x1024xf32> to vector<32x992xf32>
    %246 = tpu.concatenate %244, %245 in 1 : vector<32x32xf32>, vector<32x992xf32> -> vector<32x1024xf32>
    %cst_83 = arith.constant 0.000000e+00 : f32
    %247 = vector.broadcast %cst_83 : f32 to vector<32x31xf32>
    %248 = vector.extract_strided_slice %235 {offsets = [0, 0], sizes = [32, 993], strides = [1, 1]} : vector<32x1024xf32> to vector<32x993xf32>
    %249 = tpu.concatenate %247, %248 in 1 : vector<32x31xf32>, vector<32x993xf32> -> vector<32x1024xf32>
    %cst_84 = arith.constant 0.000000e+00 : f32
    %250 = vector.shape_cast %20 : vector<1x1024xi1> to vector<1x1024xi1>
    %251 = vector.broadcast %250 : vector<1x1024xi1> to vector<32x1024xi1>
    %252 = vector.broadcast %cst_84 : f32 to vector<32x1024xf32>
    %253 = arith.select %251, %249, %252 : vector<32x1024xi1>, vector<32x1024xf32>
    %cst_85 = arith.constant 0.000000e+00 : f32
    %254 = vector.broadcast %cst_85 : f32 to vector<32x1xf32>
    %255 = vector.extract_strided_slice %235 {offsets = [0, 0], sizes = [32, 1023], strides = [1, 1]} : vector<32x1024xf32> to vector<32x1023xf32>
    %256 = tpu.concatenate %254, %255 in 1 : vector<32x1xf32>, vector<32x1023xf32> -> vector<32x1024xf32>
    %cst_86 = arith.constant 0.000000e+00 : f32
    %257 = vector.shape_cast %18 : vector<1x1024xi1> to vector<1x1024xi1>
    %258 = vector.broadcast %257 : vector<1x1024xi1> to vector<32x1024xi1>
    %259 = vector.broadcast %cst_86 : f32 to vector<32x1024xf32>
    %260 = arith.select %258, %256, %259 : vector<32x1024xi1>, vector<32x1024xf32>
    %cst_87 = arith.constant 0.000000e+00 : f32
    %261 = vector.broadcast %cst_87 : f32 to vector<32x1xf32>
    %262 = vector.extract_strided_slice %235 {offsets = [0, 1], sizes = [32, 1023], strides = [1, 1]} : vector<32x1024xf32> to vector<32x1023xf32>
    %263 = tpu.concatenate %262, %261 in 1 : vector<32x1023xf32>, vector<32x1xf32> -> vector<32x1024xf32>
    %cst_88 = arith.constant 0.000000e+00 : f32
    %264 = vector.shape_cast %20 : vector<1x1024xi1> to vector<1x1024xi1>
    %265 = vector.broadcast %264 : vector<1x1024xi1> to vector<32x1024xi1>
    %266 = vector.broadcast %cst_88 : f32 to vector<32x1024xf32>
    %267 = arith.select %265, %263, %266 : vector<32x1024xi1>, vector<32x1024xf32>
    %cst_89 = arith.constant 0.000000e+00 : f32
    %268 = vector.broadcast %cst_89 : f32 to vector<32x31xf32>
    %269 = vector.extract_strided_slice %235 {offsets = [0, 31], sizes = [32, 993], strides = [1, 1]} : vector<32x1024xf32> to vector<32x993xf32>
    %270 = tpu.concatenate %269, %268 in 1 : vector<32x993xf32>, vector<32x31xf32> -> vector<32x1024xf32>
    %cst_90 = arith.constant 0.000000e+00 : f32
    %271 = vector.shape_cast %18 : vector<1x1024xi1> to vector<1x1024xi1>
    %272 = vector.broadcast %271 : vector<1x1024xi1> to vector<32x1024xi1>
    %273 = vector.broadcast %cst_90 : f32 to vector<32x1024xf32>
    %274 = arith.select %272, %270, %273 : vector<32x1024xi1>, vector<32x1024xf32>
    %cst_91 = arith.constant 0.000000e+00 : f32
    %275 = vector.broadcast %cst_91 : f32 to vector<32x32xf32>
    %276 = vector.extract_strided_slice %235 {offsets = [0, 32], sizes = [32, 992], strides = [1, 1]} : vector<32x1024xf32> to vector<32x992xf32>
    %277 = tpu.concatenate %276, %275 in 1 : vector<32x992xf32>, vector<32x32xf32> -> vector<32x1024xf32>
    %cst_92 = arith.constant 0.000000e+00 : f32
    %278 = vector.broadcast %cst_92 : f32 to vector<32x33xf32>
    %279 = vector.extract_strided_slice %235 {offsets = [0, 33], sizes = [32, 991], strides = [1, 1]} : vector<32x1024xf32> to vector<32x991xf32>
    %280 = tpu.concatenate %279, %278 in 1 : vector<32x991xf32>, vector<32x33xf32> -> vector<32x1024xf32>
    %cst_93 = arith.constant 0.000000e+00 : f32
    %281 = vector.shape_cast %20 : vector<1x1024xi1> to vector<1x1024xi1>
    %282 = vector.broadcast %281 : vector<1x1024xi1> to vector<32x1024xi1>
    %283 = vector.broadcast %cst_93 : f32 to vector<32x1024xf32>
    %284 = arith.select %282, %280, %283 : vector<32x1024xi1>, vector<32x1024xf32>
    %285 = tpu.concatenate %243, %246, %253, %260, %235, %267, %274, %277, %284 in 0 : vector<32x1024xf32>, vector<32x1024xf32>, vector<32x1024xf32>, vector<32x1024xf32>, vector<32x1024xf32>, vector<32x1024xf32>, vector<32x1024xf32>, vector<32x1024xf32>, vector<32x1024xf32> -> vector<288x1024xf32>
    %cst_94 = arith.constant dense<0.000000e+00> : vector<32x1024xf32>
    %286 = tpu.matmul %236, %285, %cst_94 {dimension_numbers = #tpu.dot_dimension_numbers<[1], [0], [0], [1], [0, 0, 1, 1], [], []>} : vector<32x288xf32>, vector<288x1024xf32>, vector<32x1024xf32> -> vector<32x1024xf32>
    %cst_95 = arith.constant 0.000000e+00 : f32
    %287 = vector.broadcast %cst_95 : f32 to vector<32x1024xf32>
    %288 = arith.maximumf %286, %287 : vector<32x1024xf32>
    %c0_96 = arith.constant 0 : index
    %c0_97 = arith.constant 0 : index
    %289 = vector.load %arg8[%c0_96, %c0_97] : memref<4x288xf32, #tpu.memory_space<vmem>>, vector<4x288xf32>
    %c0_98 = arith.constant 0 : index
    %c0_99 = arith.constant 0 : index
    %290 = vector.load %arg9[%c0_98, %c0_99] : memref<4x1xf32, #tpu.memory_space<vmem>>, vector<4x1xf32>
    %cst_100 = arith.constant 0.000000e+00 : f32
    %291 = vector.broadcast %cst_100 : f32 to vector<32x33xf32>
    %292 = vector.extract_strided_slice %288 {offsets = [0, 0], sizes = [32, 991], strides = [1, 1]} : vector<32x1024xf32> to vector<32x991xf32>
    %293 = tpu.concatenate %291, %292 in 1 : vector<32x33xf32>, vector<32x991xf32> -> vector<32x1024xf32>
    %cst_101 = arith.constant 0.000000e+00 : f32
    %294 = vector.shape_cast %18 : vector<1x1024xi1> to vector<1x1024xi1>
    %295 = vector.broadcast %294 : vector<1x1024xi1> to vector<32x1024xi1>
    %296 = vector.broadcast %cst_101 : f32 to vector<32x1024xf32>
    %297 = arith.select %295, %293, %296 : vector<32x1024xi1>, vector<32x1024xf32>
    %cst_102 = arith.constant 0.000000e+00 : f32
    %298 = vector.broadcast %cst_102 : f32 to vector<32x32xf32>
    %299 = vector.extract_strided_slice %288 {offsets = [0, 0], sizes = [32, 992], strides = [1, 1]} : vector<32x1024xf32> to vector<32x992xf32>
    %300 = tpu.concatenate %298, %299 in 1 : vector<32x32xf32>, vector<32x992xf32> -> vector<32x1024xf32>
    %cst_103 = arith.constant 0.000000e+00 : f32
    %301 = vector.broadcast %cst_103 : f32 to vector<32x31xf32>
    %302 = vector.extract_strided_slice %288 {offsets = [0, 0], sizes = [32, 993], strides = [1, 1]} : vector<32x1024xf32> to vector<32x993xf32>
    %303 = tpu.concatenate %301, %302 in 1 : vector<32x31xf32>, vector<32x993xf32> -> vector<32x1024xf32>
    %cst_104 = arith.constant 0.000000e+00 : f32
    %304 = vector.shape_cast %20 : vector<1x1024xi1> to vector<1x1024xi1>
    %305 = vector.broadcast %304 : vector<1x1024xi1> to vector<32x1024xi1>
    %306 = vector.broadcast %cst_104 : f32 to vector<32x1024xf32>
    %307 = arith.select %305, %303, %306 : vector<32x1024xi1>, vector<32x1024xf32>
    %cst_105 = arith.constant 0.000000e+00 : f32
    %308 = vector.broadcast %cst_105 : f32 to vector<32x1xf32>
    %309 = vector.extract_strided_slice %288 {offsets = [0, 0], sizes = [32, 1023], strides = [1, 1]} : vector<32x1024xf32> to vector<32x1023xf32>
    %310 = tpu.concatenate %308, %309 in 1 : vector<32x1xf32>, vector<32x1023xf32> -> vector<32x1024xf32>
    %cst_106 = arith.constant 0.000000e+00 : f32
    %311 = vector.shape_cast %18 : vector<1x1024xi1> to vector<1x1024xi1>
    %312 = vector.broadcast %311 : vector<1x1024xi1> to vector<32x1024xi1>
    %313 = vector.broadcast %cst_106 : f32 to vector<32x1024xf32>
    %314 = arith.select %312, %310, %313 : vector<32x1024xi1>, vector<32x1024xf32>
    %cst_107 = arith.constant 0.000000e+00 : f32
    %315 = vector.broadcast %cst_107 : f32 to vector<32x1xf32>
    %316 = vector.extract_strided_slice %288 {offsets = [0, 1], sizes = [32, 1023], strides = [1, 1]} : vector<32x1024xf32> to vector<32x1023xf32>
    %317 = tpu.concatenate %316, %315 in 1 : vector<32x1023xf32>, vector<32x1xf32> -> vector<32x1024xf32>
    %cst_108 = arith.constant 0.000000e+00 : f32
    %318 = vector.shape_cast %20 : vector<1x1024xi1> to vector<1x1024xi1>
    %319 = vector.broadcast %318 : vector<1x1024xi1> to vector<32x1024xi1>
    %320 = vector.broadcast %cst_108 : f32 to vector<32x1024xf32>
    %321 = arith.select %319, %317, %320 : vector<32x1024xi1>, vector<32x1024xf32>
    %cst_109 = arith.constant 0.000000e+00 : f32
    %322 = vector.broadcast %cst_109 : f32 to vector<32x31xf32>
    %323 = vector.extract_strided_slice %288 {offsets = [0, 31], sizes = [32, 993], strides = [1, 1]} : vector<32x1024xf32> to vector<32x993xf32>
    %324 = tpu.concatenate %323, %322 in 1 : vector<32x993xf32>, vector<32x31xf32> -> vector<32x1024xf32>
    %cst_110 = arith.constant 0.000000e+00 : f32
    %325 = vector.shape_cast %18 : vector<1x1024xi1> to vector<1x1024xi1>
    %326 = vector.broadcast %325 : vector<1x1024xi1> to vector<32x1024xi1>
    %327 = vector.broadcast %cst_110 : f32 to vector<32x1024xf32>
    %328 = arith.select %326, %324, %327 : vector<32x1024xi1>, vector<32x1024xf32>
    %cst_111 = arith.constant 0.000000e+00 : f32
    %329 = vector.broadcast %cst_111 : f32 to vector<32x32xf32>
    %330 = vector.extract_strided_slice %288 {offsets = [0, 32], sizes = [32, 992], strides = [1, 1]} : vector<32x1024xf32> to vector<32x992xf32>
    %331 = tpu.concatenate %330, %329 in 1 : vector<32x992xf32>, vector<32x32xf32> -> vector<32x1024xf32>
    %cst_112 = arith.constant 0.000000e+00 : f32
    %332 = vector.broadcast %cst_112 : f32 to vector<32x33xf32>
    %333 = vector.extract_strided_slice %288 {offsets = [0, 33], sizes = [32, 991], strides = [1, 1]} : vector<32x1024xf32> to vector<32x991xf32>
    %334 = tpu.concatenate %333, %332 in 1 : vector<32x991xf32>, vector<32x33xf32> -> vector<32x1024xf32>
    %cst_113 = arith.constant 0.000000e+00 : f32
    %335 = vector.shape_cast %20 : vector<1x1024xi1> to vector<1x1024xi1>
    %336 = vector.broadcast %335 : vector<1x1024xi1> to vector<32x1024xi1>
    %337 = vector.broadcast %cst_113 : f32 to vector<32x1024xf32>
    %338 = arith.select %336, %334, %337 : vector<32x1024xi1>, vector<32x1024xf32>
    %339 = tpu.concatenate %297, %300, %307, %314, %288, %321, %328, %331, %338 in 0 : vector<32x1024xf32>, vector<32x1024xf32>, vector<32x1024xf32>, vector<32x1024xf32>, vector<32x1024xf32>, vector<32x1024xf32>, vector<32x1024xf32>, vector<32x1024xf32>, vector<32x1024xf32> -> vector<288x1024xf32>
    %cst_114 = arith.constant dense<0.000000e+00> : vector<4x1024xf32>
    %340 = tpu.matmul %289, %339, %cst_114 {dimension_numbers = #tpu.dot_dimension_numbers<[1], [0], [0], [1], [0, 0, 1, 1], [], []>} : vector<4x288xf32>, vector<288x1024xf32>, vector<4x1024xf32> -> vector<4x1024xf32>
    %341 = vector.broadcast %290 : vector<4x1xf32> to vector<4x1024xf32>
    %342 = arith.addf %340, %341 : vector<4x1024xf32>
    %c0_115 = arith.constant 0 : index
    %c0_116 = arith.constant 0 : index
    %c0_117 = arith.constant 0 : index
    %343 = vector.load %arg10[%c0_115, %c0_116, %c0_117] : memref<1x4x1024xf32, #tpu.memory_space<vmem>>, vector<1x4x1024xf32>
    %344 = vector.shape_cast %343 : vector<1x4x1024xf32> to vector<4x1024xf32>
    %345 = vector.shape_cast %342 : vector<4x1024xf32> to vector<1x4x1024xf32>
    tpu.vector_store %arg10[%c0_115, %c0_116, %c0_117], %345 {strides = array<i32>} : memref<1x4x1024xf32, #tpu.memory_space<vmem>>, vector<1x4x1024xf32>,
    return
  }
  func.func @transform_0(%arg0: i32) -> (i32, i32, i32) {
    %c0_i32 = arith.constant 0 : i32
    %c0_i32_0 = arith.constant 0 : i32
    %c0_i32_1 = arith.constant 0 : i32
    return %arg0, %c0_i32, %c0_i32_0 : i32, i32, i32
  }
  func.func @transform_1(%arg0: i32) -> (i32, i32) {
    %c0_i32 = arith.constant 0 : i32
    %c0_i32_0 = arith.constant 0 : i32
    %c0_i32_1 = arith.constant 0 : i32
    return %c0_i32, %c0_i32_0 : i32, i32
  }
  func.func @transform_2(%arg0: i32) -> (i32, i32) {
    %c0_i32 = arith.constant 0 : i32
    %c0_i32_0 = arith.constant 0 : i32
    %c0_i32_1 = arith.constant 0 : i32
    return %c0_i32, %c0_i32_0 : i32, i32
  }
  func.func @transform_3(%arg0: i32) -> (i32, i32) {
    %c0_i32 = arith.constant 0 : i32
    %c0_i32_0 = arith.constant 0 : i32
    %c0_i32_1 = arith.constant 0 : i32
    return %c0_i32, %c0_i32_0 : i32, i32
  }
  func.func @transform_4(%arg0: i32) -> (i32, i32) {
    %c0_i32 = arith.constant 0 : i32
    %c0_i32_0 = arith.constant 0 : i32
    %c0_i32_1 = arith.constant 0 : i32
    return %c0_i32, %c0_i32_0 : i32, i32
  }
  func.func @transform_5(%arg0: i32) -> (i32, i32) {
    %c0_i32 = arith.constant 0 : i32
    %c0_i32_0 = arith.constant 0 : i32
    %c0_i32_1 = arith.constant 0 : i32
    return %c0_i32, %c0_i32_0 : i32, i32
  }
  func.func @transform_6(%arg0: i32) -> (i32, i32) {
    %c0_i32 = arith.constant 0 : i32
    %c0_i32_0 = arith.constant 0 : i32
    %c0_i32_1 = arith.constant 0 : i32
    return %c0_i32, %c0_i32_0 : i32, i32
  }
  func.func @transform_7(%arg0: i32) -> (i32, i32) {
    %c0_i32 = arith.constant 0 : i32
    %c0_i32_0 = arith.constant 0 : i32
    %c0_i32_1 = arith.constant 0 : i32
    return %c0_i32, %c0_i32_0 : i32, i32
  }
  func.func @transform_8(%arg0: i32) -> (i32, i32) {
    %c0_i32 = arith.constant 0 : i32
    %c0_i32_0 = arith.constant 0 : i32
    %c0_i32_1 = arith.constant 0 : i32
    return %c0_i32, %c0_i32_0 : i32, i32
  }
  func.func @transform_9(%arg0: i32) -> (i32, i32, i32) {
    %c0_i32 = arith.constant 0 : i32
    %c0_i32_0 = arith.constant 0 : i32
    %c0_i32_1 = arith.constant 0 : i32
    return %arg0, %c0_i32, %c0_i32_0 : i32, i32, i32
  }
}

</mosaic_0001>

<llo_original>
// kernel: decrease_vdsr_forward.2
$region0: #{decrease_vdsr_forward.2}
  #allocation0 [shape = 'u32[]', space=smem, size = 0x4, offset = 0x4, fixed_abs, tag = 'smem constant byte address 0x4 - core index']
  #allocation1 [shape = 'u32[144,128]{1,0:T(1,128)}', space=vmem, size = 0x12000, scoped, tag = 'internal scratch']
  %s0 = inlined_call_operand.vmem [shape: f32[2,8,256], index: 0, kind: input, shape index: {}]
  %s1 = inlined_call_operand.vmem [shape: f32[16,72], index: 1, kind: input, shape index: {}]
  %s2 = inlined_call_operand.vmem [shape: f32[16,1], index: 2, kind: input, shape index: {}]
  %s3 = inlined_call_operand.vmem [shape: f32[2,16,256], index: 3, kind: output, shape index: {}]
  %s4 = sld [smem:[#allocation0]]
  $region45: #{decrease_vdsr_forward.2} parent=0
    _
  %s6 = ssub.s32 1, %s4
  %s7 = scalar_select 0, %s6, %s4
  loop: start=0, step=1, limit=4
  $region2: #{decrease_vdsr_forward.2} parent=0 // loop_pre_header
    _
  $region3: #{decrease_vdsr_forward.2} parent=0 // loop_header
    %s9 = sphi 0, %s13
    %p10 = scmp.ge.s32.totalorder %s9, 4
    %s19 = sphi 0, %s21
    %s22 = sphi 0, %s19
    %s23 = sphi 0, %s22
    %s39 = sphi 0, %s23
    %s43 = sphi 0, %s43
    %s45 = sphi 0, %s43
    %s46 = sphi 0, %s45
    %s60 = sphi 0, %s46
    %s64 = sphi 0, %s64
    %s66 = sphi 0, %s64
    %s67 = sphi 0, %s66
    %s81 = sphi 0, %s67
    %s87 = sphi 0, %s89
    %s90 = sphi 0, %s87
    %s91 = sphi 0, %s90
    %s107 = sphi 0, %s91
  $region4: #{decrease_vdsr_forward.2} parent=0 // loop_header_branch
    %12 = sbr.rel (%p10) target = $region8
  $region5: #{decrease_vdsr_forward.2} parent=0 // loop_body
    %s14 = ssub.s32 %s9, 1
    %s15 = ssub.s32 %s9, 2
    %s16 = sadd.s32 %s9, 1
    %s17 = ssub.s32 %s9, %s16
    %p18 = scmp.eq.s32.totalorder %s17, 0
    %s20 = sadd.s32 %s19, 1
    %s21 = scalar_select %p18, %s19, %s20
    %p24 = pneg %p18
    %p25 = scmp.eq.s32.totalorder %s9, 1
    %p26 = por %p24, %p25
    %p27 = scmp.ne.s32.totalorder %s19, %s22
    %p28 = scmp.eq.s32.totalorder %s9, 0
    %p29 = por %p27, %p28
    %p30 = scmp.ne.s32.totalorder %s19, %s22
    %p31 = scmp.eq.s32.totalorder %s14, 1
    %p32 = por %p30, %p31
    %p33 = scmp.ne.s32.totalorder %s22, %s23
    %p34 = scmp.eq.s32.totalorder %s14, 0
    %p35 = por %p33, %p34
    %p36 = scmp.ne.s32.totalorder %s22, %s23
    %p37 = scmp.eq.s32.totalorder %s15, 1
    %p38 = por %p36, %p37
    %p40 = scmp.ne.s32.totalorder %s23, %s39
    %p41 = scmp.eq.s32.totalorder %s15, 0
    %p42 = por %p40, %p41
    %s44 = sadd.s32 %s43, 1
    %p47 = scmp.eq.s32.totalorder %s9, 1
    %p48 = scmp.ne.s32.totalorder %s43, %s45
    %p49 = scmp.eq.s32.totalorder %s9, 0
    %p50 = por %p48, %p49
    %p51 = scmp.ne.s32.totalorder %s43, %s45
    %p52 = scmp.eq.s32.totalorder %s14, 1
    %p53 = por %p51, %p52
    %p54 = scmp.ne.s32.totalorder %s45, %s46
    %p55 = scmp.eq.s32.totalorder %s14, 0
    %p56 = por %p54, %p55
    %p57 = scmp.ne.s32.totalorder %s45, %s46
    %p58 = scmp.eq.s32.totalorder %s15, 1
    %p59 = por %p57, %p58
    %p61 = scmp.ne.s32.totalorder %s46, %s60
    %p62 = scmp.eq.s32.totalorder %s15, 0
    %p63 = por %p61, %p62
    %s65 = sadd.s32 %s64, 1
    %p68 = scmp.eq.s32.totalorder %s9, 1
    %p69 = scmp.ne.s32.totalorder %s64, %s66
    %p70 = scmp.eq.s32.totalorder %s9, 0
    %p71 = por %p69, %p70
    %p72 = scmp.ne.s32.totalorder %s64, %s66
    %p73 = scmp.eq.s32.totalorder %s14, 1
    %p74 = por %p72, %p73
    %p75 = scmp.ne.s32.totalorder %s66, %s67
    %p76 = scmp.eq.s32.totalorder %s14, 0
    %p77 = por %p75, %p76
    %p78 = scmp.ne.s32.totalorder %s66, %s67
    %p79 = scmp.eq.s32.totalorder %s15, 1
    %p80 = por %p78, %p79
    %p82 = scmp.ne.s32.totalorder %s67, %s81
    %p83 = scmp.eq.s32.totalorder %s15, 0
    %p84 = por %p82, %p83
    %s85 = ssub.s32 %s9, %s16
    %p86 = scmp.eq.s32.totalorder %s85, 0
    %s88 = sadd.s32 %s87, 1
    %s89 = scalar_select %p86, %s87, %s88
    %p92 = pneg %p86
    %p93 = scmp.eq.s32.totalorder %s9, 1
    %p94 = por %p92, %p93
    %p95 = scmp.ne.s32.totalorder %s87, %s90
    %p96 = scmp.eq.s32.totalorder %s9, 0
    %p97 = por %p95, %p96
    %p98 = scmp.ne.s32.totalorder %s87, %s90
    %p99 = scmp.eq.s32.totalorder %s14, 1
    %p100 = por %p98, %p99
    %p101 = scmp.ne.s32.totalorder %s90, %s91
    %p102 = scmp.eq.s32.totalorder %s14, 0
    %p103 = por %p101, %p102
    %p104 = scmp.ne.s32.totalorder %s90, %s91
    %p105 = scmp.eq.s32.totalorder %s15, 1
    %p106 = por %p104, %p105
    %p108 = scmp.ne.s32.totalorder %s91, %s107
    %p109 = scmp.eq.s32.totalorder %s15, 0
    %p110 = por %p108, %p109
    %p111 = scmp.le.s32.totalorder 1, %s9
    %p112 = scmp.lt.s32.totalorder %s9, 3
    %p113 = pnand %p111, %p112
    %p114 = pneg %p113
    // Predicated region
    $region9: #{decrease_vdsr_forward.2} parent=5 // pred_check
      _
    $region10: #{decrease_vdsr_forward.2} parent=5 // pred_check_branch
      %116 = sbr.rel (%p113) target = $region12
    $region11: #{decrease_vdsr_forward.2} parent=5 // pred_region
      %s117 = ssub.s32 %s9, 1
      // Predicated region
      $region13: #{decrease_vdsr_forward.2} parent=11 // pred_check
        %p118 = pneg %p56
      $region14: #{decrease_vdsr_forward.2} parent=11 // pred_check_branch
        %120 = sbr.rel (%p118) target = $region16
      $region15: #{decrease_vdsr_forward.2} parent=11 // pred_region
        _
      $region16: #{decrease_vdsr_forward.2} parent=11 // pred_fallthru
        _
      // Predicated region
      $region17: #{decrease_vdsr_forward.2} parent=11 // pred_check
        %p121 = pneg %p77
      $region18: #{decrease_vdsr_forward.2} parent=11 // pred_check_branch
        %123 = sbr.rel (%p121) target = $region20
      $region19: #{decrease_vdsr_forward.2} parent=11 // pred_region
        _
      $region20: #{decrease_vdsr_forward.2} parent=11 // pred_fallthru
        _
    $region12: #{decrease_vdsr_forward.2} parent=5 // pred_fallthru
      _
    %p124 = scmp.lt.s32.totalorder %s9, 2
    // Predicated region
    $region21: #{decrease_vdsr_forward.2} parent=5 // pred_check
      %p125 = pneg %p124
    $region22: #{decrease_vdsr_forward.2} parent=5 // pred_check_branch
      %127 = sbr.rel (%p125) target = $region24
    $region23: #{decrease_vdsr_forward.2} parent=5 // pred_region
      // Predicated region
      $region25: #{decrease_vdsr_forward.2} parent=23 // pred_check
        %p128 = pneg %p29
      $region26: #{decrease_vdsr_forward.2} parent=23 // pred_check_branch
        %130 = sbr.rel (%p128) target = $region28
      $region27: #{decrease_vdsr_forward.2} parent=23 // pred_region
        %p131 = scmp.lt.s32.totalorder %s9, 1
        %s132 = scalar_select %p131, %s9, 1
        %s133 = smul.addr %s132, 2
        %s134 = smul.addr %s133, 8
        %s135 = scalar_lea.vmem %s0, %s134
      $region28: #{decrease_vdsr_forward.2} parent=23 // pred_fallthru
        _
    $region24: #{decrease_vdsr_forward.2} parent=5 // pred_fallthru
      _
    %p136 = scmp.le.s32.totalorder 1, %s9
    %p137 = scmp.lt.s32.totalorder %s9, 3
    %p138 = pnand %p136, %p137
    %p139 = pneg %p138
    // Predicated region
    $region29: #{decrease_vdsr_forward.2} parent=5 // pred_check
      _
    $region30: #{decrease_vdsr_forward.2} parent=5 // pred_check_branch
      %141 = sbr.rel (%p138) target = $region32
    $region31: #{decrease_vdsr_forward.2} parent=5 // pred_region
      %s142 = ssub.s32 %s9, 1
      %p143 = scmp.lt.s32.totalorder %s14, 1
      %s144 = scalar_select %p143, %s14, 1
      %s145 = smul.addr %s144, 2
      %s146 = smul.addr %s145, 8
      %s147 = scalar_lea.vmem %s0, %s146
      %p148 = pneg %p35
      %p149 = pneg %p32
      %p150 = pneg %p56
      %p151 = pneg %p53
      %p152 = pneg %p77
      %p153 = pneg %p74
      %p154 = pneg %p103
      %p155 = pneg %p100
      %p156 = scmp.lt.s32.totalorder %s14, 1
      %s157 = scalar_select %p156, %s14, 1
      %s158 = smul.addr %s157, 4
      %s159 = smul.addr %s158, 8
      %s160 = scalar_lea.vmem %s3, %s159
      %p161 = scmp.lt.s32.totalorder %s14, 1
      %s162 = scalar_select %p161, %s14, 1
      %s163 = smul.addr %s162, 2
      %s164 = smul.addr %s163, 8
      %s165 = scalar_lea.vmem %s0, %s164
      %p166 = scmp.lt.s32.totalorder %s14, 1
      %s167 = scalar_select %p166, %s14, 1
      %s168 = smul.addr %s167, 4
      %s169 = smul.addr %s168, 8
      %s170 = scalar_lea.vmem %s3, %s169
      %v171 = vlaneseq
      %v172 = vand.u32 %v171, 127
      %v173 = vadd.s32 %v172, 128
      %vm174 = vcmp.lt.s32.totalorder %v172, 0
      %v175 = vsub.s32 0, %v172
      %v176 = vsel %vm174, %v175, %v172
      %v177 = vshrl.u32 %v176, 4
      %v178 = vand.u32 %v176, 15
      %v179 = vsub.s32 0, %v178
      %v180 = vsel %vm174, %v179, %v178
      %vm181 = vcmp.lt.s32.totalorder %v173, 0
      %v182 = vsub.s32 0, %v173
      %v183 = vsel %vm181, %v182, %v173
      %v184 = vshrl.u32 %v183, 4
      %v185 = vand.u32 %v183, 15
      %v186 = vsub.s32 0, %v185
      %v187 = vsel %vm181, %v186, %v185
      %vm188 = vcmp.ne.s32.totalorder %v180, 0
      %vm189 = vcmp.ne.s32.totalorder %v187, 0
      %vm190 = vcmp.lt.s32.totalorder %v180, 0
      %vm191 = vcmp.lt.s32.totalorder %v187, 0
      %vm192 = vmand %vm190, %vm188
      %vm193 = vmand %vm191, %vm189
      %v194 = vadd.s32 %v180, 16
      %v195 = vadd.s32 %v187, 16
      %v196 = vsel %vm192, %v194, %v180
      %v197 = vsel %vm193, %v195, %v187
      %vm198 = vcmp.ne.s32.totalorder %v196, 0
      %vm199 = vcmp.ne.s32.totalorder %v197, 0
      %vm200 = vcmp.ne.s32.totalorder %v196, 15
      %vm201 = vcmp.ne.s32.totalorder %v197, 15
      %v202 = vld [vmem:[%s165] sm:$0xff]
      %v203 = vld [vmem:[%s165 + $0x8] sm:$0xff]
      %v204 = vld [vmem:[%s1] sm:$0xff]
      %v205 = vld [vmem:[%s1 + $0x8] sm:$0xff]
      %v206 = vld [vmem:[%s2] sm:$0xff]
      %v207 = vld [vmem:[%s2 + $0x8] sm:$0xff]
      %210 = vrot.lane.b32.xlu0 %v202, 17
      %v211 = vpop.permute.xlu0 %210
      %212 = vrot.lane.b32.xlu0 %v203, 17
      %v213 = vpop.permute.xlu0 %212
      %vm214 = vcmask 138240
      %v215 = vsel %vm214, %v211, %v213
      %v218 = vsel %vm214, 0.0, %v211
      %v219 = vsel %vm198, 1, 0
      %v220 = vsel %vm199, 1, 0
      %vm221 = vcmp.eq.s32.totalorder %v219, 1
      %vm222 = vcmp.eq.s32.totalorder %v220, 1
      %v223 = vsel %vm221, %v218, 0.0
      %v224 = vsel %vm222, %v215, 0.0
      %225 = vrot.lane.b32.xlu0 %v202, 16
      %v226 = vpop.permute.xlu0 %225
      %227 = vrot.lane.b32.xlu0 %v203, 16
      %v228 = vpop.permute.xlu0 %227
      %vm229 = vcmask 130048
      %v230 = vsel %vm229, %v226, %v228
      %v233 = vsel %vm229, 0.0, %v226
      %234 = vrot.lane.b32.xlu0 %v202, 15
      %v235 = vpop.permute.xlu0 %234
      %236 = vrot.lane.b32.xlu0 %v203, 15
      %v237 = vpop.permute.xlu0 %236
      %vm238 = vcmask 121856
      %v239 = vsel %vm238, %v235, %v237
      %v242 = vsel %vm238, 0.0, %v235
      %v243 = vsel %vm200, 1, 0
      %v244 = vsel %vm201, 1, 0
      %vm245 = vcmp.eq.s32.totalorder %v243, 1
      %vm246 = vcmp.eq.s32.totalorder %v244, 1
      %v247 = vsel %vm245, %v242, 0.0
      %v248 = vsel %vm246, %v239, 0.0
      %249 = vrot.lane.b32.xlu0 %v202, 1
      %v250 = vpop.permute.xlu0 %249
      %251 = vrot.lane.b32.xlu0 %v203, 1
      %v252 = vpop.permute.xlu0 %251
      %vm253 = vcmask 7168
      %v254 = vsel %vm253, %v250, %v252
      %v257 = vsel %vm253, 0.0, %v250
      %v258 = vsel %vm221, %v257, 0.0
      %v259 = vsel %vm222, %v254, 0.0
      %260 = vrot.lane.b32.xlu0 %v202, 127
      %v261 = vpop.permute.xlu0 %260
      %262 = vrot.lane.b32.xlu0 %v203, 127
      %v263 = vpop.permute.xlu0 %262
      %vm264 = vcmask 1039360
      %v265 = vsel %vm264, %v261, %v263
      %v268 = vsel %vm264, %v263, 0.0
      %v269 = vsel %vm245, %v265, 0.0
      %v270 = vsel %vm246, %v268, 0.0
      %271 = vrot.lane.b32.xlu0 %v202, 113
      %v272 = vpop.permute.xlu0 %271
      %273 = vrot.lane.b32.xlu0 %v203, 113
      %v274 = vpop.permute.xlu0 %273
      %vm275 = vcmask 924672
      %v276 = vsel %vm275, %v272, %v274
      %v279 = vsel %vm275, %v274, 0.0
      %v280 = vsel %vm221, %v276, 0.0
      %v281 = vsel %vm222, %v279, 0.0
      %282 = vrot.lane.b32.xlu0 %v202, 112
      %v283 = vpop.permute.xlu0 %282
      %284 = vrot.lane.b32.xlu0 %v203, 112
      %v285 = vpop.permute.xlu0 %284
      %vm286 = vcmask 916480
      %v287 = vsel %vm286, %v283, %v285
      %v290 = vsel %vm286, %v285, 0.0
      %291 = vrot.lane.b32.xlu0 %v202, 111
      %v292 = vpop.permute.xlu0 %291
      %293 = vrot.lane.b32.xlu0 %v203, 111
      %v294 = vpop.permute.xlu0 %293
      %vm295 = vcmask 908288
      %v296 = vsel %vm295, %v292, %v294
      %v299 = vsel %vm295, %v294, 0.0
      %v300 = vsel %vm245, %v296, 0.0
      %v301 = vsel %vm246, %v299, 0.0
      %303 = vset.pattern.permute.xlu0 0
      %304 = vperm.xlu0 %303, %v206
      %v305 = vpop.permute.xlu0 %304
      %308 = vset.pattern.permute.xlu0 0
      %309 = vperm.xlu0 %308, %v207
      %v310 = vpop.permute.xlu0 %309
      %vm312 = vcmask 588800
      %v314 = vsel %vm312, %v204, 0
      %v317 = vsel %vm312, %v205, 0
      %319 = vmatprep.subr.mxu0 %v224
      %320 = vmatpush1.msra.mxu0 %v223
      %321 = vmatprep.subr.mxu0 %v230
      %322 = vmatpush1.msra.mxu0 %v233
      %323 = vmatprep.subr.mxu0 %v248
      %324 = vmatpush1.msra.mxu0 %v247
      %325 = vmatprep.subr.mxu0 %v259
      %326 = vmatpush1.msra.mxu0 %v258
      %327 = vmatprep.subr.mxu0 %v203
      %328 = vmatpush1.msra.mxu0 %v202
      %329 = vmatprep.subr.mxu0 %v270
      %330 = vmatpush1.msra.mxu0 %v269
      %331 = vmatprep.subr.mxu0 %v281
      %332 = vmatpush1.msra.mxu0 %v280
      %333 = vmatprep.subr.mxu0 %v290
      %334 = vmatpush1.msra.mxu0 %v287
      %335 = vmatprep.subr.mxu0 %v301
      %336 = vmatpush1.msra.mxu0 %v300
      %337 = vmatprep.subr.mxu0 0.0
      %338 = vmatpush1.msra.mxu0 0.0
      %339 = vmatprep.subr.mxu0 0.0
      %340 = vmatpush1.msra.mxu0 0.0
      %341 = vmatprep.subr.mxu0 0.0
      %342 = vmatpush1.msra.mxu0 0.0
      %343 = vmatprep.subr.mxu0 0.0
      %344 = vmatpush1.msra.mxu0 0.0
      %345 = vmatprep.subr.mxu0 0.0
      %346 = vmatpush1.msra.mxu0 0.0
      %347 = vmatprep.subr.mxu0 0.0
      %348 = vmatpush1.msra.mxu0 0.0
      %349 = vmatprep.subr.mxu0 0.0
      %350 = vmatpush1.msra.mxu0 0.0
      %351 = vmatprep.subr.mxu0 0.0
      %352 = vmatpush1.msra.mxu0 0.0
      %353 = vmatprep.subr.mxu0 0.0
      %354 = vmatpush1.msra.mxu0 0.0
      %355 = vmatprep.subr.mxu0 0.0
      %356 = vmatpush1.msra.mxu0 0.0
      %357 = vmatprep.subr.mxu0 0.0
      %358 = vmatpush1.msra.mxu0 0.0
      %359 = vmatprep.subr.mxu0 0.0
      %360 = vmatpush1.msra.mxu0 0.0
      %361 = vmatprep.subr.mxu0 0.0
      %362 = vmatpush1.msra.mxu0 0.0
      %363 = vmatprep.subr.mxu0 0.0
      %364 = vmatpush1.msra.mxu0 0.0
      %365 = vmatprep.subr.mxu0 0.0
      %366 = vmatpush1.msra.mxu0 0.0
      %367 = vmatprep.subr.mxu0 0.0
      %368 = vmatpush1.msra.mxu0 0.0
      %369 = vmatprep.subr.mxu0 0.0
      %370 = vmatpush1.msra.mxu0 0.0
      %371 = vmatprep.subr.mxu0 0.0
      %372 = vmatpush1.msra.mxu0 0.0
      %373 = vmatprep.subr.mxu0 0.0
      %374 = vmatpush1.msra.mxu0 0.0
      %375 = vmatprep.subr.mxu0 0.0
      %376 = vmatpush1.msra.mxu0 0.0
      %377 = vmatprep.subr.mxu0 0.0
      %378 = vmatpush1.msra.mxu0 0.0
      %379 = vmatprep.subr.mxu0 0.0
      %380 = vmatpush1.msra.mxu0 0.0
      %381 = vmatprep.subr.mxu0 0.0
      %382 = vmatpush1.msra.mxu0 0.0
      %383 = vmatprep.mubr.f32.mxu0 0.0
      %384 = vmatmul.mubr.f32.gmra.mrb[0].mxu0 %v314
      %v385 = vpop.f32.mrb[0].mxu0
      %v386 = vadd.f32 %v305, %v385
      %v387 = vpop.f32.mrb[0].mxu0
      %v388 = vadd.f32 %v305, %v387
      %389 = vmatprep.mubr.f32.mxu0 0.0
      %390 = vmatmul.mubr.f32.gmra.mrb[0].mxu0 %v317
      %v391 = vpop.f32.mrb[0].mxu0
      %v392 = vadd.f32 %v310, %v391
      %v393 = vpop.f32.mrb[0].mxu0
      %v394 = vadd.f32 %v310, %v393
      %395 = vdwg.mxu0
      %396 = vst [vmem:[%s170] sm:$0xff] %v386
      %397 = vst [vmem:[%s170 + $0x8] sm:$0xff] %v388
      %398 = vst [vmem:[%s170 + $0x10] sm:$0xff] %v392
      %399 = vst [vmem:[%s170 + $0x18] sm:$0xff] %v394
      %p400 = scmp.lt.s32.totalorder %s14, 1
      %s401 = scalar_select %p400, %s14, 1
      %s402 = smul.addr %s401, 4
      %s403 = smul.addr %s402, 8
      %s404 = scalar_lea.vmem %s3, %s403
      // Predicated region
      $region33: #{decrease_vdsr_forward.2} parent=31 // pred_check
        %p405 = pneg %p100
      $region34: #{decrease_vdsr_forward.2} parent=31 // pred_check_branch
        %407 = sbr.rel (%p405) target = $region36
      $region35: #{decrease_vdsr_forward.2} parent=31 // pred_region
        _
      $region36: #{decrease_vdsr_forward.2} parent=31 // pred_fallthru
        _
    $region32: #{decrease_vdsr_forward.2} parent=5 // pred_fallthru
      _
    %p408 = scmp.le.s32.totalorder 2, %s9
    // Predicated region
    $region37: #{decrease_vdsr_forward.2} parent=5 // pred_check
      %p409 = pneg %p408
    $region38: #{decrease_vdsr_forward.2} parent=5 // pred_check_branch
      %411 = sbr.rel (%p409) target = $region40
    $region39: #{decrease_vdsr_forward.2} parent=5 // pred_region
      %s412 = ssub.s32 %s9, 2
      // Predicated region
      $region41: #{decrease_vdsr_forward.2} parent=39 // pred_check
        %p413 = pneg %p106
      $region42: #{decrease_vdsr_forward.2} parent=39 // pred_check_branch
        %415 = sbr.rel (%p413) target = $region44
      $region43: #{decrease_vdsr_forward.2} parent=39 // pred_region
        %p416 = scmp.lt.s32.totalorder %s15, 1
        %s417 = scalar_select %p416, %s15, 1
        %s418 = smul.addr %s417, 4
        %s419 = smul.addr %s418, 8
        %s420 = scalar_lea.vmem %s3, %s419
      $region44: #{decrease_vdsr_forward.2} parent=39 // pred_fallthru
        _
    $region40: #{decrease_vdsr_forward.2} parent=5 // pred_fallthru
      _
  $region6: #{decrease_vdsr_forward.2} parent=0 // loop_footer
    %s13 = sadd.s32 1, %s9
  $region7: #{decrease_vdsr_forward.2} parent=0 // loop_footer_branch
    %8 = sbr.rel target = $region3
  $region8: #{decrease_vdsr_forward.2} parent=0 // loop_exit
    _

// kernel: decrease_vdsr_forward.3
$region0: #{decrease_vdsr_forward.3}
  #allocation0 [shape = 'u32[]', space=smem, size = 0x4, offset = 0x4, fixed_abs, tag = 'smem constant byte address 0x4 - core index']
  #allocation1 [shape = 'u32[144,128]{1,0:T(1,128)}', space=vmem, size = 0x12000, scoped, tag = 'internal scratch']
  %s0 = inlined_call_operand.vmem [shape: f32[2,8,1024], index: 0, kind: input, shape index: {}]
  %s1 = inlined_call_operand.vmem [shape: f32[32,72], index: 1, kind: input, shape index: {}]
  %s2 = inlined_call_operand.vmem [shape: f32[32,1], index: 2, kind: input, shape index: {}]
  %s3 = inlined_call_operand.vmem [shape: f32[32,288], index: 3, kind: input, shape index: {}]
  %s4 = inlined_call_operand.vmem [shape: f32[32,288], index: 4, kind: input, shape index: {}]
  %s5 = inlined_call_operand.vmem [shape: f32[32,288], index: 5, kind: input, shape index: {}]
  %s6 = inlined_call_operand.vmem [shape: f32[32,288], index: 6, kind: input, shape index: {}]
  %s7 = inlined_call_operand.vmem [shape: f32[4,288], index: 7, kind: input, shape index: {}]
  %s8 = inlined_call_operand.vmem [shape: f32[4,1], index: 8, kind: input, shape index: {}]
  %s9 = inlined_call_operand.vmem [shape: f32[2,4,1024], index: 9, kind: output, shape index: {}]
  %s10 = sld [smem:[#allocation0]]
  $region69: #{decrease_vdsr_forward.3} parent=0
    _
  %s12 = ssub.s32 1, %s10
  %s13 = scalar_select 0, %s12, %s10
  loop: start=0, step=1, limit=4
  $region2: #{decrease_vdsr_forward.3} parent=0 // loop_pre_header
    _
  $region3: #{decrease_vdsr_forward.3} parent=0 // loop_header
    %s15 = sphi 0, %s19
    %p16 = scmp.ge.s32.totalorder %s15, 4
    %s25 = sphi 0, %s27
    %s28 = sphi 0, %s25
    %s29 = sphi 0, %s28
    %s45 = sphi 0, %s29
    %s49 = sphi 0, %s49
    %s51 = sphi 0, %s49
    %s52 = sphi 0, %s51
    %s66 = sphi 0, %s52
    %s70 = sphi 0, %s70
    %s72 = sphi 0, %s70
    %s73 = sphi 0, %s72
    %s87 = sphi 0, %s73
    %s91 = sphi 0, %s91
    %s93 = sphi 0, %s91
    %s94 = sphi 0, %s93
    %s108 = sphi 0, %s94
    %s112 = sphi 0, %s112
    %s114 = sphi 0, %s112
    %s115 = sphi 0, %s114
    %s129 = sphi 0, %s115
    %s133 = sphi 0, %s133
    %s135 = sphi 0, %s133
    %s136 = sphi 0, %s135
    %s150 = sphi 0, %s136
    %s154 = sphi 0, %s154
    %s156 = sphi 0, %s154
    %s157 = sphi 0, %s156
    %s171 = sphi 0, %s157
    %s175 = sphi 0, %s175
    %s177 = sphi 0, %s175
    %s178 = sphi 0, %s177
    %s192 = sphi 0, %s178
    %s196 = sphi 0, %s196
    %s198 = sphi 0, %s196
    %s199 = sphi 0, %s198
    %s213 = sphi 0, %s199
    %s219 = sphi 0, %s221
    %s222 = sphi 0, %s219
    %s223 = sphi 0, %s222
    %s239 = sphi 0, %s223
  $region4: #{decrease_vdsr_forward.3} parent=0 // loop_header_branch
    %18 = sbr.rel (%p16) target = $region8
  $region5: #{decrease_vdsr_forward.3} parent=0 // loop_body
    %s20 = ssub.s32 %s15, 1
    %s21 = ssub.s32 %s15, 2
    %s22 = sadd.s32 %s15, 1
    %s23 = ssub.s32 %s15, %s22
    %p24 = scmp.eq.s32.totalorder %s23, 0
    %s26 = sadd.s32 %s25, 1
    %s27 = scalar_select %p24, %s25, %s26
    %p30 = pneg %p24
    %p31 = scmp.eq.s32.totalorder %s15, 1
    %p32 = por %p30, %p31
    %p33 = scmp.ne.s32.totalorder %s25, %s28
    %p34 = scmp.eq.s32.totalorder %s15, 0
    %p35 = por %p33, %p34
    %p36 = scmp.ne.s32.totalorder %s25, %s28
    %p37 = scmp.eq.s32.totalorder %s20, 1
    %p38 = por %p36, %p37
    %p39 = scmp.ne.s32.totalorder %s28, %s29
    %p40 = scmp.eq.s32.totalorder %s20, 0
    %p41 = por %p39, %p40
    %p42 = scmp.ne.s32.totalorder %s28, %s29
    %p43 = scmp.eq.s32.totalorder %s21, 1
    %p44 = por %p42, %p43
    %p46 = scmp.ne.s32.totalorder %s29, %s45
    %p47 = scmp.eq.s32.totalorder %s21, 0
    %p48 = por %p46, %p47
    %s50 = sadd.s32 %s49, 1
    %p53 = scmp.eq.s32.totalorder %s15, 1
    %p54 = scmp.ne.s32.totalorder %s49, %s51
    %p55 = scmp.eq.s32.totalorder %s15, 0
    %p56 = por %p54, %p55
    %p57 = scmp.ne.s32.totalorder %s49, %s51
    %p58 = scmp.eq.s32.totalorder %s20, 1
    %p59 = por %p57, %p58
    %p60 = scmp.ne.s32.totalorder %s51, %s52
    %p61 = scmp.eq.s32.totalorder %s20, 0
    %p62 = por %p60, %p61
    %p63 = scmp.ne.s32.totalorder %s51, %s52
    %p64 = scmp.eq.s32.totalorder %s21, 1
    %p65 = por %p63, %p64
    %p67 = scmp.ne.s32.totalorder %s52, %s66
    %p68 = scmp.eq.s32.totalorder %s21, 0
    %p69 = por %p67, %p68
    %s71 = sadd.s32 %s70, 1
    %p74 = scmp.eq.s32.totalorder %s15, 1
    %p75 = scmp.ne.s32.totalorder %s70, %s72
    %p76 = scmp.eq.s32.totalorder %s15, 0
    %p77 = por %p75, %p76
    %p78 = scmp.ne.s32.totalorder %s70, %s72
    %p79 = scmp.eq.s32.totalorder %s20, 1
    %p80 = por %p78, %p79
    %p81 = scmp.ne.s32.totalorder %s72, %s73
    %p82 = scmp.eq.s32.totalorder %s20, 0
    %p83 = por %p81, %p82
    %p84 = scmp.ne.s32.totalorder %s72, %s73
    %p85 = scmp.eq.s32.totalorder %s21, 1
    %p86 = por %p84, %p85
    %p88 = scmp.ne.s32.totalorder %s73, %s87
    %p89 = scmp.eq.s32.totalorder %s21, 0
    %p90 = por %p88, %p89
    %s92 = sadd.s32 %s91, 1
    %p95 = scmp.eq.s32.totalorder %s15, 1
    %p96 = scmp.ne.s32.totalorder %s91, %s93
    %p97 = scmp.eq.s32.totalorder %s15, 0
    %p98 = por %p96, %p97
    %p99 = scmp.ne.s32.totalorder %s91, %s93
    %p100 = scmp.eq.s32.totalorder %s20, 1
    %p101 = por %p99, %p100
    %p102 = scmp.ne.s32.totalorder %s93, %s94
    %p103 = scmp.eq.s32.totalorder %s20, 0
    %p104 = por %p102, %p103
    %p105 = scmp.ne.s32.totalorder %s93, %s94
    %p106 = scmp.eq.s32.totalorder %s21, 1
    %p107 = por %p105, %p106
    %p109 = scmp.ne.s32.totalorder %s94, %s108
    %p110 = scmp.eq.s32.totalorder %s21, 0
    %p111 = por %p109, %p110
    %s113 = sadd.s32 %s112, 1
    %p116 = scmp.eq.s32.totalorder %s15, 1
    %p117 = scmp.ne.s32.totalorder %s112, %s114
    %p118 = scmp.eq.s32.totalorder %s15, 0
    %p119 = por %p117, %p118
    %p120 = scmp.ne.s32.totalorder %s112, %s114
    %p121 = scmp.eq.s32.totalorder %s20, 1
    %p122 = por %p120, %p121
    %p123 = scmp.ne.s32.totalorder %s114, %s115
    %p124 = scmp.eq.s32.totalorder %s20, 0
    %p125 = por %p123, %p124
    %p126 = scmp.ne.s32.totalorder %s114, %s115
    %p127 = scmp.eq.s32.totalorder %s21, 1
    %p128 = por %p126, %p127
    %p130 = scmp.ne.s32.totalorder %s115, %s129
    %p131 = scmp.eq.s32.totalorder %s21, 0
    %p132 = por %p130, %p131
    %s134 = sadd.s32 %s133, 1
    %p137 = scmp.eq.s32.totalorder %s15, 1
    %p138 = scmp.ne.s32.totalorder %s133, %s135
    %p139 = scmp.eq.s32.totalorder %s15, 0
    %p140 = por %p138, %p139
    %p141 = scmp.ne.s32.totalorder %s133, %s135
    %p142 = scmp.eq.s32.totalorder %s20, 1
    %p143 = por %p141, %p142
    %p144 = scmp.ne.s32.totalorder %s135, %s136
    %p145 = scmp.eq.s32.totalorder %s20, 0
    %p146 = por %p144, %p145
    %p147 = scmp.ne.s32.totalorder %s135, %s136
    %p148 = scmp.eq.s32.totalorder %s21, 1
    %p149 = por %p147, %p148
    %p151 = scmp.ne.s32.totalorder %s136, %s150
    %p152 = scmp.eq.s32.totalorder %s21, 0
    %p153 = por %p151, %p152
    %s155 = sadd.s32 %s154, 1
    %p158 = scmp.eq.s32.totalorder %s15, 1
    %p159 = scmp.ne.s32.totalorder %s154, %s156
    %p160 = scmp.eq.s32.totalorder %s15, 0
    %p161 = por %p159, %p160
    %p162 = scmp.ne.s32.totalorder %s154, %s156
    %p163 = scmp.eq.s32.totalorder %s20, 1
    %p164 = por %p162, %p163
    %p165 = scmp.ne.s32.totalorder %s156, %s157
    %p166 = scmp.eq.s32.totalorder %s20, 0
    %p167 = por %p165, %p166
    %p168 = scmp.ne.s32.totalorder %s156, %s157
    %p169 = scmp.eq.s32.totalorder %s21, 1
    %p170 = por %p168, %p169
    %p172 = scmp.ne.s32.totalorder %s157, %s171
    %p173 = scmp.eq.s32.totalorder %s21, 0
    %p174 = por %p172, %p173
    %s176 = sadd.s32 %s175, 1
    %p179 = scmp.eq.s32.totalorder %s15, 1
    %p180 = scmp.ne.s32.totalorder %s175, %s177
    %p181 = scmp.eq.s32.totalorder %s15, 0
    %p182 = por %p180, %p181
    %p183 = scmp.ne.s32.totalorder %s175, %s177
    %p184 = scmp.eq.s32.totalorder %s20, 1
    %p185 = por %p183, %p184
    %p186 = scmp.ne.s32.totalorder %s177, %s178
    %p187 = scmp.eq.s32.totalorder %s20, 0
    %p188 = por %p186, %p187
    %p189 = scmp.ne.s32.totalorder %s177, %s178
    %p190 = scmp.eq.s32.totalorder %s21, 1
    %p191 = por %p189, %p190
    %p193 = scmp.ne.s32.totalorder %s178, %s192
    %p194 = scmp.eq.s32.totalorder %s21, 0
    %p195 = por %p193, %p194
    %s197 = sadd.s32 %s196, 1
    %p200 = scmp.eq.s32.totalorder %s15, 1
    %p201 = scmp.ne.s32.totalorder %s196, %s198
    %p202 = scmp.eq.s32.totalorder %s15, 0
    %p203 = por %p201, %p202
    %p204 = scmp.ne.s32.totalorder %s196, %s198
    %p205 = scmp.eq.s32.totalorder %s20, 1
    %p206 = por %p204, %p205
    %p207 = scmp.ne.s32.totalorder %s198, %s199
    %p208 = scmp.eq.s32.totalorder %s20, 0
    %p209 = por %p207, %p208
    %p210 = scmp.ne.s32.totalorder %s198, %s199
    %p211 = scmp.eq.s32.totalorder %s21, 1
    %p212 = por %p210, %p211
    %p214 = scmp.ne.s32.totalorder %s199, %s213
    %p215 = scmp.eq.s32.totalorder %s21, 0
    %p216 = por %p214, %p215
    %s217 = ssub.s32 %s15, %s22
    %p218 = scmp.eq.s32.totalorder %s217, 0
    %s220 = sadd.s32 %s219, 1
    %s221 = scalar_select %p218, %s219, %s220
    %p224 = pneg %p218
    %p225 = scmp.eq.s32.totalorder %s15, 1
    %p226 = por %p224, %p225
    %p227 = scmp.ne.s32.totalorder %s219, %s222
    %p228 = scmp.eq.s32.totalorder %s15, 0
    %p229 = por %p227, %p228
    %p230 = scmp.ne.s32.totalorder %s219, %s222
    %p231 = scmp.eq.s32.totalorder %s20, 1
    %p232 = por %p230, %p231
    %p233 = scmp.ne.s32.totalorder %s222, %s223
    %p234 = scmp.eq.s32.totalorder %s20, 0
    %p235 = por %p233, %p234
    %p236 = scmp.ne.s32.totalorder %s222, %s223
    %p237 = scmp.eq.s32.totalorder %s21, 1
    %p238 = por %p236, %p237
    %p240 = scmp.ne.s32.totalorder %s223, %s239
    %p241 = scmp.eq.s32.totalorder %s21, 0
    %p242 = por %p240, %p241
    %p243 = scmp.le.s32.totalorder 1, %s15
    %p244 = scmp.lt.s32.totalorder %s15, 3
    %p245 = pnand %p243, %p244
    %p246 = pneg %p245
    // Predicated region
    $region9: #{decrease_vdsr_forward.3} parent=5 // pred_check
      _
    $region10: #{decrease_vdsr_forward.3} parent=5 // pred_check_branch
      %248 = sbr.rel (%p245) target = $region12
    $region11: #{decrease_vdsr_forward.3} parent=5 // pred_region
      %s249 = ssub.s32 %s15, 1
      // Predicated region
      $region13: #{decrease_vdsr_forward.3} parent=11 // pred_check
        %p250 = pneg %p62
      $region14: #{decrease_vdsr_forward.3} parent=11 // pred_check_branch
        %252 = sbr.rel (%p250) target = $region16
      $region15: #{decrease_vdsr_forward.3} parent=11 // pred_region
        _
      $region16: #{decrease_vdsr_forward.3} parent=11 // pred_fallthru
        _
      // Predicated region
      $region17: #{decrease_vdsr_forward.3} parent=11 // pred_check
        %p253 = pneg %p83
      $region18: #{decrease_vdsr_forward.3} parent=11 // pred_check_branch
        %255 = sbr.rel (%p253) target = $region20
      $region19: #{decrease_vdsr_forward.3} parent=11 // pred_region
        _
      $region20: #{decrease_vdsr_forward.3} parent=11 // pred_fallthru
        _
      // Predicated region
      $region21: #{decrease_vdsr_forward.3} parent=11 // pred_check
        %p256 = pneg %p104
      $region22: #{decrease_vdsr_forward.3} parent=11 // pred_check_branch
        %258 = sbr.rel (%p256) target = $region24
      $region23: #{decrease_vdsr_forward.3} parent=11 // pred_region
        _
      $region24: #{decrease_vdsr_forward.3} parent=11 // pred_fallthru
        _
      // Predicated region
      $region25: #{decrease_vdsr_forward.3} parent=11 // pred_check
        %p259 = pneg %p125
      $region26: #{decrease_vdsr_forward.3} parent=11 // pred_check_branch
        %261 = sbr.rel (%p259) target = $region28
      $region27: #{decrease_vdsr_forward.3} parent=11 // pred_region
        _
      $region28: #{decrease_vdsr_forward.3} parent=11 // pred_fallthru
        _
      // Predicated region
      $region29: #{decrease_vdsr_forward.3} parent=11 // pred_check
        %p262 = pneg %p146
      $region30: #{decrease_vdsr_forward.3} parent=11 // pred_check_branch
        %264 = sbr.rel (%p262) target = $region32
      $region31: #{decrease_vdsr_forward.3} parent=11 // pred_region
        _
      $region32: #{decrease_vdsr_forward.3} parent=11 // pred_fallthru
        _
      // Predicated region
      $region33: #{decrease_vdsr_forward.3} parent=11 // pred_check
        %p265 = pneg %p167
      $region34: #{decrease_vdsr_forward.3} parent=11 // pred_check_branch
        %267 = sbr.rel (%p265) target = $region36
      $region35: #{decrease_vdsr_forward.3} parent=11 // pred_region
        _
      $region36: #{decrease_vdsr_forward.3} parent=11 // pred_fallthru
        _
      // Predicated region
      $region37: #{decrease_vdsr_forward.3} parent=11 // pred_check
        %p268 = pneg %p188
      $region38: #{decrease_vdsr_forward.3} parent=11 // pred_check_branch
        %270 = sbr.rel (%p268) target = $region40
      $region39: #{decrease_vdsr_forward.3} parent=11 // pred_region
        _
      $region40: #{decrease_vdsr_forward.3} parent=11 // pred_fallthru
        _
      // Predicated region
      $region41: #{decrease_vdsr_forward.3} parent=11 // pred_check
        %p271 = pneg %p209
      $region42: #{decrease_vdsr_forward.3} parent=11 // pred_check_branch
        %273 = sbr.rel (%p271) target = $region44
      $region43: #{decrease_vdsr_forward.3} parent=11 // pred_region
        _
      $region44: #{decrease_vdsr_forward.3} parent=11 // pred_fallthru
        _
    $region12: #{decrease_vdsr_forward.3} parent=5 // pred_fallthru
      _
    %p274 = scmp.lt.s32.totalorder %s15, 2
    // Predicated region
    $region45: #{decrease_vdsr_forward.3} parent=5 // pred_check
      %p275 = pneg %p274
    $region46: #{decrease_vdsr_forward.3} parent=5 // pred_check_branch
      %277 = sbr.rel (%p275) target = $region48
    $region47: #{decrease_vdsr_forward.3} parent=5 // pred_region
      // Predicated region
      $region49: #{decrease_vdsr_forward.3} parent=47 // pred_check
        %p278 = pneg %p35
      $region50: #{decrease_vdsr_forward.3} parent=47 // pred_check_branch
        %280 = sbr.rel (%p278) target = $region52
      $region51: #{decrease_vdsr_forward.3} parent=47 // pred_region
        %p281 = scmp.lt.s32.totalorder %s15, 1
        %s282 = scalar_select %p281, %s15, 1
        %s283 = smul.addr %s282, 8
        %s284 = smul.addr %s283, 8
        %s285 = scalar_lea.vmem %s0, %s284
      $region52: #{decrease_vdsr_forward.3} parent=47 // pred_fallthru
        _
    $region48: #{decrease_vdsr_forward.3} parent=5 // pred_fallthru
      _
    %p286 = scmp.le.s32.totalorder 1, %s15
    %p287 = scmp.lt.s32.totalorder %s15, 3
    %p288 = pnand %p286, %p287
    %p289 = pneg %p288
    // Predicated region
    $region53: #{decrease_vdsr_forward.3} parent=5 // pred_check
      _
    $region54: #{decrease_vdsr_forward.3} parent=5 // pred_check_branch
      %291 = sbr.rel (%p288) target = $region56
    $region55: #{decrease_vdsr_forward.3} parent=5 // pred_region
      %s292 = ssub.s32 %s15, 1
      %p293 = scmp.lt.s32.totalorder %s20, 1
      %s294 = scalar_select %p293, %s20, 1
      %s295 = smul.addr %s294, 8
      %s296 = smul.addr %s295, 8
      %s297 = scalar_lea.vmem %s0, %s296
      %p298 = pneg %p41
      %p299 = pneg %p38
      %p300 = pneg %p62
      %p301 = pneg %p59
      %p302 = pneg %p83
      %p303 = pneg %p80
      %p304 = pneg %p104
      %p305 = pneg %p101
      %p306 = pneg %p125
      %p307 = pneg %p122
      %p308 = pneg %p146
      %p309 = pneg %p143
      %p310 = pneg %p167
      %p311 = pneg %p164
      %p312 = pneg %p188
      %p313 = pneg %p185
      %p314 = pneg %p209
      %p315 = pneg %p206
      %p316 = pneg %p235
      %p317 = pneg %p232
      %p318 = scmp.lt.s32.totalorder %s20, 1
      %s319 = scalar_select %p318, %s20, 1
      %s320 = smul.addr %s319, 8
      %s321 = smul.addr %s320, 4
      %s322 = scalar_lea.vmem %s9, %s321
      %p323 = scmp.lt.s32.totalorder %s20, 1
      %s324 = scalar_select %p323, %s20, 1
      %s325 = smul.addr %s324, 8
      %s326 = smul.addr %s325, 8
      %s327 = scalar_lea.vmem %s0, %s326
      %p328 = scmp.lt.s32.totalorder %s20, 1
      %s329 = scalar_select %p328, %s20, 1
      %s330 = smul.addr %s329, 8
      %s331 = smul.addr %s330, 4
      %s332 = scalar_lea.vmem %s9, %s331
      %v333 = vlaneseq
      %v334 = vand.u32 %v333, 127
      %v335 = vadd.s32 %v334, 128
      %v336 = vadd.s32 %v334, 256
      %v337 = vadd.s32 %v334, 384
      %v338 = vadd.s32 %v334, 512
      %v339 = vadd.s32 %v334, 640
      %v340 = vadd.s32 %v334, 768
      %v341 = vadd.s32 %v334, 896
      %vm342 = vcmp.lt.s32.totalorder %v334, 0
      %v343 = vsub.s32 0, %v334
      %v344 = vsel %vm342, %v343, %v334
      %v345 = vshrl.u32 %v344, 5
      %v346 = vand.u32 %v344, 31
      %v347 = vsub.s32 0, %v346
      %v348 = vsel %vm342, %v347, %v346
      %vm349 = vcmp.lt.s32.totalorder %v335, 0
      %v350 = vsub.s32 0, %v335
      %v351 = vsel %vm349, %v350, %v335
      %v352 = vshrl.u32 %v351, 5
      %v353 = vand.u32 %v351, 31
      %v354 = vsub.s32 0, %v353
      %v355 = vsel %vm349, %v354, %v353
      %vm356 = vcmp.lt.s32.totalorder %v336, 0
      %v357 = vsub.s32 0, %v336
      %v358 = vsel %vm356, %v357, %v336
      %v359 = vshrl.u32 %v358, 5
      %v360 = vand.u32 %v358, 31
      %v361 = vsub.s32 0, %v360
      %v362 = vsel %vm356, %v361, %v360
      %vm363 = vcmp.lt.s32.totalorder %v337, 0
      %v364 = vsub.s32 0, %v337
      %v365 = vsel %vm363, %v364, %v337
      %v366 = vshrl.u32 %v365, 5
      %v367 = vand.u32 %v365, 31
      %v368 = vsub.s32 0, %v367
      %v369 = vsel %vm363, %v368, %v367
      %vm370 = vcmp.lt.s32.totalorder %v338, 0
      %v371 = vsub.s32 0, %v338
      %v372 = vsel %vm370, %v371, %v338
      %v373 = vshrl.u32 %v372, 5
      %v374 = vand.u32 %v372, 31
      %v375 = vsub.s32 0, %v374
      %v376 = vsel %vm370, %v375, %v374
      %vm377 = vcmp.lt.s32.totalorder %v339, 0
      %v378 = vsub.s32 0, %v339
      %v379 = vsel %vm377, %v378, %v339
      %v380 = vshrl.u32 %v379, 5
      %v381 = vand.u32 %v379, 31
      %v382 = vsub.s32 0, %v381
      %v383 = vsel %vm377, %v382, %v381
      %vm384 = vcmp.lt.s32.totalorder %v340, 0
      %v385 = vsub.s32 0, %v340
      %v386 = vsel %vm384, %v385, %v340
      %v387 = vshrl.u32 %v386, 5
      %v388 = vand.u32 %v386, 31
      %v389 = vsub.s32 0, %v388
      %v390 = vsel %vm384, %v389, %v388
      %vm391 = vcmp.lt.s32.totalorder %v341, 0
      %v392 = vsub.s32 0, %v341
      %v393 = vsel %vm391, %v392, %v341
      %v394 = vshrl.u32 %v393, 5
      %v395 = vand.u32 %v393, 31
      %v396 = vsub.s32 0, %v395
      %v397 = vsel %vm391, %v396, %v395
      %vm398 = vcmp.ne.s32.totalorder %v348, 0
      %vm399 = vcmp.ne.s32.totalorder %v355, 0
      %vm400 = vcmp.ne.s32.totalorder %v362, 0
      %vm401 = vcmp.ne.s32.totalorder %v369, 0
      %vm402 = vcmp.ne.s32.totalorder %v376, 0
      %vm403 = vcmp.ne.s32.totalorder %v383, 0
      %vm404 = vcmp.ne.s32.totalorder %v390, 0
      %vm405 = vcmp.ne.s32.totalorder %v397, 0
      %vm406 = vcmp.lt.s32.totalorder %v348, 0
      %vm407 = vcmp.lt.s32.totalorder %v355, 0
      %vm408 = vcmp.lt.s32.totalorder %v362, 0
      %vm409 = vcmp.lt.s32.totalorder %v369, 0
      %vm410 = vcmp.lt.s32.totalorder %v376, 0
      %vm411 = vcmp.lt.s32.totalorder %v383, 0
      %vm412 = vcmp.lt.s32.totalorder %v390, 0
      %vm413 = vcmp.lt.s32.totalorder %v397, 0
      %vm414 = vmand %vm406, %vm398
      %vm415 = vmand %vm407, %vm399
      %vm416 = vmand %vm408, %vm400
      %vm417 = vmand %vm409, %vm401
      %vm418 = vmand %vm410, %vm402
      %vm419 = vmand %vm411, %vm403
      %vm420 = vmand %vm412, %vm404
      %vm421 = vmand %vm413, %vm405
      %v422 = vadd.s32 %v348, 32
      %v423 = vadd.s32 %v355, 32
      %v424 = vadd.s32 %v362, 32
      %v425 = vadd.s32 %v369, 32
      %v426 = vadd.s32 %v376, 32
      %v427 = vadd.s32 %v383, 32
      %v428 = vadd.s32 %v390, 32
      %v429 = vadd.s32 %v397, 32
      %v430 = vsel %vm414, %v422, %v348
      %v431 = vsel %vm415, %v423, %v355
      %v432 = vsel %vm416, %v424, %v362
      %v433 = vsel %vm417, %v425, %v369
      %v434 = vsel %vm418, %v426, %v376
      %v435 = vsel %vm419, %v427, %v383
      %v436 = vsel %vm420, %v428, %v390
      %v437 = vsel %vm421, %v429, %v397
      %vm438 = vcmp.ne.s32.totalorder %v430, 0
      %vm439 = vcmp.ne.s32.totalorder %v431, 0
      %vm440 = vcmp.ne.s32.totalorder %v432, 0
      %vm441 = vcmp.ne.s32.totalorder %v433, 0
      %vm442 = vcmp.ne.s32.totalorder %v434, 0
      %vm443 = vcmp.ne.s32.totalorder %v435, 0
      %vm444 = vcmp.ne.s32.totalorder %v436, 0
      %vm445 = vcmp.ne.s32.totalorder %v437, 0
      %vm446 = vcmp.ne.s32.totalorder %v430, 31
      %vm447 = vcmp.ne.s32.totalorder %v431, 31
      %vm448 = vcmp.ne.s32.totalorder %v432, 31
      %vm449 = vcmp.ne.s32.totalorder %v433, 31
      %vm450 = vcmp.ne.s32.totalorder %v434, 31
      %vm451 = vcmp.ne.s32.totalorder %v435, 31
      %vm452 = vcmp.ne.s32.totalorder %v436, 31
      %vm453 = vcmp.ne.s32.totalorder %v437, 31
      %v454 = vld [vmem:[%s327] sm:$0xff]
      %v455 = vld [vmem:[%s327 + $0x8] sm:$0xff]
      %v456 = vld [vmem:[%s327 + $0x10] sm:$0xff]
      %v457 = vld [vmem:[%s327 + $0x18] sm:$0xff]
      %v458 = vld [vmem:[%s327 + $0x20] sm:$0xff]
      %v459 = vld [vmem:[%s327 + $0x28] sm:$0xff]
      %v460 = vld [vmem:[%s327 + $0x30] sm:$0xff]
      %v461 = vld [vmem:[%s327 + $0x38] sm:$0xff]
      %v462 = vld [vmem:[%s1] sm:$0xff]
      %v463 = vld [vmem:[%s1 + $0x8] sm:$0xff]
      %v464 = vld [vmem:[%s1 + $0x10] sm:$0xff]
      %v465 = vld [vmem:[%s1 + $0x18] sm:$0xff]
      %v466 = vld [vmem:[%s2] sm:$0xff]
      %v467 = vld [vmem:[%s2 + $0x8] sm:$0xff]
      %v468 = vld [vmem:[%s2 + $0x10] sm:$0xff]
      %v469 = vld [vmem:[%s2 + $0x18] sm:$0xff]
      %478 = vrot.lane.b32.xlu0 %v454, 33
      %v479 = vpop.permute.xlu0 %478
      %480 = vrot.lane.b32.xlu0 %v455, 33
      %v481 = vpop.permute.xlu0 %480
      %482 = vrot.lane.b32.xlu0 %v456, 33
      %v483 = vpop.permute.xlu0 %482
      %484 = vrot.lane.b32.xlu0 %v457, 33
      %v485 = vpop.permute.xlu0 %484
      %486 = vrot.lane.b32.xlu0 %v458, 33
      %v487 = vpop.permute.xlu0 %486
      %488 = vrot.lane.b32.xlu0 %v459, 33
      %v489 = vpop.permute.xlu0 %488
      %490 = vrot.lane.b32.xlu0 %v460, 33
      %v491 = vpop.permute.xlu0 %490
      %492 = vrot.lane.b32.xlu0 %v461, 33
      %v493 = vpop.permute.xlu0 %492
      %vm494 = vcmask 269312
      %v495 = vsel %vm494, %v479, %v481
      %v496 = vsel %vm494, %v481, %v483
      %v497 = vsel %vm494, %v483, %v485
      %v498 = vsel %vm494, %v485, %v487
      %v499 = vsel %vm494, %v487, %v489
      %v500 = vsel %vm494, %v489, %v491
      %v501 = vsel %vm494, %v491, %v493
      %v510 = vsel %vm494, 0.0, %v479
      %v511 = vsel %vm438, 1, 0
      %v512 = vsel %vm439, 1, 0
      %v513 = vsel %vm440, 1, 0
      %v514 = vsel %vm441, 1, 0
      %v515 = vsel %vm442, 1, 0
      %v516 = vsel %vm443, 1, 0
      %v517 = vsel %vm444, 1, 0
      %v518 = vsel %vm445, 1, 0
      %vm519 = vcmp.eq.s32.totalorder %v511, 1
      %vm520 = vcmp.eq.s32.totalorder %v512, 1
      %vm521 = vcmp.eq.s32.totalorder %v513, 1
      %vm522 = vcmp.eq.s32.totalorder %v514, 1
      %vm523 = vcmp.eq.s32.totalorder %v515, 1
      %vm524 = vcmp.eq.s32.totalorder %v516, 1
      %vm525 = vcmp.eq.s32.totalorder %v517, 1
      %vm526 = vcmp.eq.s32.totalorder %v518, 1
      %v527 = vsel %vm519, %v510, 0.0
      %v528 = vsel %vm520, %v495, 0.0
      %v529 = vsel %vm521, %v496, 0.0
      %v530 = vsel %vm522, %v497, 0.0
      %v531 = vsel %vm523, %v498, 0.0
      %v532 = vsel %vm524, %v499, 0.0
      %v533 = vsel %vm525, %v500, 0.0
      %v534 = vsel %vm526, %v501, 0.0
      %535 = vrot.lane.b32.xlu0 %v454, 32
      %v536 = vpop.permute.xlu0 %535
      %537 = vrot.lane.b32.xlu0 %v455, 32
      %v538 = vpop.permute.xlu0 %537
      %539 = vrot.lane.b32.xlu0 %v456, 32
      %v540 = vpop.permute.xlu0 %539
      %541 = vrot.lane.b32.xlu0 %v457, 32
      %v542 = vpop.permute.xlu0 %541
      %543 = vrot.lane.b32.xlu0 %v458, 32
      %v544 = vpop.permute.xlu0 %543
      %545 = vrot.lane.b32.xlu0 %v459, 32
      %v546 = vpop.permute.xlu0 %545
      %547 = vrot.lane.b32.xlu0 %v460, 32
      %v548 = vpop.permute.xlu0 %547
      %549 = vrot.lane.b32.xlu0 %v461, 32
      %v550 = vpop.permute.xlu0 %549
      %vm551 = vcmask 261120
      %v552 = vsel %vm551, %v536, %v538
      %v553 = vsel %vm551, %v538, %v540
      %v554 = vsel %vm551, %v540, %v542
      %v555 = vsel %vm551, %v542, %v544
      %v556 = vsel %vm551, %v544, %v546
      %v557 = vsel %vm551, %v546, %v548
      %v558 = vsel %vm551, %v548, %v550
      %v567 = vsel %vm551, 0.0, %v536
      %568 = vrot.lane.b32.xlu0 %v454, 31
      %v569 = vpop.permute.xlu0 %568
      %570 = vrot.lane.b32.xlu0 %v455, 31
      %v571 = vpop.permute.xlu0 %570
      %572 = vrot.lane.b32.xlu0 %v456, 31
      %v573 = vpop.permute.xlu0 %572
      %574 = vrot.lane.b32.xlu0 %v457, 31
      %v575 = vpop.permute.xlu0 %574
      %576 = vrot.lane.b32.xlu0 %v458, 31
      %v577 = vpop.permute.xlu0 %576
      %578 = vrot.lane.b32.xlu0 %v459, 31
      %v579 = vpop.permute.xlu0 %578
      %580 = vrot.lane.b32.xlu0 %v460, 31
      %v581 = vpop.permute.xlu0 %580
      %582 = vrot.lane.b32.xlu0 %v461, 31
      %v583 = vpop.permute.xlu0 %582
      %vm584 = vcmask 252928
      %v585 = vsel %vm584, %v569, %v571
      %v586 = vsel %vm584, %v571, %v573
      %v587 = vsel %vm584, %v573, %v575
      %v588 = vsel %vm584, %v575, %v577
      %v589 = vsel %vm584, %v577, %v579
      %v590 = vsel %vm584, %v579, %v581
      %v591 = vsel %vm584, %v581, %v583
      %v600 = vsel %vm584, 0.0, %v569
      %v601 = vsel %vm446, 1, 0
      %v602 = vsel %vm447, 1, 0
      %v603 = vsel %vm448, 1, 0
      %v604 = vsel %vm449, 1, 0
      %v605 = vsel %vm450, 1, 0
      %v606 = vsel %vm451, 1, 0
      %v607 = vsel %vm452, 1, 0
      %v608 = vsel %vm453, 1, 0
      %vm609 = vcmp.eq.s32.totalorder %v601, 1
      %vm610 = vcmp.eq.s32.totalorder %v602, 1
      %vm611 = vcmp.eq.s32.totalorder %v603, 1
      %vm612 = vcmp.eq.s32.totalorder %v604, 1
      %vm613 = vcmp.eq.s32.totalorder %v605, 1
      %vm614 = vcmp.eq.s32.totalorder %v606, 1
      %vm615 = vcmp.eq.s32.totalorder %v607, 1
      %vm616 = vcmp.eq.s32.totalorder %v608, 1
      %v617 = vsel %vm609, %v600, 0.0
      %v618 = vsel %vm610, %v585, 0.0
      %v619 = vsel %vm611, %v586, 0.0
      %v620 = vsel %vm612, %v587, 0.0
      %v621 = vsel %vm613, %v588, 0.0
      %v622 = vsel %vm614, %v589, 0.0
      %v623 = vsel %vm615, %v590, 0.0
      %v624 = vsel %vm616, %v591, 0.0
      %625 = vrot.lane.b32.xlu0 %v454, 1
      %v626 = vpop.permute.xlu0 %625
      %627 = vrot.lane.b32.xlu0 %v455, 1
      %v628 = vpop.permute.xlu0 %627
      %629 = vrot.lane.b32.xlu0 %v456, 1
      %v630 = vpop.permute.xlu0 %629
      %631 = vrot.lane.b32.xlu0 %v457, 1
      %v632 = vpop.permute.xlu0 %631
      %633 = vrot.lane.b32.xlu0 %v458, 1
      %v634 = vpop.permute.xlu0 %633
      %635 = vrot.lane.b32.xlu0 %v459, 1
      %v636 = vpop.permute.xlu0 %635
      %637 = vrot.lane.b32.xlu0 %v460, 1
      %v638 = vpop.permute.xlu0 %637
      %639 = vrot.lane.b32.xlu0 %v461, 1
      %v640 = vpop.permute.xlu0 %639
      %vm641 = vcmask 7168
      %v642 = vsel %vm641, %v626, %v628
      %v643 = vsel %vm641, %v628, %v630
      %v644 = vsel %vm641, %v630, %v632
      %v645 = vsel %vm641, %v632, %v634
      %v646 = vsel %vm641, %v634, %v636
      %v647 = vsel %vm641, %v636, %v638
      %v648 = vsel %vm641, %v638, %v640
      %v657 = vsel %vm641, 0.0, %v626
      %v658 = vsel %vm519, %v657, 0.0
      %v659 = vsel %vm520, %v642, 0.0
      %v660 = vsel %vm521, %v643, 0.0
      %v661 = vsel %vm522, %v644, 0.0
      %v662 = vsel %vm523, %v645, 0.0
      %v663 = vsel %vm524, %v646, 0.0
      %v664 = vsel %vm525, %v647, 0.0
      %v665 = vsel %vm526, %v648, 0.0
      %666 = vrot.lane.b32.xlu0 %v454, 127
      %v667 = vpop.permute.xlu0 %666
      %668 = vrot.lane.b32.xlu0 %v455, 127
      %v669 = vpop.permute.xlu0 %668
      %670 = vrot.lane.b32.xlu0 %v456, 127
      %v671 = vpop.permute.xlu0 %670
      %672 = vrot.lane.b32.xlu0 %v457, 127
      %v673 = vpop.permute.xlu0 %672
      %674 = vrot.lane.b32.xlu0 %v458, 127
      %v675 = vpop.permute.xlu0 %674
      %676 = vrot.lane.b32.xlu0 %v459, 127
      %v677 = vpop.permute.xlu0 %676
      %678 = vrot.lane.b32.xlu0 %v460, 127
      %v679 = vpop.permute.xlu0 %678
      %680 = vrot.lane.b32.xlu0 %v461, 127
      %v681 = vpop.permute.xlu0 %680
      %vm682 = vcmask 1039360
      %v683 = vsel %vm682, %v667, %v669
      %v684 = vsel %vm682, %v669, %v671
      %v685 = vsel %vm682, %v671, %v673
      %v686 = vsel %vm682, %v673, %v675
      %v687 = vsel %vm682, %v675, %v677
      %v688 = vsel %vm682, %v677, %v679
      %v689 = vsel %vm682, %v679, %v681
      %v698 = vsel %vm682, %v681, 0.0
      %v699 = vsel %vm609, %v683, 0.0
      %v700 = vsel %vm610, %v684, 0.0
      %v701 = vsel %vm611, %v685, 0.0
      %v702 = vsel %vm612, %v686, 0.0
      %v703 = vsel %vm613, %v687, 0.0
      %v704 = vsel %vm614, %v688, 0.0
      %v705 = vsel %vm615, %v689, 0.0
      %v706 = vsel %vm616, %v698, 0.0
      %707 = vrot.lane.b32.xlu0 %v454, 97
      %v708 = vpop.permute.xlu0 %707
      %709 = vrot.lane.b32.xlu0 %v455, 97
      %v710 = vpop.permute.xlu0 %709
      %711 = vrot.lane.b32.xlu0 %v456, 97
      %v712 = vpop.permute.xlu0 %711
      %713 = vrot.lane.b32.xlu0 %v457, 97
      %v714 = vpop.permute.xlu0 %713
      %715 = vrot.lane.b32.xlu0 %v458, 97
      %v716 = vpop.permute.xlu0 %715
      %717 = vrot.lane.b32.xlu0 %v459, 97
      %v718 = vpop.permute.xlu0 %717
      %719 = vrot.lane.b32.xlu0 %v460, 97
      %v720 = vpop.permute.xlu0 %719
      %721 = vrot.lane.b32.xlu0 %v461, 97
      %v722 = vpop.permute.xlu0 %721
      %vm723 = vcmask 793600
      %v724 = vsel %vm723, %v708, %v710
      %v725 = vsel %vm723, %v710, %v712
      %v726 = vsel %vm723, %v712, %v714
      %v727 = vsel %vm723, %v714, %v716
      %v728 = vsel %vm723, %v716, %v718
      %v729 = vsel %vm723, %v718, %v720
      %v730 = vsel %vm723, %v720, %v722
      %v739 = vsel %vm723, %v722, 0.0
      %v740 = vsel %vm519, %v724, 0.0
      %v741 = vsel %vm520, %v725, 0.0
      %v742 = vsel %vm521, %v726, 0.0
      %v743 = vsel %vm522, %v727, 0.0
      %v744 = vsel %vm523, %v728, 0.0
      %v745 = vsel %vm524, %v729, 0.0
      %v746 = vsel %vm525, %v730, 0.0
      %v747 = vsel %vm526, %v739, 0.0
      %748 = vrot.lane.b32.xlu0 %v454, 96
      %v749 = vpop.permute.xlu0 %748
      %750 = vrot.lane.b32.xlu0 %v455, 96
      %v751 = vpop.permute.xlu0 %750
      %752 = vrot.lane.b32.xlu0 %v456, 96
      %v753 = vpop.permute.xlu0 %752
      %754 = vrot.lane.b32.xlu0 %v457, 96
      %v755 = vpop.permute.xlu0 %754
      %756 = vrot.lane.b32.xlu0 %v458, 96
      %v757 = vpop.permute.xlu0 %756
      %758 = vrot.lane.b32.xlu0 %v459, 96
      %v759 = vpop.permute.xlu0 %758
      %760 = vrot.lane.b32.xlu0 %v460, 96
      %v761 = vpop.permute.xlu0 %760
      %762 = vrot.lane.b32.xlu0 %v461, 96
      %v763 = vpop.permute.xlu0 %762
      %vm764 = vcmask 785408
      %v765 = vsel %vm764, %v749, %v751
      %v766 = vsel %vm764, %v751, %v753
      %v767 = vsel %vm764, %v753, %v755
      %v768 = vsel %vm764, %v755, %v757
      %v769 = vsel %vm764, %v757, %v759
      %v770 = vsel %vm764, %v759, %v761
      %v771 = vsel %vm764, %v761, %v763
      %v780 = vsel %vm764, %v763, 0.0
      %781 = vrot.lane.b32.xlu0 %v454, 95
      %v782 = vpop.permute.xlu0 %781
      %783 = vrot.lane.b32.xlu0 %v455, 95
      %v784 = vpop.permute.xlu0 %783
      %785 = vrot.lane.b32.xlu0 %v456, 95
      %v786 = vpop.permute.xlu0 %785
      %787 = vrot.lane.b32.xlu0 %v457, 95
      %v788 = vpop.permute.xlu0 %787
      %789 = vrot.lane.b32.xlu0 %v458, 95
      %v790 = vpop.permute.xlu0 %789
      %791 = vrot.lane.b32.xlu0 %v459, 95
      %v792 = vpop.permute.xlu0 %791
      %793 = vrot.lane.b32.xlu0 %v460, 95
      %v794 = vpop.permute.xlu0 %793
      %795 = vrot.lane.b32.xlu0 %v461, 95
      %v796 = vpop.permute.xlu0 %795
      %vm797 = vcmask 777216
      %v798 = vsel %vm797, %v782, %v784
      %v799 = vsel %vm797, %v784, %v786
      %v800 = vsel %vm797, %v786, %v788
      %v801 = vsel %vm797, %v788, %v790
      %v802 = vsel %vm797, %v790, %v792
      %v803 = vsel %vm797, %v792, %v794
      %v804 = vsel %vm797, %v794, %v796
      %v813 = vsel %vm797, %v796, 0.0
      %v814 = vsel %vm609, %v798, 0.0
      %v815 = vsel %vm610, %v799, 0.0
      %v816 = vsel %vm611, %v800, 0.0
      %v817 = vsel %vm612, %v801, 0.0
      %v818 = vsel %vm613, %v802, 0.0
      %v819 = vsel %vm614, %v803, 0.0
      %v820 = vsel %vm615, %v804, 0.0
      %v821 = vsel %vm616, %v813, 0.0
      %823 = vset.pattern.permute.xlu0 0
      %824 = vperm.xlu0 %823, %v466
      %v825 = vpop.permute.xlu0 %824
      %828 = vset.pattern.permute.xlu0 0
      %829 = vperm.xlu0 %828, %v467
      %v830 = vpop.permute.xlu0 %829
      %833 = vset.pattern.permute.xlu0 0
      %834 = vperm.xlu0 %833, %v468
      %v835 = vpop.permute.xlu0 %834
      %838 = vset.pattern.permute.xlu0 0
      %839 = vperm.xlu0 %838, %v469
      %v840 = vpop.permute.xlu0 %839
      %vm842 = vcmask 588800
      %v844 = vsel %vm842, %v462, 0
      %v847 = vsel %vm842, %v463, 0
      %v850 = vsel %vm842, %v464, 0
      %v853 = vsel %vm842, %v465, 0
      %855 = vmatprep.subr.mxu0 %v528
      %856 = vmatpush1.msra.mxu0 %v527
      %857 = vmatprep.subr.mxu0 %v552
      %858 = vmatpush1.msra.mxu0 %v567
      %859 = vmatprep.subr.mxu0 %v618
      %860 = vmatpush1.msra.mxu0 %v617
      %861 = vmatprep.subr.mxu0 %v659
      %862 = vmatpush1.msra.mxu0 %v658
      %863 = vmatprep.subr.mxu0 %v455
      %864 = vmatpush1.msra.mxu0 %v454
      %865 = vmatprep.subr.mxu0 %v700
      %866 = vmatpush1.msra.mxu0 %v699
      %867 = vmatprep.subr.mxu0 %v741
      %868 = vmatpush1.msra.mxu0 %v740
      %869 = vmatprep.subr.mxu0 %v766
      %870 = vmatpush1.msra.mxu0 %v765
      %871 = vmatprep.subr.mxu0 %v815
      %872 = vmatpush1.msra.mxu0 %v814
      %873 = vmatprep.subr.mxu0 0.0
      %874 = vmatpush1.msra.mxu0 0.0
      %875 = vmatprep.subr.mxu0 0.0
      %876 = vmatpush1.msra.mxu0 0.0
      %877 = vmatprep.subr.mxu0 0.0
      %878 = vmatpush1.msra.mxu0 0.0
      %879 = vmatprep.subr.mxu0 0.0
      %880 = vmatpush1.msra.mxu0 0.0
      %881 = vmatprep.subr.mxu0 0.0
      %882 = vmatpush1.msra.mxu0 0.0
      %883 = vmatprep.subr.mxu0 0.0
      %884 = vmatpush1.msra.mxu0 0.0
      %885 = vmatprep.subr.mxu0 0.0
      %886 = vmatpush1.msra.mxu0 0.0
      %887 = vmatprep.subr.mxu0 0.0
      %888 = vmatpush1.msra.mxu0 0.0
      %889 = vmatprep.subr.mxu0 0.0
      %890 = vmatpush1.msra.mxu0 0.0
      %891 = vmatprep.subr.mxu0 0.0
      %892 = vmatpush1.msra.mxu0 0.0
      %893 = vmatprep.subr.mxu0 0.0
      %894 = vmatpush1.msra.mxu0 0.0
      %895 = vmatprep.subr.mxu0 0.0
      %896 = vmatpush1.msra.mxu0 0.0
      %897 = vmatprep.subr.mxu0 0.0
      %898 = vmatpush1.msra.mxu0 0.0
      %899 = vmatprep.subr.mxu0 0.0
      %900 = vmatpush1.msra.mxu0 0.0
      %901 = vmatprep.subr.mxu0 0.0
      %902 = vmatpush1.msra.mxu0 0.0
      %903 = vmatprep.subr.mxu0 0.0
      %904 = vmatpush1.msra.mxu0 0.0
      %905 = vmatprep.subr.mxu0 0.0
      %906 = vmatpush1.msra.mxu0 0.0
      %907 = vmatprep.subr.mxu0 0.0
      %908 = vmatpush1.msra.mxu0 0.0
      %909 = vmatprep.subr.mxu0 0.0
      %910 = vmatpush1.msra.mxu0 0.0
      %911 = vmatprep.subr.mxu0 0.0
      %912 = vmatpush1.msra.mxu0 0.0
      %913 = vmatprep.subr.mxu0 0.0
      %914 = vmatpush1.msra.mxu0 0.0
      %915 = vmatprep.subr.mxu0 0.0
      %916 = vmatpush1.msra.mxu0 0.0
      %917 = vmatprep.subr.mxu0 0.0
      %918 = vmatpush1.msra.mxu0 0.0
      %919 = vmatprep.mubr.f32.mxu0 0.0
      %920 = vmatmul.mubr.f32.gmra.mrb[0].mxu0 %v844
      %v921 = vpop.f32.mrb[0].mxu0
      %v922 = vadd.f32 %v825, %v921
      %v923 = vpop.f32.mrb[0].mxu0
      %v924 = vadd.f32 %v825, %v923
      %925 = vmatprep.mubr.f32.mxu0 0.0
      %926 = vmatmul.mubr.f32.gmra.mrb[0].mxu0 %v847
      %v927 = vpop.f32.mrb[0].mxu0
      %v928 = vadd.f32 %v830, %v927
      %v929 = vpop.f32.mrb[0].mxu0
      %v930 = vadd.f32 %v830, %v929
      %931 = vmatprep.mubr.f32.mxu0 0.0
      %932 = vmatmul.mubr.f32.gmra.mrb[0].mxu0 %v850
      %v933 = vpop.f32.mrb[0].mxu0
      %v934 = vadd.f32 %v835, %v933
      %v935 = vpop.f32.mrb[0].mxu0
      %v936 = vadd.f32 %v835, %v935
      %937 = vmatprep.mubr.f32.mxu0 0.0
      %938 = vmatmul.mubr.f32.gmra.mrb[0].mxu0 %v853
      %v939 = vpop.f32.mrb[0].mxu0
      %v940 = vadd.f32 %v840, %v939
      %v941 = vpop.f32.mrb[0].mxu0
      %v942 = vadd.f32 %v840, %v941
      %943 = vdwg.mxu0
      %944 = vmatprep.subr.mxu0 %v530
      %945 = vmatpush1.msra.mxu0 %v529
      %946 = vmatprep.subr.mxu0 %v554
      %947 = vmatpush1.msra.mxu0 %v553
      %948 = vmatprep.subr.mxu0 %v620
      %949 = vmatpush1.msra.mxu0 %v619
      %950 = vmatprep.subr.mxu0 %v661
      %951 = vmatpush1.msra.mxu0 %v660
      %952 = vmatprep.subr.mxu0 %v457
      %953 = vmatpush1.msra.mxu0 %v456
      %954 = vmatprep.subr.mxu0 %v702
      %955 = vmatpush1.msra.mxu0 %v701
      %956 = vmatprep.subr.mxu0 %v743
      %957 = vmatpush1.msra.mxu0 %v742
      %958 = vmatprep.subr.mxu0 %v768
      %959 = vmatpush1.msra.mxu0 %v767
      %960 = vmatprep.subr.mxu0 %v817
      %961 = vmatpush1.msra.mxu0 %v816
      %962 = vmatprep.subr.mxu0 0.0
      %963 = vmatpush1.msra.mxu0 0.0
      %964 = vmatprep.subr.mxu0 0.0
      %965 = vmatpush1.msra.mxu0 0.0
      %966 = vmatprep.subr.mxu0 0.0
      %967 = vmatpush1.msra.mxu0 0.0
      %968 = vmatprep.subr.mxu0 0.0
      %969 = vmatpush1.msra.mxu0 0.0
      %970 = vmatprep.subr.mxu0 0.0
      %971 = vmatpush1.msra.mxu0 0.0
      %972 = vmatprep.subr.mxu0 0.0
      %973 = vmatpush1.msra.mxu0 0.0
      %974 = vmatprep.subr.mxu0 0.0
      %975 = vmatpush1.msra.mxu0 0.0
      %976 = vmatprep.subr.mxu0 0.0
      %977 = vmatpush1.msra.mxu0 0.0
      %978 = vmatprep.subr.mxu0 0.0
      %979 = vmatpush1.msra.mxu0 0.0
      %980 = vmatprep.subr.mxu0 0.0
      %981 = vmatpush1.msra.mxu0 0.0
      %982 = vmatprep.subr.mxu0 0.0
      %983 = vmatpush1.msra.mxu0 0.0
      %984 = vmatprep.subr.mxu0 0.0
      %985 = vmatpush1.msra.mxu0 0.0
      %986 = vmatprep.subr.mxu0 0.0
      %987 = vmatpush1.msra.mxu0 0.0
      %988 = vmatprep.subr.mxu0 0.0
      %989 = vmatpush1.msra.mxu0 0.0
      %990 = vmatprep.subr.mxu0 0.0
      %991 = vmatpush1.msra.mxu0 0.0
      %992 = vmatprep.subr.mxu0 0.0
      %993 = vmatpush1.msra.mxu0 0.0
      %994 = vmatprep.subr.mxu0 0.0
      %995 = vmatpush1.msra.mxu0 0.0
      %996 = vmatprep.subr.mxu0 0.0
      %997 = vmatpush1.msra.mxu0 0.0
      %998 = vmatprep.subr.mxu0 0.0
      %999 = vmatpush1.msra.mxu0 0.0
      %1000 = vmatprep.subr.mxu0 0.0
      %1001 = vmatpush1.msra.mxu0 0.0
      %1002 = vmatprep.subr.mxu0 0.0
      %1003 = vmatpush1.msra.mxu0 0.0
      %1004 = vmatprep.subr.mxu0 0.0
      %1005 = vmatpush1.msra.mxu0 0.0
      %1006 = vmatprep.subr.mxu0 0.0
      %1007 = vmatpush1.msra.mxu0 0.0
      %1008 = vmatprep.mubr.f32.mxu0 0.0
      %1009 = vmatmul.mubr.f32.gmra.mrb[0].mxu0 %v844
      %v1010 = vpop.f32.mrb[0].mxu0
      %v1011 = vadd.f32 %v825, %v1010
      %v1012 = vpop.f32.mrb[0].mxu0
      %v1013 = vadd.f32 %v825, %v1012
      %1014 = vmatprep.mubr.f32.mxu0 0.0
      %1015 = vmatmul.mubr.f32.gmra.mrb[0].mxu0 %v847
      %v1016 = vpop.f32.mrb[0].mxu0
      %v1017 = vadd.f32 %v830, %v1016
      %v1018 = vpop.f32.mrb[0].mxu0
      %v1019 = vadd.f32 %v830, %v1018
      %1020 = vmatprep.mubr.f32.mxu0 0.0
      %1021 = vmatmul.mubr.f32.gmra.mrb[0].mxu0 %v850
      %v1022 = vpop.f32.mrb[0].mxu0
      %v1023 = vadd.f32 %v835, %v1022
      %v1024 = vpop.f32.mrb[0].mxu0
      %v1025 = vadd.f32 %v835, %v1024
      %1026 = vmatprep.mubr.f32.mxu0 0.0
      %1027 = vmatmul.mubr.f32.gmra.mrb[0].mxu0 %v853
      %v1028 = vpop.f32.mrb[0].mxu0
      %v1029 = vadd.f32 %v840, %v1028
      %v1030 = vpop.f32.mrb[0].mxu0
      %v1031 = vadd.f32 %v840, %v1030
      %1032 = vdwg.mxu0
      %1033 = vmatprep.subr.mxu0 %v532
      %1034 = vmatpush1.msra.mxu0 %v531
      %1035 = vmatprep.subr.mxu0 %v556
      %1036 = vmatpush1.msra.mxu0 %v555
      %1037 = vmatprep.subr.mxu0 %v622
      %1038 = vmatpush1.msra.mxu0 %v621
      %1039 = vmatprep.subr.mxu0 %v663
      %1040 = vmatpush1.msra.mxu0 %v662
      %1041 = vmatprep.subr.mxu0 %v459
      %1042 = vmatpush1.msra.mxu0 %v458
      %1043 = vmatprep.subr.mxu0 %v704
      %1044 = vmatpush1.msra.mxu0 %v703
      %1045 = vmatprep.subr.mxu0 %v745
      %1046 = vmatpush1.msra.mxu0 %v744
      %1047 = vmatprep.subr.mxu0 %v770
      %1048 = vmatpush1.msra.mxu0 %v769
      %1049 = vmatprep.subr.mxu0 %v819
      %1050 = vmatpush1.msra.mxu0 %v818
      %1051 = vmatprep.subr.mxu0 0.0
      %1052 = vmatpush1.msra.mxu0 0.0
      %1053 = vmatprep.subr.mxu0 0.0
      %1054 = vmatpush1.msra.mxu0 0.0
      %1055 = vmatprep.subr.mxu0 0.0
      %1056 = vmatpush1.msra.mxu0 0.0
      %1057 = vmatprep.subr.mxu0 0.0
      %1058 = vmatpush1.msra.mxu0 0.0
      %1059 = vmatprep.subr.mxu0 0.0
      %1060 = vmatpush1.msra.mxu0 0.0
      %1061 = vmatprep.subr.mxu0 0.0
      %1062 = vmatpush1.msra.mxu0 0.0
      %1063 = vmatprep.subr.mxu0 0.0
      %1064 = vmatpush1.msra.mxu0 0.0
      %1065 = vmatprep.subr.mxu0 0.0
      %1066 = vmatpush1.msra.mxu0 0.0
      %1067 = vmatprep.subr.mxu0 0.0
      %1068 = vmatpush1.msra.mxu0 0.0
      %1069 = vmatprep.subr.mxu0 0.0
      %1070 = vmatpush1.msra.mxu0 0.0
      %1071 = vmatprep.subr.mxu0 0.0
      %1072 = vmatpush1.msra.mxu0 0.0
      %1073 = vmatprep.subr.mxu0 0.0
      %1074 = vmatpush1.msra.mxu0 0.0
      %1075 = vmatprep.subr.mxu0 0.0
      %1076 = vmatpush1.msra.mxu0 0.0
      %1077 = vmatprep.subr.mxu0 0.0
      %1078 = vmatpush1.msra.mxu0 0.0
      %1079 = vmatprep.subr.mxu0 0.0
      %1080 = vmatpush1.msra.mxu0 0.0
      %1081 = vmatprep.subr.mxu0 0.0
      %1082 = vmatpush1.msra.mxu0 0.0
      %1083 = vmatprep.subr.mxu0 0.0
      %1084 = vmatpush1.msra.mxu0 0.0
      %1085 = vmatprep.subr.mxu0 0.0
      %1086 = vmatpush1.msra.mxu0 0.0
      %1087 = vmatprep.subr.mxu0 0.0
      %1088 = vmatpush1.msra.mxu0 0.0
      %1089 = vmatprep.subr.mxu0 0.0
      %1090 = vmatpush1.msra.mxu0 0.0
      %1091 = vmatprep.subr.mxu0 0.0
      %1092 = vmatpush1.msra.mxu0 0.0
      %1093 = vmatprep.subr.mxu0 0.0
      %1094 = vmatpush1.msra.mxu0 0.0
      %1095 = vmatprep.subr.mxu0 0.0
      %1096 = vmatpush1.msra.mxu0 0.0
      %1097 = vmatprep.mubr.f32.mxu0 0.0
      %1098 = vmatmul.mubr.f32.gmra.mrb[0].mxu0 %v844
      %v1099 = vpop.f32.mrb[0].mxu0
      %v1100 = vadd.f32 %v825, %v1099
      %v1101 = vpop.f32.mrb[0].mxu0
      %v1102 = vadd.f32 %v825, %v1101
      %1103 = vmatprep.mubr.f32.mxu0 0.0
      %1104 = vmatmul.mubr.f32.gmra.mrb[0].mxu0 %v847
      %v1105 = vpop.f32.mrb[0].mxu0
      %v1106 = vadd.f32 %v830, %v1105
      %v1107 = vpop.f32.mrb[0].mxu0
      %v1108 = vadd.f32 %v830, %v1107
      %1109 = vmatprep.mubr.f32.mxu0 0.0
      %1110 = vmatmul.mubr.f32.gmra.mrb[0].mxu0 %v850
      %v1111 = vpop.f32.mrb[0].mxu0
      %v1112 = vadd.f32 %v835, %v1111
      %v1113 = vpop.f32.mrb[0].mxu0
      %v1114 = vadd.f32 %v835, %v1113
      %1115 = vmatprep.mubr.f32.mxu0 0.0
      %1116 = vmatmul.mubr.f32.gmra.mrb[0].mxu0 %v853
      %v1117 = vpop.f32.mrb[0].mxu0
      %v1118 = vadd.f32 %v840, %v1117
      %v1119 = vpop.f32.mrb[0].mxu0
      %v1120 = vadd.f32 %v840, %v1119
      %1121 = vdwg.mxu0
      %1122 = vmatprep.subr.mxu0 %v534
      %1123 = vmatpush1.msra.mxu0 %v533
      %1124 = vmatprep.subr.mxu0 %v558
      %1125 = vmatpush1.msra.mxu0 %v557
      %1126 = vmatprep.subr.mxu0 %v624
      %1127 = vmatpush1.msra.mxu0 %v623
      %1128 = vmatprep.subr.mxu0 %v665
      %1129 = vmatpush1.msra.mxu0 %v664
      %1130 = vmatprep.subr.mxu0 %v461
      %1131 = vmatpush1.msra.mxu0 %v460
      %1132 = vmatprep.subr.mxu0 %v706
      %1133 = vmatpush1.msra.mxu0 %v705
      %1134 = vmatprep.subr.mxu0 %v747
      %1135 = vmatpush1.msra.mxu0 %v746
      %1136 = vmatprep.subr.mxu0 %v780
      %1137 = vmatpush1.msra.mxu0 %v771
      %1138 = vmatprep.subr.mxu0 %v821
      %1139 = vmatpush1.msra.mxu0 %v820
      %1140 = vmatprep.subr.mxu0 0.0
      %1141 = vmatpush1.msra.mxu0 0.0
      %1142 = vmatprep.subr.mxu0 0.0
      %1143 = vmatpush1.msra.mxu0 0.0
      %1144 = vmatprep.subr.mxu0 0.0
      %1145 = vmatpush1.msra.mxu0 0.0
      %1146 = vmatprep.subr.mxu0 0.0
      %1147 = vmatpush1.msra.mxu0 0.0
      %1148 = vmatprep.subr.mxu0 0.0
      %1149 = vmatpush1.msra.mxu0 0.0
      %1150 = vmatprep.subr.mxu0 0.0
      %1151 = vmatpush1.msra.mxu0 0.0
      %1152 = vmatprep.subr.mxu0 0.0
      %1153 = vmatpush1.msra.mxu0 0.0
      %1154 = vmatprep.subr.mxu0 0.0
      %1155 = vmatpush1.msra.mxu0 0.0
      %1156 = vmatprep.subr.mxu0 0.0
      %1157 = vmatpush1.msra.mxu0 0.0
      %1158 = vmatprep.subr.mxu0 0.0
      %1159 = vmatpush1.msra.mxu0 0.0
      %1160 = vmatprep.subr.mxu0 0.0
      %1161 = vmatpush1.msra.mxu0 0.0
      %1162 = vmatprep.subr.mxu0 0.0
      %1163 = vmatpush1.msra.mxu0 0.0
      %1164 = vmatprep.subr.mxu0 0.0
      %1165 = vmatpush1.msra.mxu0 0.0
      %1166 = vmatprep.subr.mxu0 0.0
      %1167 = vmatpush1.msra.mxu0 0.0
      %1168 = vmatprep.subr.mxu0 0.0
      %1169 = vmatpush1.msra.mxu0 0.0
      %1170 = vmatprep.subr.mxu0 0.0
      %1171 = vmatpush1.msra.mxu0 0.0
      %1172 = vmatprep.subr.mxu0 0.0
      %1173 = vmatpush1.msra.mxu0 0.0
      %1174 = vmatprep.subr.mxu0 0.0
      %1175 = vmatpush1.msra.mxu0 0.0
      %1176 = vmatprep.subr.mxu0 0.0
      %1177 = vmatpush1.msra.mxu0 0.0
      %1178 = vmatprep.subr.mxu0 0.0
      %1179 = vmatpush1.msra.mxu0 0.0
      %1180 = vmatprep.subr.mxu0 0.0
      %1181 = vmatpush1.msra.mxu0 0.0
      %1182 = vmatprep.subr.mxu0 0.0
      %1183 = vmatpush1.msra.mxu0 0.0
      %1184 = vmatprep.subr.mxu0 0.0
      %1185 = vmatpush1.msra.mxu0 0.0
      %1186 = vmatprep.mubr.f32.mxu0 0.0
      %1187 = vmatmul.mubr.f32.gmra.mrb[0].mxu0 %v844
      %v1188 = vpop.f32.mrb[0].mxu0
      %v1189 = vadd.f32 %v825, %v1188
      %v1190 = vpop.f32.mrb[0].mxu0
      %v1191 = vadd.f32 %v825, %v1190
      %1192 = vmatprep.mubr.f32.mxu0 0.0
      %1193 = vmatmul.mubr.f32.gmra.mrb[0].mxu0 %v847
      %v1194 = vpop.f32.mrb[0].mxu0
      %v1195 = vadd.f32 %v830, %v1194
      %v1196 = vpop.f32.mrb[0].mxu0
      %v1197 = vadd.f32 %v830, %v1196
      %1198 = vmatprep.mubr.f32.mxu0 0.0
      %1199 = vmatmul.mubr.f32.gmra.mrb[0].mxu0 %v850
      %v1200 = vpop.f32.mrb[0].mxu0
      %v1201 = vadd.f32 %v835, %v1200
      %v1202 = vpop.f32.mrb[0].mxu0
      %v1203 = vadd.f32 %v835, %v1202
      %1204 = vmatprep.mubr.f32.mxu0 0.0
      %1205 = vmatmul.mubr.f32.gmra.mrb[0].mxu0 %v853
      %v1206 = vpop.f32.mrb[0].mxu0
      %v1207 = vadd.f32 %v840, %v1206
      %v1208 = vpop.f32.mrb[0].mxu0
      %v1209 = vadd.f32 %v840, %v1208
      %1210 = vdwg.mxu0
      %v1211 = vld [vmem:[%s3] sm:$0xff]
      %v1212 = vld [vmem:[%s3 + $0x8] sm:$0xff]
      %v1213 = vld [vmem:[%s3 + $0x10] sm:$0xff]
      %v1214 = vld [vmem:[%s3 + $0x18] sm:$0xff]
      %v1215 = vld [vmem:[%s3 + $0x20] sm:$0xff]
      %v1216 = vld [vmem:[%s3 + $0x28] sm:$0xff]
      %v1217 = vld [vmem:[%s3 + $0x30] sm:$0xff]
      %v1218 = vld [vmem:[%s3 + $0x38] sm:$0xff]
      %v1219 = vld [vmem:[%s3 + $0x40] sm:$0xff]
      %v1220 = vld [vmem:[%s3 + $0x48] sm:$0xff]
      %v1221 = vld [vmem:[%s3 + $0x50] sm:$0xff]
      %v1222 = vld [vmem:[%s3 + $0x58] sm:$0xff]
      %1255 = vrot.lane.b32.xlu0 %v922, 33
      %v1256 = vpop.permute.xlu0 %1255
      %1257 = vrot.lane.b32.xlu0 %v924, 33
      %v1258 = vpop.permute.xlu0 %1257
      %1259 = vrot.lane.b32.xlu0 %v1011, 33
      %v1260 = vpop.permute.xlu0 %1259
      %1261 = vrot.lane.b32.xlu0 %v1013, 33
      %v1262 = vpop.permute.xlu0 %1261
      %1263 = vrot.lane.b32.xlu0 %v1100, 33
      %v1264 = vpop.permute.xlu0 %1263
      %1265 = vrot.lane.b32.xlu0 %v1102, 33
      %v1266 = vpop.permute.xlu0 %1265
      %1267 = vrot.lane.b32.xlu0 %v1189, 33
      %v1268 = vpop.permute.xlu0 %1267
      %1269 = vrot.lane.b32.xlu0 %v1191, 33
      %v1270 = vpop.permute.xlu0 %1269
      %1271 = vrot.lane.b32.xlu0 %v928, 33
      %v1272 = vpop.permute.xlu0 %1271
      %1273 = vrot.lane.b32.xlu0 %v930, 33
      %v1274 = vpop.permute.xlu0 %1273
      %1275 = vrot.lane.b32.xlu0 %v1017, 33
      %v1276 = vpop.permute.xlu0 %1275
      %1277 = vrot.lane.b32.xlu0 %v1019, 33
      %v1278 = vpop.permute.xlu0 %1277
      %1279 = vrot.lane.b32.xlu0 %v1106, 33
      %v1280 = vpop.permute.xlu0 %1279
      %1281 = vrot.lane.b32.xlu0 %v1108, 33
      %v1282 = vpop.permute.xlu0 %1281
      %1283 = vrot.lane.b32.xlu0 %v1195, 33
      %v1284 = vpop.permute.xlu0 %1283
      %1285 = vrot.lane.b32.xlu0 %v1197, 33
      %v1286 = vpop.permute.xlu0 %1285
      %1287 = vrot.lane.b32.xlu0 %v934, 33
      %v1288 = vpop.permute.xlu0 %1287
      %1289 = vrot.lane.b32.xlu0 %v936, 33
      %v1290 = vpop.permute.xlu0 %1289
      %1291 = vrot.lane.b32.xlu0 %v1023, 33
      %v1292 = vpop.permute.xlu0 %1291
      %1293 = vrot.lane.b32.xlu0 %v1025, 33
      %v1294 = vpop.permute.xlu0 %1293
      %1295 = vrot.lane.b32.xlu0 %v1112, 33
      %v1296 = vpop.permute.xlu0 %1295
      %1297 = vrot.lane.b32.xlu0 %v1114, 33
      %v1298 = vpop.permute.xlu0 %1297
      %1299 = vrot.lane.b32.xlu0 %v1201, 33
      %v1300 = vpop.permute.xlu0 %1299
      %1301 = vrot.lane.b32.xlu0 %v1203, 33
      %v1302 = vpop.permute.xlu0 %1301
      %1303 = vrot.lane.b32.xlu0 %v940, 33
      %v1304 = vpop.permute.xlu0 %1303
      %1305 = vrot.lane.b32.xlu0 %v942, 33
      %v1306 = vpop.permute.xlu0 %1305
      %1307 = vrot.lane.b32.xlu0 %v1029, 33
      %v1308 = vpop.permute.xlu0 %1307
      %1309 = vrot.lane.b32.xlu0 %v1031, 33
      %v1310 = vpop.permute.xlu0 %1309
      %1311 = vrot.lane.b32.xlu0 %v1118, 33
      %v1312 = vpop.permute.xlu0 %1311
      %1313 = vrot.lane.b32.xlu0 %v1120, 33
      %v1314 = vpop.permute.xlu0 %1313
      %1315 = vrot.lane.b32.xlu0 %v1207, 33
      %v1316 = vpop.permute.xlu0 %1315
      %1317 = vrot.lane.b32.xlu0 %v1209, 33
      %v1318 = vpop.permute.xlu0 %1317
      %v1319 = vsel %vm494, %v1256, %v1258
      %v1320 = vsel %vm494, %v1258, %v1260
      %v1321 = vsel %vm494, %v1260, %v1262
      %v1322 = vsel %vm494, %v1262, %v1264
      %v1323 = vsel %vm494, %v1264, %v1266
      %v1324 = vsel %vm494, %v1266, %v1268
      %v1325 = vsel %vm494, %v1268, %v1270
      %v1326 = vsel %vm494, %v1272, %v1274
      %v1327 = vsel %vm494, %v1274, %v1276
      %v1328 = vsel %vm494, %v1276, %v1278
      %v1329 = vsel %vm494, %v1278, %v1280
      %v1330 = vsel %vm494, %v1280, %v1282
      %v1331 = vsel %vm494, %v1282, %v1284
      %v1332 = vsel %vm494, %v1284, %v1286
      %v1333 = vsel %vm494, %v1288, %v1290
      %v1334 = vsel %vm494, %v1290, %v1292
      %v1335 = vsel %vm494, %v1292, %v1294
      %v1336 = vsel %vm494, %v1294, %v1296
      %v1337 = vsel %vm494, %v1296, %v1298
      %v1338 = vsel %vm494, %v1298, %v1300
      %v1339 = vsel %vm494, %v1300, %v1302
      %v1340 = vsel %vm494, %v1304, %v1306
      %v1341 = vsel %vm494, %v1306, %v1308
      %v1342 = vsel %vm494, %v1308, %v1310
      %v1343 = vsel %vm494, %v1310, %v1312
      %v1344 = vsel %vm494, %v1312, %v1314
      %v1345 = vsel %vm494, %v1314, %v1316
      %v1346 = vsel %vm494, %v1316, %v1318
      %v1379 = vsel %vm494, 0.0, %v1256
      %v1380 = vsel %vm494, 0.0, %v1272
      %v1381 = vsel %vm494, 0.0, %v1288
      %v1382 = vsel %vm494, 0.0, %v1304
      %v1383 = vsel %vm519, %v1379, 0.0
      %v1384 = vsel %vm520, %v1319, 0.0
      %v1385 = vsel %vm521, %v1320, 0.0
      %v1386 = vsel %vm522, %v1321, 0.0
      %v1387 = vsel %vm523, %v1322, 0.0
      %v1388 = vsel %vm524, %v1323, 0.0
      %v1389 = vsel %vm525, %v1324, 0.0
      %v1390 = vsel %vm526, %v1325, 0.0
      %v1391 = vsel %vm519, %v1380, 0.0
      %v1392 = vsel %vm520, %v1326, 0.0
      %v1393 = vsel %vm521, %v1327, 0.0
      %v1394 = vsel %vm522, %v1328, 0.0
      %v1395 = vsel %vm523, %v1329, 0.0
      %v1396 = vsel %vm524, %v1330, 0.0
      %v1397 = vsel %vm525, %v1331, 0.0
      %v1398 = vsel %vm526, %v1332, 0.0
      %v1399 = vsel %vm519, %v1381, 0.0
      %v1400 = vsel %vm520, %v1333, 0.0
      %v1401 = vsel %vm521, %v1334, 0.0
      %v1402 = vsel %vm522, %v1335, 0.0
      %v1403 = vsel %vm523, %v1336, 0.0
      %v1404 = vsel %vm524, %v1337, 0.0
      %v1405 = vsel %vm525, %v1338, 0.0
      %v1406 = vsel %vm526, %v1339, 0.0
      %v1407 = vsel %vm519, %v1382, 0.0
      %v1408 = vsel %vm520, %v1340, 0.0
      %v1409 = vsel %vm521, %v1341, 0.0
      %v1410 = vsel %vm522, %v1342, 0.0
      %v1411 = vsel %vm523, %v1343, 0.0
      %v1412 = vsel %vm524, %v1344, 0.0
      %v1413 = vsel %vm525, %v1345, 0.0
      %v1414 = vsel %vm526, %v1346, 0.0
      %1415 = vrot.lane.b32.xlu0 %v922, 32
      %v1416 = vpop.permute.xlu0 %1415
      %1417 = vrot.lane.b32.xlu0 %v924, 32
      %v1418 = vpop.permute.xlu0 %1417
      %1419 = vrot.lane.b32.xlu0 %v1011, 32
      %v1420 = vpop.permute.xlu0 %1419
      %1421 = vrot.lane.b32.xlu0 %v1013, 32
      %v1422 = vpop.permute.xlu0 %1421
      %1423 = vrot.lane.b32.xlu0 %v1100, 32
      %v1424 = vpop.permute.xlu0 %1423
      %1425 = vrot.lane.b32.xlu0 %v1102, 32
      %v1426 = vpop.permute.xlu0 %1425
      %1427 = vrot.lane.b32.xlu0 %v1189, 32
      %v1428 = vpop.permute.xlu0 %1427
      %1429 = vrot.lane.b32.xlu0 %v1191, 32
      %v1430 = vpop.permute.xlu0 %1429
      %1431 = vrot.lane.b32.xlu0 %v928, 32
      %v1432 = vpop.permute.xlu0 %1431
      %1433 = vrot.lane.b32.xlu0 %v930, 32
      %v1434 = vpop.permute.xlu0 %1433
      %1435 = vrot.lane.b32.xlu0 %v1017, 32
      %v1436 = vpop.permute.xlu0 %1435
      %1437 = vrot.lane.b32.xlu0 %v1019, 32
      %v1438 = vpop.permute.xlu0 %1437
      %1439 = vrot.lane.b32.xlu0 %v1106, 32
      %v1440 = vpop.permute.xlu0 %1439
      %1441 = vrot.lane.b32.xlu0 %v1108, 32
      %v1442 = vpop.permute.xlu0 %1441
      %1443 = vrot.lane.b32.xlu0 %v1195, 32
      %v1444 = vpop.permute.xlu0 %1443
      %1445 = vrot.lane.b32.xlu0 %v1197, 32
      %v1446 = vpop.permute.xlu0 %1445
      %1447 = vrot.lane.b32.xlu0 %v934, 32
      %v1448 = vpop.permute.xlu0 %1447
      %1449 = vrot.lane.b32.xlu0 %v936, 32
      %v1450 = vpop.permute.xlu0 %1449
      %1451 = vrot.lane.b32.xlu0 %v1023, 32
      %v1452 = vpop.permute.xlu0 %1451
      %1453 = vrot.lane.b32.xlu0 %v1025, 32
      %v1454 = vpop.permute.xlu0 %1453
      %1455 = vrot.lane.b32.xlu0 %v1112, 32
      %v1456 = vpop.permute.xlu0 %1455
      %1457 = vrot.lane.b32.xlu0 %v1114, 32
      %v1458 = vpop.permute.xlu0 %1457
      %1459 = vrot.lane.b32.xlu0 %v1201, 32
      %v1460 = vpop.permute.xlu0 %1459
      %1461 = vrot.lane.b32.xlu0 %v1203, 32
      %v1462 = vpop.permute.xlu0 %1461
      %1463 = vrot.lane.b32.xlu0 %v940, 32
      %v1464 = vpop.permute.xlu0 %1463
      %1465 = vrot.lane.b32.xlu0 %v942, 32
      %v1466 = vpop.permute.xlu0 %1465
      %1467 = vrot.lane.b32.xlu0 %v1029, 32
      %v1468 = vpop.permute.xlu0 %1467
      %1469 = vrot.lane.b32.xlu0 %v1031, 32
      %v1470 = vpop.permute.xlu0 %1469
      %1471 = vrot.lane.b32.xlu0 %v1118, 32
      %v1472 = vpop.permute.xlu0 %1471
      %1473 = vrot.lane.b32.xlu0 %v1120, 32
      %v1474 = vpop.permute.xlu0 %1473
      %1475 = vrot.lane.b32.xlu0 %v1207, 32
      %v1476 = vpop.permute.xlu0 %1475
      %1477 = vrot.lane.b32.xlu0 %v1209, 32
      %v1478 = vpop.permute.xlu0 %1477
      %v1479 = vsel %vm551, %v1416, %v1418
      %v1480 = vsel %vm551, %v1418, %v1420
      %v1481 = vsel %vm551, %v1420, %v1422
      %v1482 = vsel %vm551, %v1422, %v1424
      %v1483 = vsel %vm551, %v1424, %v1426
      %v1484 = vsel %vm551, %v1426, %v1428
      %v1485 = vsel %vm551, %v1428, %v1430
      %v1486 = vsel %vm551, %v1432, %v1434
      %v1487 = vsel %vm551, %v1434, %v1436
      %v1488 = vsel %vm551, %v1436, %v1438
      %v1489 = vsel %vm551, %v1438, %v1440
      %v1490 = vsel %vm551, %v1440, %v1442
      %v1491 = vsel %vm551, %v1442, %v1444
      %v1492 = vsel %vm551, %v1444, %v1446
      %v1493 = vsel %vm551, %v1448, %v1450
      %v1494 = vsel %vm551, %v1450, %v1452
      %v1495 = vsel %vm551, %v1452, %v1454
      %v1496 = vsel %vm551, %v1454, %v1456
      %v1497 = vsel %vm551, %v1456, %v1458
      %v1498 = vsel %vm551, %v1458, %v1460
      %v1499 = vsel %vm551, %v1460, %v1462
      %v1500 = vsel %vm551, %v1464, %v1466
      %v1501 = vsel %vm551, %v1466, %v1468
      %v1502 = vsel %vm551, %v1468, %v1470
      %v1503 = vsel %vm551, %v1470, %v1472
      %v1504 = vsel %vm551, %v1472, %v1474
      %v1505 = vsel %vm551, %v1474, %v1476
      %v1506 = vsel %vm551, %v1476, %v1478
      %v1539 = vsel %vm551, 0.0, %v1416
      %v1540 = vsel %vm551, 0.0, %v1432
      %v1541 = vsel %vm551, 0.0, %v1448
      %v1542 = vsel %vm551, 0.0, %v1464
      %1543 = vrot.lane.b32.xlu0 %v922, 31
      %v1544 = vpop.permute.xlu0 %1543
      %1545 = vrot.lane.b32.xlu0 %v924, 31
      %v1546 = vpop.permute.xlu0 %1545
      %1547 = vrot.lane.b32.xlu0 %v1011, 31
      %v1548 = vpop.permute.xlu0 %1547
      %1549 = vrot.lane.b32.xlu0 %v1013, 31
      %v1550 = vpop.permute.xlu0 %1549
      %1551 = vrot.lane.b32.xlu0 %v1100, 31
      %v1552 = vpop.permute.xlu0 %1551
      %1553 = vrot.lane.b32.xlu0 %v1102, 31
      %v1554 = vpop.permute.xlu0 %1553
      %1555 = vrot.lane.b32.xlu0 %v1189, 31
      %v1556 = vpop.permute.xlu0 %1555
      %1557 = vrot.lane.b32.xlu0 %v1191, 31
      %v1558 = vpop.permute.xlu0 %1557
      %1559 = vrot.lane.b32.xlu0 %v928, 31
      %v1560 = vpop.permute.xlu0 %1559
      %1561 = vrot.lane.b32.xlu0 %v930, 31
      %v1562 = vpop.permute.xlu0 %1561
      %1563 = vrot.lane.b32.xlu0 %v1017, 31
      %v1564 = vpop.permute.xlu0 %1563
      %1565 = vrot.lane.b32.xlu0 %v1019, 31
      %v1566 = vpop.permute.xlu0 %1565
      %1567 = vrot.lane.b32.xlu0 %v1106, 31
      %v1568 = vpop.permute.xlu0 %1567
      %1569 = vrot.lane.b32.xlu0 %v1108, 31
      %v1570 = vpop.permute.xlu0 %1569
      %1571 = vrot.lane.b32.xlu0 %v1195, 31
      %v1572 = vpop.permute.xlu0 %1571
      %1573 = vrot.lane.b32.xlu0 %v1197, 31
      %v1574 = vpop.permute.xlu0 %1573
      %1575 = vrot.lane.b32.xlu0 %v934, 31
      %v1576 = vpop.permute.xlu0 %1575
      %1577 = vrot.lane.b32.xlu0 %v936, 31
      %v1578 = vpop.permute.xlu0 %1577
      %1579 = vrot.lane.b32.xlu0 %v1023, 31
      %v1580 = vpop.permute.xlu0 %1579
      %1581 = vrot.lane.b32.xlu0 %v1025, 31
      %v1582 = vpop.permute.xlu0 %1581
      %1583 = vrot.lane.b32.xlu0 %v1112, 31
      %v1584 = vpop.permute.xlu0 %1583
      %1585 = vrot.lane.b32.xlu0 %v1114, 31
      %v1586 = vpop.permute.xlu0 %1585
      %1587 = vrot.lane.b32.xlu0 %v1201, 31
      %v1588 = vpop.permute.xlu0 %1587
      %1589 = vrot.lane.b32.xlu0 %v1203, 31
      %v1590 = vpop.permute.xlu0 %1589
      %1591 = vrot.lane.b32.xlu0 %v940, 31
      %v1592 = vpop.permute.xlu0 %1591
      %1593 = vrot.lane.b32.xlu0 %v942, 31
      %v1594 = vpop.permute.xlu0 %1593
      %1595 = vrot.lane.b32.xlu0 %v1029, 31
      %v1596 = vpop.permute.xlu0 %1595
      %1597 = vrot.lane.b32.xlu0 %v1031, 31
      %v1598 = vpop.permute.xlu0 %1597
      %1599 = vrot.lane.b32.xlu0 %v1118, 31
      %v1600 = vpop.permute.xlu0 %1599
      %1601 = vrot.lane.b32.xlu0 %v1120, 31
      %v1602 = vpop.permute.xlu0 %1601
      %1603 = vrot.lane.b32.xlu0 %v1207, 31
      %v1604 = vpop.permute.xlu0 %1603
      %1605 = vrot.lane.b32.xlu0 %v1209, 31
      %v1606 = vpop.permute.xlu0 %1605
      %v1607 = vsel %vm584, %v1544, %v1546
      %v1608 = vsel %vm584, %v1546, %v1548
      %v1609 = vsel %vm584, %v1548, %v1550
      %v1610 = vsel %vm584, %v1550, %v1552
      %v1611 = vsel %vm584, %v1552, %v1554
      %v1612 = vsel %vm584, %v1554, %v1556
      %v1613 = vsel %vm584, %v1556, %v1558
      %v1614 = vsel %vm584, %v1560, %v1562
      %v1615 = vsel %vm584, %v1562, %v1564
      %v1616 = vsel %vm584, %v1564, %v1566
      %v1617 = vsel %vm584, %v1566, %v1568
      %v1618 = vsel %vm584, %v1568, %v1570
      %v1619 = vsel %vm584, %v1570, %v1572
      %v1620 = vsel %vm584, %v1572, %v1574
      %v1621 = vsel %vm584, %v1576, %v1578
      %v1622 = vsel %vm584, %v1578, %v1580
      %v1623 = vsel %vm584, %v1580, %v1582
      %v1624 = vsel %vm584, %v1582, %v1584
      %v1625 = vsel %vm584, %v1584, %v1586
      %v1626 = vsel %vm584, %v1586, %v1588
      %v1627 = vsel %vm584, %v1588, %v1590
      %v1628 = vsel %vm584, %v1592, %v1594
      %v1629 = vsel %vm584, %v1594, %v1596
      %v1630 = vsel %vm584, %v1596, %v1598
      %v1631 = vsel %vm584, %v1598, %v1600
      %v1632 = vsel %vm584, %v1600, %v1602
      %v1633 = vsel %vm584, %v1602, %v1604
      %v1634 = vsel %vm584, %v1604, %v1606
      %v1667 = vsel %vm584, 0.0, %v1544
      %v1668 = vsel %vm584, 0.0, %v1560
      %v1669 = vsel %vm584, 0.0, %v1576
      %v1670 = vsel %vm584, 0.0, %v1592
      %v1671 = vsel %vm609, %v1667, 0.0
      %v1672 = vsel %vm610, %v1607, 0.0
      %v1673 = vsel %vm611, %v1608, 0.0
      %v1674 = vsel %vm612, %v1609, 0.0
      %v1675 = vsel %vm613, %v1610, 0.0
      %v1676 = vsel %vm614, %v1611, 0.0
      %v1677 = vsel %vm615, %v1612, 0.0
      %v1678 = vsel %vm616, %v1613, 0.0
      %v1679 = vsel %vm609, %v1668, 0.0
      %v1680 = vsel %vm610, %v1614, 0.0
      %v1681 = vsel %vm611, %v1615, 0.0
      %v1682 = vsel %vm612, %v1616, 0.0
      %v1683 = vsel %vm613, %v1617, 0.0
      %v1684 = vsel %vm614, %v1618, 0.0
      %v1685 = vsel %vm615, %v1619, 0.0
      %v1686 = vsel %vm616, %v1620, 0.0
      %v1687 = vsel %vm609, %v1669, 0.0
      %v1688 = vsel %vm610, %v1621, 0.0
      %v1689 = vsel %vm611, %v1622, 0.0
      %v1690 = vsel %vm612, %v1623, 0.0
      %v1691 = vsel %vm613, %v1624, 0.0
      %v1692 = vsel %vm614, %v1625, 0.0
      %v1693 = vsel %vm615, %v1626, 0.0
      %v1694 = vsel %vm616, %v1627, 0.0
      %v1695 = vsel %vm609, %v1670, 0.0
      %v1696 = vsel %vm610, %v1628, 0.0
      %v1697 = vsel %vm611, %v1629, 0.0
      %v1698 = vsel %vm612, %v1630, 0.0
      %v1699 = vsel %vm613, %v1631, 0.0
      %v1700 = vsel %vm614, %v1632, 0.0
      %v1701 = vsel %vm615, %v1633, 0.0
      %v1702 = vsel %vm616, %v1634, 0.0
      %1703 = vrot.lane.b32.xlu0 %v922, 1
      %v1704 = vpop.permute.xlu0 %1703
      %1705 = vrot.lane.b32.xlu0 %v924, 1
      %v1706 = vpop.permute.xlu0 %1705
      %1707 = vrot.lane.b32.xlu0 %v1011, 1
      %v1708 = vpop.permute.xlu0 %1707
      %1709 = vrot.lane.b32.xlu0 %v1013, 1
      %v1710 = vpop.permute.xlu0 %1709
      %1711 = vrot.lane.b32.xlu0 %v1100, 1
      %v1712 = vpop.permute.xlu0 %1711
      %1713 = vrot.lane.b32.xlu0 %v1102, 1
      %v1714 = vpop.permute.xlu0 %1713
      %1715 = vrot.lane.b32.xlu0 %v1189, 1
      %v1716 = vpop.permute.xlu0 %1715
      %1717 = vrot.lane.b32.xlu0 %v1191, 1
      %v1718 = vpop.permute.xlu0 %1717
      %1719 = vrot.lane.b32.xlu0 %v928, 1
      %v1720 = vpop.permute.xlu0 %1719
      %1721 = vrot.lane.b32.xlu0 %v930, 1
      %v1722 = vpop.permute.xlu0 %1721
      %1723 = vrot.lane.b32.xlu0 %v1017, 1
      %v1724 = vpop.permute.xlu0 %1723
      %1725 = vrot.lane.b32.xlu0 %v1019, 1
      %v1726 = vpop.permute.xlu0 %1725
      %1727 = vrot.lane.b32.xlu0 %v1106, 1
      %v1728 = vpop.permute.xlu0 %1727
      %1729 = vrot.lane.b32.xlu0 %v1108, 1
      %v1730 = vpop.permute.xlu0 %1729
      %1731 = vrot.lane.b32.xlu0 %v1195, 1
      %v1732 = vpop.permute.xlu0 %1731
      %1733 = vrot.lane.b32.xlu0 %v1197, 1
      %v1734 = vpop.permute.xlu0 %1733
      %1735 = vrot.lane.b32.xlu0 %v934, 1
      %v1736 = vpop.permute.xlu0 %1735
      %1737 = vrot.lane.b32.xlu0 %v936, 1
      %v1738 = vpop.permute.xlu0 %1737
      %1739 = vrot.lane.b32.xlu0 %v1023, 1
      %v1740 = vpop.permute.xlu0 %1739
      %1741 = vrot.lane.b32.xlu0 %v1025, 1
      %v1742 = vpop.permute.xlu0 %1741
      %1743 = vrot.lane.b32.xlu0 %v1112, 1
      %v1744 = vpop.permute.xlu0 %1743
      %1745 = vrot.lane.b32.xlu0 %v1114, 1
      %v1746 = vpop.permute.xlu0 %1745
      %1747 = vrot.lane.b32.xlu0 %v1201, 1
      %v1748 = vpop.permute.xlu0 %1747
      %1749 = vrot.lane.b32.xlu0 %v1203, 1
      %v1750 = vpop.permute.xlu0 %1749
      %1751 = vrot.lane.b32.xlu0 %v940, 1
      %v1752 = vpop.permute.xlu0 %1751
      %1753 = vrot.lane.b32.xlu0 %v942, 1
      %v1754 = vpop.permute.xlu0 %1753
      %1755 = vrot.lane.b32.xlu0 %v1029, 1
      %v1756 = vpop.permute.xlu0 %1755
      %1757 = vrot.lane.b32.xlu0 %v1031, 1
      %v1758 = vpop.permute.xlu0 %1757
      %1759 = vrot.lane.b32.xlu0 %v1118, 1
      %v1760 = vpop.permute.xlu0 %1759
      %1761 = vrot.lane.b32.xlu0 %v1120, 1
      %v1762 = vpop.permute.xlu0 %1761
      %1763 = vrot.lane.b32.xlu0 %v1207, 1
      %v1764 = vpop.permute.xlu0 %1763
      %1765 = vrot.lane.b32.xlu0 %v1209, 1
      %v1766 = vpop.permute.xlu0 %1765
      %v1767 = vsel %vm641, %v1704, %v1706
      %v1768 = vsel %vm641, %v1706, %v1708
      %v1769 = vsel %vm641, %v1708, %v1710
      %v1770 = vsel %vm641, %v1710, %v1712
      %v1771 = vsel %vm641, %v1712, %v1714
      %v1772 = vsel %vm641, %v1714, %v1716
      %v1773 = vsel %vm641, %v1716, %v1718
      %v1774 = vsel %vm641, %v1720, %v1722
      %v1775 = vsel %vm641, %v1722, %v1724
      %v1776 = vsel %vm641, %v1724, %v1726
      %v1777 = vsel %vm641, %v1726, %v1728
      %v1778 = vsel %vm641, %v1728, %v1730
      %v1779 = vsel %vm641, %v1730, %v1732
      %v1780 = vsel %vm641, %v1732, %v1734
      %v1781 = vsel %vm641, %v1736, %v1738
      %v1782 = vsel %vm641, %v1738, %v1740
      %v1783 = vsel %vm641, %v1740, %v1742
      %v1784 = vsel %vm641, %v1742, %v1744
      %v1785 = vsel %vm641, %v1744, %v1746
      %v1786 = vsel %vm641, %v1746, %v1748
      %v1787 = vsel %vm641, %v1748, %v1750
      %v1788 = vsel %vm641, %v1752, %v1754
      %v1789 = vsel %vm641, %v1754, %v1756
      %v1790 = vsel %vm641, %v1756, %v1758
      %v1791 = vsel %vm641, %v1758, %v1760
      %v1792 = vsel %vm641, %v1760, %v1762
      %v1793 = vsel %vm641, %v1762, %v1764
      %v1794 = vsel %vm641, %v1764, %v1766
      %v1827 = vsel %vm641, 0.0, %v1704
      %v1828 = vsel %vm641, 0.0, %v1720
      %v1829 = vsel %vm641, 0.0, %v1736
      %v1830 = vsel %vm641, 0.0, %v1752
      %v1831 = vsel %vm519, %v1827, 0.0
      %v1832 = vsel %vm520, %v1767, 0.0
      %v1833 = vsel %vm521, %v1768, 0.0
      %v1834 = vsel %vm522, %v1769, 0.0
      %v1835 = vsel %vm523, %v1770, 0.0
      %v1836 = vsel %vm524, %v1771, 0.0
      %v1837 = vsel %vm525, %v1772, 0.0
      %v1838 = vsel %vm526, %v1773, 0.0
      %v1839 = vsel %vm519, %v1828, 0.0
      %v1840 = vsel %vm520, %v1774, 0.0
      %v1841 = vsel %vm521, %v1775, 0.0
      %v1842 = vsel %vm522, %v1776, 0.0
      %v1843 = vsel %vm523, %v1777, 0.0
      %v1844 = vsel %vm524, %v1778, 0.0
      %v1845 = vsel %vm525, %v1779, 0.0
      %v1846 = vsel %vm526, %v1780, 0.0
      %v1847 = vsel %vm519, %v1829, 0.0
      %v1848 = vsel %vm520, %v1781, 0.0
      %v1849 = vsel %vm521, %v1782, 0.0
      %v1850 = vsel %vm522, %v1783, 0.0
      %v1851 = vsel %vm523, %v1784, 0.0
      %v1852 = vsel %vm524, %v1785, 0.0
      %v1853 = vsel %vm525, %v1786, 0.0
      %v1854 = vsel %vm526, %v1787, 0.0
      %v1855 = vsel %vm519, %v1830, 0.0
      %v1856 = vsel %vm520, %v1788, 0.0
      %v1857 = vsel %vm521, %v1789, 0.0
      %v1858 = vsel %vm522, %v1790, 0.0
      %v1859 = vsel %vm523, %v1791, 0.0
      %v1860 = vsel %vm524, %v1792, 0.0
      %v1861 = vsel %vm525, %v1793, 0.0
      %v1862 = vsel %vm526, %v1794, 0.0
      %1863 = vrot.lane.b32.xlu0 %v922, 127
      %v1864 = vpop.permute.xlu0 %1863
      %1865 = vrot.lane.b32.xlu0 %v924, 127
      %v1866 = vpop.permute.xlu0 %1865
      %1867 = vrot.lane.b32.xlu0 %v1011, 127
      %v1868 = vpop.permute.xlu0 %1867
      %1869 = vrot.lane.b32.xlu0 %v1013, 127
      %v1870 = vpop.permute.xlu0 %1869
      %1871 = vrot.lane.b32.xlu0 %v1100, 127
      %v1872 = vpop.permute.xlu0 %1871
      %1873 = vrot.lane.b32.xlu0 %v1102, 127
      %v1874 = vpop.permute.xlu0 %1873
      %1875 = vrot.lane.b32.xlu0 %v1189, 127
      %v1876 = vpop.permute.xlu0 %1875
      %1877 = vrot.lane.b32.xlu0 %v1191, 127
      %v1878 = vpop.permute.xlu0 %1877
      %1879 = vrot.lane.b32.xlu0 %v928, 127
      %v1880 = vpop.permute.xlu0 %1879
      %1881 = vrot.lane.b32.xlu0 %v930, 127
      %v1882 = vpop.permute.xlu0 %1881
      %1883 = vrot.lane.b32.xlu0 %v1017, 127
      %v1884 = vpop.permute.xlu0 %1883
      %1885 = vrot.lane.b32.xlu0 %v1019, 127
      %v1886 = vpop.permute.xlu0 %1885
      %1887 = vrot.lane.b32.xlu0 %v1106, 127
      %v1888 = vpop.permute.xlu0 %1887
      %1889 = vrot.lane.b32.xlu0 %v1108, 127
      %v1890 = vpop.permute.xlu0 %1889
      %1891 = vrot.lane.b32.xlu0 %v1195, 127
      %v1892 = vpop.permute.xlu0 %1891
      %1893 = vrot.lane.b32.xlu0 %v1197, 127
      %v1894 = vpop.permute.xlu0 %1893
      %1895 = vrot.lane.b32.xlu0 %v934, 127
      %v1896 = vpop.permute.xlu0 %1895
      %1897 = vrot.lane.b32.xlu0 %v936, 127
      %v1898 = vpop.permute.xlu0 %1897
      %1899 = vrot.lane.b32.xlu0 %v1023, 127
      %v1900 = vpop.permute.xlu0 %1899
      %1901 = vrot.lane.b32.xlu0 %v1025, 127
      %v1902 = vpop.permute.xlu0 %1901
      %1903 = vrot.lane.b32.xlu0 %v1112, 127
      %v1904 = vpop.permute.xlu0 %1903
      %1905 = vrot.lane.b32.xlu0 %v1114, 127
      %v1906 = vpop.permute.xlu0 %1905
      %1907 = vrot.lane.b32.xlu0 %v1201, 127
      %v1908 = vpop.permute.xlu0 %1907
      %1909 = vrot.lane.b32.xlu0 %v1203, 127
      %v1910 = vpop.permute.xlu0 %1909
      %1911 = vrot.lane.b32.xlu0 %v940, 127
      %v1912 = vpop.permute.xlu0 %1911
      %1913 = vrot.lane.b32.xlu0 %v942, 127
      %v1914 = vpop.permute.xlu0 %1913
      %1915 = vrot.lane.b32.xlu0 %v1029, 127
      %v1916 = vpop.permute.xlu0 %1915
      %1917 = vrot.lane.b32.xlu0 %v1031, 127
      %v1918 = vpop.permute.xlu0 %1917
      %1919 = vrot.lane.b32.xlu0 %v1118, 127
      %v1920 = vpop.permute.xlu0 %1919
      %1921 = vrot.lane.b32.xlu0 %v1120, 127
      %v1922 = vpop.permute.xlu0 %1921
      %1923 = vrot.lane.b32.xlu0 %v1207, 127
      %v1924 = vpop.permute.xlu0 %1923
      %1925 = vrot.lane.b32.xlu0 %v1209, 127
      %v1926 = vpop.permute.xlu0 %1925
      %v1927 = vsel %vm682, %v1864, %v1866
      %v1928 = vsel %vm682, %v1866, %v1868
      %v1929 = vsel %vm682, %v1868, %v1870
      %v1930 = vsel %vm682, %v1870, %v1872
      %v1931 = vsel %vm682, %v1872, %v1874
      %v1932 = vsel %vm682, %v1874, %v1876
      %v1933 = vsel %vm682, %v1876, %v1878
      %v1934 = vsel %vm682, %v1880, %v1882
      %v1935 = vsel %vm682, %v1882, %v1884
      %v1936 = vsel %vm682, %v1884, %v1886
      %v1937 = vsel %vm682, %v1886, %v1888
      %v1938 = vsel %vm682, %v1888, %v1890
      %v1939 = vsel %vm682, %v1890, %v1892
      %v1940 = vsel %vm682, %v1892, %v1894
      %v1941 = vsel %vm682, %v1896, %v1898
      %v1942 = vsel %vm682, %v1898, %v1900
      %v1943 = vsel %vm682, %v1900, %v1902
      %v1944 = vsel %vm682, %v1902, %v1904
      %v1945 = vsel %vm682, %v1904, %v1906
      %v1946 = vsel %vm682, %v1906, %v1908
      %v1947 = vsel %vm682, %v1908, %v1910
      %v1948 = vsel %vm682, %v1912, %v1914
      %v1949 = vsel %vm682, %v1914, %v1916
      %v1950 = vsel %vm682, %v1916, %v1918
      %v1951 = vsel %vm682, %v1918, %v1920
      %v1952 = vsel %vm682, %v1920, %v1922
      %v1953 = vsel %vm682, %v1922, %v1924
      %v1954 = vsel %vm682, %v1924, %v1926
      %v1987 = vsel %vm682, %v1878, 0.0
      %v1988 = vsel %vm682, %v1894, 0.0
      %v1989 = vsel %vm682, %v1910, 0.0
      %v1990 = vsel %vm682, %v1926, 0.0
      %v1991 = vsel %vm609, %v1927, 0.0
      %v1992 = vsel %vm610, %v1928, 0.0
      %v1993 = vsel %vm611, %v1929, 0.0
      %v1994 = vsel %vm612, %v1930, 0.0
      %v1995 = vsel %vm613, %v1931, 0.0
      %v1996 = vsel %vm614, %v1932, 0.0
      %v1997 = vsel %vm615, %v1933, 0.0
      %v1998 = vsel %vm616, %v1987, 0.0
      %v1999 = vsel %vm609, %v1934, 0.0
      %v2000 = vsel %vm610, %v1935, 0.0
      %v2001 = vsel %vm611, %v1936, 0.0
      %v2002 = vsel %vm612, %v1937, 0.0
      %v2003 = vsel %vm613, %v1938, 0.0
      %v2004 = vsel %vm614, %v1939, 0.0
      %v2005 = vsel %vm615, %v1940, 0.0
      %v2006 = vsel %vm616, %v1988, 0.0
      %v2007 = vsel %vm609, %v1941, 0.0
      %v2008 = vsel %vm610, %v1942, 0.0
      %v2009 = vsel %vm611, %v1943, 0.0
      %v2010 = vsel %vm612, %v1944, 0.0
      %v2011 = vsel %vm613, %v1945, 0.0
      %v2012 = vsel %vm614, %v1946, 0.0
      %v2013 = vsel %vm615, %v1947, 0.0
      %v2014 = vsel %vm616, %v1989, 0.0
      %v2015 = vsel %vm609, %v1948, 0.0
      %v2016 = vsel %vm610, %v1949, 0.0
      %v2017 = vsel %vm611, %v1950, 0.0
      %v2018 = vsel %vm612, %v1951, 0.0
      %v2019 = vsel %vm613, %v1952, 0.0
      %v2020 = vsel %vm614, %v1953, 0.0
      %v2021 = vsel %vm615, %v1954, 0.0
      %v2022 = vsel %vm616, %v1990, 0.0
      %2023 = vrot.lane.b32.xlu0 %v922, 97
      %v2024 = vpop.permute.xlu0 %2023
      %2025 = vrot.lane.b32.xlu0 %v924, 97
      %v2026 = vpop.permute.xlu0 %2025
      %2027 = vrot.lane.b32.xlu0 %v1011, 97
      %v2028 = vpop.permute.xlu0 %2027
      %2029 = vrot.lane.b32.xlu0 %v1013, 97
      %v2030 = vpop.permute.xlu0 %2029
      %2031 = vrot.lane.b32.xlu0 %v1100, 97
      %v2032 = vpop.permute.xlu0 %2031
      %2033 = vrot.lane.b32.xlu0 %v1102, 97
      %v2034 = vpop.permute.xlu0 %2033
      %2035 = vrot.lane.b32.xlu0 %v1189, 97
      %v2036 = vpop.permute.xlu0 %2035
      %2037 = vrot.lane.b32.xlu0 %v1191, 97
      %v2038 = vpop.permute.xlu0 %2037
      %2039 = vrot.lane.b32.xlu0 %v928, 97
      %v2040 = vpop.permute.xlu0 %2039
      %2041 = vrot.lane.b32.xlu0 %v930, 97
      %v2042 = vpop.permute.xlu0 %2041
      %2043 = vrot.lane.b32.xlu0 %v1017, 97
      %v2044 = vpop.permute.xlu0 %2043
      %2045 = vrot.lane.b32.xlu0 %v1019, 97
      %v2046 = vpop.permute.xlu0 %2045
      %2047 = vrot.lane.b32.xlu0 %v1106, 97
      %v2048 = vpop.permute.xlu0 %2047
      %2049 = vrot.lane.b32.xlu0 %v1108, 97
      %v2050 = vpop.permute.xlu0 %2049
      %2051 = vrot.lane.b32.xlu0 %v1195, 97
      %v2052 = vpop.permute.xlu0 %2051
      %2053 = vrot.lane.b32.xlu0 %v1197, 97
      %v2054 = vpop.permute.xlu0 %2053
      %2055 = vrot.lane.b32.xlu0 %v934, 97
      %v2056 = vpop.permute.xlu0 %2055
      %2057 = vrot.lane.b32.xlu0 %v936, 97
      %v2058 = vpop.permute.xlu0 %2057
      %2059 = vrot.lane.b32.xlu0 %v1023, 97
      %v2060 = vpop.permute.xlu0 %2059
      %2061 = vrot.lane.b32.xlu0 %v1025, 97
      %v2062 = vpop.permute.xlu0 %2061
      %2063 = vrot.lane.b32.xlu0 %v1112, 97
      %v2064 = vpop.permute.xlu0 %2063
      %2065 = vrot.lane.b32.xlu0 %v1114, 97
      %v2066 = vpop.permute.xlu0 %2065
      %2067 = vrot.lane.b32.xlu0 %v1201, 97
      %v2068 = vpop.permute.xlu0 %2067
      %2069 = vrot.lane.b32.xlu0 %v1203, 97
      %v2070 = vpop.permute.xlu0 %2069
      %2071 = vrot.lane.b32.xlu0 %v940, 97
      %v2072 = vpop.permute.xlu0 %2071
      %2073 = vrot.lane.b32.xlu0 %v942, 97
      %v2074 = vpop.permute.xlu0 %2073
      %2075 = vrot.lane.b32.xlu0 %v1029, 97
      %v2076 = vpop.permute.xlu0 %2075
      %2077 = vrot.lane.b32.xlu0 %v1031, 97
      %v2078 = vpop.permute.xlu0 %2077
      %2079 = vrot.lane.b32.xlu0 %v1118, 97
      %v2080 = vpop.permute.xlu0 %2079
      %2081 = vrot.lane.b32.xlu0 %v1120, 97
      %v2082 = vpop.permute.xlu0 %2081
      %2083 = vrot.lane.b32.xlu0 %v1207, 97
      %v2084 = vpop.permute.xlu0 %2083
      %2085 = vrot.lane.b32.xlu0 %v1209, 97
      %v2086 = vpop.permute.xlu0 %2085
      %v2087 = vsel %vm723, %v2024, %v2026
      %v2088 = vsel %vm723, %v2026, %v2028
      %v2089 = vsel %vm723, %v2028, %v2030
      %v2090 = vsel %vm723, %v2030, %v2032
      %v2091 = vsel %vm723, %v2032, %v2034
      %v2092 = vsel %vm723, %v2034, %v2036
      %v2093 = vsel %vm723, %v2036, %v2038
      %v2094 = vsel %vm723, %v2040, %v2042
      %v2095 = vsel %vm723, %v2042, %v2044
      %v2096 = vsel %vm723, %v2044, %v2046
      %v2097 = vsel %vm723, %v2046, %v2048
      %v2098 = vsel %vm723, %v2048, %v2050
      %v2099 = vsel %vm723, %v2050, %v2052
      %v2100 = vsel %vm723, %v2052, %v2054
      %v2101 = vsel %vm723, %v2056, %v2058
      %v2102 = vsel %vm723, %v2058, %v2060
      %v2103 = vsel %vm723, %v2060, %v2062
      %v2104 = vsel %vm723, %v2062, %v2064
      %v2105 = vsel %vm723, %v2064, %v2066
      %v2106 = vsel %vm723, %v2066, %v2068
      %v2107 = vsel %vm723, %v2068, %v2070
      %v2108 = vsel %vm723, %v2072, %v2074
      %v2109 = vsel %vm723, %v2074, %v2076
      %v2110 = vsel %vm723, %v2076, %v2078
      %v2111 = vsel %vm723, %v2078, %v2080
      %v2112 = vsel %vm723, %v2080, %v2082
      %v2113 = vsel %vm723, %v2082, %v2084
      %v2114 = vsel %vm723, %v2084, %v2086
      %v2147 = vsel %vm723, %v2038, 0.0
      %v2148 = vsel %vm723, %v2054, 0.0
      %v2149 = vsel %vm723, %v2070, 0.0
      %v2150 = vsel %vm723, %v2086, 0.0
      %v2151 = vsel %vm519, %v2087, 0.0
      %v2152 = vsel %vm520, %v2088, 0.0
      %v2153 = vsel %vm521, %v2089, 0.0
      %v2154 = vsel %vm522, %v2090, 0.0
      %v2155 = vsel %vm523, %v2091, 0.0
      %v2156 = vsel %vm524, %v2092, 0.0
      %v2157 = vsel %vm525, %v2093, 0.0
      %v2158 = vsel %vm526, %v2147, 0.0
      %v2159 = vsel %vm519, %v2094, 0.0
      %v2160 = vsel %vm520, %v2095, 0.0
      %v2161 = vsel %vm521, %v2096, 0.0
      %v2162 = vsel %vm522, %v2097, 0.0
      %v2163 = vsel %vm523, %v2098, 0.0
      %v2164 = vsel %vm524, %v2099, 0.0
      %v2165 = vsel %vm525, %v2100, 0.0
      %v2166 = vsel %vm526, %v2148, 0.0
      %v2167 = vsel %vm519, %v2101, 0.0
      %v2168 = vsel %vm520, %v2102, 0.0
      %v2169 = vsel %vm521, %v2103, 0.0
      %v2170 = vsel %vm522, %v2104, 0.0
      %v2171 = vsel %vm523, %v2105, 0.0
      %v2172 = vsel %vm524, %v2106, 0.0
      %v2173 = vsel %vm525, %v2107, 0.0
      %v2174 = vsel %vm526, %v2149, 0.0
      %v2175 = vsel %vm519, %v2108, 0.0
      %v2176 = vsel %vm520, %v2109, 0.0
      %v2177 = vsel %vm521, %v2110, 0.0
      %v2178 = vsel %vm522, %v2111, 0.0
      %v2179 = vsel %vm523, %v2112, 0.0
      %v2180 = vsel %vm524, %v2113, 0.0
      %v2181 = vsel %vm525, %v2114, 0.0
      %v2182 = vsel %vm526, %v2150, 0.0
      %2183 = vrot.lane.b32.xlu0 %v922, 96
      %v2184 = vpop.permute.xlu0 %2183
      %2185 = vrot.lane.b32.xlu0 %v924, 96
      %v2186 = vpop.permute.xlu0 %2185
      %2187 = vrot.lane.b32.xlu0 %v1011, 96
      %v2188 = vpop.permute.xlu0 %2187
      %2189 = vrot.lane.b32.xlu0 %v1013, 96
      %v2190 = vpop.permute.xlu0 %2189
      %2191 = vrot.lane.b32.xlu0 %v1100, 96
      %v2192 = vpop.permute.xlu0 %2191
      %2193 = vrot.lane.b32.xlu0 %v1102, 96
      %v2194 = vpop.permute.xlu0 %2193
      %2195 = vrot.lane.b32.xlu0 %v1189, 96
      %v2196 = vpop.permute.xlu0 %2195
      %2197 = vrot.lane.b32.xlu0 %v1191, 96
      %v2198 = vpop.permute.xlu0 %2197
      %2199 = vrot.lane.b32.xlu0 %v928, 96
      %v2200 = vpop.permute.xlu0 %2199
      %2201 = vrot.lane.b32.xlu0 %v930, 96
      %v2202 = vpop.permute.xlu0 %2201
      %2203 = vrot.lane.b32.xlu0 %v1017, 96
      %v2204 = vpop.permute.xlu0 %2203
      %2205 = vrot.lane.b32.xlu0 %v1019, 96
      %v2206 = vpop.permute.xlu0 %2205
      %2207 = vrot.lane.b32.xlu0 %v1106, 96
      %v2208 = vpop.permute.xlu0 %2207
      %2209 = vrot.lane.b32.xlu0 %v1108, 96
      %v2210 = vpop.permute.xlu0 %2209
      %2211 = vrot.lane.b32.xlu0 %v1195, 96
      %v2212 = vpop.permute.xlu0 %2211
      %2213 = vrot.lane.b32.xlu0 %v1197, 96
      %v2214 = vpop.permute.xlu0 %2213
      %2215 = vrot.lane.b32.xlu0 %v934, 96
      %v2216 = vpop.permute.xlu0 %2215
      %2217 = vrot.lane.b32.xlu0 %v936, 96
      %v2218 = vpop.permute.xlu0 %2217
      %2219 = vrot.lane.b32.xlu0 %v1023, 96
      %v2220 = vpop.permute.xlu0 %2219
      %2221 = vrot.lane.b32.xlu0 %v1025, 96
      %v2222 = vpop.permute.xlu0 %2221
      %2223 = vrot.lane.b32.xlu0 %v1112, 96
      %v2224 = vpop.permute.xlu0 %2223
      %2225 = vrot.lane.b32.xlu0 %v1114, 96
      %v2226 = vpop.permute.xlu0 %2225
      %2227 = vrot.lane.b32.xlu0 %v1201, 96
      %v2228 = vpop.permute.xlu0 %2227
      %2229 = vrot.lane.b32.xlu0 %v1203, 96
      %v2230 = vpop.permute.xlu0 %2229
      %2231 = vrot.lane.b32.xlu0 %v940, 96
      %v2232 = vpop.permute.xlu0 %2231
      %2233 = vrot.lane.b32.xlu0 %v942, 96
      %v2234 = vpop.permute.xlu0 %2233
      %2235 = vrot.lane.b32.xlu0 %v1029, 96
      %v2236 = vpop.permute.xlu0 %2235
      %2237 = vrot.lane.b32.xlu0 %v1031, 96
      %v2238 = vpop.permute.xlu0 %2237
      %2239 = vrot.lane.b32.xlu0 %v1118, 96
      %v2240 = vpop.permute.xlu0 %2239
      %2241 = vrot.lane.b32.xlu0 %v1120, 96
      %v2242 = vpop.permute.xlu0 %2241
      %2243 = vrot.lane.b32.xlu0 %v1207, 96
      %v2244 = vpop.permute.xlu0 %2243
      %2245 = vrot.lane.b32.xlu0 %v1209, 96
      %v2246 = vpop.permute.xlu0 %2245
      %v2247 = vsel %vm764, %v2184, %v2186
      %v2248 = vsel %vm764, %v2186, %v2188
      %v2249 = vsel %vm764, %v2188, %v2190
      %v2250 = vsel %vm764, %v2190, %v2192
      %v2251 = vsel %vm764, %v2192, %v2194
      %v2252 = vsel %vm764, %v2194, %v2196
      %v2253 = vsel %vm764, %v2196, %v2198
      %v2254 = vsel %vm764, %v2200, %v2202
      %v2255 = vsel %vm764, %v2202, %v2204
      %v2256 = vsel %vm764, %v2204, %v2206
      %v2257 = vsel %vm764, %v2206, %v2208
      %v2258 = vsel %vm764, %v2208, %v2210
      %v2259 = vsel %vm764, %v2210, %v2212
      %v2260 = vsel %vm764, %v2212, %v2214
      %v2261 = vsel %vm764, %v2216, %v2218
      %v2262 = vsel %vm764, %v2218, %v2220
      %v2263 = vsel %vm764, %v2220, %v2222
      %v2264 = vsel %vm764, %v2222, %v2224
      %v2265 = vsel %vm764, %v2224, %v2226
      %v2266 = vsel %vm764, %v2226, %v2228
      %v2267 = vsel %vm764, %v2228, %v2230
      %v2268 = vsel %vm764, %v2232, %v2234
      %v2269 = vsel %vm764, %v2234, %v2236
      %v2270 = vsel %vm764, %v2236, %v2238
      %v2271 = vsel %vm764, %v2238, %v2240
      %v2272 = vsel %vm764, %v2240, %v2242
      %v2273 = vsel %vm764, %v2242, %v2244
      %v2274 = vsel %vm764, %v2244, %v2246
      %v2307 = vsel %vm764, %v2198, 0.0
      %v2308 = vsel %vm764, %v2214, 0.0
      %v2309 = vsel %vm764, %v2230, 0.0
      %v2310 = vsel %vm764, %v2246, 0.0
      %2311 = vrot.lane.b32.xlu0 %v922, 95
      %v2312 = vpop.permute.xlu0 %2311
      %2313 = vrot.lane.b32.xlu0 %v924, 95
      %v2314 = vpop.permute.xlu0 %2313
      %2315 = vrot.lane.b32.xlu0 %v1011, 95
      %v2316 = vpop.permute.xlu0 %2315
      %2317 = vrot.lane.b32.xlu0 %v1013, 95
      %v2318 = vpop.permute.xlu0 %2317
      %2319 = vrot.lane.b32.xlu0 %v1100, 95
      %v2320 = vpop.permute.xlu0 %2319
      %2321 = vrot.lane.b32.xlu0 %v1102, 95
      %v2322 = vpop.permute.xlu0 %2321
      %2323 = vrot.lane.b32.xlu0 %v1189, 95
      %v2324 = vpop.permute.xlu0 %2323
      %2325 = vrot.lane.b32.xlu0 %v1191, 95
      %v2326 = vpop.permute.xlu0 %2325
      %2327 = vrot.lane.b32.xlu0 %v928, 95
      %v2328 = vpop.permute.xlu0 %2327
      %2329 = vrot.lane.b32.xlu0 %v930, 95
      %v2330 = vpop.permute.xlu0 %2329
      %2331 = vrot.lane.b32.xlu0 %v1017, 95
      %v2332 = vpop.permute.xlu0 %2331
      %2333 = vrot.lane.b32.xlu0 %v1019, 95
      %v2334 = vpop.permute.xlu0 %2333
      %2335 = vrot.lane.b32.xlu0 %v1106, 95
      %v2336 = vpop.permute.xlu0 %2335
      %2337 = vrot.lane.b32.xlu0 %v1108, 95
      %v2338 = vpop.permute.xlu0 %2337
      %2339 = vrot.lane.b32.xlu0 %v1195, 95
      %v2340 = vpop.permute.xlu0 %2339
      %2341 = vrot.lane.b32.xlu0 %v1197, 95
      %v2342 = vpop.permute.xlu0 %2341
      %2343 = vrot.lane.b32.xlu0 %v934, 95
      %v2344 = vpop.permute.xlu0 %2343
      %2345 = vrot.lane.b32.xlu0 %v936, 95
      %v2346 = vpop.permute.xlu0 %2345
      %2347 = vrot.lane.b32.xlu0 %v1023, 95
      %v2348 = vpop.permute.xlu0 %2347
      %2349 = vrot.lane.b32.xlu0 %v1025, 95
      %v2350 = vpop.permute.xlu0 %2349
      %2351 = vrot.lane.b32.xlu0 %v1112, 95
      %v2352 = vpop.permute.xlu0 %2351
      %2353 = vrot.lane.b32.xlu0 %v1114, 95
      %v2354 = vpop.permute.xlu0 %2353
      %2355 = vrot.lane.b32.xlu0 %v1201, 95
      %v2356 = vpop.permute.xlu0 %2355
      %2357 = vrot.lane.b32.xlu0 %v1203, 95
      %v2358 = vpop.permute.xlu0 %2357
      %2359 = vrot.lane.b32.xlu0 %v940, 95
      %v2360 = vpop.permute.xlu0 %2359
      %2361 = vrot.lane.b32.xlu0 %v942, 95
      %v2362 = vpop.permute.xlu0 %2361
      %2363 = vrot.lane.b32.xlu0 %v1029, 95
      %v2364 = vpop.permute.xlu0 %2363
      %2365 = vrot.lane.b32.xlu0 %v1031, 95
      %v2366 = vpop.permute.xlu0 %2365
      %2367 = vrot.lane.b32.xlu0 %v1118, 95
      %v2368 = vpop.permute.xlu0 %2367
      %2369 = vrot.lane.b32.xlu0 %v1120, 95
      %v2370 = vpop.permute.xlu0 %2369
      %2371 = vrot.lane.b32.xlu0 %v1207, 95
      %v2372 = vpop.permute.xlu0 %2371
      %2373 = vrot.lane.b32.xlu0 %v1209, 95
      %v2374 = vpop.permute.xlu0 %2373
      %v2375 = vsel %vm797, %v2312, %v2314
      %v2376 = vsel %vm797, %v2314, %v2316
      %v2377 = vsel %vm797, %v2316, %v2318
      %v2378 = vsel %vm797, %v2318, %v2320
      %v2379 = vsel %vm797, %v2320, %v2322
      %v2380 = vsel %vm797, %v2322, %v2324
      %v2381 = vsel %vm797, %v2324, %v2326
      %v2382 = vsel %vm797, %v2328, %v2330
      %v2383 = vsel %vm797, %v2330, %v2332
      %v2384 = vsel %vm797, %v2332, %v2334
      %v2385 = vsel %vm797, %v2334, %v2336
      %v2386 = vsel %vm797, %v2336, %v2338
      %v2387 = vsel %vm797, %v2338, %v2340
      %v2388 = vsel %vm797, %v2340, %v2342
      %v2389 = vsel %vm797, %v2344, %v2346
      %v2390 = vsel %vm797, %v2346, %v2348
      %v2391 = vsel %vm797, %v2348, %v2350
      %v2392 = vsel %vm797, %v2350, %v2352
      %v2393 = vsel %vm797, %v2352, %v2354
      %v2394 = vsel %vm797, %v2354, %v2356
      %v2395 = vsel %vm797, %v2356, %v2358
      %v2396 = vsel %vm797, %v2360, %v2362
      %v2397 = vsel %vm797, %v2362, %v2364
      %v2398 = vsel %vm797, %v2364, %v2366
      %v2399 = vsel %vm797, %v2366, %v2368
      %v2400 = vsel %vm797, %v2368, %v2370
      %v2401 = vsel %vm797, %v2370, %v2372
      %v2402 = vsel %vm797, %v2372, %v2374
      %v2435 = vsel %vm797, %v2326, 0.0
      %v2436 = vsel %vm797, %v2342, 0.0
      %v2437 = vsel %vm797, %v2358, 0.0
      %v2438 = vsel %vm797, %v2374, 0.0
      %v2439 = vsel %vm609, %v2375, 0.0
      %v2440 = vsel %vm610, %v2376, 0.0
      %v2441 = vsel %vm611, %v2377, 0.0
      %v2442 = vsel %vm612, %v2378, 0.0
      %v2443 = vsel %vm613, %v2379, 0.0
      %v2444 = vsel %vm614, %v2380, 0.0
      %v2445 = vsel %vm615, %v2381, 0.0
      %v2446 = vsel %vm616, %v2435, 0.0
      %v2447 = vsel %vm609, %v2382, 0.0
      %v2448 = vsel %vm610, %v2383, 0.0
      %v2449 = vsel %vm611, %v2384, 0.0
      %v2450 = vsel %vm612, %v2385, 0.0
      %v2451 = vsel %vm613, %v2386, 0.0
      %v2452 = vsel %vm614, %v2387, 0.0
      %v2453 = vsel %vm615, %v2388, 0.0
      %v2454 = vsel %vm616, %v2436, 0.0
      %v2455 = vsel %vm609, %v2389, 0.0
      %v2456 = vsel %vm610, %v2390, 0.0
      %v2457 = vsel %vm611, %v2391, 0.0
      %v2458 = vsel %vm612, %v2392, 0.0
      %v2459 = vsel %vm613, %v2393, 0.0
      %v2460 = vsel %vm614, %v2394, 0.0
      %v2461 = vsel %vm615, %v2395, 0.0
      %v2462 = vsel %vm616, %v2437, 0.0
      %v2463 = vsel %vm609, %v2396, 0.0
      %v2464 = vsel %vm610, %v2397, 0.0
      %v2465 = vsel %vm611, %v2398, 0.0
      %v2466 = vsel %vm612, %v2399, 0.0
      %v2467 = vsel %vm613, %v2400, 0.0
      %v2468 = vsel %vm614, %v2401, 0.0
      %v2469 = vsel %vm615, %v2402, 0.0
      %v2470 = vsel %vm616, %v2438, 0.0
      %v2472 = vsel %vm551, %v1213, 0
      %v2475 = vsel %vm551, %v1216, 0
      %v2478 = vsel %vm551, %v1219, 0
      %v2481 = vsel %vm551, %v1222, 0
      %2483 = vmatprep.subr.mxu0 %v1384
      %2484 = vmatpush1.msra.mxu0 %v1383
      %2485 = vmatprep.subr.mxu0 %v1392
      %2486 = vmatpush1.msra.mxu0 %v1391
      %2487 = vmatprep.subr.mxu0 %v1400
      %2488 = vmatpush1.msra.mxu0 %v1399
      %2489 = vmatprep.subr.mxu0 %v1408
      %2490 = vmatpush1.msra.mxu0 %v1407
      %2491 = vmatprep.subr.mxu0 %v1479
      %2492 = vmatpush1.msra.mxu0 %v1539
      %2493 = vmatprep.subr.mxu0 %v1486
      %2494 = vmatpush1.msra.mxu0 %v1540
      %2495 = vmatprep.subr.mxu0 %v1493
      %2496 = vmatpush1.msra.mxu0 %v1541
      %2497 = vmatprep.subr.mxu0 %v1500
      %2498 = vmatpush1.msra.mxu0 %v1542
      %2499 = vmatprep.subr.mxu0 %v1672
      %2500 = vmatpush1.msra.mxu0 %v1671
      %2501 = vmatprep.subr.mxu0 %v1680
      %2502 = vmatpush1.msra.mxu0 %v1679
      %2503 = vmatprep.subr.mxu0 %v1688
      %2504 = vmatpush1.msra.mxu0 %v1687
      %2505 = vmatprep.subr.mxu0 %v1696
      %2506 = vmatpush1.msra.mxu0 %v1695
      %2507 = vmatprep.subr.mxu0 %v1832
      %2508 = vmatpush1.msra.mxu0 %v1831
      %2509 = vmatprep.subr.mxu0 %v1840
      %2510 = vmatpush1.msra.mxu0 %v1839
      %2511 = vmatprep.subr.mxu0 %v1848
      %2512 = vmatpush1.msra.mxu0 %v1847
      %2513 = vmatprep.subr.mxu0 %v1856
      %2514 = vmatpush1.msra.mxu0 %v1855
      %2515 = vmatprep.subr.mxu0 %v924
      %2516 = vmatpush1.msra.mxu0 %v922
      %2517 = vmatprep.subr.mxu0 %v930
      %2518 = vmatpush1.msra.mxu0 %v928
      %2519 = vmatprep.subr.mxu0 %v936
      %2520 = vmatpush1.msra.mxu0 %v934
      %2521 = vmatprep.subr.mxu0 %v942
      %2522 = vmatpush1.msra.mxu0 %v940
      %2523 = vmatprep.subr.mxu0 %v1992
      %2524 = vmatpush1.msra.mxu0 %v1991
      %2525 = vmatprep.subr.mxu0 %v2000
      %2526 = vmatpush1.msra.mxu0 %v1999
      %2527 = vmatprep.subr.mxu0 %v2008
      %2528 = vmatpush1.msra.mxu0 %v2007
      %2529 = vmatprep.subr.mxu0 %v2016
      %2530 = vmatpush1.msra.mxu0 %v2015
      %2531 = vmatprep.subr.mxu0 %v2152
      %2532 = vmatpush1.msra.mxu0 %v2151
      %2533 = vmatprep.subr.mxu0 %v2160
      %2534 = vmatpush1.msra.mxu0 %v2159
      %2535 = vmatprep.subr.mxu0 %v2168
      %2536 = vmatpush1.msra.mxu0 %v2167
      %2537 = vmatprep.subr.mxu0 %v2176
      %2538 = vmatpush1.msra.mxu0 %v2175
      %2539 = vmatprep.subr.mxu0 %v2248
      %2540 = vmatpush1.msra.mxu0 %v2247
      %2541 = vmatprep.subr.mxu0 %v2255
      %2542 = vmatpush1.msra.mxu0 %v2254
      %2543 = vmatprep.subr.mxu0 %v2262
      %2544 = vmatpush1.msra.mxu0 %v2261
      %2545 = vmatprep.subr.mxu0 %v2269
      %2546 = vmatpush1.msra.mxu0 %v2268
      %2547 = vmatprep.mubr.f32.mxu0 %v1212
      %2548 = vmatmul.mubr.f32.gmra.mrb[0].mxu0 %v1211
      %v2549 = vpop.f32.mrb[0].mxu0
      %v2550 = vadd.f32 0.0, %v2549
      %v2551 = vpop.f32.mrb[0].mxu0
      %v2552 = vadd.f32 0.0, %v2551
      %2553 = vmatprep.mubr.f32.mxu0 %v1215
      %2554 = vmatmul.mubr.f32.gmra.mrb[0].mxu0 %v1214
      %v2555 = vpop.f32.mrb[0].mxu0
      %v2556 = vadd.f32 0.0, %v2555
      %v2557 = vpop.f32.mrb[0].mxu0
      %v2558 = vadd.f32 0.0, %v2557
      %2559 = vmatprep.mubr.f32.mxu0 %v1218
      %2560 = vmatmul.mubr.f32.gmra.mrb[0].mxu0 %v1217
      %v2561 = vpop.f32.mrb[0].mxu0
      %v2562 = vadd.f32 0.0, %v2561
      %v2563 = vpop.f32.mrb[0].mxu0
      %v2564 = vadd.f32 0.0, %v2563
      %2565 = vmatprep.mubr.f32.mxu0 %v1221
      %2566 = vmatmul.mubr.f32.gmra.mrb[0].mxu0 %v1220
      %v2567 = vpop.f32.mrb[0].mxu0
      %v2568 = vadd.f32 0.0, %v2567
      %v2569 = vpop.f32.mrb[0].mxu0
      %v2570 = vadd.f32 0.0, %v2569
      %2571 = vdwg.mxu0
      %2572 = vmatprep.subr.mxu0 %v2440
      %2573 = vmatpush1.msra.mxu0 %v2439
      %2574 = vmatprep.subr.mxu0 %v2448
      %2575 = vmatpush1.msra.mxu0 %v2447
      %2576 = vmatprep.subr.mxu0 %v2456
      %2577 = vmatpush1.msra.mxu0 %v2455
      %2578 = vmatprep.subr.mxu0 %v2464
      %2579 = vmatpush1.msra.mxu0 %v2463
      %2580 = vmatprep.subr.mxu0 0.0
      %2581 = vmatpush1.msra.mxu0 0.0
      %2582 = vmatprep.subr.mxu0 0.0
      %2583 = vmatpush1.msra.mxu0 0.0
      %2584 = vmatprep.subr.mxu0 0.0
      %2585 = vmatpush1.msra.mxu0 0.0
      %2586 = vmatprep.subr.mxu0 0.0
      %2587 = vmatpush1.msra.mxu0 0.0
      %2588 = vmatprep.subr.mxu0 0.0
      %2589 = vmatpush1.msra.mxu0 0.0
      %2590 = vmatprep.subr.mxu0 0.0
      %2591 = vmatpush1.msra.mxu0 0.0
      %2592 = vmatprep.subr.mxu0 0.0
      %2593 = vmatpush1.msra.mxu0 0.0
      %2594 = vmatprep.subr.mxu0 0.0
      %2595 = vmatpush1.msra.mxu0 0.0
      %2596 = vmatprep.subr.mxu0 0.0
      %2597 = vmatpush1.msra.mxu0 0.0
      %2598 = vmatprep.subr.mxu0 0.0
      %2599 = vmatpush1.msra.mxu0 0.0
      %2600 = vmatprep.subr.mxu0 0.0
      %2601 = vmatpush1.msra.mxu0 0.0
      %2602 = vmatprep.subr.mxu0 0.0
      %2603 = vmatpush1.msra.mxu0 0.0
      %2604 = vmatprep.subr.mxu0 0.0
      %2605 = vmatpush1.msra.mxu0 0.0
      %2606 = vmatprep.subr.mxu0 0.0
      %2607 = vmatpush1.msra.mxu0 0.0
      %2608 = vmatprep.subr.mxu0 0.0
      %2609 = vmatpush1.msra.mxu0 0.0
      %2610 = vmatprep.subr.mxu0 0.0
      %2611 = vmatpush1.msra.mxu0 0.0
      %2612 = vmatprep.subr.mxu0 0.0
      %2613 = vmatpush1.msra.mxu0 0.0
      %2614 = vmatprep.subr.mxu0 0.0
      %2615 = vmatpush1.msra.mxu0 0.0
      %2616 = vmatprep.subr.mxu0 0.0
      %2617 = vmatpush1.msra.mxu0 0.0
      %2618 = vmatprep.subr.mxu0 0.0
      %2619 = vmatpush1.msra.mxu0 0.0
      %2620 = vmatprep.subr.mxu0 0.0
      %2621 = vmatpush1.msra.mxu0 0.0
      %2622 = vmatprep.subr.mxu0 0.0
      %2623 = vmatpush1.msra.mxu0 0.0
      %2624 = vmatprep.subr.mxu0 0.0
      %2625 = vmatpush1.msra.mxu0 0.0
      %2626 = vmatprep.subr.mxu0 0.0
      %2627 = vmatpush1.msra.mxu0 0.0
      %2628 = vmatprep.subr.mxu0 0.0
      %2629 = vmatpush1.msra.mxu0 0.0
      %2630 = vmatprep.subr.mxu0 0.0
      %2631 = vmatpush1.msra.mxu0 0.0
      %2632 = vmatprep.subr.mxu0 0.0
      %2633 = vmatpush1.msra.mxu0 0.0
      %2634 = vmatprep.subr.mxu0 0.0
      %2635 = vmatpush1.msra.mxu0 0.0
      %2636 = vmatprep.mubr.f32.mxu0 0.0
      %2637 = vmatmul.mubr.f32.gmra.mrb[0].mxu0 %v2472
      %v2638 = vpop.f32.mrb[0].mxu0
      %v2639 = vadd.f32 %v2550, %v2638
      %v2640 = vpop.f32.mrb[0].mxu0
      %v2641 = vadd.f32 %v2552, %v2640
      %2642 = vmatprep.mubr.f32.mxu0 0.0
      %2643 = vmatmul.mubr.f32.gmra.mrb[0].mxu0 %v2475
      %v2644 = vpop.f32.mrb[0].mxu0
      %v2645 = vadd.f32 %v2556, %v2644
      %v2646 = vpop.f32.mrb[0].mxu0
      %v2647 = vadd.f32 %v2558, %v2646
      %2648 = vmatprep.mubr.f32.mxu0 0.0
      %2649 = vmatmul.mubr.f32.gmra.mrb[0].mxu0 %v2478
      %v2650 = vpop.f32.mrb[0].mxu0
      %v2651 = vadd.f32 %v2562, %v2650
      %v2652 = vpop.f32.mrb[0].mxu0
      %v2653 = vadd.f32 %v2564, %v2652
      %2654 = vmatprep.mubr.f32.mxu0 0.0
      %2655 = vmatmul.mubr.f32.gmra.mrb[0].mxu0 %v2481
      %v2656 = vpop.f32.mrb[0].mxu0
      %v2657 = vadd.f32 %v2568, %v2656
      %v2658 = vpop.f32.mrb[0].mxu0
      %v2659 = vadd.f32 %v2570, %v2658
      %2660 = vdwg.mxu0
      %2661 = vmatprep.subr.mxu0 %v1386
      %2662 = vmatpush1.msra.mxu0 %v1385
      %2663 = vmatprep.subr.mxu0 %v1394
      %2664 = vmatpush1.msra.mxu0 %v1393
      %2665 = vmatprep.subr.mxu0 %v1402
      %2666 = vmatpush1.msra.mxu0 %v1401
      %2667 = vmatprep.subr.mxu0 %v1410
      %2668 = vmatpush1.msra.mxu0 %v1409
      %2669 = vmatprep.subr.mxu0 %v1481
      %2670 = vmatpush1.msra.mxu0 %v1480
      %2671 = vmatprep.subr.mxu0 %v1488
      %2672 = vmatpush1.msra.mxu0 %v1487
      %2673 = vmatprep.subr.mxu0 %v1495
      %2674 = vmatpush1.msra.mxu0 %v1494
      %2675 = vmatprep.subr.mxu0 %v1502
      %2676 = vmatpush1.msra.mxu0 %v1501
      %2677 = vmatprep.subr.mxu0 %v1674
      %2678 = vmatpush1.msra.mxu0 %v1673
      %2679 = vmatprep.subr.mxu0 %v1682
      %2680 = vmatpush1.msra.mxu0 %v1681
      %2681 = vmatprep.subr.mxu0 %v1690
      %2682 = vmatpush1.msra.mxu0 %v1689
      %2683 = vmatprep.subr.mxu0 %v1698
      %2684 = vmatpush1.msra.mxu0 %v1697
      %2685 = vmatprep.subr.mxu0 %v1834
      %2686 = vmatpush1.msra.mxu0 %v1833
      %2687 = vmatprep.subr.mxu0 %v1842
      %2688 = vmatpush1.msra.mxu0 %v1841
      %2689 = vmatprep.subr.mxu0 %v1850
      %2690 = vmatpush1.msra.mxu0 %v1849
      %2691 = vmatprep.subr.mxu0 %v1858
      %2692 = vmatpush1.msra.mxu0 %v1857
      %2693 = vmatprep.subr.mxu0 %v1013
      %2694 = vmatpush1.msra.mxu0 %v1011
      %2695 = vmatprep.subr.mxu0 %v1019
      %2696 = vmatpush1.msra.mxu0 %v1017
      %2697 = vmatprep.subr.mxu0 %v1025
      %2698 = vmatpush1.msra.mxu0 %v1023
      %2699 = vmatprep.subr.mxu0 %v1031
      %2700 = vmatpush1.msra.mxu0 %v1029
      %2701 = vmatprep.subr.mxu0 %v1994
      %2702 = vmatpush1.msra.mxu0 %v1993
      %2703 = vmatprep.subr.mxu0 %v2002
      %2704 = vmatpush1.msra.mxu0 %v2001
      %2705 = vmatprep.subr.mxu0 %v2010
      %2706 = vmatpush1.msra.mxu0 %v2009
      %2707 = vmatprep.subr.mxu0 %v2018
      %2708 = vmatpush1.msra.mxu0 %v2017
      %2709 = vmatprep.subr.mxu0 %v2154
      %2710 = vmatpush1.msra.mxu0 %v2153
      %2711 = vmatprep.subr.mxu0 %v2162
      %2712 = vmatpush1.msra.mxu0 %v2161
      %2713 = vmatprep.subr.mxu0 %v2170
      %2714 = vmatpush1.msra.mxu0 %v2169
      %2715 = vmatprep.subr.mxu0 %v2178
      %2716 = vmatpush1.msra.mxu0 %v2177
      %2717 = vmatprep.subr.mxu0 %v2250
      %2718 = vmatpush1.msra.mxu0 %v2249
      %2719 = vmatprep.subr.mxu0 %v2257
      %2720 = vmatpush1.msra.mxu0 %v2256
      %2721 = vmatprep.subr.mxu0 %v2264
      %2722 = vmatpush1.msra.mxu0 %v2263
      %2723 = vmatprep.subr.mxu0 %v2271
      %2724 = vmatpush1.msra.mxu0 %v2270
      %2725 = vmatprep.mubr.f32.mxu0 %v1212
      %2726 = vmatmul.mubr.f32.gmra.mrb[0].mxu0 %v1211
      %v2727 = vpop.f32.mrb[0].mxu0
      %v2728 = vadd.f32 0.0, %v2727
      %v2729 = vpop.f32.mrb[0].mxu0
      %v2730 = vadd.f32 0.0, %v2729
      %2731 = vmatprep.mubr.f32.mxu0 %v1215
      %2732 = vmatmul.mubr.f32.gmra.mrb[0].mxu0 %v1214
      %v2733 = vpop.f32.mrb[0].mxu0
      %v2734 = vadd.f32 0.0, %v2733
      %v2735 = vpop.f32.mrb[0].mxu0
      %v2736 = vadd.f32 0.0, %v2735
      %2737 = vmatprep.mubr.f32.mxu0 %v1218
      %2738 = vmatmul.mubr.f32.gmra.mrb[0].mxu0 %v1217
      %v2739 = vpop.f32.mrb[0].mxu0
      %v2740 = vadd.f32 0.0, %v2739
      %v2741 = vpop.f32.mrb[0].mxu0
      %v2742 = vadd.f32 0.0, %v2741
      %2743 = vmatprep.mubr.f32.mxu0 %v1221
      %2744 = vmatmul.mubr.f32.gmra.mrb[0].mxu0 %v1220
      %v2745 = vpop.f32.mrb[0].mxu0
      %v2746 = vadd.f32 0.0, %v2745
      %v2747 = vpop.f32.mrb[0].mxu0
      %v2748 = vadd.f32 0.0, %v2747
      %2749 = vdwg.mxu0
      %2750 = vmatprep.subr.mxu0 %v2442
      %2751 = vmatpush1.msra.mxu0 %v2441
      %2752 = vmatprep.subr.mxu0 %v2450
      %2753 = vmatpush1.msra.mxu0 %v2449
      %2754 = vmatprep.subr.mxu0 %v2458
      %2755 = vmatpush1.msra.mxu0 %v2457
      %2756 = vmatprep.subr.mxu0 %v2466
      %2757 = vmatpush1.msra.mxu0 %v2465
      %2758 = vmatprep.subr.mxu0 0.0
      %2759 = vmatpush1.msra.mxu0 0.0
      %2760 = vmatprep.subr.mxu0 0.0
      %2761 = vmatpush1.msra.mxu0 0.0
      %2762 = vmatprep.subr.mxu0 0.0
      %2763 = vmatpush1.msra.mxu0 0.0
      %2764 = vmatprep.subr.mxu0 0.0
      %2765 = vmatpush1.msra.mxu0 0.0
      %2766 = vmatprep.subr.mxu0 0.0
      %2767 = vmatpush1.msra.mxu0 0.0
      %2768 = vmatprep.subr.mxu0 0.0
      %2769 = vmatpush1.msra.mxu0 0.0
      %2770 = vmatprep.subr.mxu0 0.0
      %2771 = vmatpush1.msra.mxu0 0.0
      %2772 = vmatprep.subr.mxu0 0.0
      %2773 = vmatpush1.msra.mxu0 0.0
      %2774 = vmatprep.subr.mxu0 0.0
      %2775 = vmatpush1.msra.mxu0 0.0
      %2776 = vmatprep.subr.mxu0 0.0
      %2777 = vmatpush1.msra.mxu0 0.0
      %2778 = vmatprep.subr.mxu0 0.0
      %2779 = vmatpush1.msra.mxu0 0.0
      %2780 = vmatprep.subr.mxu0 0.0
      %2781 = vmatpush1.msra.mxu0 0.0
      %2782 = vmatprep.subr.mxu0 0.0
      %2783 = vmatpush1.msra.mxu0 0.0
      %2784 = vmatprep.subr.mxu0 0.0
      %2785 = vmatpush1.msra.mxu0 0.0
      %2786 = vmatprep.subr.mxu0 0.0
      %2787 = vmatpush1.msra.mxu0 0.0
      %2788 = vmatprep.subr.mxu0 0.0
      %2789 = vmatpush1.msra.mxu0 0.0
      %2790 = vmatprep.subr.mxu0 0.0
      %2791 = vmatpush1.msra.mxu0 0.0
      %2792 = vmatprep.subr.mxu0 0.0
      %2793 = vmatpush1.msra.mxu0 0.0
      %2794 = vmatprep.subr.mxu0 0.0
      %2795 = vmatpush1.msra.mxu0 0.0
      %2796 = vmatprep.subr.mxu0 0.0
      %2797 = vmatpush1.msra.mxu0 0.0
      %2798 = vmatprep.subr.mxu0 0.0
      %2799 = vmatpush1.msra.mxu0 0.0
      %2800 = vmatprep.subr.mxu0 0.0
      %2801 = vmatpush1.msra.mxu0 0.0
      %2802 = vmatprep.subr.mxu0 0.0
      %2803 = vmatpush1.msra.mxu0 0.0
      %2804 = vmatprep.subr.mxu0 0.0
      %2805 = vmatpush1.msra.mxu0 0.0
      %2806 = vmatprep.subr.mxu0 0.0
      %2807 = vmatpush1.msra.mxu0 0.0
      %2808 = vmatprep.subr.mxu0 0.0
      %2809 = vmatpush1.msra.mxu0 0.0
      %2810 = vmatprep.subr.mxu0 0.0
      %2811 = vmatpush1.msra.mxu0 0.0
      %2812 = vmatprep.subr.mxu0 0.0
      %2813 = vmatpush1.msra.mxu0 0.0
      %2814 = vmatprep.mubr.f32.mxu0 0.0
      %2815 = vmatmul.mubr.f32.gmra.mrb[0].mxu0 %v2472
      %v2816 = vpop.f32.mrb[0].mxu0
      %v2817 = vadd.f32 %v2728, %v2816
      %v2818 = vpop.f32.mrb[0].mxu0
      %v2819 = vadd.f32 %v2730, %v2818
      %2820 = vmatprep.mubr.f32.mxu0 0.0
      %2821 = vmatmul.mubr.f32.gmra.mrb[0].mxu0 %v2475
      %v2822 = vpop.f32.mrb[0].mxu0
      %v2823 = vadd.f32 %v2734, %v2822
      %v2824 = vpop.f32.mrb[0].mxu0
      %v2825 = vadd.f32 %v2736, %v2824
      %2826 = vmatprep.mubr.f32.mxu0 0.0
      %2827 = vmatmul.mubr.f32.gmra.mrb[0].mxu0 %v2478
      %v2828 = vpop.f32.mrb[0].mxu0
      %v2829 = vadd.f32 %v2740, %v2828
      %v2830 = vpop.f32.mrb[0].mxu0
      %v2831 = vadd.f32 %v2742, %v2830
      %2832 = vmatprep.mubr.f32.mxu0 0.0
      %2833 = vmatmul.mubr.f32.gmra.mrb[0].mxu0 %v2481
      %v2834 = vpop.f32.mrb[0].mxu0
      %v2835 = vadd.f32 %v2746, %v2834
      %v2836 = vpop.f32.mrb[0].mxu0
      %v2837 = vadd.f32 %v2748, %v2836
      %2838 = vdwg.mxu0
      %2839 = vmatprep.subr.mxu0 %v1388
      %2840 = vmatpush1.msra.mxu0 %v1387
      %2841 = vmatprep.subr.mxu0 %v1396
      %2842 = vmatpush1.msra.mxu0 %v1395
      %2843 = vmatprep.subr.mxu0 %v1404
      %2844 = vmatpush1.msra.mxu0 %v1403
      %2845 = vmatprep.subr.mxu0 %v1412
      %2846 = vmatpush1.msra.mxu0 %v1411
      %2847 = vmatprep.subr.mxu0 %v1483
      %2848 = vmatpush1.msra.mxu0 %v1482
      %2849 = vmatprep.subr.mxu0 %v1490
      %2850 = vmatpush1.msra.mxu0 %v1489
      %2851 = vmatprep.subr.mxu0 %v1497
      %2852 = vmatpush1.msra.mxu0 %v1496
      %2853 = vmatprep.subr.mxu0 %v1504
      %2854 = vmatpush1.msra.mxu0 %v1503
      %2855 = vmatprep.subr.mxu0 %v1676
      %2856 = vmatpush1.msra.mxu0 %v1675
      %2857 = vmatprep.subr.mxu0 %v1684
      %2858 = vmatpush1.msra.mxu0 %v1683
      %2859 = vmatprep.subr.mxu0 %v1692
      %2860 = vmatpush1.msra.mxu0 %v1691
      %2861 = vmatprep.subr.mxu0 %v1700
      %2862 = vmatpush1.msra.mxu0 %v1699
      %2863 = vmatprep.subr.mxu0 %v1836
      %2864 = vmatpush1.msra.mxu0 %v1835
      %2865 = vmatprep.subr.mxu0 %v1844
      %2866 = vmatpush1.msra.mxu0 %v1843
      %2867 = vmatprep.subr.mxu0 %v1852
      %2868 = vmatpush1.msra.mxu0 %v1851
      %2869 = vmatprep.subr.mxu0 %v1860
      %2870 = vmatpush1.msra.mxu0 %v1859
      %2871 = vmatprep.subr.mxu0 %v1102
      %2872 = vmatpush1.msra.mxu0 %v1100
      %2873 = vmatprep.subr.mxu0 %v1108
      %2874 = vmatpush1.msra.mxu0 %v1106
      %2875 = vmatprep.subr.mxu0 %v1114
      %2876 = vmatpush1.msra.mxu0 %v1112
      %2877 = vmatprep.subr.mxu0 %v1120
      %2878 = vmatpush1.msra.mxu0 %v1118
      %2879 = vmatprep.subr.mxu0 %v1996
      %2880 = vmatpush1.msra.mxu0 %v1995
      %2881 = vmatprep.subr.mxu0 %v2004
      %2882 = vmatpush1.msra.mxu0 %v2003
      %2883 = vmatprep.subr.mxu0 %v2012
      %2884 = vmatpush1.msra.mxu0 %v2011
      %2885 = vmatprep.subr.mxu0 %v2020
      %2886 = vmatpush1.msra.mxu0 %v2019
      %2887 = vmatprep.subr.mxu0 %v2156
      %2888 = vmatpush1.msra.mxu0 %v2155
      %2889 = vmatprep.subr.mxu0 %v2164
      %2890 = vmatpush1.msra.mxu0 %v2163
      %2891 = vmatprep.subr.mxu0 %v2172
      %2892 = vmatpush1.msra.mxu0 %v2171
      %2893 = vmatprep.subr.mxu0 %v2180
      %2894 = vmatpush1.msra.mxu0 %v2179
      %2895 = vmatprep.subr.mxu0 %v2252
      %2896 = vmatpush1.msra.mxu0 %v2251
      %2897 = vmatprep.subr.mxu0 %v2259
      %2898 = vmatpush1.msra.mxu0 %v2258
      %2899 = vmatprep.subr.mxu0 %v2266
      %2900 = vmatpush1.msra.mxu0 %v2265
      %2901 = vmatprep.subr.mxu0 %v2273
      %2902 = vmatpush1.msra.mxu0 %v2272
      %2903 = vmatprep.mubr.f32.mxu0 %v1212
      %2904 = vmatmul.mubr.f32.gmra.mrb[0].mxu0 %v1211
      %v2905 = vpop.f32.mrb[0].mxu0
      %v2906 = vadd.f32 0.0, %v2905
      %v2907 = vpop.f32.mrb[0].mxu0
      %v2908 = vadd.f32 0.0, %v2907
      %2909 = vmatprep.mubr.f32.mxu0 %v1215
      %2910 = vmatmul.mubr.f32.gmra.mrb[0].mxu0 %v1214
      %v2911 = vpop.f32.mrb[0].mxu0
      %v2912 = vadd.f32 0.0, %v2911
      %v2913 = vpop.f32.mrb[0].mxu0
      %v2914 = vadd.f32 0.0, %v2913
      %2915 = vmatprep.mubr.f32.mxu0 %v1218
      %2916 = vmatmul.mubr.f32.gmra.mrb[0].mxu0 %v1217
      %v2917 = vpop.f32.mrb[0].mxu0
      %v2918 = vadd.f32 0.0, %v2917
      %v2919 = vpop.f32.mrb[0].mxu0
      %v2920 = vadd.f32 0.0, %v2919
      %2921 = vmatprep.mubr.f32.mxu0 %v1221
      %2922 = vmatmul.mubr.f32.gmra.mrb[0].mxu0 %v1220
      %v2923 = vpop.f32.mrb[0].mxu0
      %v2924 = vadd.f32 0.0, %v2923
      %v2925 = vpop.f32.mrb[0].mxu0
      %v2926 = vadd.f32 0.0, %v2925
      %2927 = vdwg.mxu0
      %2928 = vmatprep.subr.mxu0 %v2444
      %2929 = vmatpush1.msra.mxu0 %v2443
      %2930 = vmatprep.subr.mxu0 %v2452
      %2931 = vmatpush1.msra.mxu0 %v2451
      %2932 = vmatprep.subr.mxu0 %v2460
      %2933 = vmatpush1.msra.mxu0 %v2459
      %2934 = vmatprep.subr.mxu0 %v2468
      %2935 = vmatpush1.msra.mxu0 %v2467
      %2936 = vmatprep.subr.mxu0 0.0
      %2937 = vmatpush1.msra.mxu0 0.0
      %2938 = vmatprep.subr.mxu0 0.0
      %2939 = vmatpush1.msra.mxu0 0.0
      %2940 = vmatprep.subr.mxu0 0.0
      %2941 = vmatpush1.msra.mxu0 0.0
      %2942 = vmatprep.subr.mxu0 0.0
      %2943 = vmatpush1.msra.mxu0 0.0
      %2944 = vmatprep.subr.mxu0 0.0
      %2945 = vmatpush1.msra.mxu0 0.0
      %2946 = vmatprep.subr.mxu0 0.0
      %2947 = vmatpush1.msra.mxu0 0.0
      %2948 = vmatprep.subr.mxu0 0.0
      %2949 = vmatpush1.msra.mxu0 0.0
      %2950 = vmatprep.subr.mxu0 0.0
      %2951 = vmatpush1.msra.mxu0 0.0
      %2952 = vmatprep.subr.mxu0 0.0
      %2953 = vmatpush1.msra.mxu0 0.0
      %2954 = vmatprep.subr.mxu0 0.0
      %2955 = vmatpush1.msra.mxu0 0.0
      %2956 = vmatprep.subr.mxu0 0.0
      %2957 = vmatpush1.msra.mxu0 0.0
      %2958 = vmatprep.subr.mxu0 0.0
      %2959 = vmatpush1.msra.mxu0 0.0
      %2960 = vmatprep.subr.mxu0 0.0
      %2961 = vmatpush1.msra.mxu0 0.0
      %2962 = vmatprep.subr.mxu0 0.0
      %2963 = vmatpush1.msra.mxu0 0.0
      %2964 = vmatprep.subr.mxu0 0.0
      %2965 = vmatpush1.msra.mxu0 0.0
      %2966 = vmatprep.subr.mxu0 0.0
      %2967 = vmatpush1.msra.mxu0 0.0
      %2968 = vmatprep.subr.mxu0 0.0
      %2969 = vmatpush1.msra.mxu0 0.0
      %2970 = vmatprep.subr.mxu0 0.0
      %2971 = vmatpush1.msra.mxu0 0.0
      %2972 = vmatprep.subr.mxu0 0.0
      %2973 = vmatpush1.msra.mxu0 0.0
      %2974 = vmatprep.subr.mxu0 0.0
      %2975 = vmatpush1.msra.mxu0 0.0
      %2976 = vmatprep.subr.mxu0 0.0
      %2977 = vmatpush1.msra.mxu0 0.0
      %2978 = vmatprep.subr.mxu0 0.0
      %2979 = vmatpush1.msra.mxu0 0.0
      %2980 = vmatprep.subr.mxu0 0.0
      %2981 = vmatpush1.msra.mxu0 0.0
      %2982 = vmatprep.subr.mxu0 0.0
      %2983 = vmatpush1.msra.mxu0 0.0
      %2984 = vmatprep.subr.mxu0 0.0
      %2985 = vmatpush1.msra.mxu0 0.0
      %2986 = vmatprep.subr.mxu0 0.0
      %2987 = vmatpush1.msra.mxu0 0.0
      %2988 = vmatprep.subr.mxu0 0.0
      %2989 = vmatpush1.msra.mxu0 0.0
      %2990 = vmatprep.subr.mxu0 0.0
      %2991 = vmatpush1.msra.mxu0 0.0
      %2992 = vmatprep.mubr.f32.mxu0 0.0
      %2993 = vmatmul.mubr.f32.gmra.mrb[0].mxu0 %v2472
      %v2994 = vpop.f32.mrb[0].mxu0
      %v2995 = vadd.f32 %v2906, %v2994
      %v2996 = vpop.f32.mrb[0].mxu0
      %v2997 = vadd.f32 %v2908, %v2996
      %2998 = vmatprep.mubr.f32.mxu0 0.0
      %2999 = vmatmul.mubr.f32.gmra.mrb[0].mxu0 %v2475
      %v3000 = vpop.f32.mrb[0].mxu0
      %v3001 = vadd.f32 %v2912, %v3000
      %v3002 = vpop.f32.mrb[0].mxu0
      %v3003 = vadd.f32 %v2914, %v3002
      %3004 = vmatprep.mubr.f32.mxu0 0.0
      %3005 = vmatmul.mubr.f32.gmra.mrb[0].mxu0 %v2478
      %v3006 = vpop.f32.mrb[0].mxu0
      %v3007 = vadd.f32 %v2918, %v3006
      %v3008 = vpop.f32.mrb[0].mxu0
      %v3009 = vadd.f32 %v2920, %v3008
      %3010 = vmatprep.mubr.f32.mxu0 0.0
      %3011 = vmatmul.mubr.f32.gmra.mrb[0].mxu0 %v2481
      %v3012 = vpop.f32.mrb[0].mxu0
      %v3013 = vadd.f32 %v2924, %v3012
      %v3014 = vpop.f32.mrb[0].mxu0
      %v3015 = vadd.f32 %v2926, %v3014
      %3016 = vdwg.mxu0
      %3017 = vmatprep.subr.mxu0 %v1390
      %3018 = vmatpush1.msra.mxu0 %v1389
      %3019 = vmatprep.subr.mxu0 %v1398
      %3020 = vmatpush1.msra.mxu0 %v1397
      %3021 = vmatprep.subr.mxu0 %v1406
      %3022 = vmatpush1.msra.mxu0 %v1405
      %3023 = vmatprep.subr.mxu0 %v1414
      %3024 = vmatpush1.msra.mxu0 %v1413
      %3025 = vmatprep.subr.mxu0 %v1485
      %3026 = vmatpush1.msra.mxu0 %v1484
      %3027 = vmatprep.subr.mxu0 %v1492
      %3028 = vmatpush1.msra.mxu0 %v1491
      %3029 = vmatprep.subr.mxu0 %v1499
      %3030 = vmatpush1.msra.mxu0 %v1498
      %3031 = vmatprep.subr.mxu0 %v1506
      %3032 = vmatpush1.msra.mxu0 %v1505
      %3033 = vmatprep.subr.mxu0 %v1678
      %3034 = vmatpush1.msra.mxu0 %v1677
      %3035 = vmatprep.subr.mxu0 %v1686
      %3036 = vmatpush1.msra.mxu0 %v1685
      %3037 = vmatprep.subr.mxu0 %v1694
      %3038 = vmatpush1.msra.mxu0 %v1693
      %3039 = vmatprep.subr.mxu0 %v1702
      %3040 = vmatpush1.msra.mxu0 %v1701
      %3041 = vmatprep.subr.mxu0 %v1838
      %3042 = vmatpush1.msra.mxu0 %v1837
      %3043 = vmatprep.subr.mxu0 %v1846
      %3044 = vmatpush1.msra.mxu0 %v1845
      %3045 = vmatprep.subr.mxu0 %v1854
      %3046 = vmatpush1.msra.mxu0 %v1853
      %3047 = vmatprep.subr.mxu0 %v1862
      %3048 = vmatpush1.msra.mxu0 %v1861
      %3049 = vmatprep.subr.mxu0 %v1191
      %3050 = vmatpush1.msra.mxu0 %v1189
      %3051 = vmatprep.subr.mxu0 %v1197
      %3052 = vmatpush1.msra.mxu0 %v1195
      %3053 = vmatprep.subr.mxu0 %v1203
      %3054 = vmatpush1.msra.mxu0 %v1201
      %3055 = vmatprep.subr.mxu0 %v1209
      %3056 = vmatpush1.msra.mxu0 %v1207
      %3057 = vmatprep.subr.mxu0 %v1998
      %3058 = vmatpush1.msra.mxu0 %v1997
      %3059 = vmatprep.subr.mxu0 %v2006
      %3060 = vmatpush1.msra.mxu0 %v2005
      %3061 = vmatprep.subr.mxu0 %v2014
      %3062 = vmatpush1.msra.mxu0 %v2013
      %3063 = vmatprep.subr.mxu0 %v2022
      %3064 = vmatpush1.msra.mxu0 %v2021
      %3065 = vmatprep.subr.mxu0 %v2158
      %3066 = vmatpush1.msra.mxu0 %v2157
      %3067 = vmatprep.subr.mxu0 %v2166
      %3068 = vmatpush1.msra.mxu0 %v2165
      %3069 = vmatprep.subr.mxu0 %v2174
      %3070 = vmatpush1.msra.mxu0 %v2173
      %3071 = vmatprep.subr.mxu0 %v2182
      %3072 = vmatpush1.msra.mxu0 %v2181
      %3073 = vmatprep.subr.mxu0 %v2307
      %3074 = vmatpush1.msra.mxu0 %v2253
      %3075 = vmatprep.subr.mxu0 %v2308
      %3076 = vmatpush1.msra.mxu0 %v2260
      %3077 = vmatprep.subr.mxu0 %v2309
      %3078 = vmatpush1.msra.mxu0 %v2267
      %3079 = vmatprep.subr.mxu0 %v2310
      %3080 = vmatpush1.msra.mxu0 %v2274
      %3081 = vmatprep.mubr.f32.mxu0 %v1212
      %3082 = vmatmul.mubr.f32.gmra.mrb[0].mxu0 %v1211
      %v3083 = vpop.f32.mrb[0].mxu0
      %v3084 = vadd.f32 0.0, %v3083
      %v3085 = vpop.f32.mrb[0].mxu0
      %v3086 = vadd.f32 0.0, %v3085
      %3087 = vmatprep.mubr.f32.mxu0 %v1215
      %3088 = vmatmul.mubr.f32.gmra.mrb[0].mxu0 %v1214
      %v3089 = vpop.f32.mrb[0].mxu0
      %v3090 = vadd.f32 0.0, %v3089
      %v3091 = vpop.f32.mrb[0].mxu0
      %v3092 = vadd.f32 0.0, %v3091
      %3093 = vmatprep.mubr.f32.mxu0 %v1218
      %3094 = vmatmul.mubr.f32.gmra.mrb[0].mxu0 %v1217
      %v3095 = vpop.f32.mrb[0].mxu0
      %v3096 = vadd.f32 0.0, %v3095
      %v3097 = vpop.f32.mrb[0].mxu0
      %v3098 = vadd.f32 0.0, %v3097
      %3099 = vmatprep.mubr.f32.mxu0 %v1221
      %3100 = vmatmul.mubr.f32.gmra.mrb[0].mxu0 %v1220
      %v3101 = vpop.f32.mrb[0].mxu0
      %v3102 = vadd.f32 0.0, %v3101
      %v3103 = vpop.f32.mrb[0].mxu0
      %v3104 = vadd.f32 0.0, %v3103
      %3105 = vdwg.mxu0
      %3106 = vmatprep.subr.mxu0 %v2446
      %3107 = vmatpush1.msra.mxu0 %v2445
      %3108 = vmatprep.subr.mxu0 %v2454
      %3109 = vmatpush1.msra.mxu0 %v2453
      %3110 = vmatprep.subr.mxu0 %v2462
      %3111 = vmatpush1.msra.mxu0 %v2461
      %3112 = vmatprep.subr.mxu0 %v2470
      %3113 = vmatpush1.msra.mxu0 %v2469
      %3114 = vmatprep.subr.mxu0 0.0
      %3115 = vmatpush1.msra.mxu0 0.0
      %3116 = vmatprep.subr.mxu0 0.0
      %3117 = vmatpush1.msra.mxu0 0.0
      %3118 = vmatprep.subr.mxu0 0.0
      %3119 = vmatpush1.msra.mxu0 0.0
      %3120 = vmatprep.subr.mxu0 0.0
      %3121 = vmatpush1.msra.mxu0 0.0
      %3122 = vmatprep.subr.mxu0 0.0
      %3123 = vmatpush1.msra.mxu0 0.0
      %3124 = vmatprep.subr.mxu0 0.0
      %3125 = vmatpush1.msra.mxu0 0.0
      %3126 = vmatprep.subr.mxu0 0.0
      %3127 = vmatpush1.msra.mxu0 0.0
      %3128 = vmatprep.subr.mxu0 0.0
      %3129 = vmatpush1.msra.mxu0 0.0
      %3130 = vmatprep.subr.mxu0 0.0
      %3131 = vmatpush1.msra.mxu0 0.0
      %3132 = vmatprep.subr.mxu0 0.0
      %3133 = vmatpush1.msra.mxu0 0.0
      %3134 = vmatprep.subr.mxu0 0.0
      %3135 = vmatpush1.msra.mxu0 0.0
      %3136 = vmatprep.subr.mxu0 0.0
      %3137 = vmatpush1.msra.mxu0 0.0
      %3138 = vmatprep.subr.mxu0 0.0
      %3139 = vmatpush1.msra.mxu0 0.0
      %3140 = vmatprep.subr.mxu0 0.0
      %3141 = vmatpush1.msra.mxu0 0.0
      %3142 = vmatprep.subr.mxu0 0.0
      %3143 = vmatpush1.msra.mxu0 0.0
      %3144 = vmatprep.subr.mxu0 0.0
      %3145 = vmatpush1.msra.mxu0 0.0
      %3146 = vmatprep.subr.mxu0 0.0
      %3147 = vmatpush1.msra.mxu0 0.0
      %3148 = vmatprep.subr.mxu0 0.0
      %3149 = vmatpush1.msra.mxu0 0.0
      %3150 = vmatprep.subr.mxu0 0.0
      %3151 = vmatpush1.msra.mxu0 0.0
      %3152 = vmatprep.subr.mxu0 0.0
      %3153 = vmatpush1.msra.mxu0 0.0
      %3154 = vmatprep.subr.mxu0 0.0
      %3155 = vmatpush1.msra.mxu0 0.0
      %3156 = vmatprep.subr.mxu0 0.0
      %3157 = vmatpush1.msra.mxu0 0.0
      %3158 = vmatprep.subr.mxu0 0.0
      %3159 = vmatpush1.msra.mxu0 0.0
      %3160 = vmatprep.subr.mxu0 0.0
      %3161 = vmatpush1.msra.mxu0 0.0
      %3162 = vmatprep.subr.mxu0 0.0
      %3163 = vmatpush1.msra.mxu0 0.0
      %3164 = vmatprep.subr.mxu0 0.0
      %3165 = vmatpush1.msra.mxu0 0.0
      %3166 = vmatprep.subr.mxu0 0.0
      %3167 = vmatpush1.msra.mxu0 0.0
      %3168 = vmatprep.subr.mxu0 0.0
      %3169 = vmatpush1.msra.mxu0 0.0
      %3170 = vmatprep.mubr.f32.mxu0 0.0
      %3171 = vmatmul.mubr.f32.gmra.mrb[0].mxu0 %v2472
      %v3172 = vpop.f32.mrb[0].mxu0
      %v3173 = vadd.f32 %v3084, %v3172
      %v3174 = vpop.f32.mrb[0].mxu0
      %v3175 = vadd.f32 %v3086, %v3174
      %3176 = vmatprep.mubr.f32.mxu0 0.0
      %3177 = vmatmul.mubr.f32.gmra.mrb[0].mxu0 %v2475
      %v3178 = vpop.f32.mrb[0].mxu0
      %v3179 = vadd.f32 %v3090, %v3178
      %v3180 = vpop.f32.mrb[0].mxu0
      %v3181 = vadd.f32 %v3092, %v3180
      %3182 = vmatprep.mubr.f32.mxu0 0.0
      %3183 = vmatmul.mubr.f32.gmra.mrb[0].mxu0 %v2478
      %v3184 = vpop.f32.mrb[0].mxu0
      %v3185 = vadd.f32 %v3096, %v3184
      %v3186 = vpop.f32.mrb[0].mxu0
      %v3187 = vadd.f32 %v3098, %v3186
      %3188 = vmatprep.mubr.f32.mxu0 0.0
      %3189 = vmatmul.mubr.f32.gmra.mrb[0].mxu0 %v2481
      %v3190 = vpop.f32.mrb[0].mxu0
      %v3191 = vadd.f32 %v3102, %v3190
      %v3192 = vpop.f32.mrb[0].mxu0
      %v3193 = vadd.f32 %v3104, %v3192
      %3194 = vdwg.mxu0
      %v3195 = vmax.f32 %v2639, 0.0
      %v3196 = vmax.f32 %v2641, 0.0
      %v3197 = vmax.f32 %v2817, 0.0
      %v3198 = vmax.f32 %v2819, 0.0
      %v3199 = vmax.f32 %v2995, 0.0
      %v3200 = vmax.f32 %v2997, 0.0
      %v3201 = vmax.f32 %v3173, 0.0
      %v3202 = vmax.f32 %v3175, 0.0
      %v3203 = vmax.f32 %v2645, 0.0
      %v3204 = vmax.f32 %v2647, 0.0
      %v3205 = vmax.f32 %v2823, 0.0
      %v3206 = vmax.f32 %v2825, 0.0
      %v3207 = vmax.f32 %v3001, 0.0
      %v3208 = vmax.f32 %v3003, 0.0
      %v3209 = vmax.f32 %v3179, 0.0
      %v3210 = vmax.f32 %v3181, 0.0
      %v3211 = vmax.f32 %v2651, 0.0
      %v3212 = vmax.f32 %v2653, 0.0
      %v3213 = vmax.f32 %v2829, 0.0
      %v3214 = vmax.f32 %v2831, 0.0
      %v3215 = vmax.f32 %v3007, 0.0
      %v3216 = vmax.f32 %v3009, 0.0
      %v3217 = vmax.f32 %v3185, 0.0
      %v3218 = vmax.f32 %v3187, 0.0
      %v3219 = vmax.f32 %v2657, 0.0
      %v3220 = vmax.f32 %v2659, 0.0
      %v3221 = vmax.f32 %v2835, 0.0
      %v3222 = vmax.f32 %v2837, 0.0
      %v3223 = vmax.f32 %v3013, 0.0
      %v3224 = vmax.f32 %v3015, 0.0
      %v3225 = vmax.f32 %v3191, 0.0
      %v3226 = vmax.f32 %v3193, 0.0
      %v3227 = vld [vmem:[%s4] sm:$0xff]
      %v3228 = vld [vmem:[%s4 + $0x8] sm:$0xff]
      %v3229 = vld [vmem:[%s4 + $0x10] sm:$0xff]
      %v3230 = vld [vmem:[%s4 + $0x18] sm:$0xff]
      %v3231 = vld [vmem:[%s4 + $0x20] sm:$0xff]
      %v3232 = vld [vmem:[%s4 + $0x28] sm:$0xff]
      %v3233 = vld [vmem:[%s4 + $0x30] sm:$0xff]
      %v3234 = vld [vmem:[%s4 + $0x38] sm:$0xff]
      %v3235 = vld [vmem:[%s4 + $0x40] sm:$0xff]
      %v3236 = vld [vmem:[%s4 + $0x48] sm:$0xff]
      %v3237 = vld [vmem:[%s4 + $0x50] sm:$0xff]
      %v3238 = vld [vmem:[%s4 + $0x58] sm:$0xff]
      %3271 = vrot.lane.b32.xlu0 %v3195, 33
      %v3272 = vpop.permute.xlu0 %3271
      %3273 = vrot.lane.b32.xlu0 %v3196, 33
      %v3274 = vpop.permute.xlu0 %3273
      %3275 = vrot.lane.b32.xlu0 %v3197, 33
      %v3276 = vpop.permute.xlu0 %3275
      %3277 = vrot.lane.b32.xlu0 %v3198, 33
      %v3278 = vpop.permute.xlu0 %3277
      %3279 = vrot.lane.b32.xlu0 %v3199, 33
      %v3280 = vpop.permute.xlu0 %3279
      %3281 = vrot.lane.b32.xlu0 %v3200, 33
      %v3282 = vpop.permute.xlu0 %3281
      %3283 = vrot.lane.b32.xlu0 %v3201, 33
      %v3284 = vpop.permute.xlu0 %3283
      %3285 = vrot.lane.b32.xlu0 %v3202, 33
      %v3286 = vpop.permute.xlu0 %3285
      %3287 = vrot.lane.b32.xlu0 %v3203, 33
      %v3288 = vpop.permute.xlu0 %3287
      %3289 = vrot.lane.b32.xlu0 %v3204, 33
      %v3290 = vpop.permute.xlu0 %3289
      %3291 = vrot.lane.b32.xlu0 %v3205, 33
      %v3292 = vpop.permute.xlu0 %3291
      %3293 = vrot.lane.b32.xlu0 %v3206, 33
      %v3294 = vpop.permute.xlu0 %3293
      %3295 = vrot.lane.b32.xlu0 %v3207, 33
      %v3296 = vpop.permute.xlu0 %3295
      %3297 = vrot.lane.b32.xlu0 %v3208, 33
      %v3298 = vpop.permute.xlu0 %3297
      %3299 = vrot.lane.b32.xlu0 %v3209, 33
      %v3300 = vpop.permute.xlu0 %3299
      %3301 = vrot.lane.b32.xlu0 %v3210, 33
      %v3302 = vpop.permute.xlu0 %3301
      %3303 = vrot.lane.b32.xlu0 %v3211, 33
      %v3304 = vpop.permute.xlu0 %3303
      %3305 = vrot.lane.b32.xlu0 %v3212, 33
      %v3306 = vpop.permute.xlu0 %3305
      %3307 = vrot.lane.b32.xlu0 %v3213, 33
      %v3308 = vpop.permute.xlu0 %3307
      %3309 = vrot.lane.b32.xlu0 %v3214, 33
      %v3310 = vpop.permute.xlu0 %3309
      %3311 = vrot.lane.b32.xlu0 %v3215, 33
      %v3312 = vpop.permute.xlu0 %3311
      %3313 = vrot.lane.b32.xlu0 %v3216, 33
      %v3314 = vpop.permute.xlu0 %3313
      %3315 = vrot.lane.b32.xlu0 %v3217, 33
      %v3316 = vpop.permute.xlu0 %3315
      %3317 = vrot.lane.b32.xlu0 %v3218, 33
      %v3318 = vpop.permute.xlu0 %3317
      %3319 = vrot.lane.b32.xlu0 %v3219, 33
      %v3320 = vpop.permute.xlu0 %3319
      %3321 = vrot.lane.b32.xlu0 %v3220, 33
      %v3322 = vpop.permute.xlu0 %3321
      %3323 = vrot.lane.b32.xlu0 %v3221, 33
      %v3324 = vpop.permute.xlu0 %3323
      %3325 = vrot.lane.b32.xlu0 %v3222, 33
      %v3326 = vpop.permute.xlu0 %3325
      %3327 = vrot.lane.b32.xlu0 %v3223, 33
      %v3328 = vpop.permute.xlu0 %3327
      %3329 = vrot.lane.b32.xlu0 %v3224, 33
      %v3330 = vpop.permute.xlu0 %3329
      %3331 = vrot.lane.b32.xlu0 %v3225, 33
      %v3332 = vpop.permute.xlu0 %3331
      %3333 = vrot.lane.b32.xlu0 %v3226, 33
      %v3334 = vpop.permute.xlu0 %3333
      %v3335 = vsel %vm494, %v3272, %v3274
      %v3336 = vsel %vm494, %v3274, %v3276
      %v3337 = vsel %vm494, %v3276, %v3278
      %v3338 = vsel %vm494, %v3278, %v3280
      %v3339 = vsel %vm494, %v3280, %v3282
      %v3340 = vsel %vm494, %v3282, %v3284
      %v3341 = vsel %vm494, %v3284, %v3286
      %v3342 = vsel %vm494, %v3288, %v3290
      %v3343 = vsel %vm494, %v3290, %v3292
      %v3344 = vsel %vm494, %v3292, %v3294
      %v3345 = vsel %vm494, %v3294, %v3296
      %v3346 = vsel %vm494, %v3296, %v3298
      %v3347 = vsel %vm494, %v3298, %v3300
      %v3348 = vsel %vm494, %v3300, %v3302
      %v3349 = vsel %vm494, %v3304, %v3306
      %v3350 = vsel %vm494, %v3306, %v3308
      %v3351 = vsel %vm494, %v3308, %v3310
      %v3352 = vsel %vm494, %v3310, %v3312
      %v3353 = vsel %vm494, %v3312, %v3314
      %v3354 = vsel %vm494, %v3314, %v3316
      %v3355 = vsel %vm494, %v3316, %v3318
      %v3356 = vsel %vm494, %v3320, %v3322
      %v3357 = vsel %vm494, %v3322, %v3324
      %v3358 = vsel %vm494, %v3324, %v3326
      %v3359 = vsel %vm494, %v3326, %v3328
      %v3360 = vsel %vm494, %v3328, %v3330
      %v3361 = vsel %vm494, %v3330, %v3332
      %v3362 = vsel %vm494, %v3332, %v3334
      %v3395 = vsel %vm494, 0.0, %v3272
      %v3396 = vsel %vm494, 0.0, %v3288
      %v3397 = vsel %vm494, 0.0, %v3304
      %v3398 = vsel %vm494, 0.0, %v3320
      %v3399 = vsel %vm519, %v3395, 0.0
      %v3400 = vsel %vm520, %v3335, 0.0
      %v3401 = vsel %vm521, %v3336, 0.0
      %v3402 = vsel %vm522, %v3337, 0.0
      %v3403 = vsel %vm523, %v3338, 0.0
      %v3404 = vsel %vm524, %v3339, 0.0
      %v3405 = vsel %vm525, %v3340, 0.0
      %v3406 = vsel %vm526, %v3341, 0.0
      %v3407 = vsel %vm519, %v3396, 0.0
      %v3408 = vsel %vm520, %v3342, 0.0
      %v3409 = vsel %vm521, %v3343, 0.0
      %v3410 = vsel %vm522, %v3344, 0.0
      %v3411 = vsel %vm523, %v3345, 0.0
      %v3412 = vsel %vm524, %v3346, 0.0
      %v3413 = vsel %vm525, %v3347, 0.0
      %v3414 = vsel %vm526, %v3348, 0.0
      %v3415 = vsel %vm519, %v3397, 0.0
      %v3416 = vsel %vm520, %v3349, 0.0
      %v3417 = vsel %vm521, %v3350, 0.0
      %v3418 = vsel %vm522, %v3351, 0.0
      %v3419 = vsel %vm523, %v3352, 0.0
      %v3420 = vsel %vm524, %v3353, 0.0
      %v3421 = vsel %vm525, %v3354, 0.0
      %v3422 = vsel %vm526, %v3355, 0.0
      %v3423 = vsel %vm519, %v3398, 0.0
      %v3424 = vsel %vm520, %v3356, 0.0
      %v3425 = vsel %vm521, %v3357, 0.0
      %v3426 = vsel %vm522, %v3358, 0.0
      %v3427 = vsel %vm523, %v3359, 0.0
      %v3428 = vsel %vm524, %v3360, 0.0
      %v3429 = vsel %vm525, %v3361, 0.0
      %v3430 = vsel %vm526, %v3362, 0.0
      %3431 = vrot.lane.b32.xlu0 %v3195, 32
      %v3432 = vpop.permute.xlu0 %3431
      %3433 = vrot.lane.b32.xlu0 %v3196, 32
      %v3434 = vpop.permute.xlu0 %3433
      %3435 = vrot.lane.b32.xlu0 %v3197, 32
      %v3436 = vpop.permute.xlu0 %3435
      %3437 = vrot.lane.b32.xlu0 %v3198, 32
      %v3438 = vpop.permute.xlu0 %3437
      %3439 = vrot.lane.b32.xlu0 %v3199, 32
      %v3440 = vpop.permute.xlu0 %3439
      %3441 = vrot.lane.b32.xlu0 %v3200, 32
      %v3442 = vpop.permute.xlu0 %3441
      %3443 = vrot.lane.b32.xlu0 %v3201, 32
      %v3444 = vpop.permute.xlu0 %3443
      %3445 = vrot.lane.b32.xlu0 %v3202, 32
      %v3446 = vpop.permute.xlu0 %3445
      %3447 = vrot.lane.b32.xlu0 %v3203, 32
      %v3448 = vpop.permute.xlu0 %3447
      %3449 = vrot.lane.b32.xlu0 %v3204, 32
      %v3450 = vpop.permute.xlu0 %3449
      %3451 = vrot.lane.b32.xlu0 %v3205, 32
      %v3452 = vpop.permute.xlu0 %3451
      %3453 = vrot.lane.b32.xlu0 %v3206, 32
      %v3454 = vpop.permute.xlu0 %3453
      %3455 = vrot.lane.b32.xlu0 %v3207, 32
      %v3456 = vpop.permute.xlu0 %3455
      %3457 = vrot.lane.b32.xlu0 %v3208, 32
      %v3458 = vpop.permute.xlu0 %3457
      %3459 = vrot.lane.b32.xlu0 %v3209, 32
      %v3460 = vpop.permute.xlu0 %3459
      %3461 = vrot.lane.b32.xlu0 %v3210, 32
      %v3462 = vpop.permute.xlu0 %3461
      %3463 = vrot.lane.b32.xlu0 %v3211, 32
      %v3464 = vpop.permute.xlu0 %3463
      %3465 = vrot.lane.b32.xlu0 %v3212, 32
      %v3466 = vpop.permute.xlu0 %3465
      %3467 = vrot.lane.b32.xlu0 %v3213, 32
      %v3468 = vpop.permute.xlu0 %3467
      %3469 = vrot.lane.b32.xlu0 %v3214, 32
      %v3470 = vpop.permute.xlu0 %3469
      %3471 = vrot.lane.b32.xlu0 %v3215, 32
      %v3472 = vpop.permute.xlu0 %3471
      %3473 = vrot.lane.b32.xlu0 %v3216, 32
      %v3474 = vpop.permute.xlu0 %3473
      %3475 = vrot.lane.b32.xlu0 %v3217, 32
      %v3476 = vpop.permute.xlu0 %3475
      %3477 = vrot.lane.b32.xlu0 %v3218, 32
      %v3478 = vpop.permute.xlu0 %3477
      %3479 = vrot.lane.b32.xlu0 %v3219, 32
      %v3480 = vpop.permute.xlu0 %3479
      %3481 = vrot.lane.b32.xlu0 %v3220, 32
      %v3482 = vpop.permute.xlu0 %3481
      %3483 = vrot.lane.b32.xlu0 %v3221, 32
      %v3484 = vpop.permute.xlu0 %3483
      %3485 = vrot.lane.b32.xlu0 %v3222, 32
      %v3486 = vpop.permute.xlu0 %3485
      %3487 = vrot.lane.b32.xlu0 %v3223, 32
      %v3488 = vpop.permute.xlu0 %3487
      %3489 = vrot.lane.b32.xlu0 %v3224, 32
      %v3490 = vpop.permute.xlu0 %3489
      %3491 = vrot.lane.b32.xlu0 %v3225, 32
      %v3492 = vpop.permute.xlu0 %3491
      %3493 = vrot.lane.b32.xlu0 %v3226, 32
      %v3494 = vpop.permute.xlu0 %3493
      %v3495 = vsel %vm551, %v3432, %v3434
      %v3496 = vsel %vm551, %v3434, %v3436
      %v3497 = vsel %vm551, %v3436, %v3438
      %v3498 = vsel %vm551, %v3438, %v3440
      %v3499 = vsel %vm551, %v3440, %v3442
      %v3500 = vsel %vm551, %v3442, %v3444
      %v3501 = vsel %vm551, %v3444, %v3446
      %v3502 = vsel %vm551, %v3448, %v3450
      %v3503 = vsel %vm551, %v3450, %v3452
      %v3504 = vsel %vm551, %v3452, %v3454
      %v3505 = vsel %vm551, %v3454, %v3456
      %v3506 = vsel %vm551, %v3456, %v3458
      %v3507 = vsel %vm551, %v3458, %v3460
      %v3508 = vsel %vm551, %v3460, %v3462
      %v3509 = vsel %vm551, %v3464, %v3466
      %v3510 = vsel %vm551, %v3466, %v3468
      %v3511 = vsel %vm551, %v3468, %v3470
      %v3512 = vsel %vm551, %v3470, %v3472
      %v3513 = vsel %vm551, %v3472, %v3474
      %v3514 = vsel %vm551, %v3474, %v3476
      %v3515 = vsel %vm551, %v3476, %v3478
      %v3516 = vsel %vm551, %v3480, %v3482
      %v3517 = vsel %vm551, %v3482, %v3484
      %v3518 = vsel %vm551, %v3484, %v3486
      %v3519 = vsel %vm551, %v3486, %v3488
      %v3520 = vsel %vm551, %v3488, %v3490
      %v3521 = vsel %vm551, %v3490, %v3492
      %v3522 = vsel %vm551, %v3492, %v3494
      %v3555 = vsel %vm551, 0.0, %v3432
      %v3556 = vsel %vm551, 0.0, %v3448
      %v3557 = vsel %vm551, 0.0, %v3464
      %v3558 = vsel %vm551, 0.0, %v3480
      %3559 = vrot.lane.b32.xlu0 %v3195, 31
      %v3560 = vpop.permute.xlu0 %3559
      %3561 = vrot.lane.b32.xlu0 %v3196, 31
      %v3562 = vpop.permute.xlu0 %3561
      %3563 = vrot.lane.b32.xlu0 %v3197, 31
      %v3564 = vpop.permute.xlu0 %3563
      %3565 = vrot.lane.b32.xlu0 %v3198, 31
      %v3566 = vpop.permute.xlu0 %3565
      %3567 = vrot.lane.b32.xlu0 %v3199, 31
      %v3568 = vpop.permute.xlu0 %3567
      %3569 = vrot.lane.b32.xlu0 %v3200, 31
      %v3570 = vpop.permute.xlu0 %3569
      %3571 = vrot.lane.b32.xlu0 %v3201, 31
      %v3572 = vpop.permute.xlu0 %3571
      %3573 = vrot.lane.b32.xlu0 %v3202, 31
      %v3574 = vpop.permute.xlu0 %3573
      %3575 = vrot.lane.b32.xlu0 %v3203, 31
      %v3576 = vpop.permute.xlu0 %3575
      %3577 = vrot.lane.b32.xlu0 %v3204, 31
      %v3578 = vpop.permute.xlu0 %3577
      %3579 = vrot.lane.b32.xlu0 %v3205, 31
      %v3580 = vpop.permute.xlu0 %3579
      %3581 = vrot.lane.b32.xlu0 %v3206, 31
      %v3582 = vpop.permute.xlu0 %3581
      %3583 = vrot.lane.b32.xlu0 %v3207, 31
      %v3584 = vpop.permute.xlu0 %3583
      %3585 = vrot.lane.b32.xlu0 %v3208, 31
      %v3586 = vpop.permute.xlu0 %3585
      %3587 = vrot.lane.b32.xlu0 %v3209, 31
      %v3588 = vpop.permute.xlu0 %3587
      %3589 = vrot.lane.b32.xlu0 %v3210, 31
      %v3590 = vpop.permute.xlu0 %3589
      %3591 = vrot.lane.b32.xlu0 %v3211, 31
      %v3592 = vpop.permute.xlu0 %3591
      %3593 = vrot.lane.b32.xlu0 %v3212, 31
      %v3594 = vpop.permute.xlu0 %3593
      %3595 = vrot.lane.b32.xlu0 %v3213, 31
      %v3596 = vpop.permute.xlu0 %3595
      %3597 = vrot.lane.b32.xlu0 %v3214, 31
      %v3598 = vpop.permute.xlu0 %3597
      %3599 = vrot.lane.b32.xlu0 %v3215, 31
      %v3600 = vpop.permute.xlu0 %3599
      %3601 = vrot.lane.b32.xlu0 %v3216, 31
      %v3602 = vpop.permute.xlu0 %3601
      %3603 = vrot.lane.b32.xlu0 %v3217, 31
      %v3604 = vpop.permute.xlu0 %3603
      %3605 = vrot.lane.b32.xlu0 %v3218, 31
      %v3606 = vpop.permute.xlu0 %3605
      %3607 = vrot.lane.b32.xlu0 %v3219, 31
      %v3608 = vpop.permute.xlu0 %3607
      %3609 = vrot.lane.b32.xlu0 %v3220, 31
      %v3610 = vpop.permute.xlu0 %3609
      %3611 = vrot.lane.b32.xlu0 %v3221, 31
      %v3612 = vpop.permute.xlu0 %3611
      %3613 = vrot.lane.b32.xlu0 %v3222, 31
      %v3614 = vpop.permute.xlu0 %3613
      %3615 = vrot.lane.b32.xlu0 %v3223, 31
      %v3616 = vpop.permute.xlu0 %3615
      %3617 = vrot.lane.b32.xlu0 %v3224, 31
      %v3618 = vpop.permute.xlu0 %3617
      %3619 = vrot.lane.b32.xlu0 %v3225, 31
      %v3620 = vpop.permute.xlu0 %3619
      %3621 = vrot.lane.b32.xlu0 %v3226, 31
      %v3622 = vpop.permute.xlu0 %3621
      %v3623 = vsel %vm584, %v3560, %v3562
      %v3624 = vsel %vm584, %v3562, %v3564
      %v3625 = vsel %vm584, %v3564, %v3566
      %v3626 = vsel %vm584, %v3566, %v3568
      %v3627 = vsel %vm584, %v3568, %v3570
      %v3628 = vsel %vm584, %v3570, %v3572
      %v3629 = vsel %vm584, %v3572, %v3574
      %v3630 = vsel %vm584, %v3576, %v3578
      %v3631 = vsel %vm584, %v3578, %v3580
      %v3632 = vsel %vm584, %v3580, %v3582
      %v3633 = vsel %vm584, %v3582, %v3584
      %v3634 = vsel %vm584, %v3584, %v3586
      %v3635 = vsel %vm584, %v3586, %v3588
      %v3636 = vsel %vm584, %v3588, %v3590
      %v3637 = vsel %vm584, %v3592, %v3594
      %v3638 = vsel %vm584, %v3594, %v3596
      %v3639 = vsel %vm584, %v3596, %v3598
      %v3640 = vsel %vm584, %v3598, %v3600
      %v3641 = vsel %vm584, %v3600, %v3602
      %v3642 = vsel %vm584, %v3602, %v3604
      %v3643 = vsel %vm584, %v3604, %v3606
      %v3644 = vsel %vm584, %v3608, %v3610
      %v3645 = vsel %vm584, %v3610, %v3612
      %v3646 = vsel %vm584, %v3612, %v3614
      %v3647 = vsel %vm584, %v3614, %v3616
      %v3648 = vsel %vm584, %v3616, %v3618
      %v3649 = vsel %vm584, %v3618, %v3620
      %v3650 = vsel %vm584, %v3620, %v3622
      %v3683 = vsel %vm584, 0.0, %v3560
      %v3684 = vsel %vm584, 0.0, %v3576
      %v3685 = vsel %vm584, 0.0, %v3592
      %v3686 = vsel %vm584, 0.0, %v3608
      %v3687 = vsel %vm609, %v3683, 0.0
      %v3688 = vsel %vm610, %v3623, 0.0
      %v3689 = vsel %vm611, %v3624, 0.0
      %v3690 = vsel %vm612, %v3625, 0.0
      %v3691 = vsel %vm613, %v3626, 0.0
      %v3692 = vsel %vm614, %v3627, 0.0
      %v3693 = vsel %vm615, %v3628, 0.0
      %v3694 = vsel %vm616, %v3629, 0.0
      %v3695 = vsel %vm609, %v3684, 0.0
      %v3696 = vsel %vm610, %v3630, 0.0
      %v3697 = vsel %vm611, %v3631, 0.0
      %v3698 = vsel %vm612, %v3632, 0.0
      %v3699 = vsel %vm613, %v3633, 0.0
      %v3700 = vsel %vm614, %v3634, 0.0
      %v3701 = vsel %vm615, %v3635, 0.0
      %v3702 = vsel %vm616, %v3636, 0.0
      %v3703 = vsel %vm609, %v3685, 0.0
      %v3704 = vsel %vm610, %v3637, 0.0
      %v3705 = vsel %vm611, %v3638, 0.0
      %v3706 = vsel %vm612, %v3639, 0.0
      %v3707 = vsel %vm613, %v3640, 0.0
      %v3708 = vsel %vm614, %v3641, 0.0
      %v3709 = vsel %vm615, %v3642, 0.0
      %v3710 = vsel %vm616, %v3643, 0.0
      %v3711 = vsel %vm609, %v3686, 0.0
      %v3712 = vsel %vm610, %v3644, 0.0
      %v3713 = vsel %vm611, %v3645, 0.0
      %v3714 = vsel %vm612, %v3646, 0.0
      %v3715 = vsel %vm613, %v3647, 0.0
      %v3716 = vsel %vm614, %v3648, 0.0
      %v3717 = vsel %vm615, %v3649, 0.0
      %v3718 = vsel %vm616, %v3650, 0.0
      %3719 = vrot.lane.b32.xlu0 %v3195, 1
      %v3720 = vpop.permute.xlu0 %3719
      %3721 = vrot.lane.b32.xlu0 %v3196, 1
      %v3722 = vpop.permute.xlu0 %3721
      %3723 = vrot.lane.b32.xlu0 %v3197, 1
      %v3724 = vpop.permute.xlu0 %3723
      %3725 = vrot.lane.b32.xlu0 %v3198, 1
      %v3726 = vpop.permute.xlu0 %3725
      %3727 = vrot.lane.b32.xlu0 %v3199, 1
      %v3728 = vpop.permute.xlu0 %3727
      %3729 = vrot.lane.b32.xlu0 %v3200, 1
      %v3730 = vpop.permute.xlu0 %3729
      %3731 = vrot.lane.b32.xlu0 %v3201, 1
      %v3732 = vpop.permute.xlu0 %3731
      %3733 = vrot.lane.b32.xlu0 %v3202, 1
      %v3734 = vpop.permute.xlu0 %3733
      %3735 = vrot.lane.b32.xlu0 %v3203, 1
      %v3736 = vpop.permute.xlu0 %3735
      %3737 = vrot.lane.b32.xlu0 %v3204, 1
      %v3738 = vpop.permute.xlu0 %3737
      %3739 = vrot.lane.b32.xlu0 %v3205, 1
      %v3740 = vpop.permute.xlu0 %3739
      %3741 = vrot.lane.b32.xlu0 %v3206, 1
      %v3742 = vpop.permute.xlu0 %3741
      %3743 = vrot.lane.b32.xlu0 %v3207, 1
      %v3744 = vpop.permute.xlu0 %3743
      %3745 = vrot.lane.b32.xlu0 %v3208, 1
      %v3746 = vpop.permute.xlu0 %3745
      %3747 = vrot.lane.b32.xlu0 %v3209, 1
      %v3748 = vpop.permute.xlu0 %3747
      %3749 = vrot.lane.b32.xlu0 %v3210, 1
      %v3750 = vpop.permute.xlu0 %3749
      %3751 = vrot.lane.b32.xlu0 %v3211, 1
      %v3752 = vpop.permute.xlu0 %3751
      %3753 = vrot.lane.b32.xlu0 %v3212, 1
      %v3754 = vpop.permute.xlu0 %3753
      %3755 = vrot.lane.b32.xlu0 %v3213, 1
      %v3756 = vpop.permute.xlu0 %3755
      %3757 = vrot.lane.b32.xlu0 %v3214, 1
      %v3758 = vpop.permute.xlu0 %3757
      %3759 = vrot.lane.b32.xlu0 %v3215, 1
      %v3760 = vpop.permute.xlu0 %3759
      %3761 = vrot.lane.b32.xlu0 %v3216, 1
      %v3762 = vpop.permute.xlu0 %3761
      %3763 = vrot.lane.b32.xlu0 %v3217, 1
      %v3764 = vpop.permute.xlu0 %3763
      %3765 = vrot.lane.b32.xlu0 %v3218, 1
      %v3766 = vpop.permute.xlu0 %3765
      %3767 = vrot.lane.b32.xlu0 %v3219, 1
      %v3768 = vpop.permute.xlu0 %3767
      %3769 = vrot.lane.b32.xlu0 %v3220, 1
      %v3770 = vpop.permute.xlu0 %3769
      %3771 = vrot.lane.b32.xlu0 %v3221, 1
      %v3772 = vpop.permute.xlu0 %3771
      %3773 = vrot.lane.b32.xlu0 %v3222, 1
      %v3774 = vpop.permute.xlu0 %3773
      %3775 = vrot.lane.b32.xlu0 %v3223, 1
      %v3776 = vpop.permute.xlu0 %3775
      %3777 = vrot.lane.b32.xlu0 %v3224, 1
      %v3778 = vpop.permute.xlu0 %3777
      %3779 = vrot.lane.b32.xlu0 %v3225, 1
      %v3780 = vpop.permute.xlu0 %3779
      %3781 = vrot.lane.b32.xlu0 %v3226, 1
      %v3782 = vpop.permute.xlu0 %3781
      %v3783 = vsel %vm641, %v3720, %v3722
      %v3784 = vsel %vm641, %v3722, %v3724
      %v3785 = vsel %vm641, %v3724, %v3726
      %v3786 = vsel %vm641, %v3726, %v3728
      %v3787 = vsel %vm641, %v3728, %v3730
      %v3788 = vsel %vm641, %v3730, %v3732
      %v3789 = vsel %vm641, %v3732, %v3734
      %v3790 = vsel %vm641, %v3736, %v3738
      %v3791 = vsel %vm641, %v3738, %v3740
      %v3792 = vsel %vm641, %v3740, %v3742
      %v3793 = vsel %vm641, %v3742, %v3744
      %v3794 = vsel %vm641, %v3744, %v3746
      %v3795 = vsel %vm641, %v3746, %v3748
      %v3796 = vsel %vm641, %v3748, %v3750
      %v3797 = vsel %vm641, %v3752, %v3754
      %v3798 = vsel %vm641, %v3754, %v3756
      %v3799 = vsel %vm641, %v3756, %v3758
      %v3800 = vsel %vm641, %v3758, %v3760
      %v3801 = vsel %vm641, %v3760, %v3762
      %v3802 = vsel %vm641, %v3762, %v3764
      %v3803 = vsel %vm641, %v3764, %v3766
      %v3804 = vsel %vm641, %v3768, %v3770
      %v3805 = vsel %vm641, %v3770, %v3772
      %v3806 = vsel %vm641, %v3772, %v3774
      %v3807 = vsel %vm641, %v3774, %v3776
      %v3808 = vsel %vm641, %v3776, %v3778
      %v3809 = vsel %vm641, %v3778, %v3780
      %v3810 = vsel %vm641, %v3780, %v3782
      %v3843 = vsel %vm641, 0.0, %v3720
      %v3844 = vsel %vm641, 0.0, %v3736
      %v3845 = vsel %vm641, 0.0, %v3752
      %v3846 = vsel %vm641, 0.0, %v3768
      %v3847 = vsel %vm519, %v3843, 0.0
      %v3848 = vsel %vm520, %v3783, 0.0
      %v3849 = vsel %vm521, %v3784, 0.0
      %v3850 = vsel %vm522, %v3785, 0.0
      %v3851 = vsel %vm523, %v3786, 0.0
      %v3852 = vsel %vm524, %v3787, 0.0
      %v3853 = vsel %vm525, %v3788, 0.0
      %v3854 = vsel %vm526, %v3789, 0.0
      %v3855 = vsel %vm519, %v3844, 0.0
      %v3856 = vsel %vm520, %v3790, 0.0
      %v3857 = vsel %vm521, %v3791, 0.0
      %v3858 = vsel %vm522, %v3792, 0.0
      %v3859 = vsel %vm523, %v3793, 0.0
      %v3860 = vsel %vm524, %v3794, 0.0
      %v3861 = vsel %vm525, %v3795, 0.0
      %v3862 = vsel %vm526, %v3796, 0.0
      %v3863 = vsel %vm519, %v3845, 0.0
      %v3864 = vsel %vm520, %v3797, 0.0
      %v3865 = vsel %vm521, %v3798, 0.0
      %v3866 = vsel %vm522, %v3799, 0.0
      %v3867 = vsel %vm523, %v3800, 0.0
      %v3868 = vsel %vm524, %v3801, 0.0
      %v3869 = vsel %vm525, %v3802, 0.0
      %v3870 = vsel %vm526, %v3803, 0.0
      %v3871 = vsel %vm519, %v3846, 0.0
      %v3872 = vsel %vm520, %v3804, 0.0
      %v3873 = vsel %vm521, %v3805, 0.0
      %v3874 = vsel %vm522, %v3806, 0.0
      %v3875 = vsel %vm523, %v3807, 0.0
      %v3876 = vsel %vm524, %v3808, 0.0
      %v3877 = vsel %vm525, %v3809, 0.0
      %v3878 = vsel %vm526, %v3810, 0.0
      %3879 = vrot.lane.b32.xlu0 %v3195, 127
      %v3880 = vpop.permute.xlu0 %3879
      %3881 = vrot.lane.b32.xlu0 %v3196, 127
      %v3882 = vpop.permute.xlu0 %3881
      %3883 = vrot.lane.b32.xlu0 %v3197, 127
      %v3884 = vpop.permute.xlu0 %3883
      %3885 = vrot.lane.b32.xlu0 %v3198, 127
      %v3886 = vpop.permute.xlu0 %3885
      %3887 = vrot.lane.b32.xlu0 %v3199, 127
      %v3888 = vpop.permute.xlu0 %3887
      %3889 = vrot.lane.b32.xlu0 %v3200, 127
      %v3890 = vpop.permute.xlu0 %3889
      %3891 = vrot.lane.b32.xlu0 %v3201, 127
      %v3892 = vpop.permute.xlu0 %3891
      %3893 = vrot.lane.b32.xlu0 %v3202, 127
      %v3894 = vpop.permute.xlu0 %3893
      %3895 = vrot.lane.b32.xlu0 %v3203, 127
      %v3896 = vpop.permute.xlu0 %3895
      %3897 = vrot.lane.b32.xlu0 %v3204, 127
      %v3898 = vpop.permute.xlu0 %3897
      %3899 = vrot.lane.b32.xlu0 %v3205, 127
      %v3900 = vpop.permute.xlu0 %3899
      %3901 = vrot.lane.b32.xlu0 %v3206, 127
      %v3902 = vpop.permute.xlu0 %3901
      %3903 = vrot.lane.b32.xlu0 %v3207, 127
      %v3904 = vpop.permute.xlu0 %3903
      %3905 = vrot.lane.b32.xlu0 %v3208, 127
      %v3906 = vpop.permute.xlu0 %3905
      %3907 = vrot.lane.b32.xlu0 %v3209, 127
      %v3908 = vpop.permute.xlu0 %3907
      %3909 = vrot.lane.b32.xlu0 %v3210, 127
      %v3910 = vpop.permute.xlu0 %3909
      %3911 = vrot.lane.b32.xlu0 %v3211, 127
      %v3912 = vpop.permute.xlu0 %3911
      %3913 = vrot.lane.b32.xlu0 %v3212, 127
      %v3914 = vpop.permute.xlu0 %3913
      %3915 = vrot.lane.b32.xlu0 %v3213, 127
      %v3916 = vpop.permute.xlu0 %3915
      %3917 = vrot.lane.b32.xlu0 %v3214, 127
      %v3918 = vpop.permute.xlu0 %3917
      %3919 = vrot.lane.b32.xlu0 %v3215, 127
      %v3920 = vpop.permute.xlu0 %3919
      %3921 = vrot.lane.b32.xlu0 %v3216, 127
      %v3922 = vpop.permute.xlu0 %3921
      %3923 = vrot.lane.b32.xlu0 %v3217, 127
      %v3924 = vpop.permute.xlu0 %3923
      %3925 = vrot.lane.b32.xlu0 %v3218, 127
      %v3926 = vpop.permute.xlu0 %3925
      %3927 = vrot.lane.b32.xlu0 %v3219, 127
      %v3928 = vpop.permute.xlu0 %3927
      %3929 = vrot.lane.b32.xlu0 %v3220, 127
      %v3930 = vpop.permute.xlu0 %3929
      %3931 = vrot.lane.b32.xlu0 %v3221, 127
      %v3932 = vpop.permute.xlu0 %3931
      %3933 = vrot.lane.b32.xlu0 %v3222, 127
      %v3934 = vpop.permute.xlu0 %3933
      %3935 = vrot.lane.b32.xlu0 %v3223, 127
      %v3936 = vpop.permute.xlu0 %3935
      %3937 = vrot.lane.b32.xlu0 %v3224, 127
      %v3938 = vpop.permute.xlu0 %3937
      %3939 = vrot.lane.b32.xlu0 %v3225, 127
      %v3940 = vpop.permute.xlu0 %3939
      %3941 = vrot.lane.b32.xlu0 %v3226, 127
      %v3942 = vpop.permute.xlu0 %3941
      %v3943 = vsel %vm682, %v3880, %v3882
      %v3944 = vsel %vm682, %v3882, %v3884
      %v3945 = vsel %vm682, %v3884, %v3886
      %v3946 = vsel %vm682, %v3886, %v3888
      %v3947 = vsel %vm682, %v3888, %v3890
      %v3948 = vsel %vm682, %v3890, %v3892
      %v3949 = vsel %vm682, %v3892, %v3894
      %v3950 = vsel %vm682, %v3896, %v3898
      %v3951 = vsel %vm682, %v3898, %v3900
      %v3952 = vsel %vm682, %v3900, %v3902
      %v3953 = vsel %vm682, %v3902, %v3904
      %v3954 = vsel %vm682, %v3904, %v3906
      %v3955 = vsel %vm682, %v3906, %v3908
      %v3956 = vsel %vm682, %v3908, %v3910
      %v3957 = vsel %vm682, %v3912, %v3914
      %v3958 = vsel %vm682, %v3914, %v3916
      %v3959 = vsel %vm682, %v3916, %v3918
      %v3960 = vsel %vm682, %v3918, %v3920
      %v3961 = vsel %vm682, %v3920, %v3922
      %v3962 = vsel %vm682, %v3922, %v3924
      %v3963 = vsel %vm682, %v3924, %v3926
      %v3964 = vsel %vm682, %v3928, %v3930
      %v3965 = vsel %vm682, %v3930, %v3932
      %v3966 = vsel %vm682, %v3932, %v3934
      %v3967 = vsel %vm682, %v3934, %v3936
      %v3968 = vsel %vm682, %v3936, %v3938
      %v3969 = vsel %vm682, %v3938, %v3940
      %v3970 = vsel %vm682, %v3940, %v3942
      %v4003 = vsel %vm682, %v3894, 0.0
      %v4004 = vsel %vm682, %v3910, 0.0
      %v4005 = vsel %vm682, %v3926, 0.0
      %v4006 = vsel %vm682, %v3942, 0.0
      %v4007 = vsel %vm609, %v3943, 0.0
      %v4008 = vsel %vm610, %v3944, 0.0
      %v4009 = vsel %vm611, %v3945, 0.0
      %v4010 = vsel %vm612, %v3946, 0.0
      %v4011 = vsel %vm613, %v3947, 0.0
      %v4012 = vsel %vm614, %v3948, 0.0
      %v4013 = vsel %vm615, %v3949, 0.0
      %v4014 = vsel %vm616, %v4003, 0.0
      %v4015 = vsel %vm609, %v3950, 0.0
      %v4016 = vsel %vm610, %v3951, 0.0
      %v4017 = vsel %vm611, %v3952, 0.0
      %v4018 = vsel %vm612, %v3953, 0.0
      %v4019 = vsel %vm613, %v3954, 0.0
      %v4020 = vsel %vm614, %v3955, 0.0
      %v4021 = vsel %vm615, %v3956, 0.0
      %v4022 = vsel %vm616, %v4004, 0.0
      %v4023 = vsel %vm609, %v3957, 0.0
      %v4024 = vsel %vm610, %v3958, 0.0
      %v4025 = vsel %vm611, %v3959, 0.0
      %v4026 = vsel %vm612, %v3960, 0.0
      %v4027 = vsel %vm613, %v3961, 0.0
      %v4028 = vsel %vm614, %v3962, 0.0
      %v4029 = vsel %vm615, %v3963, 0.0
      %v4030 = vsel %vm616, %v4005, 0.0
      %v4031 = vsel %vm609, %v3964, 0.0
      %v4032 = vsel %vm610, %v3965, 0.0
      %v4033 = vsel %vm611, %v3966, 0.0
      %v4034 = vsel %vm612, %v3967, 0.0
      %v4035 = vsel %vm613, %v3968, 0.0
      %v4036 = vsel %vm614, %v3969, 0.0
      %v4037 = vsel %vm615, %v3970, 0.0
      %v4038 = vsel %vm616, %v4006, 0.0
      %4039 = vrot.lane.b32.xlu0 %v3195, 97
      %v4040 = vpop.permute.xlu0 %4039
      %4041 = vrot.lane.b32.xlu0 %v3196, 97
      %v4042 = vpop.permute.xlu0 %4041
      %4043 = vrot.lane.b32.xlu0 %v3197, 97
      %v4044 = vpop.permute.xlu0 %4043
      %4045 = vrot.lane.b32.xlu0 %v3198, 97
      %v4046 = vpop.permute.xlu0 %4045
      %4047 = vrot.lane.b32.xlu0 %v3199, 97
      %v4048 = vpop.permute.xlu0 %4047
      %4049 = vrot.lane.b32.xlu0 %v3200, 97
      %v4050 = vpop.permute.xlu0 %4049
      %4051 = vrot.lane.b32.xlu0 %v3201, 97
      %v4052 = vpop.permute.xlu0 %4051
      %4053 = vrot.lane.b32.xlu0 %v3202, 97
      %v4054 = vpop.permute.xlu0 %4053
      %4055 = vrot.lane.b32.xlu0 %v3203, 97
      %v4056 = vpop.permute.xlu0 %4055
      %4057 = vrot.lane.b32.xlu0 %v3204, 97
      %v4058 = vpop.permute.xlu0 %4057
      %4059 = vrot.lane.b32.xlu0 %v3205, 97
      %v4060 = vpop.permute.xlu0 %4059
      %4061 = vrot.lane.b32.xlu0 %v3206, 97
      %v4062 = vpop.permute.xlu0 %4061
      %4063 = vrot.lane.b32.xlu0 %v3207, 97
      %v4064 = vpop.permute.xlu0 %4063
      %4065 = vrot.lane.b32.xlu0 %v3208, 97
      %v4066 = vpop.permute.xlu0 %4065
      %4067 = vrot.lane.b32.xlu0 %v3209, 97
      %v4068 = vpop.permute.xlu0 %4067
      %4069 = vrot.lane.b32.xlu0 %v3210, 97
      %v4070 = vpop.permute.xlu0 %4069
      %4071 = vrot.lane.b32.xlu0 %v3211, 97
      %v4072 = vpop.permute.xlu0 %4071
      %4073 = vrot.lane.b32.xlu0 %v3212, 97
      %v4074 = vpop.permute.xlu0 %4073
      %4075 = vrot.lane.b32.xlu0 %v3213, 97
      %v4076 = vpop.permute.xlu0 %4075
      %4077 = vrot.lane.b32.xlu0 %v3214, 97
      %v4078 = vpop.permute.xlu0 %4077
      %4079 = vrot.lane.b32.xlu0 %v3215, 97
      %v4080 = vpop.permute.xlu0 %4079
      %4081 = vrot.lane.b32.xlu0 %v3216, 97
      %v4082 = vpop.permute.xlu0 %4081
      %4083 = vrot.lane.b32.xlu0 %v3217, 97
      %v4084 = vpop.permute.xlu0 %4083
      %4085 = vrot.lane.b32.xlu0 %v3218, 97
      %v4086 = vpop.permute.xlu0 %4085
      %4087 = vrot.lane.b32.xlu0 %v3219, 97
      %v4088 = vpop.permute.xlu0 %4087
      %4089 = vrot.lane.b32.xlu0 %v3220, 97
      %v4090 = vpop.permute.xlu0 %4089
      %4091 = vrot.lane.b32.xlu0 %v3221, 97
      %v4092 = vpop.permute.xlu0 %4091
      %4093 = vrot.lane.b32.xlu0 %v3222, 97
      %v4094 = vpop.permute.xlu0 %4093
      %4095 = vrot.lane.b32.xlu0 %v3223, 97
      %v4096 = vpop.permute.xlu0 %4095
      %4097 = vrot.lane.b32.xlu0 %v3224, 97
      %v4098 = vpop.permute.xlu0 %4097
      %4099 = vrot.lane.b32.xlu0 %v3225, 97
      %v4100 = vpop.permute.xlu0 %4099
      %4101 = vrot.lane.b32.xlu0 %v3226, 97
      %v4102 = vpop.permute.xlu0 %4101
      %v4103 = vsel %vm723, %v4040, %v4042
      %v4104 = vsel %vm723, %v4042, %v4044
      %v4105 = vsel %vm723, %v4044, %v4046
      %v4106 = vsel %vm723, %v4046, %v4048
      %v4107 = vsel %vm723, %v4048, %v4050
      %v4108 = vsel %vm723, %v4050, %v4052
      %v4109 = vsel %vm723, %v4052, %v4054
      %v4110 = vsel %vm723, %v4056, %v4058
      %v4111 = vsel %vm723, %v4058, %v4060
      %v4112 = vsel %vm723, %v4060, %v4062
      %v4113 = vsel %vm723, %v4062, %v4064
      %v4114 = vsel %vm723, %v4064, %v4066
      %v4115 = vsel %vm723, %v4066, %v4068
      %v4116 = vsel %vm723, %v4068, %v4070
      %v4117 = vsel %vm723, %v4072, %v4074
      %v4118 = vsel %vm723, %v4074, %v4076
      %v4119 = vsel %vm723, %v4076, %v4078
      %v4120 = vsel %vm723, %v4078, %v4080
      %v4121 = vsel %vm723, %v4080, %v4082
      %v4122 = vsel %vm723, %v4082, %v4084
      %v4123 = vsel %vm723, %v4084, %v4086
      %v4124 = vsel %vm723, %v4088, %v4090
      %v4125 = vsel %vm723, %v4090, %v4092
      %v4126 = vsel %vm723, %v4092, %v4094
      %v4127 = vsel %vm723, %v4094, %v4096
      %v4128 = vsel %vm723, %v4096, %v4098
      %v4129 = vsel %vm723, %v4098, %v4100
      %v4130 = vsel %vm723, %v4100, %v4102
      %v4163 = vsel %vm723, %v4054, 0.0
      %v4164 = vsel %vm723, %v4070, 0.0
      %v4165 = vsel %vm723, %v4086, 0.0
      %v4166 = vsel %vm723, %v4102, 0.0
      %v4167 = vsel %vm519, %v4103, 0.0
      %v4168 = vsel %vm520, %v4104, 0.0
      %v4169 = vsel %vm521, %v4105, 0.0
      %v4170 = vsel %vm522, %v4106, 0.0
      %v4171 = vsel %vm523, %v4107, 0.0
      %v4172 = vsel %vm524, %v4108, 0.0
      %v4173 = vsel %vm525, %v4109, 0.0
      %v4174 = vsel %vm526, %v4163, 0.0
      %v4175 = vsel %vm519, %v4110, 0.0
      %v4176 = vsel %vm520, %v4111, 0.0
      %v4177 = vsel %vm521, %v4112, 0.0
      %v4178 = vsel %vm522, %v4113, 0.0
      %v4179 = vsel %vm523, %v4114, 0.0
      %v4180 = vsel %vm524, %v4115, 0.0
      %v4181 = vsel %vm525, %v4116, 0.0
      %v4182 = vsel %vm526, %v4164, 0.0
      %v4183 = vsel %vm519, %v4117, 0.0
      %v4184 = vsel %vm520, %v4118, 0.0
      %v4185 = vsel %vm521, %v4119, 0.0
      %v4186 = vsel %vm522, %v4120, 0.0
      %v4187 = vsel %vm523, %v4121, 0.0
      %v4188 = vsel %vm524, %v4122, 0.0
      %v4189 = vsel %vm525, %v4123, 0.0
      %v4190 = vsel %vm526, %v4165, 0.0
      %v4191 = vsel %vm519, %v4124, 0.0
      %v4192 = vsel %vm520, %v4125, 0.0
      %v4193 = vsel %vm521, %v4126, 0.0
      %v4194 = vsel %vm522, %v4127, 0.0
      %v4195 = vsel %vm523, %v4128, 0.0
      %v4196 = vsel %vm524, %v4129, 0.0
      %v4197 = vsel %vm525, %v4130, 0.0
      %v4198 = vsel %vm526, %v4166, 0.0
      %4199 = vrot.lane.b32.xlu0 %v3195, 96
      %v4200 = vpop.permute.xlu0 %4199
      %4201 = vrot.lane.b32.xlu0 %v3196, 96
      %v4202 = vpop.permute.xlu0 %4201
      %4203 = vrot.lane.b32.xlu0 %v3197, 96
      %v4204 = vpop.permute.xlu0 %4203
      %4205 = vrot.lane.b32.xlu0 %v3198, 96
      %v4206 = vpop.permute.xlu0 %4205
      %4207 = vrot.lane.b32.xlu0 %v3199, 96
      %v4208 = vpop.permute.xlu0 %4207
      %4209 = vrot.lane.b32.xlu0 %v3200, 96
      %v4210 = vpop.permute.xlu0 %4209
      %4211 = vrot.lane.b32.xlu0 %v3201, 96
      %v4212 = vpop.permute.xlu0 %4211
      %4213 = vrot.lane.b32.xlu0 %v3202, 96
      %v4214 = vpop.permute.xlu0 %4213
      %4215 = vrot.lane.b32.xlu0 %v3203, 96
      %v4216 = vpop.permute.xlu0 %4215
      %4217 = vrot.lane.b32.xlu0 %v3204, 96
      %v4218 = vpop.permute.xlu0 %4217
      %4219 = vrot.lane.b32.xlu0 %v3205, 96
      %v4220 = vpop.permute.xlu0 %4219
      %4221 = vrot.lane.b32.xlu0 %v3206, 96
      %v4222 = vpop.permute.xlu0 %4221
      %4223 = vrot.lane.b32.xlu0 %v3207, 96
      %v4224 = vpop.permute.xlu0 %4223
      %4225 = vrot.lane.b32.xlu0 %v3208, 96
      %v4226 = vpop.permute.xlu0 %4225
      %4227 = vrot.lane.b32.xlu0 %v3209, 96
      %v4228 = vpop.permute.xlu0 %4227
      %4229 = vrot.lane.b32.xlu0 %v3210, 96
      %v4230 = vpop.permute.xlu0 %4229
      %4231 = vrot.lane.b32.xlu0 %v3211, 96
      %v4232 = vpop.permute.xlu0 %4231
      %4233 = vrot.lane.b32.xlu0 %v3212, 96
      %v4234 = vpop.permute.xlu0 %4233
      %4235 = vrot.lane.b32.xlu0 %v3213, 96
      %v4236 = vpop.permute.xlu0 %4235
      %4237 = vrot.lane.b32.xlu0 %v3214, 96
      %v4238 = vpop.permute.xlu0 %4237
      %4239 = vrot.lane.b32.xlu0 %v3215, 96
      %v4240 = vpop.permute.xlu0 %4239
      %4241 = vrot.lane.b32.xlu0 %v3216, 96
      %v4242 = vpop.permute.xlu0 %4241
      %4243 = vrot.lane.b32.xlu0 %v3217, 96
      %v4244 = vpop.permute.xlu0 %4243
      %4245 = vrot.lane.b32.xlu0 %v3218, 96
      %v4246 = vpop.permute.xlu0 %4245
      %4247 = vrot.lane.b32.xlu0 %v3219, 96
      %v4248 = vpop.permute.xlu0 %4247
      %4249 = vrot.lane.b32.xlu0 %v3220, 96
      %v4250 = vpop.permute.xlu0 %4249
      %4251 = vrot.lane.b32.xlu0 %v3221, 96
      %v4252 = vpop.permute.xlu0 %4251
      %4253 = vrot.lane.b32.xlu0 %v3222, 96
      %v4254 = vpop.permute.xlu0 %4253
      %4255 = vrot.lane.b32.xlu0 %v3223, 96
      %v4256 = vpop.permute.xlu0 %4255
      %4257 = vrot.lane.b32.xlu0 %v3224, 96
      %v4258 = vpop.permute.xlu0 %4257
      %4259 = vrot.lane.b32.xlu0 %v3225, 96
      %v4260 = vpop.permute.xlu0 %4259
      %4261 = vrot.lane.b32.xlu0 %v3226, 96
      %v4262 = vpop.permute.xlu0 %4261
      %v4263 = vsel %vm764, %v4200, %v4202
      %v4264 = vsel %vm764, %v4202, %v4204
      %v4265 = vsel %vm764, %v4204, %v4206
      %v4266 = vsel %vm764, %v4206, %v4208
      %v4267 = vsel %vm764, %v4208, %v4210
      %v4268 = vsel %vm764, %v4210, %v4212
      %v4269 = vsel %vm764, %v4212, %v4214
      %v4270 = vsel %vm764, %v4216, %v4218
      %v4271 = vsel %vm764, %v4218, %v4220
      %v4272 = vsel %vm764, %v4220, %v4222
      %v4273 = vsel %vm764, %v4222, %v4224
      %v4274 = vsel %vm764, %v4224, %v4226
      %v4275 = vsel %vm764, %v4226, %v4228
      %v4276 = vsel %vm764, %v4228, %v4230
      %v4277 = vsel %vm764, %v4232, %v4234
      %v4278 = vsel %vm764, %v4234, %v4236
      %v4279 = vsel %vm764, %v4236, %v4238
      %v4280 = vsel %vm764, %v4238, %v4240
      %v4281 = vsel %vm764, %v4240, %v4242
      %v4282 = vsel %vm764, %v4242, %v4244
      %v4283 = vsel %vm764, %v4244, %v4246
      %v4284 = vsel %vm764, %v4248, %v4250
      %v4285 = vsel %vm764, %v4250, %v4252
      %v4286 = vsel %vm764, %v4252, %v4254
      %v4287 = vsel %vm764, %v4254, %v4256
      %v4288 = vsel %vm764, %v4256, %v4258
      %v4289 = vsel %vm764, %v4258, %v4260
      %v4290 = vsel %vm764, %v4260, %v4262
      %v4323 = vsel %vm764, %v4214, 0.0
      %v4324 = vsel %vm764, %v4230, 0.0
      %v4325 = vsel %vm764, %v4246, 0.0
      %v4326 = vsel %vm764, %v4262, 0.0
      %4327 = vrot.lane.b32.xlu0 %v3195, 95
      %v4328 = vpop.permute.xlu0 %4327
      %4329 = vrot.lane.b32.xlu0 %v3196, 95
      %v4330 = vpop.permute.xlu0 %4329
      %4331 = vrot.lane.b32.xlu0 %v3197, 95
      %v4332 = vpop.permute.xlu0 %4331
      %4333 = vrot.lane.b32.xlu0 %v3198, 95
      %v4334 = vpop.permute.xlu0 %4333
      %4335 = vrot.lane.b32.xlu0 %v3199, 95
      %v4336 = vpop.permute.xlu0 %4335
      %4337 = vrot.lane.b32.xlu0 %v3200, 95
      %v4338 = vpop.permute.xlu0 %4337
      %4339 = vrot.lane.b32.xlu0 %v3201, 95
      %v4340 = vpop.permute.xlu0 %4339
      %4341 = vrot.lane.b32.xlu0 %v3202, 95
      %v4342 = vpop.permute.xlu0 %4341
      %4343 = vrot.lane.b32.xlu0 %v3203, 95
      %v4344 = vpop.permute.xlu0 %4343
      %4345 = vrot.lane.b32.xlu0 %v3204, 95
      %v4346 = vpop.permute.xlu0 %4345
      %4347 = vrot.lane.b32.xlu0 %v3205, 95
      %v4348 = vpop.permute.xlu0 %4347
      %4349 = vrot.lane.b32.xlu0 %v3206, 95
      %v4350 = vpop.permute.xlu0 %4349
      %4351 = vrot.lane.b32.xlu0 %v3207, 95
      %v4352 = vpop.permute.xlu0 %4351
      %4353 = vrot.lane.b32.xlu0 %v3208, 95
      %v4354 = vpop.permute.xlu0 %4353
      %4355 = vrot.lane.b32.xlu0 %v3209, 95
      %v4356 = vpop.permute.xlu0 %4355
      %4357 = vrot.lane.b32.xlu0 %v3210, 95
      %v4358 = vpop.permute.xlu0 %4357
      %4359 = vrot.lane.b32.xlu0 %v3211, 95
      %v4360 = vpop.permute.xlu0 %4359
      %4361 = vrot.lane.b32.xlu0 %v3212, 95
      %v4362 = vpop.permute.xlu0 %4361
      %4363 = vrot.lane.b32.xlu0 %v3213, 95
      %v4364 = vpop.permute.xlu0 %4363
      %4365 = vrot.lane.b32.xlu0 %v3214, 95
      %v4366 = vpop.permute.xlu0 %4365
      %4367 = vrot.lane.b32.xlu0 %v3215, 95
      %v4368 = vpop.permute.xlu0 %4367
      %4369 = vrot.lane.b32.xlu0 %v3216, 95
      %v4370 = vpop.permute.xlu0 %4369
      %4371 = vrot.lane.b32.xlu0 %v3217, 95
      %v4372 = vpop.permute.xlu0 %4371
      %4373 = vrot.lane.b32.xlu0 %v3218, 95
      %v4374 = vpop.permute.xlu0 %4373
      %4375 = vrot.lane.b32.xlu0 %v3219, 95
      %v4376 = vpop.permute.xlu0 %4375
      %4377 = vrot.lane.b32.xlu0 %v3220, 95
      %v4378 = vpop.permute.xlu0 %4377
      %4379 = vrot.lane.b32.xlu0 %v3221, 95
      %v4380 = vpop.permute.xlu0 %4379
      %4381 = vrot.lane.b32.xlu0 %v3222, 95
      %v4382 = vpop.permute.xlu0 %4381
      %4383 = vrot.lane.b32.xlu0 %v3223, 95
      %v4384 = vpop.permute.xlu0 %4383
      %4385 = vrot.lane.b32.xlu0 %v3224, 95
      %v4386 = vpop.permute.xlu0 %4385
      %4387 = vrot.lane.b32.xlu0 %v3225, 95
      %v4388 = vpop.permute.xlu0 %4387
      %4389 = vrot.lane.b32.xlu0 %v3226, 95
      %v4390 = vpop.permute.xlu0 %4389
      %v4391 = vsel %vm797, %v4328, %v4330
      %v4392 = vsel %vm797, %v4330, %v4332
      %v4393 = vsel %vm797, %v4332, %v4334
      %v4394 = vsel %vm797, %v4334, %v4336
      %v4395 = vsel %vm797, %v4336, %v4338
      %v4396 = vsel %vm797, %v4338, %v4340
      %v4397 = vsel %vm797, %v4340, %v4342
      %v4398 = vsel %vm797, %v4344, %v4346
      %v4399 = vsel %vm797, %v4346, %v4348
      %v4400 = vsel %vm797, %v4348, %v4350
      %v4401 = vsel %vm797, %v4350, %v4352
      %v4402 = vsel %vm797, %v4352, %v4354
      %v4403 = vsel %vm797, %v4354, %v4356
      %v4404 = vsel %vm797, %v4356, %v4358
      %v4405 = vsel %vm797, %v4360, %v4362
      %v4406 = vsel %vm797, %v4362, %v4364
      %v4407 = vsel %vm797, %v4364, %v4366
      %v4408 = vsel %vm797, %v4366, %v4368
      %v4409 = vsel %vm797, %v4368, %v4370
      %v4410 = vsel %vm797, %v4370, %v4372
      %v4411 = vsel %vm797, %v4372, %v4374
      %v4412 = vsel %vm797, %v4376, %v4378
      %v4413 = vsel %vm797, %v4378, %v4380
      %v4414 = vsel %vm797, %v4380, %v4382
      %v4415 = vsel %vm797, %v4382, %v4384
      %v4416 = vsel %vm797, %v4384, %v4386
      %v4417 = vsel %vm797, %v4386, %v4388
      %v4418 = vsel %vm797, %v4388, %v4390
      %v4451 = vsel %vm797, %v4342, 0.0
      %v4452 = vsel %vm797, %v4358, 0.0
      %v4453 = vsel %vm797, %v4374, 0.0
      %v4454 = vsel %vm797, %v4390, 0.0
      %v4455 = vsel %vm609, %v4391, 0.0
      %v4456 = vsel %vm610, %v4392, 0.0
      %v4457 = vsel %vm611, %v4393, 0.0
      %v4458 = vsel %vm612, %v4394, 0.0
      %v4459 = vsel %vm613, %v4395, 0.0
      %v4460 = vsel %vm614, %v4396, 0.0
      %v4461 = vsel %vm615, %v4397, 0.0
      %v4462 = vsel %vm616, %v4451, 0.0
      %v4463 = vsel %vm609, %v4398, 0.0
      %v4464 = vsel %vm610, %v4399, 0.0
      %v4465 = vsel %vm611, %v4400, 0.0
      %v4466 = vsel %vm612, %v4401, 0.0
      %v4467 = vsel %vm613, %v4402, 0.0
      %v4468 = vsel %vm614, %v4403, 0.0
      %v4469 = vsel %vm615, %v4404, 0.0
      %v4470 = vsel %vm616, %v4452, 0.0
      %v4471 = vsel %vm609, %v4405, 0.0
      %v4472 = vsel %vm610, %v4406, 0.0
      %v4473 = vsel %vm611, %v4407, 0.0
      %v4474 = vsel %vm612, %v4408, 0.0
      %v4475 = vsel %vm613, %v4409, 0.0
      %v4476 = vsel %vm614, %v4410, 0.0
      %v4477 = vsel %vm615, %v4411, 0.0
      %v4478 = vsel %vm616, %v4453, 0.0
      %v4479 = vsel %vm609, %v4412, 0.0
      %v4480 = vsel %vm610, %v4413, 0.0
      %v4481 = vsel %vm611, %v4414, 0.0
      %v4482 = vsel %vm612, %v4415, 0.0
      %v4483 = vsel %vm613, %v4416, 0.0
      %v4484 = vsel %vm614, %v4417, 0.0
      %v4485 = vsel %vm615, %v4418, 0.0
      %v4486 = vsel %vm616, %v4454, 0.0
      %v4488 = vsel %vm551, %v3229, 0
      %v4491 = vsel %vm551, %v3232, 0
      %v4494 = vsel %vm551, %v3235, 0
      %v4497 = vsel %vm551, %v3238, 0
      %4499 = vmatprep.subr.mxu0 %v3400
      %4500 = vmatpush1.msra.mxu0 %v3399
      %4501 = vmatprep.subr.mxu0 %v3408
      %4502 = vmatpush1.msra.mxu0 %v3407
      %4503 = vmatprep.subr.mxu0 %v3416
      %4504 = vmatpush1.msra.mxu0 %v3415
      %4505 = vmatprep.subr.mxu0 %v3424
      %4506 = vmatpush1.msra.mxu0 %v3423
      %4507 = vmatprep.subr.mxu0 %v3495
      %4508 = vmatpush1.msra.mxu0 %v3555
      %4509 = vmatprep.subr.mxu0 %v3502
      %4510 = vmatpush1.msra.mxu0 %v3556
      %4511 = vmatprep.subr.mxu0 %v3509
      %4512 = vmatpush1.msra.mxu0 %v3557
      %4513 = vmatprep.subr.mxu0 %v3516
      %4514 = vmatpush1.msra.mxu0 %v3558
      %4515 = vmatprep.subr.mxu0 %v3688
      %4516 = vmatpush1.msra.mxu0 %v3687
      %4517 = vmatprep.subr.mxu0 %v3696
      %4518 = vmatpush1.msra.mxu0 %v3695
      %4519 = vmatprep.subr.mxu0 %v3704
      %4520 = vmatpush1.msra.mxu0 %v3703
      %4521 = vmatprep.subr.mxu0 %v3712
      %4522 = vmatpush1.msra.mxu0 %v3711
      %4523 = vmatprep.subr.mxu0 %v3848
      %4524 = vmatpush1.msra.mxu0 %v3847
      %4525 = vmatprep.subr.mxu0 %v3856
      %4526 = vmatpush1.msra.mxu0 %v3855
      %4527 = vmatprep.subr.mxu0 %v3864
      %4528 = vmatpush1.msra.mxu0 %v3863
      %4529 = vmatprep.subr.mxu0 %v3872
      %4530 = vmatpush1.msra.mxu0 %v3871
      %4531 = vmatprep.subr.mxu0 %v3196
      %4532 = vmatpush1.msra.mxu0 %v3195
      %4533 = vmatprep.subr.mxu0 %v3204
      %4534 = vmatpush1.msra.mxu0 %v3203
      %4535 = vmatprep.subr.mxu0 %v3212
      %4536 = vmatpush1.msra.mxu0 %v3211
      %4537 = vmatprep.subr.mxu0 %v3220
      %4538 = vmatpush1.msra.mxu0 %v3219
      %4539 = vmatprep.subr.mxu0 %v4008
      %4540 = vmatpush1.msra.mxu0 %v4007
      %4541 = vmatprep.subr.mxu0 %v4016
      %4542 = vmatpush1.msra.mxu0 %v4015
      %4543 = vmatprep.subr.mxu0 %v4024
      %4544 = vmatpush1.msra.mxu0 %v4023
      %4545 = vmatprep.subr.mxu0 %v4032
      %4546 = vmatpush1.msra.mxu0 %v4031
      %4547 = vmatprep.subr.mxu0 %v4168
      %4548 = vmatpush1.msra.mxu0 %v4167
      %4549 = vmatprep.subr.mxu0 %v4176
      %4550 = vmatpush1.msra.mxu0 %v4175
      %4551 = vmatprep.subr.mxu0 %v4184
      %4552 = vmatpush1.msra.mxu0 %v4183
      %4553 = vmatprep.subr.mxu0 %v4192
      %4554 = vmatpush1.msra.mxu0 %v4191
      %4555 = vmatprep.subr.mxu0 %v4264
      %4556 = vmatpush1.msra.mxu0 %v4263
      %4557 = vmatprep.subr.mxu0 %v4271
      %4558 = vmatpush1.msra.mxu0 %v4270
      %4559 = vmatprep.subr.mxu0 %v4278
      %4560 = vmatpush1.msra.mxu0 %v4277
      %4561 = vmatprep.subr.mxu0 %v4285
      %4562 = vmatpush1.msra.mxu0 %v4284
      %4563 = vmatprep.mubr.f32.mxu0 %v3228
      %4564 = vmatmul.mubr.f32.gmra.mrb[0].mxu0 %v3227
      %v4565 = vpop.f32.mrb[0].mxu0
      %v4566 = vadd.f32 0.0, %v4565
      %v4567 = vpop.f32.mrb[0].mxu0
      %v4568 = vadd.f32 0.0, %v4567
      %4569 = vmatprep.mubr.f32.mxu0 %v3231
      %4570 = vmatmul.mubr.f32.gmra.mrb[0].mxu0 %v3230
      %v4571 = vpop.f32.mrb[0].mxu0
      %v4572 = vadd.f32 0.0, %v4571
      %v4573 = vpop.f32.mrb[0].mxu0
      %v4574 = vadd.f32 0.0, %v4573
      %4575 = vmatprep.mubr.f32.mxu0 %v3234
      %4576 = vmatmul.mubr.f32.gmra.mrb[0].mxu0 %v3233
      %v4577 = vpop.f32.mrb[0].mxu0
      %v4578 = vadd.f32 0.0, %v4577
      %v4579 = vpop.f32.mrb[0].mxu0
      %v4580 = vadd.f32 0.0, %v4579
      %4581 = vmatprep.mubr.f32.mxu0 %v3237
      %4582 = vmatmul.mubr.f32.gmra.mrb[0].mxu0 %v3236
      %v4583 = vpop.f32.mrb[0].mxu0
      %v4584 = vadd.f32 0.0, %v4583
      %v4585 = vpop.f32.mrb[0].mxu0
      %v4586 = vadd.f32 0.0, %v4585
      %4587 = vdwg.mxu0
      %4588 = vmatprep.subr.mxu0 %v4456
      %4589 = vmatpush1.msra.mxu0 %v4455
      %4590 = vmatprep.subr.mxu0 %v4464
      %4591 = vmatpush1.msra.mxu0 %v4463
      %4592 = vmatprep.subr.mxu0 %v4472
      %4593 = vmatpush1.msra.mxu0 %v4471
      %4594 = vmatprep.subr.mxu0 %v4480
      %4595 = vmatpush1.msra.mxu0 %v4479
      %4596 = vmatprep.subr.mxu0 0.0
      %4597 = vmatpush1.msra.mxu0 0.0
      %4598 = vmatprep.subr.mxu0 0.0
      %4599 = vmatpush1.msra.mxu0 0.0
      %4600 = vmatprep.subr.mxu0 0.0
      %4601 = vmatpush1.msra.mxu0 0.0
      %4602 = vmatprep.subr.mxu0 0.0
      %4603 = vmatpush1.msra.mxu0 0.0
      %4604 = vmatprep.subr.mxu0 0.0
      %4605 = vmatpush1.msra.mxu0 0.0
      %4606 = vmatprep.subr.mxu0 0.0
      %4607 = vmatpush1.msra.mxu0 0.0
      %4608 = vmatprep.subr.mxu0 0.0
      %4609 = vmatpush1.msra.mxu0 0.0
      %4610 = vmatprep.subr.mxu0 0.0
      %4611 = vmatpush1.msra.mxu0 0.0
      %4612 = vmatprep.subr.mxu0 0.0
      %4613 = vmatpush1.msra.mxu0 0.0
      %4614 = vmatprep.subr.mxu0 0.0
      %4615 = vmatpush1.msra.mxu0 0.0
      %4616 = vmatprep.subr.mxu0 0.0
      %4617 = vmatpush1.msra.mxu0 0.0
      %4618 = vmatprep.subr.mxu0 0.0
      %4619 = vmatpush1.msra.mxu0 0.0
      %4620 = vmatprep.subr.mxu0 0.0
      %4621 = vmatpush1.msra.mxu0 0.0
      %4622 = vmatprep.subr.mxu0 0.0
      %4623 = vmatpush1.msra.mxu0 0.0
      %4624 = vmatprep.subr.mxu0 0.0
      %4625 = vmatpush1.msra.mxu0 0.0
      %4626 = vmatprep.subr.mxu0 0.0
      %4627 = vmatpush1.msra.mxu0 0.0
      %4628 = vmatprep.subr.mxu0 0.0
      %4629 = vmatpush1.msra.mxu0 0.0
      %4630 = vmatprep.subr.mxu0 0.0
      %4631 = vmatpush1.msra.mxu0 0.0
      %4632 = vmatprep.subr.mxu0 0.0
      %4633 = vmatpush1.msra.mxu0 0.0
      %4634 = vmatprep.subr.mxu0 0.0
      %4635 = vmatpush1.msra.mxu0 0.0
      %4636 = vmatprep.subr.mxu0 0.0
      %4637 = vmatpush1.msra.mxu0 0.0
      %4638 = vmatprep.subr.mxu0 0.0
      %4639 = vmatpush1.msra.mxu0 0.0
      %4640 = vmatprep.subr.mxu0 0.0
      %4641 = vmatpush1.msra.mxu0 0.0
      %4642 = vmatprep.subr.mxu0 0.0
      %4643 = vmatpush1.msra.mxu0 0.0
      %4644 = vmatprep.subr.mxu0 0.0
      %4645 = vmatpush1.msra.mxu0 0.0
      %4646 = vmatprep.subr.mxu0 0.0
      %4647 = vmatpush1.msra.mxu0 0.0
      %4648 = vmatprep.subr.mxu0 0.0
      %4649 = vmatpush1.msra.mxu0 0.0
      %4650 = vmatprep.subr.mxu0 0.0
      %4651 = vmatpush1.msra.mxu0 0.0
      %4652 = vmatprep.mubr.f32.mxu0 0.0
      %4653 = vmatmul.mubr.f32.gmra.mrb[0].mxu0 %v4488
      %v4654 = vpop.f32.mrb[0].mxu0
      %v4655 = vadd.f32 %v4566, %v4654
      %v4656 = vpop.f32.mrb[0].mxu0
      %v4657 = vadd.f32 %v4568, %v4656
      %4658 = vmatprep.mubr.f32.mxu0 0.0
      %4659 = vmatmul.mubr.f32.gmra.mrb[0].mxu0 %v4491
      %v4660 = vpop.f32.mrb[0].mxu0
      %v4661 = vadd.f32 %v4572, %v4660
      %v4662 = vpop.f32.mrb[0].mxu0
      %v4663 = vadd.f32 %v4574, %v4662
      %4664 = vmatprep.mubr.f32.mxu0 0.0
      %4665 = vmatmul.mubr.f32.gmra.mrb[0].mxu0 %v4494
      %v4666 = vpop.f32.mrb[0].mxu0
      %v4667 = vadd.f32 %v4578, %v4666
      %v4668 = vpop.f32.mrb[0].mxu0
      %v4669 = vadd.f32 %v4580, %v4668
      %4670 = vmatprep.mubr.f32.mxu0 0.0
      %4671 = vmatmul.mubr.f32.gmra.mrb[0].mxu0 %v4497
      %v4672 = vpop.f32.mrb[0].mxu0
      %v4673 = vadd.f32 %v4584, %v4672
      %v4674 = vpop.f32.mrb[0].mxu0
      %v4675 = vadd.f32 %v4586, %v4674
      %4676 = vdwg.mxu0
      %4677 = vmatprep.subr.mxu0 %v3402
      %4678 = vmatpush1.msra.mxu0 %v3401
      %4679 = vmatprep.subr.mxu0 %v3410
      %4680 = vmatpush1.msra.mxu0 %v3409
      %4681 = vmatprep.subr.mxu0 %v3418
      %4682 = vmatpush1.msra.mxu0 %v3417
      %4683 = vmatprep.subr.mxu0 %v3426
      %4684 = vmatpush1.msra.mxu0 %v3425
      %4685 = vmatprep.subr.mxu0 %v3497
      %4686 = vmatpush1.msra.mxu0 %v3496
      %4687 = vmatprep.subr.mxu0 %v3504
      %4688 = vmatpush1.msra.mxu0 %v3503
      %4689 = vmatprep.subr.mxu0 %v3511
      %4690 = vmatpush1.msra.mxu0 %v3510
      %4691 = vmatprep.subr.mxu0 %v3518
      %4692 = vmatpush1.msra.mxu0 %v3517
      %4693 = vmatprep.subr.mxu0 %v3690
      %4694 = vmatpush1.msra.mxu0 %v3689
      %4695 = vmatprep.subr.mxu0 %v3698
      %4696 = vmatpush1.msra.mxu0 %v3697
      %4697 = vmatprep.subr.mxu0 %v3706
      %4698 = vmatpush1.msra.mxu0 %v3705
      %4699 = vmatprep.subr.mxu0 %v3714
      %4700 = vmatpush1.msra.mxu0 %v3713
      %4701 = vmatprep.subr.mxu0 %v3850
      %4702 = vmatpush1.msra.mxu0 %v3849
      %4703 = vmatprep.subr.mxu0 %v3858
      %4704 = vmatpush1.msra.mxu0 %v3857
      %4705 = vmatprep.subr.mxu0 %v3866
      %4706 = vmatpush1.msra.mxu0 %v3865
      %4707 = vmatprep.subr.mxu0 %v3874
      %4708 = vmatpush1.msra.mxu0 %v3873
      %4709 = vmatprep.subr.mxu0 %v3198
      %4710 = vmatpush1.msra.mxu0 %v3197
      %4711 = vmatprep.subr.mxu0 %v3206
      %4712 = vmatpush1.msra.mxu0 %v3205
      %4713 = vmatprep.subr.mxu0 %v3214
      %4714 = vmatpush1.msra.mxu0 %v3213
      %4715 = vmatprep.subr.mxu0 %v3222
      %4716 = vmatpush1.msra.mxu0 %v3221
      %4717 = vmatprep.subr.mxu0 %v4010
      %4718 = vmatpush1.msra.mxu0 %v4009
      %4719 = vmatprep.subr.mxu0 %v4018
      %4720 = vmatpush1.msra.mxu0 %v4017
      %4721 = vmatprep.subr.mxu0 %v4026
      %4722 = vmatpush1.msra.mxu0 %v4025
      %4723 = vmatprep.subr.mxu0 %v4034
      %4724 = vmatpush1.msra.mxu0 %v4033
      %4725 = vmatprep.subr.mxu0 %v4170
      %4726 = vmatpush1.msra.mxu0 %v4169
      %4727 = vmatprep.subr.mxu0 %v4178
      %4728 = vmatpush1.msra.mxu0 %v4177
      %4729 = vmatprep.subr.mxu0 %v4186
      %4730 = vmatpush1.msra.mxu0 %v4185
      %4731 = vmatprep.subr.mxu0 %v4194
      %4732 = vmatpush1.msra.mxu0 %v4193
      %4733 = vmatprep.subr.mxu0 %v4266
      %4734 = vmatpush1.msra.mxu0 %v4265
      %4735 = vmatprep.subr.mxu0 %v4273
      %4736 = vmatpush1.msra.mxu0 %v4272
      %4737 = vmatprep.subr.mxu0 %v4280
      %4738 = vmatpush1.msra.mxu0 %v4279
      %4739 = vmatprep.subr.mxu0 %v4287
      %4740 = vmatpush1.msra.mxu0 %v4286
      %4741 = vmatprep.mubr.f32.mxu0 %v3228
      %4742 = vmatmul.mubr.f32.gmra.mrb[0].mxu0 %v3227
      %v4743 = vpop.f32.mrb[0].mxu0
      %v4744 = vadd.f32 0.0, %v4743
      %v4745 = vpop.f32.mrb[0].mxu0
      %v4746 = vadd.f32 0.0, %v4745
      %4747 = vmatprep.mubr.f32.mxu0 %v3231
      %4748 = vmatmul.mubr.f32.gmra.mrb[0].mxu0 %v3230
      %v4749 = vpop.f32.mrb[0].mxu0
      %v4750 = vadd.f32 0.0, %v4749
      %v4751 = vpop.f32.mrb[0].mxu0
      %v4752 = vadd.f32 0.0, %v4751
      %4753 = vmatprep.mubr.f32.mxu0 %v3234
      %4754 = vmatmul.mubr.f32.gmra.mrb[0].mxu0 %v3233
      %v4755 = vpop.f32.mrb[0].mxu0
      %v4756 = vadd.f32 0.0, %v4755
      %v4757 = vpop.f32.mrb[0].mxu0
      %v4758 = vadd.f32 0.0, %v4757
      %4759 = vmatprep.mubr.f32.mxu0 %v3237
      %4760 = vmatmul.mubr.f32.gmra.mrb[0].mxu0 %v3236
      %v4761 = vpop.f32.mrb[0].mxu0
      %v4762 = vadd.f32 0.0, %v4761
      %v4763 = vpop.f32.mrb[0].mxu0
      %v4764 = vadd.f32 0.0, %v4763
      %4765 = vdwg.mxu0
      %4766 = vmatprep.subr.mxu0 %v4458
      %4767 = vmatpush1.msra.mxu0 %v4457
      %4768 = vmatprep.subr.mxu0 %v4466
      %4769 = vmatpush1.msra.mxu0 %v4465
      %4770 = vmatprep.subr.mxu0 %v4474
      %4771 = vmatpush1.msra.mxu0 %v4473
      %4772 = vmatprep.subr.mxu0 %v4482
      %4773 = vmatpush1.msra.mxu0 %v4481
      %4774 = vmatprep.subr.mxu0 0.0
      %4775 = vmatpush1.msra.mxu0 0.0
      %4776 = vmatprep.subr.mxu0 0.0
      %4777 = vmatpush1.msra.mxu0 0.0
      %4778 = vmatprep.subr.mxu0 0.0
      %4779 = vmatpush1.msra.mxu0 0.0
      %4780 = vmatprep.subr.mxu0 0.0
      %4781 = vmatpush1.msra.mxu0 0.0
      %4782 = vmatprep.subr.mxu0 0.0
      %4783 = vmatpush1.msra.mxu0 0.0
      %4784 = vmatprep.subr.mxu0 0.0
      %4785 = vmatpush1.msra.mxu0 0.0
      %4786 = vmatprep.subr.mxu0 0.0
      %4787 = vmatpush1.msra.mxu0 0.0
      %4788 = vmatprep.subr.mxu0 0.0
      %4789 = vmatpush1.msra.mxu0 0.0
      %4790 = vmatprep.subr.mxu0 0.0
      %4791 = vmatpush1.msra.mxu0 0.0
      %4792 = vmatprep.subr.mxu0 0.0
      %4793 = vmatpush1.msra.mxu0 0.0
      %4794 = vmatprep.subr.mxu0 0.0
      %4795 = vmatpush1.msra.mxu0 0.0
      %4796 = vmatprep.subr.mxu0 0.0
      %4797 = vmatpush1.msra.mxu0 0.0
      %4798 = vmatprep.subr.mxu0 0.0
      %4799 = vmatpush1.msra.mxu0 0.0
      %4800 = vmatprep.subr.mxu0 0.0
      %4801 = vmatpush1.msra.mxu0 0.0
      %4802 = vmatprep.subr.mxu0 0.0
      %4803 = vmatpush1.msra.mxu0 0.0
      %4804 = vmatprep.subr.mxu0 0.0
      %4805 = vmatpush1.msra.mxu0 0.0
      %4806 = vmatprep.subr.mxu0 0.0
      %4807 = vmatpush1.msra.mxu0 0.0
      %4808 = vmatprep.subr.mxu0 0.0
      %4809 = vmatpush1.msra.mxu0 0.0
      %4810 = vmatprep.subr.mxu0 0.0
      %4811 = vmatpush1.msra.mxu0 0.0
      %4812 = vmatprep.subr.mxu0 0.0
      %4813 = vmatpush1.msra.mxu0 0.0
      %4814 = vmatprep.subr.mxu0 0.0
      %4815 = vmatpush1.msra.mxu0 0.0
      %4816 = vmatprep.subr.mxu0 0.0
      %4817 = vmatpush1.msra.mxu0 0.0
      %4818 = vmatprep.subr.mxu0 0.0
      %4819 = vmatpush1.msra.mxu0 0.0
      %4820 = vmatprep.subr.mxu0 0.0
      %4821 = vmatpush1.msra.mxu0 0.0
      %4822 = vmatprep.subr.mxu0 0.0
      %4823 = vmatpush1.msra.mxu0 0.0
      %4824 = vmatprep.subr.mxu0 0.0
      %4825 = vmatpush1.msra.mxu0 0.0
      %4826 = vmatprep.subr.mxu0 0.0
      %4827 = vmatpush1.msra.mxu0 0.0
      %4828 = vmatprep.subr.mxu0 0.0
      %4829 = vmatpush1.msra.mxu0 0.0
      %4830 = vmatprep.mubr.f32.mxu0 0.0
      %4831 = vmatmul.mubr.f32.gmra.mrb[0].mxu0 %v4488
      %v4832 = vpop.f32.mrb[0].mxu0
      %v4833 = vadd.f32 %v4744, %v4832
      %v4834 = vpop.f32.mrb[0].mxu0
      %v4835 = vadd.f32 %v4746, %v4834
      %4836 = vmatprep.mubr.f32.mxu0 0.0
      %4837 = vmatmul.mubr.f32.gmra.mrb[0].mxu0 %v4491
      %v4838 = vpop.f32.mrb[0].mxu0
      %v4839 = vadd.f32 %v4750, %v4838
      %v4840 = vpop.f32.mrb[0].mxu0
      %v4841 = vadd.f32 %v4752, %v4840
      %4842 = vmatprep.mubr.f32.mxu0 0.0
      %4843 = vmatmul.mubr.f32.gmra.mrb[0].mxu0 %v4494
      %v4844 = vpop.f32.mrb[0].mxu0
      %v4845 = vadd.f32 %v4756, %v4844
      %v4846 = vpop.f32.mrb[0].mxu0
      %v4847 = vadd.f32 %v4758, %v4846
      %4848 = vmatprep.mubr.f32.mxu0 0.0
      %4849 = vmatmul.mubr.f32.gmra.mrb[0].mxu0 %v4497
      %v4850 = vpop.f32.mrb[0].mxu0
      %v4851 = vadd.f32 %v4762, %v4850
      %v4852 = vpop.f32.mrb[0].mxu0
      %v4853 = vadd.f32 %v4764, %v4852
      %4854 = vdwg.mxu0
      %4855 = vmatprep.subr.mxu0 %v3404
      %4856 = vmatpush1.msra.mxu0 %v3403
      %4857 = vmatprep.subr.mxu0 %v3412
      %4858 = vmatpush1.msra.mxu0 %v3411
      %4859 = vmatprep.subr.mxu0 %v3420
      %4860 = vmatpush1.msra.mxu0 %v3419
      %4861 = vmatprep.subr.mxu0 %v3428
      %4862 = vmatpush1.msra.mxu0 %v3427
      %4863 = vmatprep.subr.mxu0 %v3499
      %4864 = vmatpush1.msra.mxu0 %v3498
      %4865 = vmatprep.subr.mxu0 %v3506
      %4866 = vmatpush1.msra.mxu0 %v3505
      %4867 = vmatprep.subr.mxu0 %v3513
      %4868 = vmatpush1.msra.mxu0 %v3512
      %4869 = vmatprep.subr.mxu0 %v3520
      %4870 = vmatpush1.msra.mxu0 %v3519
      %4871 = vmatprep.subr.mxu0 %v3692
      %4872 = vmatpush1.msra.mxu0 %v3691
      %4873 = vmatprep.subr.mxu0 %v3700
      %4874 = vmatpush1.msra.mxu0 %v3699
      %4875 = vmatprep.subr.mxu0 %v3708
      %4876 = vmatpush1.msra.mxu0 %v3707
      %4877 = vmatprep.subr.mxu0 %v3716
      %4878 = vmatpush1.msra.mxu0 %v3715
      %4879 = vmatprep.subr.mxu0 %v3852
      %4880 = vmatpush1.msra.mxu0 %v3851
      %4881 = vmatprep.subr.mxu0 %v3860
      %4882 = vmatpush1.msra.mxu0 %v3859
      %4883 = vmatprep.subr.mxu0 %v3868
      %4884 = vmatpush1.msra.mxu0 %v3867
      %4885 = vmatprep.subr.mxu0 %v3876
      %4886 = vmatpush1.msra.mxu0 %v3875
      %4887 = vmatprep.subr.mxu0 %v3200
      %4888 = vmatpush1.msra.mxu0 %v3199
      %4889 = vmatprep.subr.mxu0 %v3208
      %4890 = vmatpush1.msra.mxu0 %v3207
      %4891 = vmatprep.subr.mxu0 %v3216
      %4892 = vmatpush1.msra.mxu0 %v3215
      %4893 = vmatprep.subr.mxu0 %v3224
      %4894 = vmatpush1.msra.mxu0 %v3223
      %4895 = vmatprep.subr.mxu0 %v4012
      %4896 = vmatpush1.msra.mxu0 %v4011
      %4897 = vmatprep.subr.mxu0 %v4020
      %4898 = vmatpush1.msra.mxu0 %v4019
      %4899 = vmatprep.subr.mxu0 %v4028
      %4900 = vmatpush1.msra.mxu0 %v4027
      %4901 = vmatprep.subr.mxu0 %v4036
      %4902 = vmatpush1.msra.mxu0 %v4035
      %4903 = vmatprep.subr.mxu0 %v4172
      %4904 = vmatpush1.msra.mxu0 %v4171
      %4905 = vmatprep.subr.mxu0 %v4180
      %4906 = vmatpush1.msra.mxu0 %v4179
      %4907 = vmatprep.subr.mxu0 %v4188
      %4908 = vmatpush1.msra.mxu0 %v4187
      %4909 = vmatprep.subr.mxu0 %v4196
      %4910 = vmatpush1.msra.mxu0 %v4195
      %4911 = vmatprep.subr.mxu0 %v4268
      %4912 = vmatpush1.msra.mxu0 %v4267
      %4913 = vmatprep.subr.mxu0 %v4275
      %4914 = vmatpush1.msra.mxu0 %v4274
      %4915 = vmatprep.subr.mxu0 %v4282
      %4916 = vmatpush1.msra.mxu0 %v4281
      %4917 = vmatprep.subr.mxu0 %v4289
      %4918 = vmatpush1.msra.mxu0 %v4288
      %4919 = vmatprep.mubr.f32.mxu0 %v3228
      %4920 = vmatmul.mubr.f32.gmra.mrb[0].mxu0 %v3227
      %v4921 = vpop.f32.mrb[0].mxu0
      %v4922 = vadd.f32 0.0, %v4921
      %v4923 = vpop.f32.mrb[0].mxu0
      %v4924 = vadd.f32 0.0, %v4923
      %4925 = vmatprep.mubr.f32.mxu0 %v3231
      %4926 = vmatmul.mubr.f32.gmra.mrb[0].mxu0 %v3230
      %v4927 = vpop.f32.mrb[0].mxu0
      %v4928 = vadd.f32 0.0, %v4927
      %v4929 = vpop.f32.mrb[0].mxu0
      %v4930 = vadd.f32 0.0, %v4929
      %4931 = vmatprep.mubr.f32.mxu0 %v3234
      %4932 = vmatmul.mubr.f32.gmra.mrb[0].mxu0 %v3233
      %v4933 = vpop.f32.mrb[0].mxu0
      %v4934 = vadd.f32 0.0, %v4933
      %v4935 = vpop.f32.mrb[0].mxu0
      %v4936 = vadd.f32 0.0, %v4935
      %4937 = vmatprep.mubr.f32.mxu0 %v3237
      %4938 = vmatmul.mubr.f32.gmra.mrb[0].mxu0 %v3236
      %v4939 = vpop.f32.mrb[0].mxu0
      %v4940 = vadd.f32 0.0, %v4939
      %v4941 = vpop.f32.mrb[0].mxu0
      %v4942 = vadd.f32 0.0, %v4941
      %4943 = vdwg.mxu0
      %4944 = vmatprep.subr.mxu0 %v4460
      %4945 = vmatpush1.msra.mxu0 %v4459
      %4946 = vmatprep.subr.mxu0 %v4468
      %4947 = vmatpush1.msra.mxu0 %v4467
      %4948 = vmatprep.subr.mxu0 %v4476
      %4949 = vmatpush1.msra.mxu0 %v4475
      %4950 = vmatprep.subr.mxu0 %v4484
      %4951 = vmatpush1.msra.mxu0 %v4483
      %4952 = vmatprep.subr.mxu0 0.0
      %4953 = vmatpush1.msra.mxu0 0.0
      %4954 = vmatprep.subr.mxu0 0.0
      %4955 = vmatpush1.msra.mxu0 0.0
      %4956 = vmatprep.subr.mxu0 0.0
      %4957 = vmatpush1.msra.mxu0 0.0
      %4958 = vmatprep.subr.mxu0 0.0
      %4959 = vmatpush1.msra.mxu0 0.0
      %4960 = vmatprep.subr.mxu0 0.0
      %4961 = vmatpush1.msra.mxu0 0.0
      %4962 = vmatprep.subr.mxu0 0.0
      %4963 = vmatpush1.msra.mxu0 0.0
      %4964 = vmatprep.subr.mxu0 0.0
      %4965 = vmatpush1.msra.mxu0 0.0
      %4966 = vmatprep.subr.mxu0 0.0
      %4967 = vmatpush1.msra.mxu0 0.0
      %4968 = vmatprep.subr.mxu0 0.0
      %4969 = vmatpush1.msra.mxu0 0.0
      %4970 = vmatprep.subr.mxu0 0.0
      %4971 = vmatpush1.msra.mxu0 0.0
      %4972 = vmatprep.subr.mxu0 0.0
      %4973 = vmatpush1.msra.mxu0 0.0
      %4974 = vmatprep.subr.mxu0 0.0
      %4975 = vmatpush1.msra.mxu0 0.0
      %4976 = vmatprep.subr.mxu0 0.0
      %4977 = vmatpush1.msra.mxu0 0.0
      %4978 = vmatprep.subr.mxu0 0.0
      %4979 = vmatpush1.msra.mxu0 0.0
      %4980 = vmatprep.subr.mxu0 0.0
      %4981 = vmatpush1.msra.mxu0 0.0
      %4982 = vmatprep.subr.mxu0 0.0
      %4983 = vmatpush1.msra.mxu0 0.0
      %4984 = vmatprep.subr.mxu0 0.0
      %4985 = vmatpush1.msra.mxu0 0.0
      %4986 = vmatprep.subr.mxu0 0.0
      %4987 = vmatpush1.msra.mxu0 0.0
      %4988 = vmatprep.subr.mxu0 0.0
      %4989 = vmatpush1.msra.mxu0 0.0
      %4990 = vmatprep.subr.mxu0 0.0
      %4991 = vmatpush1.msra.mxu0 0.0
      %4992 = vmatprep.subr.mxu0 0.0
      %4993 = vmatpush1.msra.mxu0 0.0
      %4994 = vmatprep.subr.mxu0 0.0
      %4995 = vmatpush1.msra.mxu0 0.0
      %4996 = vmatprep.subr.mxu0 0.0
      %4997 = vmatpush1.msra.mxu0 0.0
      %4998 = vmatprep.subr.mxu0 0.0
      %4999 = vmatpush1.msra.mxu0 0.0
      %5000 = vmatprep.subr.mxu0 0.0
      %5001 = vmatpush1.msra.mxu0 0.0
      %5002 = vmatprep.subr.mxu0 0.0
      %5003 = vmatpush1.msra.mxu0 0.0
      %5004 = vmatprep.subr.mxu0 0.0
      %5005 = vmatpush1.msra.mxu0 0.0
      %5006 = vmatprep.subr.mxu0 0.0
      %5007 = vmatpush1.msra.mxu0 0.0
      %5008 = vmatprep.mubr.f32.mxu0 0.0
      %5009 = vmatmul.mubr.f32.gmra.mrb[0].mxu0 %v4488
      %v5010 = vpop.f32.mrb[0].mxu0
      %v5011 = vadd.f32 %v4922, %v5010
      %v5012 = vpop.f32.mrb[0].mxu0
      %v5013 = vadd.f32 %v4924, %v5012
      %5014 = vmatprep.mubr.f32.mxu0 0.0
      %5015 = vmatmul.mubr.f32.gmra.mrb[0].mxu0 %v4491
      %v5016 = vpop.f32.mrb[0].mxu0
      %v5017 = vadd.f32 %v4928, %v5016
      %v5018 = vpop.f32.mrb[0].mxu0
      %v5019 = vadd.f32 %v4930, %v5018
      %5020 = vmatprep.mubr.f32.mxu0 0.0
      %5021 = vmatmul.mubr.f32.gmra.mrb[0].mxu0 %v4494
      %v5022 = vpop.f32.mrb[0].mxu0
      %v5023 = vadd.f32 %v4934, %v5022
      %v5024 = vpop.f32.mrb[0].mxu0
      %v5025 = vadd.f32 %v4936, %v5024
      %5026 = vmatprep.mubr.f32.mxu0 0.0
      %5027 = vmatmul.mubr.f32.gmra.mrb[0].mxu0 %v4497
      %v5028 = vpop.f32.mrb[0].mxu0
      %v5029 = vadd.f32 %v4940, %v5028
      %v5030 = vpop.f32.mrb[0].mxu0
      %v5031 = vadd.f32 %v4942, %v5030
      %5032 = vdwg.mxu0
      %5033 = vmatprep.subr.mxu0 %v3406
      %5034 = vmatpush1.msra.mxu0 %v3405
      %5035 = vmatprep.subr.mxu0 %v3414
      %5036 = vmatpush1.msra.mxu0 %v3413
      %5037 = vmatprep.subr.mxu0 %v3422
      %5038 = vmatpush1.msra.mxu0 %v3421
      %5039 = vmatprep.subr.mxu0 %v3430
      %5040 = vmatpush1.msra.mxu0 %v3429
      %5041 = vmatprep.subr.mxu0 %v3501
      %5042 = vmatpush1.msra.mxu0 %v3500
      %5043 = vmatprep.subr.mxu0 %v3508
      %5044 = vmatpush1.msra.mxu0 %v3507
      %5045 = vmatprep.subr.mxu0 %v3515
      %5046 = vmatpush1.msra.mxu0 %v3514
      %5047 = vmatprep.subr.mxu0 %v3522
      %5048 = vmatpush1.msra.mxu0 %v3521
      %5049 = vmatprep.subr.mxu0 %v3694
      %5050 = vmatpush1.msra.mxu0 %v3693
      %5051 = vmatprep.subr.mxu0 %v3702
      %5052 = vmatpush1.msra.mxu0 %v3701
      %5053 = vmatprep.subr.mxu0 %v3710
      %5054 = vmatpush1.msra.mxu0 %v3709
      %5055 = vmatprep.subr.mxu0 %v3718
      %5056 = vmatpush1.msra.mxu0 %v3717
      %5057 = vmatprep.subr.mxu0 %v3854
      %5058 = vmatpush1.msra.mxu0 %v3853
      %5059 = vmatprep.subr.mxu0 %v3862
      %5060 = vmatpush1.msra.mxu0 %v3861
      %5061 = vmatprep.subr.mxu0 %v3870
      %5062 = vmatpush1.msra.mxu0 %v3869
      %5063 = vmatprep.subr.mxu0 %v3878
      %5064 = vmatpush1.msra.mxu0 %v3877
      %5065 = vmatprep.subr.mxu0 %v3202
      %5066 = vmatpush1.msra.mxu0 %v3201
      %5067 = vmatprep.subr.mxu0 %v3210
      %5068 = vmatpush1.msra.mxu0 %v3209
      %5069 = vmatprep.subr.mxu0 %v3218
      %5070 = vmatpush1.msra.mxu0 %v3217
      %5071 = vmatprep.subr.mxu0 %v3226
      %5072 = vmatpush1.msra.mxu0 %v3225
      %5073 = vmatprep.subr.mxu0 %v4014
      %5074 = vmatpush1.msra.mxu0 %v4013
      %5075 = vmatprep.subr.mxu0 %v4022
      %5076 = vmatpush1.msra.mxu0 %v4021
      %5077 = vmatprep.subr.mxu0 %v4030
      %5078 = vmatpush1.msra.mxu0 %v4029
      %5079 = vmatprep.subr.mxu0 %v4038
      %5080 = vmatpush1.msra.mxu0 %v4037
      %5081 = vmatprep.subr.mxu0 %v4174
      %5082 = vmatpush1.msra.mxu0 %v4173
      %5083 = vmatprep.subr.mxu0 %v4182
      %5084 = vmatpush1.msra.mxu0 %v4181
      %5085 = vmatprep.subr.mxu0 %v4190
      %5086 = vmatpush1.msra.mxu0 %v4189
      %5087 = vmatprep.subr.mxu0 %v4198
      %5088 = vmatpush1.msra.mxu0 %v4197
      %5089 = vmatprep.subr.mxu0 %v4323
      %5090 = vmatpush1.msra.mxu0 %v4269
      %5091 = vmatprep.subr.mxu0 %v4324
      %5092 = vmatpush1.msra.mxu0 %v4276
      %5093 = vmatprep.subr.mxu0 %v4325
      %5094 = vmatpush1.msra.mxu0 %v4283
      %5095 = vmatprep.subr.mxu0 %v4326
      %5096 = vmatpush1.msra.mxu0 %v4290
      %5097 = vmatprep.mubr.f32.mxu0 %v3228
      %5098 = vmatmul.mubr.f32.gmra.mrb[0].mxu0 %v3227
      %v5099 = vpop.f32.mrb[0].mxu0
      %v5100 = vadd.f32 0.0, %v5099
      %v5101 = vpop.f32.mrb[0].mxu0
      %v5102 = vadd.f32 0.0, %v5101
      %5103 = vmatprep.mubr.f32.mxu0 %v3231
      %5104 = vmatmul.mubr.f32.gmra.mrb[0].mxu0 %v3230
      %v5105 = vpop.f32.mrb[0].mxu0
      %v5106 = vadd.f32 0.0, %v5105
      %v5107 = vpop.f32.mrb[0].mxu0
      %v5108 = vadd.f32 0.0, %v5107
      %5109 = vmatprep.mubr.f32.mxu0 %v3234
      %5110 = vmatmul.mubr.f32.gmra.mrb[0].mxu0 %v3233
      %v5111 = vpop.f32.mrb[0].mxu0
      %v5112 = vadd.f32 0.0, %v5111
      %v5113 = vpop.f32.mrb[0].mxu0
      %v5114 = vadd.f32 0.0, %v5113
      %5115 = vmatprep.mubr.f32.mxu0 %v3237
      %5116 = vmatmul.mubr.f32.gmra.mrb[0].mxu0 %v3236
      %v5117 = vpop.f32.mrb[0].mxu0
      %v5118 = vadd.f32 0.0, %v5117
      %v5119 = vpop.f32.mrb[0].mxu0
      %v5120 = vadd.f32 0.0, %v5119
      %5121 = vdwg.mxu0
      %5122 = vmatprep.subr.mxu0 %v4462
      %5123 = vmatpush1.msra.mxu0 %v4461
      %5124 = vmatprep.subr.mxu0 %v4470
      %5125 = vmatpush1.msra.mxu0 %v4469
      %5126 = vmatprep.subr.mxu0 %v4478
      %5127 = vmatpush1.msra.mxu0 %v4477
      %5128 = vmatprep.subr.mxu0 %v4486
      %5129 = vmatpush1.msra.mxu0 %v4485
      %5130 = vmatprep.subr.mxu0 0.0
      %5131 = vmatpush1.msra.mxu0 0.0
      %5132 = vmatprep.subr.mxu0 0.0
      %5133 = vmatpush1.msra.mxu0 0.0
      %5134 = vmatprep.subr.mxu0 0.0
      %5135 = vmatpush1.msra.mxu0 0.0
      %5136 = vmatprep.subr.mxu0 0.0
      %5137 = vmatpush1.msra.mxu0 0.0
      %5138 = vmatprep.subr.mxu0 0.0
      %5139 = vmatpush1.msra.mxu0 0.0
      %5140 = vmatprep.subr.mxu0 0.0
      %5141 = vmatpush1.msra.mxu0 0.0
      %5142 = vmatprep.subr.mxu0 0.0
      %5143 = vmatpush1.msra.mxu0 0.0
      %5144 = vmatprep.subr.mxu0 0.0
      %5145 = vmatpush1.msra.mxu0 0.0
      %5146 = vmatprep.subr.mxu0 0.0
      %5147 = vmatpush1.msra.mxu0 0.0
      %5148 = vmatprep.subr.mxu0 0.0
      %5149 = vmatpush1.msra.mxu0 0.0
      %5150 = vmatprep.subr.mxu0 0.0
      %5151 = vmatpush1.msra.mxu0 0.0
      %5152 = vmatprep.subr.mxu0 0.0
      %5153 = vmatpush1.msra.mxu0 0.0
      %5154 = vmatprep.subr.mxu0 0.0
      %5155 = vmatpush1.msra.mxu0 0.0
      %5156 = vmatprep.subr.mxu0 0.0
      %5157 = vmatpush1.msra.mxu0 0.0
      %5158 = vmatprep.subr.mxu0 0.0
      %5159 = vmatpush1.msra.mxu0 0.0
      %5160 = vmatprep.subr.mxu0 0.0
      %5161 = vmatpush1.msra.mxu0 0.0
      %5162 = vmatprep.subr.mxu0 0.0
      %5163 = vmatpush1.msra.mxu0 0.0
      %5164 = vmatprep.subr.mxu0 0.0
      %5165 = vmatpush1.msra.mxu0 0.0
      %5166 = vmatprep.subr.mxu0 0.0
      %5167 = vmatpush1.msra.mxu0 0.0
      %5168 = vmatprep.subr.mxu0 0.0
      %5169 = vmatpush1.msra.mxu0 0.0
      %5170 = vmatprep.subr.mxu0 0.0
      %5171 = vmatpush1.msra.mxu0 0.0
      %5172 = vmatprep.subr.mxu0 0.0
      %5173 = vmatpush1.msra.mxu0 0.0
      %5174 = vmatprep.subr.mxu0 0.0
      %5175 = vmatpush1.msra.mxu0 0.0
      %5176 = vmatprep.subr.mxu0 0.0
      %5177 = vmatpush1.msra.mxu0 0.0
      %5178 = vmatprep.subr.mxu0 0.0
      %5179 = vmatpush1.msra.mxu0 0.0
      %5180 = vmatprep.subr.mxu0 0.0
      %5181 = vmatpush1.msra.mxu0 0.0
      %5182 = vmatprep.subr.mxu0 0.0
      %5183 = vmatpush1.msra.mxu0 0.0
      %5184 = vmatprep.subr.mxu0 0.0
      %5185 = vmatpush1.msra.mxu0 0.0
      %5186 = vmatprep.mubr.f32.mxu0 0.0
      %5187 = vmatmul.mubr.f32.gmra.mrb[0].mxu0 %v4488
      %v5188 = vpop.f32.mrb[0].mxu0
      %v5189 = vadd.f32 %v5100, %v5188
      %v5190 = vpop.f32.mrb[0].mxu0
      %v5191 = vadd.f32 %v5102, %v5190
      %5192 = vmatprep.mubr.f32.mxu0 0.0
      %5193 = vmatmul.mubr.f32.gmra.mrb[0].mxu0 %v4491
      %v5194 = vpop.f32.mrb[0].mxu0
      %v5195 = vadd.f32 %v5106, %v5194
      %v5196 = vpop.f32.mrb[0].mxu0
      %v5197 = vadd.f32 %v5108, %v5196
      %5198 = vmatprep.mubr.f32.mxu0 0.0
      %5199 = vmatmul.mubr.f32.gmra.mrb[0].mxu0 %v4494
      %v5200 = vpop.f32.mrb[0].mxu0
      %v5201 = vadd.f32 %v5112, %v5200
      %v5202 = vpop.f32.mrb[0].mxu0
      %v5203 = vadd.f32 %v5114, %v5202
      %5204 = vmatprep.mubr.f32.mxu0 0.0
      %5205 = vmatmul.mubr.f32.gmra.mrb[0].mxu0 %v4497
      %v5206 = vpop.f32.mrb[0].mxu0
      %v5207 = vadd.f32 %v5118, %v5206
      %v5208 = vpop.f32.mrb[0].mxu0
      %v5209 = vadd.f32 %v5120, %v5208
      %5210 = vdwg.mxu0
      %v5211 = vmax.f32 %v4655, 0.0
      %v5212 = vmax.f32 %v4657, 0.0
      %v5213 = vmax.f32 %v4833, 0.0
      %v5214 = vmax.f32 %v4835, 0.0
      %v5215 = vmax.f32 %v5011, 0.0
      %v5216 = vmax.f32 %v5013, 0.0
      %v5217 = vmax.f32 %v5189, 0.0
      %v5218 = vmax.f32 %v5191, 0.0
      %v5219 = vmax.f32 %v4661, 0.0
      %v5220 = vmax.f32 %v4663, 0.0
      %v5221 = vmax.f32 %v4839, 0.0
      %v5222 = vmax.f32 %v4841, 0.0
      %v5223 = vmax.f32 %v5017, 0.0
      %v5224 = vmax.f32 %v5019, 0.0
      %v5225 = vmax.f32 %v5195, 0.0
      %v5226 = vmax.f32 %v5197, 0.0
      %v5227 = vmax.f32 %v4667, 0.0
      %v5228 = vmax.f32 %v4669, 0.0
      %v5229 = vmax.f32 %v4845, 0.0
      %v5230 = vmax.f32 %v4847, 0.0
      %v5231 = vmax.f32 %v5023, 0.0
      %v5232 = vmax.f32 %v5025, 0.0
      %v5233 = vmax.f32 %v5201, 0.0
      %v5234 = vmax.f32 %v5203, 0.0
      %v5235 = vmax.f32 %v4673, 0.0
      %v5236 = vmax.f32 %v4675, 0.0
      %v5237 = vmax.f32 %v4851, 0.0
      %v5238 = vmax.f32 %v4853, 0.0
      %v5239 = vmax.f32 %v5029, 0.0
      %v5240 = vmax.f32 %v5031, 0.0
      %v5241 = vmax.f32 %v5207, 0.0
      %v5242 = vmax.f32 %v5209, 0.0
      %v5243 = vld [vmem:[%s5] sm:$0xff]
      %v5244 = vld [vmem:[%s5 + $0x8] sm:$0xff]
      %v5245 = vld [vmem:[%s5 + $0x10] sm:$0xff]
      %v5246 = vld [vmem:[%s5 + $0x18] sm:$0xff]
      %v5247 = vld [vmem:[%s5 + $0x20] sm:$0xff]
      %v5248 = vld [vmem:[%s5 + $0x28] sm:$0xff]
      %v5249 = vld [vmem:[%s5 + $0x30] sm:$0xff]
      %v5250 = vld [vmem:[%s5 + $0x38] sm:$0xff]
      %v5251 = vld [vmem:[%s5 + $0x40] sm:$0xff]
      %v5252 = vld [vmem:[%s5 + $0x48] sm:$0xff]
      %v5253 = vld [vmem:[%s5 + $0x50] sm:$0xff]
      %v5254 = vld [vmem:[%s5 + $0x58] sm:$0xff]
      %5287 = vrot.lane.b32.xlu0 %v5211, 33
      %v5288 = vpop.permute.xlu0 %5287
      %5289 = vrot.lane.b32.xlu0 %v5212, 33
      %v5290 = vpop.permute.xlu0 %5289
      %5291 = vrot.lane.b32.xlu0 %v5213, 33
      %v5292 = vpop.permute.xlu0 %5291
      %5293 = vrot.lane.b32.xlu0 %v5214, 33
      %v5294 = vpop.permute.xlu0 %5293
      %5295 = vrot.lane.b32.xlu0 %v5215, 33
      %v5296 = vpop.permute.xlu0 %5295
      %5297 = vrot.lane.b32.xlu0 %v5216, 33
      %v5298 = vpop.permute.xlu0 %5297
      %5299 = vrot.lane.b32.xlu0 %v5217, 33
      %v5300 = vpop.permute.xlu0 %5299
      %5301 = vrot.lane.b32.xlu0 %v5218, 33
      %v5302 = vpop.permute.xlu0 %5301
      %5303 = vrot.lane.b32.xlu0 %v5219, 33
      %v5304 = vpop.permute.xlu0 %5303
      %5305 = vrot.lane.b32.xlu0 %v5220, 33
      %v5306 = vpop.permute.xlu0 %5305
      %5307 = vrot.lane.b32.xlu0 %v5221, 33
      %v5308 = vpop.permute.xlu0 %5307
      %5309 = vrot.lane.b32.xlu0 %v5222, 33
      %v5310 = vpop.permute.xlu0 %5309
      %5311 = vrot.lane.b32.xlu0 %v5223, 33
      %v5312 = vpop.permute.xlu0 %5311
      %5313 = vrot.lane.b32.xlu0 %v5224, 33
      %v5314 = vpop.permute.xlu0 %5313
      %5315 = vrot.lane.b32.xlu0 %v5225, 33
      %v5316 = vpop.permute.xlu0 %5315
      %5317 = vrot.lane.b32.xlu0 %v5226, 33
      %v5318 = vpop.permute.xlu0 %5317
      %5319 = vrot.lane.b32.xlu0 %v5227, 33
      %v5320 = vpop.permute.xlu0 %5319
      %5321 = vrot.lane.b32.xlu0 %v5228, 33
      %v5322 = vpop.permute.xlu0 %5321
      %5323 = vrot.lane.b32.xlu0 %v5229, 33
      %v5324 = vpop.permute.xlu0 %5323
      %5325 = vrot.lane.b32.xlu0 %v5230, 33
      %v5326 = vpop.permute.xlu0 %5325
      %5327 = vrot.lane.b32.xlu0 %v5231, 33
      %v5328 = vpop.permute.xlu0 %5327
      %5329 = vrot.lane.b32.xlu0 %v5232, 33
      %v5330 = vpop.permute.xlu0 %5329
      %5331 = vrot.lane.b32.xlu0 %v5233, 33
      %v5332 = vpop.permute.xlu0 %5331
      %5333 = vrot.lane.b32.xlu0 %v5234, 33
      %v5334 = vpop.permute.xlu0 %5333
      %5335 = vrot.lane.b32.xlu0 %v5235, 33
      %v5336 = vpop.permute.xlu0 %5335
      %5337 = vrot.lane.b32.xlu0 %v5236, 33
      %v5338 = vpop.permute.xlu0 %5337
      %5339 = vrot.lane.b32.xlu0 %v5237, 33
      %v5340 = vpop.permute.xlu0 %5339
      %5341 = vrot.lane.b32.xlu0 %v5238, 33
      %v5342 = vpop.permute.xlu0 %5341
      %5343 = vrot.lane.b32.xlu0 %v5239, 33
      %v5344 = vpop.permute.xlu0 %5343
      %5345 = vrot.lane.b32.xlu0 %v5240, 33
      %v5346 = vpop.permute.xlu0 %5345
      %5347 = vrot.lane.b32.xlu0 %v5241, 33
      %v5348 = vpop.permute.xlu0 %5347
      %5349 = vrot.lane.b32.xlu0 %v5242, 33
      %v5350 = vpop.permute.xlu0 %5349
      %v5351 = vsel %vm494, %v5288, %v5290
      %v5352 = vsel %vm494, %v5290, %v5292
      %v5353 = vsel %vm494, %v5292, %v5294
      %v5354 = vsel %vm494, %v5294, %v5296
      %v5355 = vsel %vm494, %v5296, %v5298
      %v5356 = vsel %vm494, %v5298, %v5300
      %v5357 = vsel %vm494, %v5300, %v5302
      %v5358 = vsel %vm494, %v5304, %v5306
      %v5359 = vsel %vm494, %v5306, %v5308
      %v5360 = vsel %vm494, %v5308, %v5310
      %v5361 = vsel %vm494, %v5310, %v5312
      %v5362 = vsel %vm494, %v5312, %v5314
      %v5363 = vsel %vm494, %v5314, %v5316
      %v5364 = vsel %vm494, %v5316, %v5318
      %v5365 = vsel %vm494, %v5320, %v5322
      %v5366 = vsel %vm494, %v5322, %v5324
      %v5367 = vsel %vm494, %v5324, %v5326
      %v5368 = vsel %vm494, %v5326, %v5328
      %v5369 = vsel %vm494, %v5328, %v5330
      %v5370 = vsel %vm494, %v5330, %v5332
      %v5371 = vsel %vm494, %v5332, %v5334
      %v5372 = vsel %vm494, %v5336, %v5338
      %v5373 = vsel %vm494, %v5338, %v5340
      %v5374 = vsel %vm494, %v5340, %v5342
      %v5375 = vsel %vm494, %v5342, %v5344
      %v5376 = vsel %vm494, %v5344, %v5346
      %v5377 = vsel %vm494, %v5346, %v5348
      %v5378 = vsel %vm494, %v5348, %v5350
      %v5411 = vsel %vm494, 0.0, %v5288
      %v5412 = vsel %vm494, 0.0, %v5304
      %v5413 = vsel %vm494, 0.0, %v5320
      %v5414 = vsel %vm494, 0.0, %v5336
      %v5415 = vsel %vm519, %v5411, 0.0
      %v5416 = vsel %vm520, %v5351, 0.0
      %v5417 = vsel %vm521, %v5352, 0.0
      %v5418 = vsel %vm522, %v5353, 0.0
      %v5419 = vsel %vm523, %v5354, 0.0
      %v5420 = vsel %vm524, %v5355, 0.0
      %v5421 = vsel %vm525, %v5356, 0.0
      %v5422 = vsel %vm526, %v5357, 0.0
      %v5423 = vsel %vm519, %v5412, 0.0
      %v5424 = vsel %vm520, %v5358, 0.0
      %v5425 = vsel %vm521, %v5359, 0.0
      %v5426 = vsel %vm522, %v5360, 0.0
      %v5427 = vsel %vm523, %v5361, 0.0
      %v5428 = vsel %vm524, %v5362, 0.0
      %v5429 = vsel %vm525, %v5363, 0.0
      %v5430 = vsel %vm526, %v5364, 0.0
      %v5431 = vsel %vm519, %v5413, 0.0
      %v5432 = vsel %vm520, %v5365, 0.0
      %v5433 = vsel %vm521, %v5366, 0.0
      %v5434 = vsel %vm522, %v5367, 0.0
      %v5435 = vsel %vm523, %v5368, 0.0
      %v5436 = vsel %vm524, %v5369, 0.0
      %v5437 = vsel %vm525, %v5370, 0.0
      %v5438 = vsel %vm526, %v5371, 0.0
      %v5439 = vsel %vm519, %v5414, 0.0
      %v5440 = vsel %vm520, %v5372, 0.0
      %v5441 = vsel %vm521, %v5373, 0.0
      %v5442 = vsel %vm522, %v5374, 0.0
      %v5443 = vsel %vm523, %v5375, 0.0
      %v5444 = vsel %vm524, %v5376, 0.0
      %v5445 = vsel %vm525, %v5377, 0.0
      %v5446 = vsel %vm526, %v5378, 0.0
      %5447 = vrot.lane.b32.xlu0 %v5211, 32
      %v5448 = vpop.permute.xlu0 %5447
      %5449 = vrot.lane.b32.xlu0 %v5212, 32
      %v5450 = vpop.permute.xlu0 %5449
      %5451 = vrot.lane.b32.xlu0 %v5213, 32
      %v5452 = vpop.permute.xlu0 %5451
      %5453 = vrot.lane.b32.xlu0 %v5214, 32
      %v5454 = vpop.permute.xlu0 %5453
      %5455 = vrot.lane.b32.xlu0 %v5215, 32
      %v5456 = vpop.permute.xlu0 %5455
      %5457 = vrot.lane.b32.xlu0 %v5216, 32
      %v5458 = vpop.permute.xlu0 %5457
      %5459 = vrot.lane.b32.xlu0 %v5217, 32
      %v5460 = vpop.permute.xlu0 %5459
      %5461 = vrot.lane.b32.xlu0 %v5218, 32
      %v5462 = vpop.permute.xlu0 %5461
      %5463 = vrot.lane.b32.xlu0 %v5219, 32
      %v5464 = vpop.permute.xlu0 %5463
      %5465 = vrot.lane.b32.xlu0 %v5220, 32
      %v5466 = vpop.permute.xlu0 %5465
      %5467 = vrot.lane.b32.xlu0 %v5221, 32
      %v5468 = vpop.permute.xlu0 %5467
      %5469 = vrot.lane.b32.xlu0 %v5222, 32
      %v5470 = vpop.permute.xlu0 %5469
      %5471 = vrot.lane.b32.xlu0 %v5223, 32
      %v5472 = vpop.permute.xlu0 %5471
      %5473 = vrot.lane.b32.xlu0 %v5224, 32
      %v5474 = vpop.permute.xlu0 %5473
      %5475 = vrot.lane.b32.xlu0 %v5225, 32
      %v5476 = vpop.permute.xlu0 %5475
      %5477 = vrot.lane.b32.xlu0 %v5226, 32
      %v5478 = vpop.permute.xlu0 %5477
      %5479 = vrot.lane.b32.xlu0 %v5227, 32
      %v5480 = vpop.permute.xlu0 %5479
      %5481 = vrot.lane.b32.xlu0 %v5228, 32
      %v5482 = vpop.permute.xlu0 %5481
      %5483 = vrot.lane.b32.xlu0 %v5229, 32
      %v5484 = vpop.permute.xlu0 %5483
      %5485 = vrot.lane.b32.xlu0 %v5230, 32
      %v5486 = vpop.permute.xlu0 %5485
      %5487 = vrot.lane.b32.xlu0 %v5231, 32
      %v5488 = vpop.permute.xlu0 %5487
      %5489 = vrot.lane.b32.xlu0 %v5232, 32
      %v5490 = vpop.permute.xlu0 %5489
      %5491 = vrot.lane.b32.xlu0 %v5233, 32
      %v5492 = vpop.permute.xlu0 %5491
      %5493 = vrot.lane.b32.xlu0 %v5234, 32
      %v5494 = vpop.permute.xlu0 %5493
      %5495 = vrot.lane.b32.xlu0 %v5235, 32
      %v5496 = vpop.permute.xlu0 %5495
      %5497 = vrot.lane.b32.xlu0 %v5236, 32
      %v5498 = vpop.permute.xlu0 %5497
      %5499 = vrot.lane.b32.xlu0 %v5237, 32
      %v5500 = vpop.permute.xlu0 %5499
      %5501 = vrot.lane.b32.xlu0 %v5238, 32
      %v5502 = vpop.permute.xlu0 %5501
      %5503 = vrot.lane.b32.xlu0 %v5239, 32
      %v5504 = vpop.permute.xlu0 %5503
      %5505 = vrot.lane.b32.xlu0 %v5240, 32
      %v5506 = vpop.permute.xlu0 %5505
      %5507 = vrot.lane.b32.xlu0 %v5241, 32
      %v5508 = vpop.permute.xlu0 %5507
      %5509 = vrot.lane.b32.xlu0 %v5242, 32
      %v5510 = vpop.permute.xlu0 %5509
      %v5511 = vsel %vm551, %v5448, %v5450
      %v5512 = vsel %vm551, %v5450, %v5452
      %v5513 = vsel %vm551, %v5452, %v5454
      %v5514 = vsel %vm551, %v5454, %v5456
      %v5515 = vsel %vm551, %v5456, %v5458
      %v5516 = vsel %vm551, %v5458, %v5460
      %v5517 = vsel %vm551, %v5460, %v5462
      %v5518 = vsel %vm551, %v5464, %v5466
      %v5519 = vsel %vm551, %v5466, %v5468
      %v5520 = vsel %vm551, %v5468, %v5470
      %v5521 = vsel %vm551, %v5470, %v5472
      %v5522 = vsel %vm551, %v5472, %v5474
      %v5523 = vsel %vm551, %v5474, %v5476
      %v5524 = vsel %vm551, %v5476, %v5478
      %v5525 = vsel %vm551, %v5480, %v5482
      %v5526 = vsel %vm551, %v5482, %v5484
      %v5527 = vsel %vm551, %v5484, %v5486
      %v5528 = vsel %vm551, %v5486, %v5488
      %v5529 = vsel %vm551, %v5488, %v5490
      %v5530 = vsel %vm551, %v5490, %v5492
      %v5531 = vsel %vm551, %v5492, %v5494
      %v5532 = vsel %vm551, %v5496, %v5498
      %v5533 = vsel %vm551, %v5498, %v5500
      %v5534 = vsel %vm551, %v5500, %v5502
      %v5535 = vsel %vm551, %v5502, %v5504
      %v5536 = vsel %vm551, %v5504, %v5506
      %v5537 = vsel %vm551, %v5506, %v5508
      %v5538 = vsel %vm551, %v5508, %v5510
      %v5571 = vsel %vm551, 0.0, %v5448
      %v5572 = vsel %vm551, 0.0, %v5464
      %v5573 = vsel %vm551, 0.0, %v5480
      %v5574 = vsel %vm551, 0.0, %v5496
      %5575 = vrot.lane.b32.xlu0 %v5211, 31
      %v5576 = vpop.permute.xlu0 %5575
      %5577 = vrot.lane.b32.xlu0 %v5212, 31
      %v5578 = vpop.permute.xlu0 %5577
      %5579 = vrot.lane.b32.xlu0 %v5213, 31
      %v5580 = vpop.permute.xlu0 %5579
      %5581 = vrot.lane.b32.xlu0 %v5214, 31
      %v5582 = vpop.permute.xlu0 %5581
      %5583 = vrot.lane.b32.xlu0 %v5215, 31
      %v5584 = vpop.permute.xlu0 %5583
      %5585 = vrot.lane.b32.xlu0 %v5216, 31
      %v5586 = vpop.permute.xlu0 %5585
      %5587 = vrot.lane.b32.xlu0 %v5217, 31
      %v5588 = vpop.permute.xlu0 %5587
      %5589 = vrot.lane.b32.xlu0 %v5218, 31
      %v5590 = vpop.permute.xlu0 %5589
      %5591 = vrot.lane.b32.xlu0 %v5219, 31
      %v5592 = vpop.permute.xlu0 %5591
      %5593 = vrot.lane.b32.xlu0 %v5220, 31
      %v5594 = vpop.permute.xlu0 %5593
      %5595 = vrot.lane.b32.xlu0 %v5221, 31
      %v5596 = vpop.permute.xlu0 %5595
      %5597 = vrot.lane.b32.xlu0 %v5222, 31
      %v5598 = vpop.permute.xlu0 %5597
      %5599 = vrot.lane.b32.xlu0 %v5223, 31
      %v5600 = vpop.permute.xlu0 %5599
      %5601 = vrot.lane.b32.xlu0 %v5224, 31
      %v5602 = vpop.permute.xlu0 %5601
      %5603 = vrot.lane.b32.xlu0 %v5225, 31
      %v5604 = vpop.permute.xlu0 %5603
      %5605 = vrot.lane.b32.xlu0 %v5226, 31
      %v5606 = vpop.permute.xlu0 %5605
      %5607 = vrot.lane.b32.xlu0 %v5227, 31
      %v5608 = vpop.permute.xlu0 %5607
      %5609 = vrot.lane.b32.xlu0 %v5228, 31
      %v5610 = vpop.permute.xlu0 %5609
      %5611 = vrot.lane.b32.xlu0 %v5229, 31
      %v5612 = vpop.permute.xlu0 %5611
      %5613 = vrot.lane.b32.xlu0 %v5230, 31
      %v5614 = vpop.permute.xlu0 %5613
      %5615 = vrot.lane.b32.xlu0 %v5231, 31
      %v5616 = vpop.permute.xlu0 %5615
      %5617 = vrot.lane.b32.xlu0 %v5232, 31
      %v5618 = vpop.permute.xlu0 %5617
      %5619 = vrot.lane.b32.xlu0 %v5233, 31
      %v5620 = vpop.permute.xlu0 %5619
      %5621 = vrot.lane.b32.xlu0 %v5234, 31
      %v5622 = vpop.permute.xlu0 %5621
      %5623 = vrot.lane.b32.xlu0 %v5235, 31
      %v5624 = vpop.permute.xlu0 %5623
      %5625 = vrot.lane.b32.xlu0 %v5236, 31
      %v5626 = vpop.permute.xlu0 %5625
      %5627 = vrot.lane.b32.xlu0 %v5237, 31
      %v5628 = vpop.permute.xlu0 %5627
      %5629 = vrot.lane.b32.xlu0 %v5238, 31
      %v5630 = vpop.permute.xlu0 %5629
      %5631 = vrot.lane.b32.xlu0 %v5239, 31
      %v5632 = vpop.permute.xlu0 %5631
      %5633 = vrot.lane.b32.xlu0 %v5240, 31
      %v5634 = vpop.permute.xlu0 %5633
      %5635 = vrot.lane.b32.xlu0 %v5241, 31
      %v5636 = vpop.permute.xlu0 %5635
      %5637 = vrot.lane.b32.xlu0 %v5242, 31
      %v5638 = vpop.permute.xlu0 %5637
      %v5639 = vsel %vm584, %v5576, %v5578
      %v5640 = vsel %vm584, %v5578, %v5580
      %v5641 = vsel %vm584, %v5580, %v5582
      %v5642 = vsel %vm584, %v5582, %v5584
      %v5643 = vsel %vm584, %v5584, %v5586
      %v5644 = vsel %vm584, %v5586, %v5588
      %v5645 = vsel %vm584, %v5588, %v5590
      %v5646 = vsel %vm584, %v5592, %v5594
      %v5647 = vsel %vm584, %v5594, %v5596
      %v5648 = vsel %vm584, %v5596, %v5598
      %v5649 = vsel %vm584, %v5598, %v5600
      %v5650 = vsel %vm584, %v5600, %v5602
      %v5651 = vsel %vm584, %v5602, %v5604
      %v5652 = vsel %vm584, %v5604, %v5606
      %v5653 = vsel %vm584, %v5608, %v5610
      %v5654 = vsel %vm584, %v5610, %v5612
      %v5655 = vsel %vm584, %v5612, %v5614
      %v5656 = vsel %vm584, %v5614, %v5616
      %v5657 = vsel %vm584, %v5616, %v5618
      %v5658 = vsel %vm584, %v5618, %v5620
      %v5659 = vsel %vm584, %v5620, %v5622
      %v5660 = vsel %vm584, %v5624, %v5626
      %v5661 = vsel %vm584, %v5626, %v5628
      %v5662 = vsel %vm584, %v5628, %v5630
      %v5663 = vsel %vm584, %v5630, %v5632
      %v5664 = vsel %vm584, %v5632, %v5634
      %v5665 = vsel %vm584, %v5634, %v5636
      %v5666 = vsel %vm584, %v5636, %v5638
      %v5699 = vsel %vm584, 0.0, %v5576
      %v5700 = vsel %vm584, 0.0, %v5592
      %v5701 = vsel %vm584, 0.0, %v5608
      %v5702 = vsel %vm584, 0.0, %v5624
      %v5703 = vsel %vm609, %v5699, 0.0
      %v5704 = vsel %vm610, %v5639, 0.0
      %v5705 = vsel %vm611, %v5640, 0.0
      %v5706 = vsel %vm612, %v5641, 0.0
      %v5707 = vsel %vm613, %v5642, 0.0
      %v5708 = vsel %vm614, %v5643, 0.0
      %v5709 = vsel %vm615, %v5644, 0.0
      %v5710 = vsel %vm616, %v5645, 0.0
      %v5711 = vsel %vm609, %v5700, 0.0
      %v5712 = vsel %vm610, %v5646, 0.0
      %v5713 = vsel %vm611, %v5647, 0.0
      %v5714 = vsel %vm612, %v5648, 0.0
      %v5715 = vsel %vm613, %v5649, 0.0
      %v5716 = vsel %vm614, %v5650, 0.0
      %v5717 = vsel %vm615, %v5651, 0.0
      %v5718 = vsel %vm616, %v5652, 0.0
      %v5719 = vsel %vm609, %v5701, 0.0
      %v5720 = vsel %vm610, %v5653, 0.0
      %v5721 = vsel %vm611, %v5654, 0.0
      %v5722 = vsel %vm612, %v5655, 0.0
      %v5723 = vsel %vm613, %v5656, 0.0
      %v5724 = vsel %vm614, %v5657, 0.0
      %v5725 = vsel %vm615, %v5658, 0.0
      %v5726 = vsel %vm616, %v5659, 0.0
      %v5727 = vsel %vm609, %v5702, 0.0
      %v5728 = vsel %vm610, %v5660, 0.0
      %v5729 = vsel %vm611, %v5661, 0.0
      %v5730 = vsel %vm612, %v5662, 0.0
      %v5731 = vsel %vm613, %v5663, 0.0
      %v5732 = vsel %vm614, %v5664, 0.0
      %v5733 = vsel %vm615, %v5665, 0.0
      %v5734 = vsel %vm616, %v5666, 0.0
      %5735 = vrot.lane.b32.xlu0 %v5211, 1
      %v5736 = vpop.permute.xlu0 %5735
      %5737 = vrot.lane.b32.xlu0 %v5212, 1
      %v5738 = vpop.permute.xlu0 %5737
      %5739 = vrot.lane.b32.xlu0 %v5213, 1
      %v5740 = vpop.permute.xlu0 %5739
      %5741 = vrot.lane.b32.xlu0 %v5214, 1
      %v5742 = vpop.permute.xlu0 %5741
      %5743 = vrot.lane.b32.xlu0 %v5215, 1
      %v5744 = vpop.permute.xlu0 %5743
      %5745 = vrot.lane.b32.xlu0 %v5216, 1
      %v5746 = vpop.permute.xlu0 %5745
      %5747 = vrot.lane.b32.xlu0 %v5217, 1
      %v5748 = vpop.permute.xlu0 %5747
      %5749 = vrot.lane.b32.xlu0 %v5218, 1
      %v5750 = vpop.permute.xlu0 %5749
      %5751 = vrot.lane.b32.xlu0 %v5219, 1
      %v5752 = vpop.permute.xlu0 %5751
      %5753 = vrot.lane.b32.xlu0 %v5220, 1
      %v5754 = vpop.permute.xlu0 %5753
      %5755 = vrot.lane.b32.xlu0 %v5221, 1
      %v5756 = vpop.permute.xlu0 %5755
      %5757 = vrot.lane.b32.xlu0 %v5222, 1
      %v5758 = vpop.permute.xlu0 %5757
      %5759 = vrot.lane.b32.xlu0 %v5223, 1
      %v5760 = vpop.permute.xlu0 %5759
      %5761 = vrot.lane.b32.xlu0 %v5224, 1
      %v5762 = vpop.permute.xlu0 %5761
      %5763 = vrot.lane.b32.xlu0 %v5225, 1
      %v5764 = vpop.permute.xlu0 %5763
      %5765 = vrot.lane.b32.xlu0 %v5226, 1
      %v5766 = vpop.permute.xlu0 %5765
      %5767 = vrot.lane.b32.xlu0 %v5227, 1
      %v5768 = vpop.permute.xlu0 %5767
      %5769 = vrot.lane.b32.xlu0 %v5228, 1
      %v5770 = vpop.permute.xlu0 %5769
      %5771 = vrot.lane.b32.xlu0 %v5229, 1
      %v5772 = vpop.permute.xlu0 %5771
      %5773 = vrot.lane.b32.xlu0 %v5230, 1
      %v5774 = vpop.permute.xlu0 %5773
      %5775 = vrot.lane.b32.xlu0 %v5231, 1
      %v5776 = vpop.permute.xlu0 %5775
      %5777 = vrot.lane.b32.xlu0 %v5232, 1
      %v5778 = vpop.permute.xlu0 %5777
      %5779 = vrot.lane.b32.xlu0 %v5233, 1
      %v5780 = vpop.permute.xlu0 %5779
      %5781 = vrot.lane.b32.xlu0 %v5234, 1
      %v5782 = vpop.permute.xlu0 %5781
      %5783 = vrot.lane.b32.xlu0 %v5235, 1
      %v5784 = vpop.permute.xlu0 %5783
      %5785 = vrot.lane.b32.xlu0 %v5236, 1
      %v5786 = vpop.permute.xlu0 %5785
      %5787 = vrot.lane.b32.xlu0 %v5237, 1
      %v5788 = vpop.permute.xlu0 %5787
      %5789 = vrot.lane.b32.xlu0 %v5238, 1
      %v5790 = vpop.permute.xlu0 %5789
      %5791 = vrot.lane.b32.xlu0 %v5239, 1
      %v5792 = vpop.permute.xlu0 %5791
      %5793 = vrot.lane.b32.xlu0 %v5240, 1
      %v5794 = vpop.permute.xlu0 %5793
      %5795 = vrot.lane.b32.xlu0 %v5241, 1
      %v5796 = vpop.permute.xlu0 %5795
      %5797 = vrot.lane.b32.xlu0 %v5242, 1
      %v5798 = vpop.permute.xlu0 %5797
      %v5799 = vsel %vm641, %v5736, %v5738
      %v5800 = vsel %vm641, %v5738, %v5740
      %v5801 = vsel %vm641, %v5740, %v5742
      %v5802 = vsel %vm641, %v5742, %v5744
      %v5803 = vsel %vm641, %v5744, %v5746
      %v5804 = vsel %vm641, %v5746, %v5748
      %v5805 = vsel %vm641, %v5748, %v5750
      %v5806 = vsel %vm641, %v5752, %v5754
      %v5807 = vsel %vm641, %v5754, %v5756
      %v5808 = vsel %vm641, %v5756, %v5758
      %v5809 = vsel %vm641, %v5758, %v5760
      %v5810 = vsel %vm641, %v5760, %v5762
      %v5811 = vsel %vm641, %v5762, %v5764
      %v5812 = vsel %vm641, %v5764, %v5766
      %v5813 = vsel %vm641, %v5768, %v5770
      %v5814 = vsel %vm641, %v5770, %v5772
      %v5815 = vsel %vm641, %v5772, %v5774
      %v5816 = vsel %vm641, %v5774, %v5776
      %v5817 = vsel %vm641, %v5776, %v5778
      %v5818 = vsel %vm641, %v5778, %v5780
      %v5819 = vsel %vm641, %v5780, %v5782
      %v5820 = vsel %vm641, %v5784, %v5786
      %v5821 = vsel %vm641, %v5786, %v5788
      %v5822 = vsel %vm641, %v5788, %v5790
      %v5823 = vsel %vm641, %v5790, %v5792
      %v5824 = vsel %vm641, %v5792, %v5794
      %v5825 = vsel %vm641, %v5794, %v5796
      %v5826 = vsel %vm641, %v5796, %v5798
      %v5859 = vsel %vm641, 0.0, %v5736
      %v5860 = vsel %vm641, 0.0, %v5752
      %v5861 = vsel %vm641, 0.0, %v5768
      %v5862 = vsel %vm641, 0.0, %v5784
      %v5863 = vsel %vm519, %v5859, 0.0
      %v5864 = vsel %vm520, %v5799, 0.0
      %v5865 = vsel %vm521, %v5800, 0.0
      %v5866 = vsel %vm522, %v5801, 0.0
      %v5867 = vsel %vm523, %v5802, 0.0
      %v5868 = vsel %vm524, %v5803, 0.0
      %v5869 = vsel %vm525, %v5804, 0.0
      %v5870 = vsel %vm526, %v5805, 0.0
      %v5871 = vsel %vm519, %v5860, 0.0
      %v5872 = vsel %vm520, %v5806, 0.0
      %v5873 = vsel %vm521, %v5807, 0.0
      %v5874 = vsel %vm522, %v5808, 0.0
      %v5875 = vsel %vm523, %v5809, 0.0
      %v5876 = vsel %vm524, %v5810, 0.0
      %v5877 = vsel %vm525, %v5811, 0.0
      %v5878 = vsel %vm526, %v5812, 0.0
      %v5879 = vsel %vm519, %v5861, 0.0
      %v5880 = vsel %vm520, %v5813, 0.0
      %v5881 = vsel %vm521, %v5814, 0.0
      %v5882 = vsel %vm522, %v5815, 0.0
      %v5883 = vsel %vm523, %v5816, 0.0
      %v5884 = vsel %vm524, %v5817, 0.0
      %v5885 = vsel %vm525, %v5818, 0.0
      %v5886 = vsel %vm526, %v5819, 0.0
      %v5887 = vsel %vm519, %v5862, 0.0
      %v5888 = vsel %vm520, %v5820, 0.0
      %v5889 = vsel %vm521, %v5821, 0.0
      %v5890 = vsel %vm522, %v5822, 0.0
      %v5891 = vsel %vm523, %v5823, 0.0
      %v5892 = vsel %vm524, %v5824, 0.0
      %v5893 = vsel %vm525, %v5825, 0.0
      %v5894 = vsel %vm526, %v5826, 0.0
      %5895 = vrot.lane.b32.xlu0 %v5211, 127
      %v5896 = vpop.permute.xlu0 %5895
      %5897 = vrot.lane.b32.xlu0 %v5212, 127
      %v5898 = vpop.permute.xlu0 %5897
      %5899 = vrot.lane.b32.xlu0 %v5213, 127
      %v5900 = vpop.permute.xlu0 %5899
      %5901 = vrot.lane.b32.xlu0 %v5214, 127
      %v5902 = vpop.permute.xlu0 %5901
      %5903 = vrot.lane.b32.xlu0 %v5215, 127
      %v5904 = vpop.permute.xlu0 %5903
      %5905 = vrot.lane.b32.xlu0 %v5216, 127
      %v5906 = vpop.permute.xlu0 %5905
      %5907 = vrot.lane.b32.xlu0 %v5217, 127
      %v5908 = vpop.permute.xlu0 %5907
      %5909 = vrot.lane.b32.xlu0 %v5218, 127
      %v5910 = vpop.permute.xlu0 %5909
      %5911 = vrot.lane.b32.xlu0 %v5219, 127
      %v5912 = vpop.permute.xlu0 %5911
      %5913 = vrot.lane.b32.xlu0 %v5220, 127
      %v5914 = vpop.permute.xlu0 %5913
      %5915 = vrot.lane.b32.xlu0 %v5221, 127
      %v5916 = vpop.permute.xlu0 %5915
      %5917 = vrot.lane.b32.xlu0 %v5222, 127
      %v5918 = vpop.permute.xlu0 %5917
      %5919 = vrot.lane.b32.xlu0 %v5223, 127
      %v5920 = vpop.permute.xlu0 %5919
      %5921 = vrot.lane.b32.xlu0 %v5224, 127
      %v5922 = vpop.permute.xlu0 %5921
      %5923 = vrot.lane.b32.xlu0 %v5225, 127
      %v5924 = vpop.permute.xlu0 %5923
      %5925 = vrot.lane.b32.xlu0 %v5226, 127
      %v5926 = vpop.permute.xlu0 %5925
      %5927 = vrot.lane.b32.xlu0 %v5227, 127
      %v5928 = vpop.permute.xlu0 %5927
      %5929 = vrot.lane.b32.xlu0 %v5228, 127
      %v5930 = vpop.permute.xlu0 %5929
      %5931 = vrot.lane.b32.xlu0 %v5229, 127
      %v5932 = vpop.permute.xlu0 %5931
      %5933 = vrot.lane.b32.xlu0 %v5230, 127
      %v5934 = vpop.permute.xlu0 %5933
      %5935 = vrot.lane.b32.xlu0 %v5231, 127
      %v5936 = vpop.permute.xlu0 %5935
      %5937 = vrot.lane.b32.xlu0 %v5232, 127
      %v5938 = vpop.permute.xlu0 %5937
      %5939 = vrot.lane.b32.xlu0 %v5233, 127
      %v5940 = vpop.permute.xlu0 %5939
      %5941 = vrot.lane.b32.xlu0 %v5234, 127
      %v5942 = vpop.permute.xlu0 %5941
      %5943 = vrot.lane.b32.xlu0 %v5235, 127
      %v5944 = vpop.permute.xlu0 %5943
      %5945 = vrot.lane.b32.xlu0 %v5236, 127
      %v5946 = vpop.permute.xlu0 %5945
      %5947 = vrot.lane.b32.xlu0 %v5237, 127
      %v5948 = vpop.permute.xlu0 %5947
      %5949 = vrot.lane.b32.xlu0 %v5238, 127
      %v5950 = vpop.permute.xlu0 %5949
      %5951 = vrot.lane.b32.xlu0 %v5239, 127
      %v5952 = vpop.permute.xlu0 %5951
      %5953 = vrot.lane.b32.xlu0 %v5240, 127
      %v5954 = vpop.permute.xlu0 %5953
      %5955 = vrot.lane.b32.xlu0 %v5241, 127
      %v5956 = vpop.permute.xlu0 %5955
      %5957 = vrot.lane.b32.xlu0 %v5242, 127
      %v5958 = vpop.permute.xlu0 %5957
      %v5959 = vsel %vm682, %v5896, %v5898
      %v5960 = vsel %vm682, %v5898, %v5900
      %v5961 = vsel %vm682, %v5900, %v5902
      %v5962 = vsel %vm682, %v5902, %v5904
      %v5963 = vsel %vm682, %v5904, %v5906
      %v5964 = vsel %vm682, %v5906, %v5908
      %v5965 = vsel %vm682, %v5908, %v5910
      %v5966 = vsel %vm682, %v5912, %v5914
      %v5967 = vsel %vm682, %v5914, %v5916
      %v5968 = vsel %vm682, %v5916, %v5918
      %v5969 = vsel %vm682, %v5918, %v5920
      %v5970 = vsel %vm682, %v5920, %v5922
      %v5971 = vsel %vm682, %v5922, %v5924
      %v5972 = vsel %vm682, %v5924, %v5926
      %v5973 = vsel %vm682, %v5928, %v5930
      %v5974 = vsel %vm682, %v5930, %v5932
      %v5975 = vsel %vm682, %v5932, %v5934
      %v5976 = vsel %vm682, %v5934, %v5936
      %v5977 = vsel %vm682, %v5936, %v5938
      %v5978 = vsel %vm682, %v5938, %v5940
      %v5979 = vsel %vm682, %v5940, %v5942
      %v5980 = vsel %vm682, %v5944, %v5946
      %v5981 = vsel %vm682, %v5946, %v5948
      %v5982 = vsel %vm682, %v5948, %v5950
      %v5983 = vsel %vm682, %v5950, %v5952
      %v5984 = vsel %vm682, %v5952, %v5954
      %v5985 = vsel %vm682, %v5954, %v5956
      %v5986 = vsel %vm682, %v5956, %v5958
      %v6019 = vsel %vm682, %v5910, 0.0
      %v6020 = vsel %vm682, %v5926, 0.0
      %v6021 = vsel %vm682, %v5942, 0.0
      %v6022 = vsel %vm682, %v5958, 0.0
      %v6023 = vsel %vm609, %v5959, 0.0
      %v6024 = vsel %vm610, %v5960, 0.0
      %v6025 = vsel %vm611, %v5961, 0.0
      %v6026 = vsel %vm612, %v5962, 0.0
      %v6027 = vsel %vm613, %v5963, 0.0
      %v6028 = vsel %vm614, %v5964, 0.0
      %v6029 = vsel %vm615, %v5965, 0.0
      %v6030 = vsel %vm616, %v6019, 0.0
      %v6031 = vsel %vm609, %v5966, 0.0
      %v6032 = vsel %vm610, %v5967, 0.0
      %v6033 = vsel %vm611, %v5968, 0.0
      %v6034 = vsel %vm612, %v5969, 0.0
      %v6035 = vsel %vm613, %v5970, 0.0
      %v6036 = vsel %vm614, %v5971, 0.0
      %v6037 = vsel %vm615, %v5972, 0.0
      %v6038 = vsel %vm616, %v6020, 0.0
      %v6039 = vsel %vm609, %v5973, 0.0
      %v6040 = vsel %vm610, %v5974, 0.0
      %v6041 = vsel %vm611, %v5975, 0.0
      %v6042 = vsel %vm612, %v5976, 0.0
      %v6043 = vsel %vm613, %v5977, 0.0
      %v6044 = vsel %vm614, %v5978, 0.0
      %v6045 = vsel %vm615, %v5979, 0.0
      %v6046 = vsel %vm616, %v6021, 0.0
      %v6047 = vsel %vm609, %v5980, 0.0
      %v6048 = vsel %vm610, %v5981, 0.0
      %v6049 = vsel %vm611, %v5982, 0.0
      %v6050 = vsel %vm612, %v5983, 0.0
      %v6051 = vsel %vm613, %v5984, 0.0
      %v6052 = vsel %vm614, %v5985, 0.0
      %v6053 = vsel %vm615, %v5986, 0.0
      %v6054 = vsel %vm616, %v6022, 0.0
      %6055 = vrot.lane.b32.xlu0 %v5211, 97
      %v6056 = vpop.permute.xlu0 %6055
      %6057 = vrot.lane.b32.xlu0 %v5212, 97
      %v6058 = vpop.permute.xlu0 %6057
      %6059 = vrot.lane.b32.xlu0 %v5213, 97
      %v6060 = vpop.permute.xlu0 %6059
      %6061 = vrot.lane.b32.xlu0 %v5214, 97
      %v6062 = vpop.permute.xlu0 %6061
      %6063 = vrot.lane.b32.xlu0 %v5215, 97
      %v6064 = vpop.permute.xlu0 %6063
      %6065 = vrot.lane.b32.xlu0 %v5216, 97
      %v6066 = vpop.permute.xlu0 %6065
      %6067 = vrot.lane.b32.xlu0 %v5217, 97
      %v6068 = vpop.permute.xlu0 %6067
      %6069 = vrot.lane.b32.xlu0 %v5218, 97
      %v6070 = vpop.permute.xlu0 %6069
      %6071 = vrot.lane.b32.xlu0 %v5219, 97
      %v6072 = vpop.permute.xlu0 %6071
      %6073 = vrot.lane.b32.xlu0 %v5220, 97
      %v6074 = vpop.permute.xlu0 %6073
      %6075 = vrot.lane.b32.xlu0 %v5221, 97
      %v6076 = vpop.permute.xlu0 %6075
      %6077 = vrot.lane.b32.xlu0 %v5222, 97
      %v6078 = vpop.permute.xlu0 %6077
      %6079 = vrot.lane.b32.xlu0 %v5223, 97
      %v6080 = vpop.permute.xlu0 %6079
      %6081 = vrot.lane.b32.xlu0 %v5224, 97
      %v6082 = vpop.permute.xlu0 %6081
      %6083 = vrot.lane.b32.xlu0 %v5225, 97
      %v6084 = vpop.permute.xlu0 %6083
      %6085 = vrot.lane.b32.xlu0 %v5226, 97
      %v6086 = vpop.permute.xlu0 %6085
      %6087 = vrot.lane.b32.xlu0 %v5227, 97
      %v6088 = vpop.permute.xlu0 %6087
      %6089 = vrot.lane.b32.xlu0 %v5228, 97
      %v6090 = vpop.permute.xlu0 %6089
      %6091 = vrot.lane.b32.xlu0 %v5229, 97
      %v6092 = vpop.permute.xlu0 %6091
      %6093 = vrot.lane.b32.xlu0 %v5230, 97
      %v6094 = vpop.permute.xlu0 %6093
      %6095 = vrot.lane.b32.xlu0 %v5231, 97
      %v6096 = vpop.permute.xlu0 %6095
      %6097 = vrot.lane.b32.xlu0 %v5232, 97
      %v6098 = vpop.permute.xlu0 %6097
      %6099 = vrot.lane.b32.xlu0 %v5233, 97
      %v6100 = vpop.permute.xlu0 %6099
      %6101 = vrot.lane.b32.xlu0 %v5234, 97
      %v6102 = vpop.permute.xlu0 %6101
      %6103 = vrot.lane.b32.xlu0 %v5235, 97
      %v6104 = vpop.permute.xlu0 %6103
      %6105 = vrot.lane.b32.xlu0 %v5236, 97
      %v6106 = vpop.permute.xlu0 %6105
      %6107 = vrot.lane.b32.xlu0 %v5237, 97
      %v6108 = vpop.permute.xlu0 %6107
      %6109 = vrot.lane.b32.xlu0 %v5238, 97
      %v6110 = vpop.permute.xlu0 %6109
      %6111 = vrot.lane.b32.xlu0 %v5239, 97
      %v6112 = vpop.permute.xlu0 %6111
      %6113 = vrot.lane.b32.xlu0 %v5240, 97
      %v6114 = vpop.permute.xlu0 %6113
      %6115 = vrot.lane.b32.xlu0 %v5241, 97
      %v6116 = vpop.permute.xlu0 %6115
      %6117 = vrot.lane.b32.xlu0 %v5242, 97
      %v6118 = vpop.permute.xlu0 %6117
      %v6119 = vsel %vm723, %v6056, %v6058
      %v6120 = vsel %vm723, %v6058, %v6060
      %v6121 = vsel %vm723, %v6060, %v6062
      %v6122 = vsel %vm723, %v6062, %v6064
      %v6123 = vsel %vm723, %v6064, %v6066
      %v6124 = vsel %vm723, %v6066, %v6068
      %v6125 = vsel %vm723, %v6068, %v6070
      %v6126 = vsel %vm723, %v6072, %v6074
      %v6127 = vsel %vm723, %v6074, %v6076
      %v6128 = vsel %vm723, %v6076, %v6078
      %v6129 = vsel %vm723, %v6078, %v6080
      %v6130 = vsel %vm723, %v6080, %v6082
      %v6131 = vsel %vm723, %v6082, %v6084
      %v6132 = vsel %vm723, %v6084, %v6086
      %v6133 = vsel %vm723, %v6088, %v6090
      %v6134 = vsel %vm723, %v6090, %v6092
      %v6135 = vsel %vm723, %v6092, %v6094
      %v6136 = vsel %vm723, %v6094, %v6096
      %v6137 = vsel %vm723, %v6096, %v6098
      %v6138 = vsel %vm723, %v6098, %v6100
      %v6139 = vsel %vm723, %v6100, %v6102
      %v6140 = vsel %vm723, %v6104, %v6106
      %v6141 = vsel %vm723, %v6106, %v6108
      %v6142 = vsel %vm723, %v6108, %v6110
      %v6143 = vsel %vm723, %v6110, %v6112
      %v6144 = vsel %vm723, %v6112, %v6114
      %v6145 = vsel %vm723, %v6114, %v6116
      %v6146 = vsel %vm723, %v6116, %v6118
      %v6179 = vsel %vm723, %v6070, 0.0
      %v6180 = vsel %vm723, %v6086, 0.0
      %v6181 = vsel %vm723, %v6102, 0.0
      %v6182 = vsel %vm723, %v6118, 0.0
      %v6183 = vsel %vm519, %v6119, 0.0
      %v6184 = vsel %vm520, %v6120, 0.0
      %v6185 = vsel %vm521, %v6121, 0.0
      %v6186 = vsel %vm522, %v6122, 0.0
      %v6187 = vsel %vm523, %v6123, 0.0
      %v6188 = vsel %vm524, %v6124, 0.0
      %v6189 = vsel %vm525, %v6125, 0.0
      %v6190 = vsel %vm526, %v6179, 0.0
      %v6191 = vsel %vm519, %v6126, 0.0
      %v6192 = vsel %vm520, %v6127, 0.0
      %v6193 = vsel %vm521, %v6128, 0.0
      %v6194 = vsel %vm522, %v6129, 0.0
      %v6195 = vsel %vm523, %v6130, 0.0
      %v6196 = vsel %vm524, %v6131, 0.0
      %v6197 = vsel %vm525, %v6132, 0.0
      %v6198 = vsel %vm526, %v6180, 0.0
      %v6199 = vsel %vm519, %v6133, 0.0
      %v6200 = vsel %vm520, %v6134, 0.0
      %v6201 = vsel %vm521, %v6135, 0.0
      %v6202 = vsel %vm522, %v6136, 0.0
      %v6203 = vsel %vm523, %v6137, 0.0
      %v6204 = vsel %vm524, %v6138, 0.0
      %v6205 = vsel %vm525, %v6139, 0.0
      %v6206 = vsel %vm526, %v6181, 0.0
      %v6207 = vsel %vm519, %v6140, 0.0
      %v6208 = vsel %vm520, %v6141, 0.0
      %v6209 = vsel %vm521, %v6142, 0.0
      %v6210 = vsel %vm522, %v6143, 0.0
      %v6211 = vsel %vm523, %v6144, 0.0
      %v6212 = vsel %vm524, %v6145, 0.0
      %v6213 = vsel %vm525, %v6146, 0.0
      %v6214 = vsel %vm526, %v6182, 0.0
      %6215 = vrot.lane.b32.xlu0 %v5211, 96
      %v6216 = vpop.permute.xlu0 %6215
      %6217 = vrot.lane.b32.xlu0 %v5212, 96
      %v6218 = vpop.permute.xlu0 %6217
      %6219 = vrot.lane.b32.xlu0 %v5213, 96
      %v6220 = vpop.permute.xlu0 %6219
      %6221 = vrot.lane.b32.xlu0 %v5214, 96
      %v6222 = vpop.permute.xlu0 %6221
      %6223 = vrot.lane.b32.xlu0 %v5215, 96
      %v6224 = vpop.permute.xlu0 %6223
      %6225 = vrot.lane.b32.xlu0 %v5216, 96
      %v6226 = vpop.permute.xlu0 %6225
      %6227 = vrot.lane.b32.xlu0 %v5217, 96
      %v6228 = vpop.permute.xlu0 %6227
      %6229 = vrot.lane.b32.xlu0 %v5218, 96
      %v6230 = vpop.permute.xlu0 %6229
      %6231 = vrot.lane.b32.xlu0 %v5219, 96
      %v6232 = vpop.permute.xlu0 %6231
      %6233 = vrot.lane.b32.xlu0 %v5220, 96
      %v6234 = vpop.permute.xlu0 %6233
      %6235 = vrot.lane.b32.xlu0 %v5221, 96
      %v6236 = vpop.permute.xlu0 %6235
      %6237 = vrot.lane.b32.xlu0 %v5222, 96
      %v6238 = vpop.permute.xlu0 %6237
      %6239 = vrot.lane.b32.xlu0 %v5223, 96
      %v6240 = vpop.permute.xlu0 %6239
      %6241 = vrot.lane.b32.xlu0 %v5224, 96
      %v6242 = vpop.permute.xlu0 %6241
      %6243 = vrot.lane.b32.xlu0 %v5225, 96
      %v6244 = vpop.permute.xlu0 %6243
      %6245 = vrot.lane.b32.xlu0 %v5226, 96
      %v6246 = vpop.permute.xlu0 %6245
      %6247 = vrot.lane.b32.xlu0 %v5227, 96
      %v6248 = vpop.permute.xlu0 %6247
      %6249 = vrot.lane.b32.xlu0 %v5228, 96
      %v6250 = vpop.permute.xlu0 %6249
      %6251 = vrot.lane.b32.xlu0 %v5229, 96
      %v6252 = vpop.permute.xlu0 %6251
      %6253 = vrot.lane.b32.xlu0 %v5230, 96
      %v6254 = vpop.permute.xlu0 %6253
      %6255 = vrot.lane.b32.xlu0 %v5231, 96
      %v6256 = vpop.permute.xlu0 %6255
      %6257 = vrot.lane.b32.xlu0 %v5232, 96
      %v6258 = vpop.permute.xlu0 %6257
      %6259 = vrot.lane.b32.xlu0 %v5233, 96
      %v6260 = vpop.permute.xlu0 %6259
      %6261 = vrot.lane.b32.xlu0 %v5234, 96
      %v6262 = vpop.permute.xlu0 %6261
      %6263 = vrot.lane.b32.xlu0 %v5235, 96
      %v6264 = vpop.permute.xlu0 %6263
      %6265 = vrot.lane.b32.xlu0 %v5236, 96
      %v6266 = vpop.permute.xlu0 %6265
      %6267 = vrot.lane.b32.xlu0 %v5237, 96
      %v6268 = vpop.permute.xlu0 %6267
      %6269 = vrot.lane.b32.xlu0 %v5238, 96
      %v6270 = vpop.permute.xlu0 %6269
      %6271 = vrot.lane.b32.xlu0 %v5239, 96
      %v6272 = vpop.permute.xlu0 %6271
      %6273 = vrot.lane.b32.xlu0 %v5240, 96
      %v6274 = vpop.permute.xlu0 %6273
      %6275 = vrot.lane.b32.xlu0 %v5241, 96
      %v6276 = vpop.permute.xlu0 %6275
      %6277 = vrot.lane.b32.xlu0 %v5242, 96
      %v6278 = vpop.permute.xlu0 %6277
      %v6279 = vsel %vm764, %v6216, %v6218
      %v6280 = vsel %vm764, %v6218, %v6220
      %v6281 = vsel %vm764, %v6220, %v6222
      %v6282 = vsel %vm764, %v6222, %v6224
      %v6283 = vsel %vm764, %v6224, %v6226
      %v6284 = vsel %vm764, %v6226, %v6228
      %v6285 = vsel %vm764, %v6228, %v6230
      %v6286 = vsel %vm764, %v6232, %v6234
      %v6287 = vsel %vm764, %v6234, %v6236
      %v6288 = vsel %vm764, %v6236, %v6238
      %v6289 = vsel %vm764, %v6238, %v6240
      %v6290 = vsel %vm764, %v6240, %v6242
      %v6291 = vsel %vm764, %v6242, %v6244
      %v6292 = vsel %vm764, %v6244, %v6246
      %v6293 = vsel %vm764, %v6248, %v6250
      %v6294 = vsel %vm764, %v6250, %v6252
      %v6295 = vsel %vm764, %v6252, %v6254
      %v6296 = vsel %vm764, %v6254, %v6256
      %v6297 = vsel %vm764, %v6256, %v6258
      %v6298 = vsel %vm764, %v6258, %v6260
      %v6299 = vsel %vm764, %v6260, %v6262
      %v6300 = vsel %vm764, %v6264, %v6266
      %v6301 = vsel %vm764, %v6266, %v6268
      %v6302 = vsel %vm764, %v6268, %v6270
      %v6303 = vsel %vm764, %v6270, %v6272
      %v6304 = vsel %vm764, %v6272, %v6274
      %v6305 = vsel %vm764, %v6274, %v6276
      %v6306 = vsel %vm764, %v6276, %v6278
      %v6339 = vsel %vm764, %v6230, 0.0
      %v6340 = vsel %vm764, %v6246, 0.0
      %v6341 = vsel %vm764, %v6262, 0.0
      %v6342 = vsel %vm764, %v6278, 0.0
      %6343 = vrot.lane.b32.xlu0 %v5211, 95
      %v6344 = vpop.permute.xlu0 %6343
      %6345 = vrot.lane.b32.xlu0 %v5212, 95
      %v6346 = vpop.permute.xlu0 %6345
      %6347 = vrot.lane.b32.xlu0 %v5213, 95
      %v6348 = vpop.permute.xlu0 %6347
      %6349 = vrot.lane.b32.xlu0 %v5214, 95
      %v6350 = vpop.permute.xlu0 %6349
      %6351 = vrot.lane.b32.xlu0 %v5215, 95
      %v6352 = vpop.permute.xlu0 %6351
      %6353 = vrot.lane.b32.xlu0 %v5216, 95
      %v6354 = vpop.permute.xlu0 %6353
      %6355 = vrot.lane.b32.xlu0 %v5217, 95
      %v6356 = vpop.permute.xlu0 %6355
      %6357 = vrot.lane.b32.xlu0 %v5218, 95
      %v6358 = vpop.permute.xlu0 %6357
      %6359 = vrot.lane.b32.xlu0 %v5219, 95
      %v6360 = vpop.permute.xlu0 %6359
      %6361 = vrot.lane.b32.xlu0 %v5220, 95
      %v6362 = vpop.permute.xlu0 %6361
      %6363 = vrot.lane.b32.xlu0 %v5221, 95
      %v6364 = vpop.permute.xlu0 %6363
      %6365 = vrot.lane.b32.xlu0 %v5222, 95
      %v6366 = vpop.permute.xlu0 %6365
      %6367 = vrot.lane.b32.xlu0 %v5223, 95
      %v6368 = vpop.permute.xlu0 %6367
      %6369 = vrot.lane.b32.xlu0 %v5224, 95
      %v6370 = vpop.permute.xlu0 %6369
      %6371 = vrot.lane.b32.xlu0 %v5225, 95
      %v6372 = vpop.permute.xlu0 %6371
      %6373 = vrot.lane.b32.xlu0 %v5226, 95
      %v6374 = vpop.permute.xlu0 %6373
      %6375 = vrot.lane.b32.xlu0 %v5227, 95
      %v6376 = vpop.permute.xlu0 %6375
      %6377 = vrot.lane.b32.xlu0 %v5228, 95
      %v6378 = vpop.permute.xlu0 %6377
      %6379 = vrot.lane.b32.xlu0 %v5229, 95
      %v6380 = vpop.permute.xlu0 %6379
      %6381 = vrot.lane.b32.xlu0 %v5230, 95
      %v6382 = vpop.permute.xlu0 %6381
      %6383 = vrot.lane.b32.xlu0 %v5231, 95
      %v6384 = vpop.permute.xlu0 %6383
      %6385 = vrot.lane.b32.xlu0 %v5232, 95
      %v6386 = vpop.permute.xlu0 %6385
      %6387 = vrot.lane.b32.xlu0 %v5233, 95
      %v6388 = vpop.permute.xlu0 %6387
      %6389 = vrot.lane.b32.xlu0 %v5234, 95
      %v6390 = vpop.permute.xlu0 %6389
      %6391 = vrot.lane.b32.xlu0 %v5235, 95
      %v6392 = vpop.permute.xlu0 %6391
      %6393 = vrot.lane.b32.xlu0 %v5236, 95
      %v6394 = vpop.permute.xlu0 %6393
      %6395 = vrot.lane.b32.xlu0 %v5237, 95
      %v6396 = vpop.permute.xlu0 %6395
      %6397 = vrot.lane.b32.xlu0 %v5238, 95
      %v6398 = vpop.permute.xlu0 %6397
      %6399 = vrot.lane.b32.xlu0 %v5239, 95
      %v6400 = vpop.permute.xlu0 %6399
      %6401 = vrot.lane.b32.xlu0 %v5240, 95
      %v6402 = vpop.permute.xlu0 %6401
      %6403 = vrot.lane.b32.xlu0 %v5241, 95
      %v6404 = vpop.permute.xlu0 %6403
      %6405 = vrot.lane.b32.xlu0 %v5242, 95
      %v6406 = vpop.permute.xlu0 %6405
      %v6407 = vsel %vm797, %v6344, %v6346
      %v6408 = vsel %vm797, %v6346, %v6348
      %v6409 = vsel %vm797, %v6348, %v6350
      %v6410 = vsel %vm797, %v6350, %v6352
      %v6411 = vsel %vm797, %v6352, %v6354
      %v6412 = vsel %vm797, %v6354, %v6356
      %v6413 = vsel %vm797, %v6356, %v6358
      %v6414 = vsel %vm797, %v6360, %v6362
      %v6415 = vsel %vm797, %v6362, %v6364
      %v6416 = vsel %vm797, %v6364, %v6366
      %v6417 = vsel %vm797, %v6366, %v6368
      %v6418 = vsel %vm797, %v6368, %v6370
      %v6419 = vsel %vm797, %v6370, %v6372
      %v6420 = vsel %vm797, %v6372, %v6374
      %v6421 = vsel %vm797, %v6376, %v6378
      %v6422 = vsel %vm797, %v6378, %v6380
      %v6423 = vsel %vm797, %v6380, %v6382
      %v6424 = vsel %vm797, %v6382, %v6384
      %v6425 = vsel %vm797, %v6384, %v6386
      %v6426 = vsel %vm797, %v6386, %v6388
      %v6427 = vsel %vm797, %v6388, %v6390
      %v6428 = vsel %vm797, %v6392, %v6394
      %v6429 = vsel %vm797, %v6394, %v6396
      %v6430 = vsel %vm797, %v6396, %v6398
      %v6431 = vsel %vm797, %v6398, %v6400
      %v6432 = vsel %vm797, %v6400, %v6402
      %v6433 = vsel %vm797, %v6402, %v6404
      %v6434 = vsel %vm797, %v6404, %v6406
      %v6467 = vsel %vm797, %v6358, 0.0
      %v6468 = vsel %vm797, %v6374, 0.0
      %v6469 = vsel %vm797, %v6390, 0.0
      %v6470 = vsel %vm797, %v6406, 0.0
      %v6471 = vsel %vm609, %v6407, 0.0
      %v6472 = vsel %vm610, %v6408, 0.0
      %v6473 = vsel %vm611, %v6409, 0.0
      %v6474 = vsel %vm612, %v6410, 0.0
      %v6475 = vsel %vm613, %v6411, 0.0
      %v6476 = vsel %vm614, %v6412, 0.0
      %v6477 = vsel %vm615, %v6413, 0.0
      %v6478 = vsel %vm616, %v6467, 0.0
      %v6479 = vsel %vm609, %v6414, 0.0
      %v6480 = vsel %vm610, %v6415, 0.0
      %v6481 = vsel %vm611, %v6416, 0.0
      %v6482 = vsel %vm612, %v6417, 0.0
      %v6483 = vsel %vm613, %v6418, 0.0
      %v6484 = vsel %vm614, %v6419, 0.0
      %v6485 = vsel %vm615, %v6420, 0.0
      %v6486 = vsel %vm616, %v6468, 0.0
      %v6487 = vsel %vm609, %v6421, 0.0
      %v6488 = vsel %vm610, %v6422, 0.0
      %v6489 = vsel %vm611, %v6423, 0.0
      %v6490 = vsel %vm612, %v6424, 0.0
      %v6491 = vsel %vm613, %v6425, 0.0
      %v6492 = vsel %vm614, %v6426, 0.0
      %v6493 = vsel %vm615, %v6427, 0.0
      %v6494 = vsel %vm616, %v6469, 0.0
      %v6495 = vsel %vm609, %v6428, 0.0
      %v6496 = vsel %vm610, %v6429, 0.0
      %v6497 = vsel %vm611, %v6430, 0.0
      %v6498 = vsel %vm612, %v6431, 0.0
      %v6499 = vsel %vm613, %v6432, 0.0
      %v6500 = vsel %vm614, %v6433, 0.0
      %v6501 = vsel %vm615, %v6434, 0.0
      %v6502 = vsel %vm616, %v6470, 0.0
      %v6504 = vsel %vm551, %v5245, 0
      %v6507 = vsel %vm551, %v5248, 0
      %v6510 = vsel %vm551, %v5251, 0
      %v6513 = vsel %vm551, %v5254, 0
      %6515 = vmatprep.subr.mxu0 %v5416
      %6516 = vmatpush1.msra.mxu0 %v5415
      %6517 = vmatprep.subr.mxu0 %v5424
      %6518 = vmatpush1.msra.mxu0 %v5423
      %6519 = vmatprep.subr.mxu0 %v5432
      %6520 = vmatpush1.msra.mxu0 %v5431
      %6521 = vmatprep.subr.mxu0 %v5440
      %6522 = vmatpush1.msra.mxu0 %v5439
      %6523 = vmatprep.subr.mxu0 %v5511
      %6524 = vmatpush1.msra.mxu0 %v5571
      %6525 = vmatprep.subr.mxu0 %v5518
      %6526 = vmatpush1.msra.mxu0 %v5572
      %6527 = vmatprep.subr.mxu0 %v5525
      %6528 = vmatpush1.msra.mxu0 %v5573
      %6529 = vmatprep.subr.mxu0 %v5532
      %6530 = vmatpush1.msra.mxu0 %v5574
      %6531 = vmatprep.subr.mxu0 %v5704
      %6532 = vmatpush1.msra.mxu0 %v5703
      %6533 = vmatprep.subr.mxu0 %v5712
      %6534 = vmatpush1.msra.mxu0 %v5711
      %6535 = vmatprep.subr.mxu0 %v5720
      %6536 = vmatpush1.msra.mxu0 %v5719
      %6537 = vmatprep.subr.mxu0 %v5728
      %6538 = vmatpush1.msra.mxu0 %v5727
      %6539 = vmatprep.subr.mxu0 %v5864
      %6540 = vmatpush1.msra.mxu0 %v5863
      %6541 = vmatprep.subr.mxu0 %v5872
      %6542 = vmatpush1.msra.mxu0 %v5871
      %6543 = vmatprep.subr.mxu0 %v5880
      %6544 = vmatpush1.msra.mxu0 %v5879
      %6545 = vmatprep.subr.mxu0 %v5888
      %6546 = vmatpush1.msra.mxu0 %v5887
      %6547 = vmatprep.subr.mxu0 %v5212
      %6548 = vmatpush1.msra.mxu0 %v5211
      %6549 = vmatprep.subr.mxu0 %v5220
      %6550 = vmatpush1.msra.mxu0 %v5219
      %6551 = vmatprep.subr.mxu0 %v5228
      %6552 = vmatpush1.msra.mxu0 %v5227
      %6553 = vmatprep.subr.mxu0 %v5236
      %6554 = vmatpush1.msra.mxu0 %v5235
      %6555 = vmatprep.subr.mxu0 %v6024
      %6556 = vmatpush1.msra.mxu0 %v6023
      %6557 = vmatprep.subr.mxu0 %v6032
      %6558 = vmatpush1.msra.mxu0 %v6031
      %6559 = vmatprep.subr.mxu0 %v6040
      %6560 = vmatpush1.msra.mxu0 %v6039
      %6561 = vmatprep.subr.mxu0 %v6048
      %6562 = vmatpush1.msra.mxu0 %v6047
      %6563 = vmatprep.subr.mxu0 %v6184
      %6564 = vmatpush1.msra.mxu0 %v6183
      %6565 = vmatprep.subr.mxu0 %v6192
      %6566 = vmatpush1.msra.mxu0 %v6191
      %6567 = vmatprep.subr.mxu0 %v6200
      %6568 = vmatpush1.msra.mxu0 %v6199
      %6569 = vmatprep.subr.mxu0 %v6208
      %6570 = vmatpush1.msra.mxu0 %v6207
      %6571 = vmatprep.subr.mxu0 %v6280
      %6572 = vmatpush1.msra.mxu0 %v6279
      %6573 = vmatprep.subr.mxu0 %v6287
      %6574 = vmatpush1.msra.mxu0 %v6286
      %6575 = vmatprep.subr.mxu0 %v6294
      %6576 = vmatpush1.msra.mxu0 %v6293
      %6577 = vmatprep.subr.mxu0 %v6301
      %6578 = vmatpush1.msra.mxu0 %v6300
      %6579 = vmatprep.mubr.f32.mxu0 %v5244
      %6580 = vmatmul.mubr.f32.gmra.mrb[0].mxu0 %v5243
      %v6581 = vpop.f32.mrb[0].mxu0
      %v6582 = vadd.f32 0.0, %v6581
      %v6583 = vpop.f32.mrb[0].mxu0
      %v6584 = vadd.f32 0.0, %v6583
      %6585 = vmatprep.mubr.f32.mxu0 %v5247
      %6586 = vmatmul.mubr.f32.gmra.mrb[0].mxu0 %v5246
      %v6587 = vpop.f32.mrb[0].mxu0
      %v6588 = vadd.f32 0.0, %v6587
      %v6589 = vpop.f32.mrb[0].mxu0
      %v6590 = vadd.f32 0.0, %v6589
      %6591 = vmatprep.mubr.f32.mxu0 %v5250
      %6592 = vmatmul.mubr.f32.gmra.mrb[0].mxu0 %v5249
      %v6593 = vpop.f32.mrb[0].mxu0
      %v6594 = vadd.f32 0.0, %v6593
      %v6595 = vpop.f32.mrb[0].mxu0
      %v6596 = vadd.f32 0.0, %v6595
      %6597 = vmatprep.mubr.f32.mxu0 %v5253
      %6598 = vmatmul.mubr.f32.gmra.mrb[0].mxu0 %v5252
      %v6599 = vpop.f32.mrb[0].mxu0
      %v6600 = vadd.f32 0.0, %v6599
      %v6601 = vpop.f32.mrb[0].mxu0
      %v6602 = vadd.f32 0.0, %v6601
      %6603 = vdwg.mxu0
      %6604 = vmatprep.subr.mxu0 %v6472
      %6605 = vmatpush1.msra.mxu0 %v6471
      %6606 = vmatprep.subr.mxu0 %v6480
      %6607 = vmatpush1.msra.mxu0 %v6479
      %6608 = vmatprep.subr.mxu0 %v6488
      %6609 = vmatpush1.msra.mxu0 %v6487
      %6610 = vmatprep.subr.mxu0 %v6496
      %6611 = vmatpush1.msra.mxu0 %v6495
      %6612 = vmatprep.subr.mxu0 0.0
      %6613 = vmatpush1.msra.mxu0 0.0
      %6614 = vmatprep.subr.mxu0 0.0
      %6615 = vmatpush1.msra.mxu0 0.0
      %6616 = vmatprep.subr.mxu0 0.0
      %6617 = vmatpush1.msra.mxu0 0.0
      %6618 = vmatprep.subr.mxu0 0.0
      %6619 = vmatpush1.msra.mxu0 0.0
      %6620 = vmatprep.subr.mxu0 0.0
      %6621 = vmatpush1.msra.mxu0 0.0
      %6622 = vmatprep.subr.mxu0 0.0
      %6623 = vmatpush1.msra.mxu0 0.0
      %6624 = vmatprep.subr.mxu0 0.0
      %6625 = vmatpush1.msra.mxu0 0.0
      %6626 = vmatprep.subr.mxu0 0.0
      %6627 = vmatpush1.msra.mxu0 0.0
      %6628 = vmatprep.subr.mxu0 0.0
      %6629 = vmatpush1.msra.mxu0 0.0
      %6630 = vmatprep.subr.mxu0 0.0
      %6631 = vmatpush1.msra.mxu0 0.0
      %6632 = vmatprep.subr.mxu0 0.0
      %6633 = vmatpush1.msra.mxu0 0.0
      %6634 = vmatprep.subr.mxu0 0.0
      %6635 = vmatpush1.msra.mxu0 0.0
      %6636 = vmatprep.subr.mxu0 0.0
      %6637 = vmatpush1.msra.mxu0 0.0
      %6638 = vmatprep.subr.mxu0 0.0
      %6639 = vmatpush1.msra.mxu0 0.0
      %6640 = vmatprep.subr.mxu0 0.0
      %6641 = vmatpush1.msra.mxu0 0.0
      %6642 = vmatprep.subr.mxu0 0.0
      %6643 = vmatpush1.msra.mxu0 0.0
      %6644 = vmatprep.subr.mxu0 0.0
      %6645 = vmatpush1.msra.mxu0 0.0
      %6646 = vmatprep.subr.mxu0 0.0
      %6647 = vmatpush1.msra.mxu0 0.0
      %6648 = vmatprep.subr.mxu0 0.0
      %6649 = vmatpush1.msra.mxu0 0.0
      %6650 = vmatprep.subr.mxu0 0.0
      %6651 = vmatpush1.msra.mxu0 0.0
      %6652 = vmatprep.subr.mxu0 0.0
      %6653 = vmatpush1.msra.mxu0 0.0
      %6654 = vmatprep.subr.mxu0 0.0
      %6655 = vmatpush1.msra.mxu0 0.0
      %6656 = vmatprep.subr.mxu0 0.0
      %6657 = vmatpush1.msra.mxu0 0.0
      %6658 = vmatprep.subr.mxu0 0.0
      %6659 = vmatpush1.msra.mxu0 0.0
      %6660 = vmatprep.subr.mxu0 0.0
      %6661 = vmatpush1.msra.mxu0 0.0
      %6662 = vmatprep.subr.mxu0 0.0
      %6663 = vmatpush1.msra.mxu0 0.0
      %6664 = vmatprep.subr.mxu0 0.0
      %6665 = vmatpush1.msra.mxu0 0.0
      %6666 = vmatprep.subr.mxu0 0.0
      %6667 = vmatpush1.msra.mxu0 0.0
      %6668 = vmatprep.mubr.f32.mxu0 0.0
      %6669 = vmatmul.mubr.f32.gmra.mrb[0].mxu0 %v6504
      %v6670 = vpop.f32.mrb[0].mxu0
      %v6671 = vadd.f32 %v6582, %v6670
      %v6672 = vpop.f32.mrb[0].mxu0
      %v6673 = vadd.f32 %v6584, %v6672
      %6674 = vmatprep.mubr.f32.mxu0 0.0
      %6675 = vmatmul.mubr.f32.gmra.mrb[0].mxu0 %v6507
      %v6676 = vpop.f32.mrb[0].mxu0
      %v6677 = vadd.f32 %v6588, %v6676
      %v6678 = vpop.f32.mrb[0].mxu0
      %v6679 = vadd.f32 %v6590, %v6678
      %6680 = vmatprep.mubr.f32.mxu0 0.0
      %6681 = vmatmul.mubr.f32.gmra.mrb[0].mxu0 %v6510
      %v6682 = vpop.f32.mrb[0].mxu0
      %v6683 = vadd.f32 %v6594, %v6682
      %v6684 = vpop.f32.mrb[0].mxu0
      %v6685 = vadd.f32 %v6596, %v6684
      %6686 = vmatprep.mubr.f32.mxu0 0.0
      %6687 = vmatmul.mubr.f32.gmra.mrb[0].mxu0 %v6513
      %v6688 = vpop.f32.mrb[0].mxu0
      %v6689 = vadd.f32 %v6600, %v6688
      %v6690 = vpop.f32.mrb[0].mxu0
      %v6691 = vadd.f32 %v6602, %v6690
      %6692 = vdwg.mxu0
      %6693 = vmatprep.subr.mxu0 %v5418
      %6694 = vmatpush1.msra.mxu0 %v5417
      %6695 = vmatprep.subr.mxu0 %v5426
      %6696 = vmatpush1.msra.mxu0 %v5425
      %6697 = vmatprep.subr.mxu0 %v5434
      %6698 = vmatpush1.msra.mxu0 %v5433
      %6699 = vmatprep.subr.mxu0 %v5442
      %6700 = vmatpush1.msra.mxu0 %v5441
      %6701 = vmatprep.subr.mxu0 %v5513
      %6702 = vmatpush1.msra.mxu0 %v5512
      %6703 = vmatprep.subr.mxu0 %v5520
      %6704 = vmatpush1.msra.mxu0 %v5519
      %6705 = vmatprep.subr.mxu0 %v5527
      %6706 = vmatpush1.msra.mxu0 %v5526
      %6707 = vmatprep.subr.mxu0 %v5534
      %6708 = vmatpush1.msra.mxu0 %v5533
      %6709 = vmatprep.subr.mxu0 %v5706
      %6710 = vmatpush1.msra.mxu0 %v5705
      %6711 = vmatprep.subr.mxu0 %v5714
      %6712 = vmatpush1.msra.mxu0 %v5713
      %6713 = vmatprep.subr.mxu0 %v5722
      %6714 = vmatpush1.msra.mxu0 %v5721
      %6715 = vmatprep.subr.mxu0 %v5730
      %6716 = vmatpush1.msra.mxu0 %v5729
      %6717 = vmatprep.subr.mxu0 %v5866
      %6718 = vmatpush1.msra.mxu0 %v5865
      %6719 = vmatprep.subr.mxu0 %v5874
      %6720 = vmatpush1.msra.mxu0 %v5873
      %6721 = vmatprep.subr.mxu0 %v5882
      %6722 = vmatpush1.msra.mxu0 %v5881
      %6723 = vmatprep.subr.mxu0 %v5890
      %6724 = vmatpush1.msra.mxu0 %v5889
      %6725 = vmatprep.subr.mxu0 %v5214
      %6726 = vmatpush1.msra.mxu0 %v5213
      %6727 = vmatprep.subr.mxu0 %v5222
      %6728 = vmatpush1.msra.mxu0 %v5221
      %6729 = vmatprep.subr.mxu0 %v5230
      %6730 = vmatpush1.msra.mxu0 %v5229
      %6731 = vmatprep.subr.mxu0 %v5238
      %6732 = vmatpush1.msra.mxu0 %v5237
      %6733 = vmatprep.subr.mxu0 %v6026
      %6734 = vmatpush1.msra.mxu0 %v6025
      %6735 = vmatprep.subr.mxu0 %v6034
      %6736 = vmatpush1.msra.mxu0 %v6033
      %6737 = vmatprep.subr.mxu0 %v6042
      %6738 = vmatpush1.msra.mxu0 %v6041
      %6739 = vmatprep.subr.mxu0 %v6050
      %6740 = vmatpush1.msra.mxu0 %v6049
      %6741 = vmatprep.subr.mxu0 %v6186
      %6742 = vmatpush1.msra.mxu0 %v6185
      %6743 = vmatprep.subr.mxu0 %v6194
      %6744 = vmatpush1.msra.mxu0 %v6193
      %6745 = vmatprep.subr.mxu0 %v6202
      %6746 = vmatpush1.msra.mxu0 %v6201
      %6747 = vmatprep.subr.mxu0 %v6210
      %6748 = vmatpush1.msra.mxu0 %v6209
      %6749 = vmatprep.subr.mxu0 %v6282
      %6750 = vmatpush1.msra.mxu0 %v6281
      %6751 = vmatprep.subr.mxu0 %v6289
      %6752 = vmatpush1.msra.mxu0 %v6288
      %6753 = vmatprep.subr.mxu0 %v6296
      %6754 = vmatpush1.msra.mxu0 %v6295
      %6755 = vmatprep.subr.mxu0 %v6303
      %6756 = vmatpush1.msra.mxu0 %v6302
      %6757 = vmatprep.mubr.f32.mxu0 %v5244
      %6758 = vmatmul.mubr.f32.gmra.mrb[0].mxu0 %v5243
      %v6759 = vpop.f32.mrb[0].mxu0
      %v6760 = vadd.f32 0.0, %v6759
      %v6761 = vpop.f32.mrb[0].mxu0
      %v6762 = vadd.f32 0.0, %v6761
      %6763 = vmatprep.mubr.f32.mxu0 %v5247
      %6764 = vmatmul.mubr.f32.gmra.mrb[0].mxu0 %v5246
      %v6765 = vpop.f32.mrb[0].mxu0
      %v6766 = vadd.f32 0.0, %v6765
      %v6767 = vpop.f32.mrb[0].mxu0
      %v6768 = vadd.f32 0.0, %v6767
      %6769 = vmatprep.mubr.f32.mxu0 %v5250
      %6770 = vmatmul.mubr.f32.gmra.mrb[0].mxu0 %v5249
      %v6771 = vpop.f32.mrb[0].mxu0
      %v6772 = vadd.f32 0.0, %v6771
      %v6773 = vpop.f32.mrb[0].mxu0
      %v6774 = vadd.f32 0.0, %v6773
      %6775 = vmatprep.mubr.f32.mxu0 %v5253
      %6776 = vmatmul.mubr.f32.gmra.mrb[0].mxu0 %v5252
      %v6777 = vpop.f32.mrb[0].mxu0
      %v6778 = vadd.f32 0.0, %v6777
      %v6779 = vpop.f32.mrb[0].mxu0
      %v6780 = vadd.f32 0.0, %v6779
      %6781 = vdwg.mxu0
      %6782 = vmatprep.subr.mxu0 %v6474
      %6783 = vmatpush1.msra.mxu0 %v6473
      %6784 = vmatprep.subr.mxu0 %v6482
      %6785 = vmatpush1.msra.mxu0 %v6481
      %6786 = vmatprep.subr.mxu0 %v6490
      %6787 = vmatpush1.msra.mxu0 %v6489
      %6788 = vmatprep.subr.mxu0 %v6498
      %6789 = vmatpush1.msra.mxu0 %v6497
      %6790 = vmatprep.subr.mxu0 0.0
      %6791 = vmatpush1.msra.mxu0 0.0
      %6792 = vmatprep.subr.mxu0 0.0
      %6793 = vmatpush1.msra.mxu0 0.0
      %6794 = vmatprep.subr.mxu0 0.0
      %6795 = vmatpush1.msra.mxu0 0.0
      %6796 = vmatprep.subr.mxu0 0.0
      %6797 = vmatpush1.msra.mxu0 0.0
      %6798 = vmatprep.subr.mxu0 0.0
      %6799 = vmatpush1.msra.mxu0 0.0
      %6800 = vmatprep.subr.mxu0 0.0
      %6801 = vmatpush1.msra.mxu0 0.0
      %6802 = vmatprep.subr.mxu0 0.0
      %6803 = vmatpush1.msra.mxu0 0.0
      %6804 = vmatprep.subr.mxu0 0.0
      %6805 = vmatpush1.msra.mxu0 0.0
      %6806 = vmatprep.subr.mxu0 0.0
      %6807 = vmatpush1.msra.mxu0 0.0
      %6808 = vmatprep.subr.mxu0 0.0
      %6809 = vmatpush1.msra.mxu0 0.0
      %6810 = vmatprep.subr.mxu0 0.0
      %6811 = vmatpush1.msra.mxu0 0.0
      %6812 = vmatprep.subr.mxu0 0.0
      %6813 = vmatpush1.msra.mxu0 0.0
      %6814 = vmatprep.subr.mxu0 0.0
      %6815 = vmatpush1.msra.mxu0 0.0
      %6816 = vmatprep.subr.mxu0 0.0
      %6817 = vmatpush1.msra.mxu0 0.0
      %6818 = vmatprep.subr.mxu0 0.0
      %6819 = vmatpush1.msra.mxu0 0.0
      %6820 = vmatprep.subr.mxu0 0.0
      %6821 = vmatpush1.msra.mxu0 0.0
      %6822 = vmatprep.subr.mxu0 0.0
      %6823 = vmatpush1.msra.mxu0 0.0
      %6824 = vmatprep.subr.mxu0 0.0
      %6825 = vmatpush1.msra.mxu0 0.0
      %6826 = vmatprep.subr.mxu0 0.0
      %6827 = vmatpush1.msra.mxu0 0.0
      %6828 = vmatprep.subr.mxu0 0.0
      %6829 = vmatpush1.msra.mxu0 0.0
      %6830 = vmatprep.subr.mxu0 0.0
      %6831 = vmatpush1.msra.mxu0 0.0
      %6832 = vmatprep.subr.mxu0 0.0
      %6833 = vmatpush1.msra.mxu0 0.0
      %6834 = vmatprep.subr.mxu0 0.0
      %6835 = vmatpush1.msra.mxu0 0.0
      %6836 = vmatprep.subr.mxu0 0.0
      %6837 = vmatpush1.msra.mxu0 0.0
      %6838 = vmatprep.subr.mxu0 0.0
      %6839 = vmatpush1.msra.mxu0 0.0
      %6840 = vmatprep.subr.mxu0 0.0
      %6841 = vmatpush1.msra.mxu0 0.0
      %6842 = vmatprep.subr.mxu0 0.0
      %6843 = vmatpush1.msra.mxu0 0.0
      %6844 = vmatprep.subr.mxu0 0.0
      %6845 = vmatpush1.msra.mxu0 0.0
      %6846 = vmatprep.mubr.f32.mxu0 0.0
      %6847 = vmatmul.mubr.f32.gmra.mrb[0].mxu0 %v6504
      %v6848 = vpop.f32.mrb[0].mxu0
      %v6849 = vadd.f32 %v6760, %v6848
      %v6850 = vpop.f32.mrb[0].mxu0
      %v6851 = vadd.f32 %v6762, %v6850
      %6852 = vmatprep.mubr.f32.mxu0 0.0
      %6853 = vmatmul.mubr.f32.gmra.mrb[0].mxu0 %v6507
      %v6854 = vpop.f32.mrb[0].mxu0
      %v6855 = vadd.f32 %v6766, %v6854
      %v6856 = vpop.f32.mrb[0].mxu0
      %v6857 = vadd.f32 %v6768, %v6856
      %6858 = vmatprep.mubr.f32.mxu0 0.0
      %6859 = vmatmul.mubr.f32.gmra.mrb[0].mxu0 %v6510
      %v6860 = vpop.f32.mrb[0].mxu0
      %v6861 = vadd.f32 %v6772, %v6860
      %v6862 = vpop.f32.mrb[0].mxu0
      %v6863 = vadd.f32 %v6774, %v6862
      %6864 = vmatprep.mubr.f32.mxu0 0.0
      %6865 = vmatmul.mubr.f32.gmra.mrb[0].mxu0 %v6513
      %v6866 = vpop.f32.mrb[0].mxu0
      %v6867 = vadd.f32 %v6778, %v6866
      %v6868 = vpop.f32.mrb[0].mxu0
      %v6869 = vadd.f32 %v6780, %v6868
      %6870 = vdwg.mxu0
      %6871 = vmatprep.subr.mxu0 %v5420
      %6872 = vmatpush1.msra.mxu0 %v5419
      %6873 = vmatprep.subr.mxu0 %v5428
      %6874 = vmatpush1.msra.mxu0 %v5427
      %6875 = vmatprep.subr.mxu0 %v5436
      %6876 = vmatpush1.msra.mxu0 %v5435
      %6877 = vmatprep.subr.mxu0 %v5444
      %6878 = vmatpush1.msra.mxu0 %v5443
      %6879 = vmatprep.subr.mxu0 %v5515
      %6880 = vmatpush1.msra.mxu0 %v5514
      %6881 = vmatprep.subr.mxu0 %v5522
      %6882 = vmatpush1.msra.mxu0 %v5521
      %6883 = vmatprep.subr.mxu0 %v5529
      %6884 = vmatpush1.msra.mxu0 %v5528
      %6885 = vmatprep.subr.mxu0 %v5536
      %6886 = vmatpush1.msra.mxu0 %v5535
      %6887 = vmatprep.subr.mxu0 %v5708
      %6888 = vmatpush1.msra.mxu0 %v5707
      %6889 = vmatprep.subr.mxu0 %v5716
      %6890 = vmatpush1.msra.mxu0 %v5715
      %6891 = vmatprep.subr.mxu0 %v5724
      %6892 = vmatpush1.msra.mxu0 %v5723
      %6893 = vmatprep.subr.mxu0 %v5732
      %6894 = vmatpush1.msra.mxu0 %v5731
      %6895 = vmatprep.subr.mxu0 %v5868
      %6896 = vmatpush1.msra.mxu0 %v5867
      %6897 = vmatprep.subr.mxu0 %v5876
      %6898 = vmatpush1.msra.mxu0 %v5875
      %6899 = vmatprep.subr.mxu0 %v5884
      %6900 = vmatpush1.msra.mxu0 %v5883
      %6901 = vmatprep.subr.mxu0 %v5892
      %6902 = vmatpush1.msra.mxu0 %v5891
      %6903 = vmatprep.subr.mxu0 %v5216
      %6904 = vmatpush1.msra.mxu0 %v5215
      %6905 = vmatprep.subr.mxu0 %v5224
      %6906 = vmatpush1.msra.mxu0 %v5223
      %6907 = vmatprep.subr.mxu0 %v5232
      %6908 = vmatpush1.msra.mxu0 %v5231
      %6909 = vmatprep.subr.mxu0 %v5240
      %6910 = vmatpush1.msra.mxu0 %v5239
      %6911 = vmatprep.subr.mxu0 %v6028
      %6912 = vmatpush1.msra.mxu0 %v6027
      %6913 = vmatprep.subr.mxu0 %v6036
      %6914 = vmatpush1.msra.mxu0 %v6035
      %6915 = vmatprep.subr.mxu0 %v6044
      %6916 = vmatpush1.msra.mxu0 %v6043
      %6917 = vmatprep.subr.mxu0 %v6052
      %6918 = vmatpush1.msra.mxu0 %v6051
      %6919 = vmatprep.subr.mxu0 %v6188
      %6920 = vmatpush1.msra.mxu0 %v6187
      %6921 = vmatprep.subr.mxu0 %v6196
      %6922 = vmatpush1.msra.mxu0 %v6195
      %6923 = vmatprep.subr.mxu0 %v6204
      %6924 = vmatpush1.msra.mxu0 %v6203
      %6925 = vmatprep.subr.mxu0 %v6212
      %6926 = vmatpush1.msra.mxu0 %v6211
      %6927 = vmatprep.subr.mxu0 %v6284
      %6928 = vmatpush1.msra.mxu0 %v6283
      %6929 = vmatprep.subr.mxu0 %v6291
      %6930 = vmatpush1.msra.mxu0 %v6290
      %6931 = vmatprep.subr.mxu0 %v6298
      %6932 = vmatpush1.msra.mxu0 %v6297
      %6933 = vmatprep.subr.mxu0 %v6305
      %6934 = vmatpush1.msra.mxu0 %v6304
      %6935 = vmatprep.mubr.f32.mxu0 %v5244
      %6936 = vmatmul.mubr.f32.gmra.mrb[0].mxu0 %v5243
      %v6937 = vpop.f32.mrb[0].mxu0
      %v6938 = vadd.f32 0.0, %v6937
      %v6939 = vpop.f32.mrb[0].mxu0
      %v6940 = vadd.f32 0.0, %v6939
      %6941 = vmatprep.mubr.f32.mxu0 %v5247
      %6942 = vmatmul.mubr.f32.gmra.mrb[0].mxu0 %v5246
      %v6943 = vpop.f32.mrb[0].mxu0
      %v6944 = vadd.f32 0.0, %v6943
      %v6945 = vpop.f32.mrb[0].mxu0
      %v6946 = vadd.f32 0.0, %v6945
      %6947 = vmatprep.mubr.f32.mxu0 %v5250
      %6948 = vmatmul.mubr.f32.gmra.mrb[0].mxu0 %v5249
      %v6949 = vpop.f32.mrb[0].mxu0
      %v6950 = vadd.f32 0.0, %v6949
      %v6951 = vpop.f32.mrb[0].mxu0
      %v6952 = vadd.f32 0.0, %v6951
      %6953 = vmatprep.mubr.f32.mxu0 %v5253
      %6954 = vmatmul.mubr.f32.gmra.mrb[0].mxu0 %v5252
      %v6955 = vpop.f32.mrb[0].mxu0
      %v6956 = vadd.f32 0.0, %v6955
      %v6957 = vpop.f32.mrb[0].mxu0
      %v6958 = vadd.f32 0.0, %v6957
      %6959 = vdwg.mxu0
      %6960 = vmatprep.subr.mxu0 %v6476
      %6961 = vmatpush1.msra.mxu0 %v6475
      %6962 = vmatprep.subr.mxu0 %v6484
      %6963 = vmatpush1.msra.mxu0 %v6483
      %6964 = vmatprep.subr.mxu0 %v6492
      %6965 = vmatpush1.msra.mxu0 %v6491
      %6966 = vmatprep.subr.mxu0 %v6500
      %6967 = vmatpush1.msra.mxu0 %v6499
      %6968 = vmatprep.subr.mxu0 0.0
      %6969 = vmatpush1.msra.mxu0 0.0
      %6970 = vmatprep.subr.mxu0 0.0
      %6971 = vmatpush1.msra.mxu0 0.0
      %6972 = vmatprep.subr.mxu0 0.0
      %6973 = vmatpush1.msra.mxu0 0.0
      %6974 = vmatprep.subr.mxu0 0.0
      %6975 = vmatpush1.msra.mxu0 0.0
      %6976 = vmatprep.subr.mxu0 0.0
      %6977 = vmatpush1.msra.mxu0 0.0
      %6978 = vmatprep.subr.mxu0 0.0
      %6979 = vmatpush1.msra.mxu0 0.0
      %6980 = vmatprep.subr.mxu0 0.0
      %6981 = vmatpush1.msra.mxu0 0.0
      %6982 = vmatprep.subr.mxu0 0.0
      %6983 = vmatpush1.msra.mxu0 0.0
      %6984 = vmatprep.subr.mxu0 0.0
      %6985 = vmatpush1.msra.mxu0 0.0
      %6986 = vmatprep.subr.mxu0 0.0
      %6987 = vmatpush1.msra.mxu0 0.0
      %6988 = vmatprep.subr.mxu0 0.0
      %6989 = vmatpush1.msra.mxu0 0.0
      %6990 = vmatprep.subr.mxu0 0.0
      %6991 = vmatpush1.msra.mxu0 0.0
      %6992 = vmatprep.subr.mxu0 0.0
      %6993 = vmatpush1.msra.mxu0 0.0
      %6994 = vmatprep.subr.mxu0 0.0
      %6995 = vmatpush1.msra.mxu0 0.0
      %6996 = vmatprep.subr.mxu0 0.0
      %6997 = vmatpush1.msra.mxu0 0.0
      %6998 = vmatprep.subr.mxu0 0.0
      %6999 = vmatpush1.msra.mxu0 0.0
      %7000 = vmatprep.subr.mxu0 0.0
      %7001 = vmatpush1.msra.mxu0 0.0
      %7002 = vmatprep.subr.mxu0 0.0
      %7003 = vmatpush1.msra.mxu0 0.0
      %7004 = vmatprep.subr.mxu0 0.0
      %7005 = vmatpush1.msra.mxu0 0.0
      %7006 = vmatprep.subr.mxu0 0.0
      %7007 = vmatpush1.msra.mxu0 0.0
      %7008 = vmatprep.subr.mxu0 0.0
      %7009 = vmatpush1.msra.mxu0 0.0
      %7010 = vmatprep.subr.mxu0 0.0
      %7011 = vmatpush1.msra.mxu0 0.0
      %7012 = vmatprep.subr.mxu0 0.0
      %7013 = vmatpush1.msra.mxu0 0.0
      %7014 = vmatprep.subr.mxu0 0.0
      %7015 = vmatpush1.msra.mxu0 0.0
      %7016 = vmatprep.subr.mxu0 0.0
      %7017 = vmatpush1.msra.mxu0 0.0
      %7018 = vmatprep.subr.mxu0 0.0
      %7019 = vmatpush1.msra.mxu0 0.0
      %7020 = vmatprep.subr.mxu0 0.0
      %7021 = vmatpush1.msra.mxu0 0.0
      %7022 = vmatprep.subr.mxu0 0.0
      %7023 = vmatpush1.msra.mxu0 0.0
      %7024 = vmatprep.mubr.f32.mxu0 0.0
      %7025 = vmatmul.mubr.f32.gmra.mrb[0].mxu0 %v6504
      %v7026 = vpop.f32.mrb[0].mxu0
      %v7027 = vadd.f32 %v6938, %v7026
      %v7028 = vpop.f32.mrb[0].mxu0
      %v7029 = vadd.f32 %v6940, %v7028
      %7030 = vmatprep.mubr.f32.mxu0 0.0
      %7031 = vmatmul.mubr.f32.gmra.mrb[0].mxu0 %v6507
      %v7032 = vpop.f32.mrb[0].mxu0
      %v7033 = vadd.f32 %v6944, %v7032
      %v7034 = vpop.f32.mrb[0].mxu0
      %v7035 = vadd.f32 %v6946, %v7034
      %7036 = vmatprep.mubr.f32.mxu0 0.0
      %7037 = vmatmul.mubr.f32.gmra.mrb[0].mxu0 %v6510
      %v7038 = vpop.f32.mrb[0].mxu0
      %v7039 = vadd.f32 %v6950, %v7038
      %v7040 = vpop.f32.mrb[0].mxu0
      %v7041 = vadd.f32 %v6952, %v7040
      %7042 = vmatprep.mubr.f32.mxu0 0.0
      %7043 = vmatmul.mubr.f32.gmra.mrb[0].mxu0 %v6513
      %v7044 = vpop.f32.mrb[0].mxu0
      %v7045 = vadd.f32 %v6956, %v7044
      %v7046 = vpop.f32.mrb[0].mxu0
      %v7047 = vadd.f32 %v6958, %v7046
      %7048 = vdwg.mxu0
      %7049 = vmatprep.subr.mxu0 %v5422
      %7050 = vmatpush1.msra.mxu0 %v5421
      %7051 = vmatprep.subr.mxu0 %v5430
      %7052 = vmatpush1.msra.mxu0 %v5429
      %7053 = vmatprep.subr.mxu0 %v5438
      %7054 = vmatpush1.msra.mxu0 %v5437
      %7055 = vmatprep.subr.mxu0 %v5446
      %7056 = vmatpush1.msra.mxu0 %v5445
      %7057 = vmatprep.subr.mxu0 %v5517
      %7058 = vmatpush1.msra.mxu0 %v5516
      %7059 = vmatprep.subr.mxu0 %v5524
      %7060 = vmatpush1.msra.mxu0 %v5523
      %7061 = vmatprep.subr.mxu0 %v5531
      %7062 = vmatpush1.msra.mxu0 %v5530
      %7063 = vmatprep.subr.mxu0 %v5538
      %7064 = vmatpush1.msra.mxu0 %v5537
      %7065 = vmatprep.subr.mxu0 %v5710
      %7066 = vmatpush1.msra.mxu0 %v5709
      %7067 = vmatprep.subr.mxu0 %v5718
      %7068 = vmatpush1.msra.mxu0 %v5717
      %7069 = vmatprep.subr.mxu0 %v5726
      %7070 = vmatpush1.msra.mxu0 %v5725
      %7071 = vmatprep.subr.mxu0 %v5734
      %7072 = vmatpush1.msra.mxu0 %v5733
      %7073 = vmatprep.subr.mxu0 %v5870
      %7074 = vmatpush1.msra.mxu0 %v5869
      %7075 = vmatprep.subr.mxu0 %v5878
      %7076 = vmatpush1.msra.mxu0 %v5877
      %7077 = vmatprep.subr.mxu0 %v5886
      %7078 = vmatpush1.msra.mxu0 %v5885
      %7079 = vmatprep.subr.mxu0 %v5894
      %7080 = vmatpush1.msra.mxu0 %v5893
      %7081 = vmatprep.subr.mxu0 %v5218
      %7082 = vmatpush1.msra.mxu0 %v5217
      %7083 = vmatprep.subr.mxu0 %v5226
      %7084 = vmatpush1.msra.mxu0 %v5225
      %7085 = vmatprep.subr.mxu0 %v5234
      %7086 = vmatpush1.msra.mxu0 %v5233
      %7087 = vmatprep.subr.mxu0 %v5242
      %7088 = vmatpush1.msra.mxu0 %v5241
      %7089 = vmatprep.subr.mxu0 %v6030
      %7090 = vmatpush1.msra.mxu0 %v6029
      %7091 = vmatprep.subr.mxu0 %v6038
      %7092 = vmatpush1.msra.mxu0 %v6037
      %7093 = vmatprep.subr.mxu0 %v6046
      %7094 = vmatpush1.msra.mxu0 %v6045
      %7095 = vmatprep.subr.mxu0 %v6054
      %7096 = vmatpush1.msra.mxu0 %v6053
      %7097 = vmatprep.subr.mxu0 %v6190
      %7098 = vmatpush1.msra.mxu0 %v6189
      %7099 = vmatprep.subr.mxu0 %v6198
      %7100 = vmatpush1.msra.mxu0 %v6197
      %7101 = vmatprep.subr.mxu0 %v6206
      %7102 = vmatpush1.msra.mxu0 %v6205
      %7103 = vmatprep.subr.mxu0 %v6214
      %7104 = vmatpush1.msra.mxu0 %v6213
      %7105 = vmatprep.subr.mxu0 %v6339
      %7106 = vmatpush1.msra.mxu0 %v6285
      %7107 = vmatprep.subr.mxu0 %v6340
      %7108 = vmatpush1.msra.mxu0 %v6292
      %7109 = vmatprep.subr.mxu0 %v6341
      %7110 = vmatpush1.msra.mxu0 %v6299
      %7111 = vmatprep.subr.mxu0 %v6342
      %7112 = vmatpush1.msra.mxu0 %v6306
      %7113 = vmatprep.mubr.f32.mxu0 %v5244
      %7114 = vmatmul.mubr.f32.gmra.mrb[0].mxu0 %v5243
      %v7115 = vpop.f32.mrb[0].mxu0
      %v7116 = vadd.f32 0.0, %v7115
      %v7117 = vpop.f32.mrb[0].mxu0
      %v7118 = vadd.f32 0.0, %v7117
      %7119 = vmatprep.mubr.f32.mxu0 %v5247
      %7120 = vmatmul.mubr.f32.gmra.mrb[0].mxu0 %v5246
      %v7121 = vpop.f32.mrb[0].mxu0
      %v7122 = vadd.f32 0.0, %v7121
      %v7123 = vpop.f32.mrb[0].mxu0
      %v7124 = vadd.f32 0.0, %v7123
      %7125 = vmatprep.mubr.f32.mxu0 %v5250
      %7126 = vmatmul.mubr.f32.gmra.mrb[0].mxu0 %v5249
      %v7127 = vpop.f32.mrb[0].mxu0
      %v7128 = vadd.f32 0.0, %v7127
      %v7129 = vpop.f32.mrb[0].mxu0
      %v7130 = vadd.f32 0.0, %v7129
      %7131 = vmatprep.mubr.f32.mxu0 %v5253
      %7132 = vmatmul.mubr.f32.gmra.mrb[0].mxu0 %v5252
      %v7133 = vpop.f32.mrb[0].mxu0
      %v7134 = vadd.f32 0.0, %v7133
      %v7135 = vpop.f32.mrb[0].mxu0
      %v7136 = vadd.f32 0.0, %v7135
      %7137 = vdwg.mxu0
      %7138 = vmatprep.subr.mxu0 %v6478
      %7139 = vmatpush1.msra.mxu0 %v6477
      %7140 = vmatprep.subr.mxu0 %v6486
      %7141 = vmatpush1.msra.mxu0 %v6485
      %7142 = vmatprep.subr.mxu0 %v6494
      %7143 = vmatpush1.msra.mxu0 %v6493
      %7144 = vmatprep.subr.mxu0 %v6502
      %7145 = vmatpush1.msra.mxu0 %v6501
      %7146 = vmatprep.subr.mxu0 0.0
      %7147 = vmatpush1.msra.mxu0 0.0
      %7148 = vmatprep.subr.mxu0 0.0
      %7149 = vmatpush1.msra.mxu0 0.0
      %7150 = vmatprep.subr.mxu0 0.0
      %7151 = vmatpush1.msra.mxu0 0.0
      %7152 = vmatprep.subr.mxu0 0.0
      %7153 = vmatpush1.msra.mxu0 0.0
      %7154 = vmatprep.subr.mxu0 0.0
      %7155 = vmatpush1.msra.mxu0 0.0
      %7156 = vmatprep.subr.mxu0 0.0
      %7157 = vmatpush1.msra.mxu0 0.0
      %7158 = vmatprep.subr.mxu0 0.0
      %7159 = vmatpush1.msra.mxu0 0.0
      %7160 = vmatprep.subr.mxu0 0.0
      %7161 = vmatpush1.msra.mxu0 0.0
      %7162 = vmatprep.subr.mxu0 0.0
      %7163 = vmatpush1.msra.mxu0 0.0
      %7164 = vmatprep.subr.mxu0 0.0
      %7165 = vmatpush1.msra.mxu0 0.0
      %7166 = vmatprep.subr.mxu0 0.0
      %7167 = vmatpush1.msra.mxu0 0.0
      %7168 = vmatprep.subr.mxu0 0.0
      %7169 = vmatpush1.msra.mxu0 0.0
      %7170 = vmatprep.subr.mxu0 0.0
      %7171 = vmatpush1.msra.mxu0 0.0
      %7172 = vmatprep.subr.mxu0 0.0
      %7173 = vmatpush1.msra.mxu0 0.0
      %7174 = vmatprep.subr.mxu0 0.0
      %7175 = vmatpush1.msra.mxu0 0.0
      %7176 = vmatprep.subr.mxu0 0.0
      %7177 = vmatpush1.msra.mxu0 0.0
      %7178 = vmatprep.subr.mxu0 0.0
      %7179 = vmatpush1.msra.mxu0 0.0
      %7180 = vmatprep.subr.mxu0 0.0
      %7181 = vmatpush1.msra.mxu0 0.0
      %7182 = vmatprep.subr.mxu0 0.0
      %7183 = vmatpush1.msra.mxu0 0.0
      %7184 = vmatprep.subr.mxu0 0.0
      %7185 = vmatpush1.msra.mxu0 0.0
      %7186 = vmatprep.subr.mxu0 0.0
      %7187 = vmatpush1.msra.mxu0 0.0
      %7188 = vmatprep.subr.mxu0 0.0
      %7189 = vmatpush1.msra.mxu0 0.0
      %7190 = vmatprep.subr.mxu0 0.0
      %7191 = vmatpush1.msra.mxu0 0.0
      %7192 = vmatprep.subr.mxu0 0.0
      %7193 = vmatpush1.msra.mxu0 0.0
      %7194 = vmatprep.subr.mxu0 0.0
      %7195 = vmatpush1.msra.mxu0 0.0
      %7196 = vmatprep.subr.mxu0 0.0
      %7197 = vmatpush1.msra.mxu0 0.0
      %7198 = vmatprep.subr.mxu0 0.0
      %7199 = vmatpush1.msra.mxu0 0.0
      %7200 = vmatprep.subr.mxu0 0.0
      %7201 = vmatpush1.msra.mxu0 0.0
      %7202 = vmatprep.mubr.f32.mxu0 0.0
      %7203 = vmatmul.mubr.f32.gmra.mrb[0].mxu0 %v6504
      %v7204 = vpop.f32.mrb[0].mxu0
      %v7205 = vadd.f32 %v7116, %v7204
      %v7206 = vpop.f32.mrb[0].mxu0
      %v7207 = vadd.f32 %v7118, %v7206
      %7208 = vmatprep.mubr.f32.mxu0 0.0
      %7209 = vmatmul.mubr.f32.gmra.mrb[0].mxu0 %v6507
      %v7210 = vpop.f32.mrb[0].mxu0
      %v7211 = vadd.f32 %v7122, %v7210
      %v7212 = vpop.f32.mrb[0].mxu0
      %v7213 = vadd.f32 %v7124, %v7212
      %7214 = vmatprep.mubr.f32.mxu0 0.0
      %7215 = vmatmul.mubr.f32.gmra.mrb[0].mxu0 %v6510
      %v7216 = vpop.f32.mrb[0].mxu0
      %v7217 = vadd.f32 %v7128, %v7216
      %v7218 = vpop.f32.mrb[0].mxu0
      %v7219 = vadd.f32 %v7130, %v7218
      %7220 = vmatprep.mubr.f32.mxu0 0.0
      %7221 = vmatmul.mubr.f32.gmra.mrb[0].mxu0 %v6513
      %v7222 = vpop.f32.mrb[0].mxu0
      %v7223 = vadd.f32 %v7134, %v7222
      %v7224 = vpop.f32.mrb[0].mxu0
      %v7225 = vadd.f32 %v7136, %v7224
      %7226 = vdwg.mxu0
      %v7227 = vmax.f32 %v6671, 0.0
      %v7228 = vmax.f32 %v6673, 0.0
      %v7229 = vmax.f32 %v6849, 0.0
      %v7230 = vmax.f32 %v6851, 0.0
      %v7231 = vmax.f32 %v7027, 0.0
      %v7232 = vmax.f32 %v7029, 0.0
      %v7233 = vmax.f32 %v7205, 0.0
      %v7234 = vmax.f32 %v7207, 0.0
      %v7235 = vmax.f32 %v6677, 0.0
      %v7236 = vmax.f32 %v6679, 0.0
      %v7237 = vmax.f32 %v6855, 0.0
      %v7238 = vmax.f32 %v6857, 0.0
      %v7239 = vmax.f32 %v7033, 0.0
      %v7240 = vmax.f32 %v7035, 0.0
      %v7241 = vmax.f32 %v7211, 0.0
      %v7242 = vmax.f32 %v7213, 0.0
      %v7243 = vmax.f32 %v6683, 0.0
      %v7244 = vmax.f32 %v6685, 0.0
      %v7245 = vmax.f32 %v6861, 0.0
      %v7246 = vmax.f32 %v6863, 0.0
      %v7247 = vmax.f32 %v7039, 0.0
      %v7248 = vmax.f32 %v7041, 0.0
      %v7249 = vmax.f32 %v7217, 0.0
      %v7250 = vmax.f32 %v7219, 0.0
      %v7251 = vmax.f32 %v6689, 0.0
      %v7252 = vmax.f32 %v6691, 0.0
      %v7253 = vmax.f32 %v6867, 0.0
      %v7254 = vmax.f32 %v6869, 0.0
      %v7255 = vmax.f32 %v7045, 0.0
      %v7256 = vmax.f32 %v7047, 0.0
      %v7257 = vmax.f32 %v7223, 0.0
      %v7258 = vmax.f32 %v7225, 0.0
      %v7259 = vld [vmem:[%s6] sm:$0xff]
      %v7260 = vld [vmem:[%s6 + $0x8] sm:$0xff]
      %v7261 = vld [vmem:[%s6 + $0x10] sm:$0xff]
      %v7262 = vld [vmem:[%s6 + $0x18] sm:$0xff]
      %v7263 = vld [vmem:[%s6 + $0x20] sm:$0xff]
      %v7264 = vld [vmem:[%s6 + $0x28] sm:$0xff]
      %v7265 = vld [vmem:[%s6 + $0x30] sm:$0xff]
      %v7266 = vld [vmem:[%s6 + $0x38] sm:$0xff]
      %v7267 = vld [vmem:[%s6 + $0x40] sm:$0xff]
      %v7268 = vld [vmem:[%s6 + $0x48] sm:$0xff]
      %v7269 = vld [vmem:[%s6 + $0x50] sm:$0xff]
      %v7270 = vld [vmem:[%s6 + $0x58] sm:$0xff]
      %7303 = vrot.lane.b32.xlu0 %v7227, 33
      %v7304 = vpop.permute.xlu0 %7303
      %7305 = vrot.lane.b32.xlu0 %v7228, 33
      %v7306 = vpop.permute.xlu0 %7305
      %7307 = vrot.lane.b32.xlu0 %v7229, 33
      %v7308 = vpop.permute.xlu0 %7307
      %7309 = vrot.lane.b32.xlu0 %v7230, 33
      %v7310 = vpop.permute.xlu0 %7309
      %7311 = vrot.lane.b32.xlu0 %v7231, 33
      %v7312 = vpop.permute.xlu0 %7311
      %7313 = vrot.lane.b32.xlu0 %v7232, 33
      %v7314 = vpop.permute.xlu0 %7313
      %7315 = vrot.lane.b32.xlu0 %v7233, 33
      %v7316 = vpop.permute.xlu0 %7315
      %7317 = vrot.lane.b32.xlu0 %v7234, 33
      %v7318 = vpop.permute.xlu0 %7317
      %7319 = vrot.lane.b32.xlu0 %v7235, 33
      %v7320 = vpop.permute.xlu0 %7319
      %7321 = vrot.lane.b32.xlu0 %v7236, 33
      %v7322 = vpop.permute.xlu0 %7321
      %7323 = vrot.lane.b32.xlu0 %v7237, 33
      %v7324 = vpop.permute.xlu0 %7323
      %7325 = vrot.lane.b32.xlu0 %v7238, 33
      %v7326 = vpop.permute.xlu0 %7325
      %7327 = vrot.lane.b32.xlu0 %v7239, 33
      %v7328 = vpop.permute.xlu0 %7327
      %7329 = vrot.lane.b32.xlu0 %v7240, 33
      %v7330 = vpop.permute.xlu0 %7329
      %7331 = vrot.lane.b32.xlu0 %v7241, 33
      %v7332 = vpop.permute.xlu0 %7331
      %7333 = vrot.lane.b32.xlu0 %v7242, 33
      %v7334 = vpop.permute.xlu0 %7333
      %7335 = vrot.lane.b32.xlu0 %v7243, 33
      %v7336 = vpop.permute.xlu0 %7335
      %7337 = vrot.lane.b32.xlu0 %v7244, 33
      %v7338 = vpop.permute.xlu0 %7337
      %7339 = vrot.lane.b32.xlu0 %v7245, 33
      %v7340 = vpop.permute.xlu0 %7339
      %7341 = vrot.lane.b32.xlu0 %v7246, 33
      %v7342 = vpop.permute.xlu0 %7341
      %7343 = vrot.lane.b32.xlu0 %v7247, 33
      %v7344 = vpop.permute.xlu0 %7343
      %7345 = vrot.lane.b32.xlu0 %v7248, 33
      %v7346 = vpop.permute.xlu0 %7345
      %7347 = vrot.lane.b32.xlu0 %v7249, 33
      %v7348 = vpop.permute.xlu0 %7347
      %7349 = vrot.lane.b32.xlu0 %v7250, 33
      %v7350 = vpop.permute.xlu0 %7349
      %7351 = vrot.lane.b32.xlu0 %v7251, 33
      %v7352 = vpop.permute.xlu0 %7351
      %7353 = vrot.lane.b32.xlu0 %v7252, 33
      %v7354 = vpop.permute.xlu0 %7353
      %7355 = vrot.lane.b32.xlu0 %v7253, 33
      %v7356 = vpop.permute.xlu0 %7355
      %7357 = vrot.lane.b32.xlu0 %v7254, 33
      %v7358 = vpop.permute.xlu0 %7357
      %7359 = vrot.lane.b32.xlu0 %v7255, 33
      %v7360 = vpop.permute.xlu0 %7359
      %7361 = vrot.lane.b32.xlu0 %v7256, 33
      %v7362 = vpop.permute.xlu0 %7361
      %7363 = vrot.lane.b32.xlu0 %v7257, 33
      %v7364 = vpop.permute.xlu0 %7363
      %7365 = vrot.lane.b32.xlu0 %v7258, 33
      %v7366 = vpop.permute.xlu0 %7365
      %v7367 = vsel %vm494, %v7304, %v7306
      %v7368 = vsel %vm494, %v7306, %v7308
      %v7369 = vsel %vm494, %v7308, %v7310
      %v7370 = vsel %vm494, %v7310, %v7312
      %v7371 = vsel %vm494, %v7312, %v7314
      %v7372 = vsel %vm494, %v7314, %v7316
      %v7373 = vsel %vm494, %v7316, %v7318
      %v7374 = vsel %vm494, %v7320, %v7322
      %v7375 = vsel %vm494, %v7322, %v7324
      %v7376 = vsel %vm494, %v7324, %v7326
      %v7377 = vsel %vm494, %v7326, %v7328
      %v7378 = vsel %vm494, %v7328, %v7330
      %v7379 = vsel %vm494, %v7330, %v7332
      %v7380 = vsel %vm494, %v7332, %v7334
      %v7381 = vsel %vm494, %v7336, %v7338
      %v7382 = vsel %vm494, %v7338, %v7340
      %v7383 = vsel %vm494, %v7340, %v7342
      %v7384 = vsel %vm494, %v7342, %v7344
      %v7385 = vsel %vm494, %v7344, %v7346
      %v7386 = vsel %vm494, %v7346, %v7348
      %v7387 = vsel %vm494, %v7348, %v7350
      %v7388 = vsel %vm494, %v7352, %v7354
      %v7389 = vsel %vm494, %v7354, %v7356
      %v7390 = vsel %vm494, %v7356, %v7358
      %v7391 = vsel %vm494, %v7358, %v7360
      %v7392 = vsel %vm494, %v7360, %v7362
      %v7393 = vsel %vm494, %v7362, %v7364
      %v7394 = vsel %vm494, %v7364, %v7366
      %v7427 = vsel %vm494, 0.0, %v7304
      %v7428 = vsel %vm494, 0.0, %v7320
      %v7429 = vsel %vm494, 0.0, %v7336
      %v7430 = vsel %vm494, 0.0, %v7352
      %v7431 = vsel %vm519, %v7427, 0.0
      %v7432 = vsel %vm520, %v7367, 0.0
      %v7433 = vsel %vm521, %v7368, 0.0
      %v7434 = vsel %vm522, %v7369, 0.0
      %v7435 = vsel %vm523, %v7370, 0.0
      %v7436 = vsel %vm524, %v7371, 0.0
      %v7437 = vsel %vm525, %v7372, 0.0
      %v7438 = vsel %vm526, %v7373, 0.0
      %v7439 = vsel %vm519, %v7428, 0.0
      %v7440 = vsel %vm520, %v7374, 0.0
      %v7441 = vsel %vm521, %v7375, 0.0
      %v7442 = vsel %vm522, %v7376, 0.0
      %v7443 = vsel %vm523, %v7377, 0.0
      %v7444 = vsel %vm524, %v7378, 0.0
      %v7445 = vsel %vm525, %v7379, 0.0
      %v7446 = vsel %vm526, %v7380, 0.0
      %v7447 = vsel %vm519, %v7429, 0.0
      %v7448 = vsel %vm520, %v7381, 0.0
      %v7449 = vsel %vm521, %v7382, 0.0
      %v7450 = vsel %vm522, %v7383, 0.0
      %v7451 = vsel %vm523, %v7384, 0.0
      %v7452 = vsel %vm524, %v7385, 0.0
      %v7453 = vsel %vm525, %v7386, 0.0
      %v7454 = vsel %vm526, %v7387, 0.0
      %v7455 = vsel %vm519, %v7430, 0.0
      %v7456 = vsel %vm520, %v7388, 0.0
      %v7457 = vsel %vm521, %v7389, 0.0
      %v7458 = vsel %vm522, %v7390, 0.0
      %v7459 = vsel %vm523, %v7391, 0.0
      %v7460 = vsel %vm524, %v7392, 0.0
      %v7461 = vsel %vm525, %v7393, 0.0
      %v7462 = vsel %vm526, %v7394, 0.0
      %7463 = vrot.lane.b32.xlu0 %v7227, 32
      %v7464 = vpop.permute.xlu0 %7463
      %7465 = vrot.lane.b32.xlu0 %v7228, 32
      %v7466 = vpop.permute.xlu0 %7465
      %7467 = vrot.lane.b32.xlu0 %v7229, 32
      %v7468 = vpop.permute.xlu0 %7467
      %7469 = vrot.lane.b32.xlu0 %v7230, 32
      %v7470 = vpop.permute.xlu0 %7469
      %7471 = vrot.lane.b32.xlu0 %v7231, 32
      %v7472 = vpop.permute.xlu0 %7471
      %7473 = vrot.lane.b32.xlu0 %v7232, 32
      %v7474 = vpop.permute.xlu0 %7473
      %7475 = vrot.lane.b32.xlu0 %v7233, 32
      %v7476 = vpop.permute.xlu0 %7475
      %7477 = vrot.lane.b32.xlu0 %v7234, 32
      %v7478 = vpop.permute.xlu0 %7477
      %7479 = vrot.lane.b32.xlu0 %v7235, 32
      %v7480 = vpop.permute.xlu0 %7479
      %7481 = vrot.lane.b32.xlu0 %v7236, 32
      %v7482 = vpop.permute.xlu0 %7481
      %7483 = vrot.lane.b32.xlu0 %v7237, 32
      %v7484 = vpop.permute.xlu0 %7483
      %7485 = vrot.lane.b32.xlu0 %v7238, 32
      %v7486 = vpop.permute.xlu0 %7485
      %7487 = vrot.lane.b32.xlu0 %v7239, 32
      %v7488 = vpop.permute.xlu0 %7487
      %7489 = vrot.lane.b32.xlu0 %v7240, 32
      %v7490 = vpop.permute.xlu0 %7489
      %7491 = vrot.lane.b32.xlu0 %v7241, 32
      %v7492 = vpop.permute.xlu0 %7491
      %7493 = vrot.lane.b32.xlu0 %v7242, 32
      %v7494 = vpop.permute.xlu0 %7493
      %7495 = vrot.lane.b32.xlu0 %v7243, 32
      %v7496 = vpop.permute.xlu0 %7495
      %7497 = vrot.lane.b32.xlu0 %v7244, 32
      %v7498 = vpop.permute.xlu0 %7497
      %7499 = vrot.lane.b32.xlu0 %v7245, 32
      %v7500 = vpop.permute.xlu0 %7499
      %7501 = vrot.lane.b32.xlu0 %v7246, 32
      %v7502 = vpop.permute.xlu0 %7501
      %7503 = vrot.lane.b32.xlu0 %v7247, 32
      %v7504 = vpop.permute.xlu0 %7503
      %7505 = vrot.lane.b32.xlu0 %v7248, 32
      %v7506 = vpop.permute.xlu0 %7505
      %7507 = vrot.lane.b32.xlu0 %v7249, 32
      %v7508 = vpop.permute.xlu0 %7507
      %7509 = vrot.lane.b32.xlu0 %v7250, 32
      %v7510 = vpop.permute.xlu0 %7509
      %7511 = vrot.lane.b32.xlu0 %v7251, 32
      %v7512 = vpop.permute.xlu0 %7511
      %7513 = vrot.lane.b32.xlu0 %v7252, 32
      %v7514 = vpop.permute.xlu0 %7513
      %7515 = vrot.lane.b32.xlu0 %v7253, 32
      %v7516 = vpop.permute.xlu0 %7515
      %7517 = vrot.lane.b32.xlu0 %v7254, 32
      %v7518 = vpop.permute.xlu0 %7517
      %7519 = vrot.lane.b32.xlu0 %v7255, 32
      %v7520 = vpop.permute.xlu0 %7519
      %7521 = vrot.lane.b32.xlu0 %v7256, 32
      %v7522 = vpop.permute.xlu0 %7521
      %7523 = vrot.lane.b32.xlu0 %v7257, 32
      %v7524 = vpop.permute.xlu0 %7523
      %7525 = vrot.lane.b32.xlu0 %v7258, 32
      %v7526 = vpop.permute.xlu0 %7525
      %v7527 = vsel %vm551, %v7464, %v7466
      %v7528 = vsel %vm551, %v7466, %v7468
      %v7529 = vsel %vm551, %v7468, %v7470
      %v7530 = vsel %vm551, %v7470, %v7472
      %v7531 = vsel %vm551, %v7472, %v7474
      %v7532 = vsel %vm551, %v7474, %v7476
      %v7533 = vsel %vm551, %v7476, %v7478
      %v7534 = vsel %vm551, %v7480, %v7482
      %v7535 = vsel %vm551, %v7482, %v7484
      %v7536 = vsel %vm551, %v7484, %v7486
      %v7537 = vsel %vm551, %v7486, %v7488
      %v7538 = vsel %vm551, %v7488, %v7490
      %v7539 = vsel %vm551, %v7490, %v7492
      %v7540 = vsel %vm551, %v7492, %v7494
      %v7541 = vsel %vm551, %v7496, %v7498
      %v7542 = vsel %vm551, %v7498, %v7500
      %v7543 = vsel %vm551, %v7500, %v7502
      %v7544 = vsel %vm551, %v7502, %v7504
      %v7545 = vsel %vm551, %v7504, %v7506
      %v7546 = vsel %vm551, %v7506, %v7508
      %v7547 = vsel %vm551, %v7508, %v7510
      %v7548 = vsel %vm551, %v7512, %v7514
      %v7549 = vsel %vm551, %v7514, %v7516
      %v7550 = vsel %vm551, %v7516, %v7518
      %v7551 = vsel %vm551, %v7518, %v7520
      %v7552 = vsel %vm551, %v7520, %v7522
      %v7553 = vsel %vm551, %v7522, %v7524
      %v7554 = vsel %vm551, %v7524, %v7526
      %v7587 = vsel %vm551, 0.0, %v7464
      %v7588 = vsel %vm551, 0.0, %v7480
      %v7589 = vsel %vm551, 0.0, %v7496
      %v7590 = vsel %vm551, 0.0, %v7512
      %7591 = vrot.lane.b32.xlu0 %v7227, 31
      %v7592 = vpop.permute.xlu0 %7591
      %7593 = vrot.lane.b32.xlu0 %v7228, 31
      %v7594 = vpop.permute.xlu0 %7593
      %7595 = vrot.lane.b32.xlu0 %v7229, 31
      %v7596 = vpop.permute.xlu0 %7595
      %7597 = vrot.lane.b32.xlu0 %v7230, 31
      %v7598 = vpop.permute.xlu0 %7597
      %7599 = vrot.lane.b32.xlu0 %v7231, 31
      %v7600 = vpop.permute.xlu0 %7599
      %7601 = vrot.lane.b32.xlu0 %v7232, 31
      %v7602 = vpop.permute.xlu0 %7601
      %7603 = vrot.lane.b32.xlu0 %v7233, 31
      %v7604 = vpop.permute.xlu0 %7603
      %7605 = vrot.lane.b32.xlu0 %v7234, 31
      %v7606 = vpop.permute.xlu0 %7605
      %7607 = vrot.lane.b32.xlu0 %v7235, 31
      %v7608 = vpop.permute.xlu0 %7607
      %7609 = vrot.lane.b32.xlu0 %v7236, 31
      %v7610 = vpop.permute.xlu0 %7609
      %7611 = vrot.lane.b32.xlu0 %v7237, 31
      %v7612 = vpop.permute.xlu0 %7611
      %7613 = vrot.lane.b32.xlu0 %v7238, 31
      %v7614 = vpop.permute.xlu0 %7613
      %7615 = vrot.lane.b32.xlu0 %v7239, 31
      %v7616 = vpop.permute.xlu0 %7615
      %7617 = vrot.lane.b32.xlu0 %v7240, 31
      %v7618 = vpop.permute.xlu0 %7617
      %7619 = vrot.lane.b32.xlu0 %v7241, 31
      %v7620 = vpop.permute.xlu0 %7619
      %7621 = vrot.lane.b32.xlu0 %v7242, 31
      %v7622 = vpop.permute.xlu0 %7621
      %7623 = vrot.lane.b32.xlu0 %v7243, 31
      %v7624 = vpop.permute.xlu0 %7623
      %7625 = vrot.lane.b32.xlu0 %v7244, 31
      %v7626 = vpop.permute.xlu0 %7625
      %7627 = vrot.lane.b32.xlu0 %v7245, 31
      %v7628 = vpop.permute.xlu0 %7627
      %7629 = vrot.lane.b32.xlu0 %v7246, 31
      %v7630 = vpop.permute.xlu0 %7629
      %7631 = vrot.lane.b32.xlu0 %v7247, 31
      %v7632 = vpop.permute.xlu0 %7631
      %7633 = vrot.lane.b32.xlu0 %v7248, 31
      %v7634 = vpop.permute.xlu0 %7633
      %7635 = vrot.lane.b32.xlu0 %v7249, 31
      %v7636 = vpop.permute.xlu0 %7635
      %7637 = vrot.lane.b32.xlu0 %v7250, 31
      %v7638 = vpop.permute.xlu0 %7637
      %7639 = vrot.lane.b32.xlu0 %v7251, 31
      %v7640 = vpop.permute.xlu0 %7639
      %7641 = vrot.lane.b32.xlu0 %v7252, 31
      %v7642 = vpop.permute.xlu0 %7641
      %7643 = vrot.lane.b32.xlu0 %v7253, 31
      %v7644 = vpop.permute.xlu0 %7643
      %7645 = vrot.lane.b32.xlu0 %v7254, 31
      %v7646 = vpop.permute.xlu0 %7645
      %7647 = vrot.lane.b32.xlu0 %v7255, 31
      %v7648 = vpop.permute.xlu0 %7647
      %7649 = vrot.lane.b32.xlu0 %v7256, 31
      %v7650 = vpop.permute.xlu0 %7649
      %7651 = vrot.lane.b32.xlu0 %v7257, 31
      %v7652 = vpop.permute.xlu0 %7651
      %7653 = vrot.lane.b32.xlu0 %v7258, 31
      %v7654 = vpop.permute.xlu0 %7653
      %v7655 = vsel %vm584, %v7592, %v7594
      %v7656 = vsel %vm584, %v7594, %v7596
      %v7657 = vsel %vm584, %v7596, %v7598
      %v7658 = vsel %vm584, %v7598, %v7600
      %v7659 = vsel %vm584, %v7600, %v7602
      %v7660 = vsel %vm584, %v7602, %v7604
      %v7661 = vsel %vm584, %v7604, %v7606
      %v7662 = vsel %vm584, %v7608, %v7610
      %v7663 = vsel %vm584, %v7610, %v7612
      %v7664 = vsel %vm584, %v7612, %v7614
      %v7665 = vsel %vm584, %v7614, %v7616
      %v7666 = vsel %vm584, %v7616, %v7618
      %v7667 = vsel %vm584, %v7618, %v7620
      %v7668 = vsel %vm584, %v7620, %v7622
      %v7669 = vsel %vm584, %v7624, %v7626
      %v7670 = vsel %vm584, %v7626, %v7628
      %v7671 = vsel %vm584, %v7628, %v7630
      %v7672 = vsel %vm584, %v7630, %v7632
      %v7673 = vsel %vm584, %v7632, %v7634
      %v7674 = vsel %vm584, %v7634, %v7636
      %v7675 = vsel %vm584, %v7636, %v7638
      %v7676 = vsel %vm584, %v7640, %v7642
      %v7677 = vsel %vm584, %v7642, %v7644
      %v7678 = vsel %vm584, %v7644, %v7646
      %v7679 = vsel %vm584, %v7646, %v7648
      %v7680 = vsel %vm584, %v7648, %v7650
      %v7681 = vsel %vm584, %v7650, %v7652
      %v7682 = vsel %vm584, %v7652, %v7654
      %v7715 = vsel %vm584, 0.0, %v7592
      %v7716 = vsel %vm584, 0.0, %v7608
      %v7717 = vsel %vm584, 0.0, %v7624
      %v7718 = vsel %vm584, 0.0, %v7640
      %v7719 = vsel %vm609, %v7715, 0.0
      %v7720 = vsel %vm610, %v7655, 0.0
      %v7721 = vsel %vm611, %v7656, 0.0
      %v7722 = vsel %vm612, %v7657, 0.0
      %v7723 = vsel %vm613, %v7658, 0.0
      %v7724 = vsel %vm614, %v7659, 0.0
      %v7725 = vsel %vm615, %v7660, 0.0
      %v7726 = vsel %vm616, %v7661, 0.0
      %v7727 = vsel %vm609, %v7716, 0.0
      %v7728 = vsel %vm610, %v7662, 0.0
      %v7729 = vsel %vm611, %v7663, 0.0
      %v7730 = vsel %vm612, %v7664, 0.0
      %v7731 = vsel %vm613, %v7665, 0.0
      %v7732 = vsel %vm614, %v7666, 0.0
      %v7733 = vsel %vm615, %v7667, 0.0
      %v7734 = vsel %vm616, %v7668, 0.0
      %v7735 = vsel %vm609, %v7717, 0.0
      %v7736 = vsel %vm610, %v7669, 0.0
      %v7737 = vsel %vm611, %v7670, 0.0
      %v7738 = vsel %vm612, %v7671, 0.0
      %v7739 = vsel %vm613, %v7672, 0.0
      %v7740 = vsel %vm614, %v7673, 0.0
      %v7741 = vsel %vm615, %v7674, 0.0
      %v7742 = vsel %vm616, %v7675, 0.0
      %v7743 = vsel %vm609, %v7718, 0.0
      %v7744 = vsel %vm610, %v7676, 0.0
      %v7745 = vsel %vm611, %v7677, 0.0
      %v7746 = vsel %vm612, %v7678, 0.0
      %v7747 = vsel %vm613, %v7679, 0.0
      %v7748 = vsel %vm614, %v7680, 0.0
      %v7749 = vsel %vm615, %v7681, 0.0
      %v7750 = vsel %vm616, %v7682, 0.0
      %7751 = vrot.lane.b32.xlu0 %v7227, 1
      %v7752 = vpop.permute.xlu0 %7751
      %7753 = vrot.lane.b32.xlu0 %v7228, 1
      %v7754 = vpop.permute.xlu0 %7753
      %7755 = vrot.lane.b32.xlu0 %v7229, 1
      %v7756 = vpop.permute.xlu0 %7755
      %7757 = vrot.lane.b32.xlu0 %v7230, 1
      %v7758 = vpop.permute.xlu0 %7757
      %7759 = vrot.lane.b32.xlu0 %v7231, 1
      %v7760 = vpop.permute.xlu0 %7759
      %7761 = vrot.lane.b32.xlu0 %v7232, 1
      %v7762 = vpop.permute.xlu0 %7761
      %7763 = vrot.lane.b32.xlu0 %v7233, 1
      %v7764 = vpop.permute.xlu0 %7763
      %7765 = vrot.lane.b32.xlu0 %v7234, 1
      %v7766 = vpop.permute.xlu0 %7765
      %7767 = vrot.lane.b32.xlu0 %v7235, 1
      %v7768 = vpop.permute.xlu0 %7767
      %7769 = vrot.lane.b32.xlu0 %v7236, 1
      %v7770 = vpop.permute.xlu0 %7769
      %7771 = vrot.lane.b32.xlu0 %v7237, 1
      %v7772 = vpop.permute.xlu0 %7771
      %7773 = vrot.lane.b32.xlu0 %v7238, 1
      %v7774 = vpop.permute.xlu0 %7773
      %7775 = vrot.lane.b32.xlu0 %v7239, 1
      %v7776 = vpop.permute.xlu0 %7775
      %7777 = vrot.lane.b32.xlu0 %v7240, 1
      %v7778 = vpop.permute.xlu0 %7777
      %7779 = vrot.lane.b32.xlu0 %v7241, 1
      %v7780 = vpop.permute.xlu0 %7779
      %7781 = vrot.lane.b32.xlu0 %v7242, 1
      %v7782 = vpop.permute.xlu0 %7781
      %7783 = vrot.lane.b32.xlu0 %v7243, 1
      %v7784 = vpop.permute.xlu0 %7783
      %7785 = vrot.lane.b32.xlu0 %v7244, 1
      %v7786 = vpop.permute.xlu0 %7785
      %7787 = vrot.lane.b32.xlu0 %v7245, 1
      %v7788 = vpop.permute.xlu0 %7787
      %7789 = vrot.lane.b32.xlu0 %v7246, 1
      %v7790 = vpop.permute.xlu0 %7789
      %7791 = vrot.lane.b32.xlu0 %v7247, 1
      %v7792 = vpop.permute.xlu0 %7791
      %7793 = vrot.lane.b32.xlu0 %v7248, 1
      %v7794 = vpop.permute.xlu0 %7793
      %7795 = vrot.lane.b32.xlu0 %v7249, 1
      %v7796 = vpop.permute.xlu0 %7795
      %7797 = vrot.lane.b32.xlu0 %v7250, 1
      %v7798 = vpop.permute.xlu0 %7797
      %7799 = vrot.lane.b32.xlu0 %v7251, 1
      %v7800 = vpop.permute.xlu0 %7799
      %7801 = vrot.lane.b32.xlu0 %v7252, 1
      %v7802 = vpop.permute.xlu0 %7801
      %7803 = vrot.lane.b32.xlu0 %v7253, 1
      %v7804 = vpop.permute.xlu0 %7803
      %7805 = vrot.lane.b32.xlu0 %v7254, 1
      %v7806 = vpop.permute.xlu0 %7805
      %7807 = vrot.lane.b32.xlu0 %v7255, 1
      %v7808 = vpop.permute.xlu0 %7807
      %7809 = vrot.lane.b32.xlu0 %v7256, 1
      %v7810 = vpop.permute.xlu0 %7809
      %7811 = vrot.lane.b32.xlu0 %v7257, 1
      %v7812 = vpop.permute.xlu0 %7811
      %7813 = vrot.lane.b32.xlu0 %v7258, 1
      %v7814 = vpop.permute.xlu0 %7813
      %v7815 = vsel %vm641, %v7752, %v7754
      %v7816 = vsel %vm641, %v7754, %v7756
      %v7817 = vsel %vm641, %v7756, %v7758
      %v7818 = vsel %vm641, %v7758, %v7760
      %v7819 = vsel %vm641, %v7760, %v7762
      %v7820 = vsel %vm641, %v7762, %v7764
      %v7821 = vsel %vm641, %v7764, %v7766
      %v7822 = vsel %vm641, %v7768, %v7770
      %v7823 = vsel %vm641, %v7770, %v7772
      %v7824 = vsel %vm641, %v7772, %v7774
      %v7825 = vsel %vm641, %v7774, %v7776
      %v7826 = vsel %vm641, %v7776, %v7778
      %v7827 = vsel %vm641, %v7778, %v7780
      %v7828 = vsel %vm641, %v7780, %v7782
      %v7829 = vsel %vm641, %v7784, %v7786
      %v7830 = vsel %vm641, %v7786, %v7788
      %v7831 = vsel %vm641, %v7788, %v7790
      %v7832 = vsel %vm641, %v7790, %v7792
      %v7833 = vsel %vm641, %v7792, %v7794
      %v7834 = vsel %vm641, %v7794, %v7796
      %v7835 = vsel %vm641, %v7796, %v7798
      %v7836 = vsel %vm641, %v7800, %v7802
      %v7837 = vsel %vm641, %v7802, %v7804
      %v7838 = vsel %vm641, %v7804, %v7806
      %v7839 = vsel %vm641, %v7806, %v7808
      %v7840 = vsel %vm641, %v7808, %v7810
      %v7841 = vsel %vm641, %v7810, %v7812
      %v7842 = vsel %vm641, %v7812, %v7814
      %v7875 = vsel %vm641, 0.0, %v7752
      %v7876 = vsel %vm641, 0.0, %v7768
      %v7877 = vsel %vm641, 0.0, %v7784
      %v7878 = vsel %vm641, 0.0, %v7800
      %v7879 = vsel %vm519, %v7875, 0.0
      %v7880 = vsel %vm520, %v7815, 0.0
      %v7881 = vsel %vm521, %v7816, 0.0
      %v7882 = vsel %vm522, %v7817, 0.0
      %v7883 = vsel %vm523, %v7818, 0.0
      %v7884 = vsel %vm524, %v7819, 0.0
      %v7885 = vsel %vm525, %v7820, 0.0
      %v7886 = vsel %vm526, %v7821, 0.0
      %v7887 = vsel %vm519, %v7876, 0.0
      %v7888 = vsel %vm520, %v7822, 0.0
      %v7889 = vsel %vm521, %v7823, 0.0
      %v7890 = vsel %vm522, %v7824, 0.0
      %v7891 = vsel %vm523, %v7825, 0.0
      %v7892 = vsel %vm524, %v7826, 0.0
      %v7893 = vsel %vm525, %v7827, 0.0
      %v7894 = vsel %vm526, %v7828, 0.0
      %v7895 = vsel %vm519, %v7877, 0.0
      %v7896 = vsel %vm520, %v7829, 0.0
      %v7897 = vsel %vm521, %v7830, 0.0
      %v7898 = vsel %vm522, %v7831, 0.0
      %v7899 = vsel %vm523, %v7832, 0.0
      %v7900 = vsel %vm524, %v7833, 0.0
      %v7901 = vsel %vm525, %v7834, 0.0
      %v7902 = vsel %vm526, %v7835, 0.0
      %v7903 = vsel %vm519, %v7878, 0.0
      %v7904 = vsel %vm520, %v7836, 0.0
      %v7905 = vsel %vm521, %v7837, 0.0
      %v7906 = vsel %vm522, %v7838, 0.0
      %v7907 = vsel %vm523, %v7839, 0.0
      %v7908 = vsel %vm524, %v7840, 0.0
      %v7909 = vsel %vm525, %v7841, 0.0
      %v7910 = vsel %vm526, %v7842, 0.0
      %7911 = vrot.lane.b32.xlu0 %v7227, 127
      %v7912 = vpop.permute.xlu0 %7911
      %7913 = vrot.lane.b32.xlu0 %v7228, 127
      %v7914 = vpop.permute.xlu0 %7913
      %7915 = vrot.lane.b32.xlu0 %v7229, 127
      %v7916 = vpop.permute.xlu0 %7915
      %7917 = vrot.lane.b32.xlu0 %v7230, 127
      %v7918 = vpop.permute.xlu0 %7917
      %7919 = vrot.lane.b32.xlu0 %v7231, 127
      %v7920 = vpop.permute.xlu0 %7919
      %7921 = vrot.lane.b32.xlu0 %v7232, 127
      %v7922 = vpop.permute.xlu0 %7921
      %7923 = vrot.lane.b32.xlu0 %v7233, 127
      %v7924 = vpop.permute.xlu0 %7923
      %7925 = vrot.lane.b32.xlu0 %v7234, 127
      %v7926 = vpop.permute.xlu0 %7925
      %7927 = vrot.lane.b32.xlu0 %v7235, 127
      %v7928 = vpop.permute.xlu0 %7927
      %7929 = vrot.lane.b32.xlu0 %v7236, 127
      %v7930 = vpop.permute.xlu0 %7929
      %7931 = vrot.lane.b32.xlu0 %v7237, 127
      %v7932 = vpop.permute.xlu0 %7931
      %7933 = vrot.lane.b32.xlu0 %v7238, 127
      %v7934 = vpop.permute.xlu0 %7933
      %7935 = vrot.lane.b32.xlu0 %v7239, 127
      %v7936 = vpop.permute.xlu0 %7935
      %7937 = vrot.lane.b32.xlu0 %v7240, 127
      %v7938 = vpop.permute.xlu0 %7937
      %7939 = vrot.lane.b32.xlu0 %v7241, 127
      %v7940 = vpop.permute.xlu0 %7939
      %7941 = vrot.lane.b32.xlu0 %v7242, 127
      %v7942 = vpop.permute.xlu0 %7941
      %7943 = vrot.lane.b32.xlu0 %v7243, 127
      %v7944 = vpop.permute.xlu0 %7943
      %7945 = vrot.lane.b32.xlu0 %v7244, 127
      %v7946 = vpop.permute.xlu0 %7945
      %7947 = vrot.lane.b32.xlu0 %v7245, 127
      %v7948 = vpop.permute.xlu0 %7947
      %7949 = vrot.lane.b32.xlu0 %v7246, 127
      %v7950 = vpop.permute.xlu0 %7949
      %7951 = vrot.lane.b32.xlu0 %v7247, 127
      %v7952 = vpop.permute.xlu0 %7951
      %7953 = vrot.lane.b32.xlu0 %v7248, 127
      %v7954 = vpop.permute.xlu0 %7953
      %7955 = vrot.lane.b32.xlu0 %v7249, 127
      %v7956 = vpop.permute.xlu0 %7955
      %7957 = vrot.lane.b32.xlu0 %v7250, 127
      %v7958 = vpop.permute.xlu0 %7957
      %7959 = vrot.lane.b32.xlu0 %v7251, 127
      %v7960 = vpop.permute.xlu0 %7959
      %7961 = vrot.lane.b32.xlu0 %v7252, 127
      %v7962 = vpop.permute.xlu0 %7961
      %7963 = vrot.lane.b32.xlu0 %v7253, 127
      %v7964 = vpop.permute.xlu0 %7963
      %7965 = vrot.lane.b32.xlu0 %v7254, 127
      %v7966 = vpop.permute.xlu0 %7965
      %7967 = vrot.lane.b32.xlu0 %v7255, 127
      %v7968 = vpop.permute.xlu0 %7967
      %7969 = vrot.lane.b32.xlu0 %v7256, 127
      %v7970 = vpop.permute.xlu0 %7969
      %7971 = vrot.lane.b32.xlu0 %v7257, 127
      %v7972 = vpop.permute.xlu0 %7971
      %7973 = vrot.lane.b32.xlu0 %v7258, 127
      %v7974 = vpop.permute.xlu0 %7973
      %v7975 = vsel %vm682, %v7912, %v7914
      %v7976 = vsel %vm682, %v7914, %v7916
      %v7977 = vsel %vm682, %v7916, %v7918
      %v7978 = vsel %vm682, %v7918, %v7920
      %v7979 = vsel %vm682, %v7920, %v7922
      %v7980 = vsel %vm682, %v7922, %v7924
      %v7981 = vsel %vm682, %v7924, %v7926
      %v7982 = vsel %vm682, %v7928, %v7930
      %v7983 = vsel %vm682, %v7930, %v7932
      %v7984 = vsel %vm682, %v7932, %v7934
      %v7985 = vsel %vm682, %v7934, %v7936
      %v7986 = vsel %vm682, %v7936, %v7938
      %v7987 = vsel %vm682, %v7938, %v7940
      %v7988 = vsel %vm682, %v7940, %v7942
      %v7989 = vsel %vm682, %v7944, %v7946
      %v7990 = vsel %vm682, %v7946, %v7948
      %v7991 = vsel %vm682, %v7948, %v7950
      %v7992 = vsel %vm682, %v7950, %v7952
      %v7993 = vsel %vm682, %v7952, %v7954
      %v7994 = vsel %vm682, %v7954, %v7956
      %v7995 = vsel %vm682, %v7956, %v7958
      %v7996 = vsel %vm682, %v7960, %v7962
      %v7997 = vsel %vm682, %v7962, %v7964
      %v7998 = vsel %vm682, %v7964, %v7966
      %v7999 = vsel %vm682, %v7966, %v7968
      %v8000 = vsel %vm682, %v7968, %v7970
      %v8001 = vsel %vm682, %v7970, %v7972
      %v8002 = vsel %vm682, %v7972, %v7974
      %v8035 = vsel %vm682, %v7926, 0.0
      %v8036 = vsel %vm682, %v7942, 0.0
      %v8037 = vsel %vm682, %v7958, 0.0
      %v8038 = vsel %vm682, %v7974, 0.0
      %v8039 = vsel %vm609, %v7975, 0.0
      %v8040 = vsel %vm610, %v7976, 0.0
      %v8041 = vsel %vm611, %v7977, 0.0
      %v8042 = vsel %vm612, %v7978, 0.0
      %v8043 = vsel %vm613, %v7979, 0.0
      %v8044 = vsel %vm614, %v7980, 0.0
      %v8045 = vsel %vm615, %v7981, 0.0
      %v8046 = vsel %vm616, %v8035, 0.0
      %v8047 = vsel %vm609, %v7982, 0.0
      %v8048 = vsel %vm610, %v7983, 0.0
      %v8049 = vsel %vm611, %v7984, 0.0
      %v8050 = vsel %vm612, %v7985, 0.0
      %v8051 = vsel %vm613, %v7986, 0.0
      %v8052 = vsel %vm614, %v7987, 0.0
      %v8053 = vsel %vm615, %v7988, 0.0
      %v8054 = vsel %vm616, %v8036, 0.0
      %v8055 = vsel %vm609, %v7989, 0.0
      %v8056 = vsel %vm610, %v7990, 0.0
      %v8057 = vsel %vm611, %v7991, 0.0
      %v8058 = vsel %vm612, %v7992, 0.0
      %v8059 = vsel %vm613, %v7993, 0.0
      %v8060 = vsel %vm614, %v7994, 0.0
      %v8061 = vsel %vm615, %v7995, 0.0
      %v8062 = vsel %vm616, %v8037, 0.0
      %v8063 = vsel %vm609, %v7996, 0.0
      %v8064 = vsel %vm610, %v7997, 0.0
      %v8065 = vsel %vm611, %v7998, 0.0
      %v8066 = vsel %vm612, %v7999, 0.0
      %v8067 = vsel %vm613, %v8000, 0.0
      %v8068 = vsel %vm614, %v8001, 0.0
      %v8069 = vsel %vm615, %v8002, 0.0
      %v8070 = vsel %vm616, %v8038, 0.0
      %8071 = vrot.lane.b32.xlu0 %v7227, 97
      %v8072 = vpop.permute.xlu0 %8071
      %8073 = vrot.lane.b32.xlu0 %v7228, 97
      %v8074 = vpop.permute.xlu0 %8073
      %8075 = vrot.lane.b32.xlu0 %v7229, 97
      %v8076 = vpop.permute.xlu0 %8075
      %8077 = vrot.lane.b32.xlu0 %v7230, 97
      %v8078 = vpop.permute.xlu0 %8077
      %8079 = vrot.lane.b32.xlu0 %v7231, 97
      %v8080 = vpop.permute.xlu0 %8079
      %8081 = vrot.lane.b32.xlu0 %v7232, 97
      %v8082 = vpop.permute.xlu0 %8081
      %8083 = vrot.lane.b32.xlu0 %v7233, 97
      %v8084 = vpop.permute.xlu0 %8083
      %8085 = vrot.lane.b32.xlu0 %v7234, 97
      %v8086 = vpop.permute.xlu0 %8085
      %8087 = vrot.lane.b32.xlu0 %v7235, 97
      %v8088 = vpop.permute.xlu0 %8087
      %8089 = vrot.lane.b32.xlu0 %v7236, 97
      %v8090 = vpop.permute.xlu0 %8089
      %8091 = vrot.lane.b32.xlu0 %v7237, 97
      %v8092 = vpop.permute.xlu0 %8091
      %8093 = vrot.lane.b32.xlu0 %v7238, 97
      %v8094 = vpop.permute.xlu0 %8093
      %8095 = vrot.lane.b32.xlu0 %v7239, 97
      %v8096 = vpop.permute.xlu0 %8095
      %8097 = vrot.lane.b32.xlu0 %v7240, 97
      %v8098 = vpop.permute.xlu0 %8097
      %8099 = vrot.lane.b32.xlu0 %v7241, 97
      %v8100 = vpop.permute.xlu0 %8099
      %8101 = vrot.lane.b32.xlu0 %v7242, 97
      %v8102 = vpop.permute.xlu0 %8101
      %8103 = vrot.lane.b32.xlu0 %v7243, 97
      %v8104 = vpop.permute.xlu0 %8103
      %8105 = vrot.lane.b32.xlu0 %v7244, 97
      %v8106 = vpop.permute.xlu0 %8105
      %8107 = vrot.lane.b32.xlu0 %v7245, 97
      %v8108 = vpop.permute.xlu0 %8107
      %8109 = vrot.lane.b32.xlu0 %v7246, 97
      %v8110 = vpop.permute.xlu0 %8109
      %8111 = vrot.lane.b32.xlu0 %v7247, 97
      %v8112 = vpop.permute.xlu0 %8111
      %8113 = vrot.lane.b32.xlu0 %v7248, 97
      %v8114 = vpop.permute.xlu0 %8113
      %8115 = vrot.lane.b32.xlu0 %v7249, 97
      %v8116 = vpop.permute.xlu0 %8115
      %8117 = vrot.lane.b32.xlu0 %v7250, 97
      %v8118 = vpop.permute.xlu0 %8117
      %8119 = vrot.lane.b32.xlu0 %v7251, 97
      %v8120 = vpop.permute.xlu0 %8119
      %8121 = vrot.lane.b32.xlu0 %v7252, 97
      %v8122 = vpop.permute.xlu0 %8121
      %8123 = vrot.lane.b32.xlu0 %v7253, 97
      %v8124 = vpop.permute.xlu0 %8123
      %8125 = vrot.lane.b32.xlu0 %v7254, 97
      %v8126 = vpop.permute.xlu0 %8125
      %8127 = vrot.lane.b32.xlu0 %v7255, 97
      %v8128 = vpop.permute.xlu0 %8127
      %8129 = vrot.lane.b32.xlu0 %v7256, 97
      %v8130 = vpop.permute.xlu0 %8129
      %8131 = vrot.lane.b32.xlu0 %v7257, 97
      %v8132 = vpop.permute.xlu0 %8131
      %8133 = vrot.lane.b32.xlu0 %v7258, 97
      %v8134 = vpop.permute.xlu0 %8133
      %v8135 = vsel %vm723, %v8072, %v8074
      %v8136 = vsel %vm723, %v8074, %v8076
      %v8137 = vsel %vm723, %v8076, %v8078
      %v8138 = vsel %vm723, %v8078, %v8080
      %v8139 = vsel %vm723, %v8080, %v8082
      %v8140 = vsel %vm723, %v8082, %v8084
      %v8141 = vsel %vm723, %v8084, %v8086
      %v8142 = vsel %vm723, %v8088, %v8090
      %v8143 = vsel %vm723, %v8090, %v8092
      %v8144 = vsel %vm723, %v8092, %v8094
      %v8145 = vsel %vm723, %v8094, %v8096
      %v8146 = vsel %vm723, %v8096, %v8098
      %v8147 = vsel %vm723, %v8098, %v8100
      %v8148 = vsel %vm723, %v8100, %v8102
      %v8149 = vsel %vm723, %v8104, %v8106
      %v8150 = vsel %vm723, %v8106, %v8108
      %v8151 = vsel %vm723, %v8108, %v8110
      %v8152 = vsel %vm723, %v8110, %v8112
      %v8153 = vsel %vm723, %v8112, %v8114
      %v8154 = vsel %vm723, %v8114, %v8116
      %v8155 = vsel %vm723, %v8116, %v8118
      %v8156 = vsel %vm723, %v8120, %v8122
      %v8157 = vsel %vm723, %v8122, %v8124
      %v8158 = vsel %vm723, %v8124, %v8126
      %v8159 = vsel %vm723, %v8126, %v8128
      %v8160 = vsel %vm723, %v8128, %v8130
      %v8161 = vsel %vm723, %v8130, %v8132
      %v8162 = vsel %vm723, %v8132, %v8134
      %v8195 = vsel %vm723, %v8086, 0.0
      %v8196 = vsel %vm723, %v8102, 0.0
      %v8197 = vsel %vm723, %v8118, 0.0
      %v8198 = vsel %vm723, %v8134, 0.0
      %v8199 = vsel %vm519, %v8135, 0.0
      %v8200 = vsel %vm520, %v8136, 0.0
      %v8201 = vsel %vm521, %v8137, 0.0
      %v8202 = vsel %vm522, %v8138, 0.0
      %v8203 = vsel %vm523, %v8139, 0.0
      %v8204 = vsel %vm524, %v8140, 0.0
      %v8205 = vsel %vm525, %v8141, 0.0
      %v8206 = vsel %vm526, %v8195, 0.0
      %v8207 = vsel %vm519, %v8142, 0.0
      %v8208 = vsel %vm520, %v8143, 0.0
      %v8209 = vsel %vm521, %v8144, 0.0
      %v8210 = vsel %vm522, %v8145, 0.0
      %v8211 = vsel %vm523, %v8146, 0.0
      %v8212 = vsel %vm524, %v8147, 0.0
      %v8213 = vsel %vm525, %v8148, 0.0
      %v8214 = vsel %vm526, %v8196, 0.0
      %v8215 = vsel %vm519, %v8149, 0.0
      %v8216 = vsel %vm520, %v8150, 0.0
      %v8217 = vsel %vm521, %v8151, 0.0
      %v8218 = vsel %vm522, %v8152, 0.0
      %v8219 = vsel %vm523, %v8153, 0.0
      %v8220 = vsel %vm524, %v8154, 0.0
      %v8221 = vsel %vm525, %v8155, 0.0
      %v8222 = vsel %vm526, %v8197, 0.0
      %v8223 = vsel %vm519, %v8156, 0.0
      %v8224 = vsel %vm520, %v8157, 0.0
      %v8225 = vsel %vm521, %v8158, 0.0
      %v8226 = vsel %vm522, %v8159, 0.0
      %v8227 = vsel %vm523, %v8160, 0.0
      %v8228 = vsel %vm524, %v8161, 0.0
      %v8229 = vsel %vm525, %v8162, 0.0
      %v8230 = vsel %vm526, %v8198, 0.0
      %8231 = vrot.lane.b32.xlu0 %v7227, 96
      %v8232 = vpop.permute.xlu0 %8231
      %8233 = vrot.lane.b32.xlu0 %v7228, 96
      %v8234 = vpop.permute.xlu0 %8233
      %8235 = vrot.lane.b32.xlu0 %v7229, 96
      %v8236 = vpop.permute.xlu0 %8235
      %8237 = vrot.lane.b32.xlu0 %v7230, 96
      %v8238 = vpop.permute.xlu0 %8237
      %8239 = vrot.lane.b32.xlu0 %v7231, 96
      %v8240 = vpop.permute.xlu0 %8239
      %8241 = vrot.lane.b32.xlu0 %v7232, 96
      %v8242 = vpop.permute.xlu0 %8241
      %8243 = vrot.lane.b32.xlu0 %v7233, 96
      %v8244 = vpop.permute.xlu0 %8243
      %8245 = vrot.lane.b32.xlu0 %v7234, 96
      %v8246 = vpop.permute.xlu0 %8245
      %8247 = vrot.lane.b32.xlu0 %v7235, 96
      %v8248 = vpop.permute.xlu0 %8247
      %8249 = vrot.lane.b32.xlu0 %v7236, 96
      %v8250 = vpop.permute.xlu0 %8249
      %8251 = vrot.lane.b32.xlu0 %v7237, 96
      %v8252 = vpop.permute.xlu0 %8251
      %8253 = vrot.lane.b32.xlu0 %v7238, 96
      %v8254 = vpop.permute.xlu0 %8253
      %8255 = vrot.lane.b32.xlu0 %v7239, 96
      %v8256 = vpop.permute.xlu0 %8255
      %8257 = vrot.lane.b32.xlu0 %v7240, 96
      %v8258 = vpop.permute.xlu0 %8257
      %8259 = vrot.lane.b32.xlu0 %v7241, 96
      %v8260 = vpop.permute.xlu0 %8259
      %8261 = vrot.lane.b32.xlu0 %v7242, 96
      %v8262 = vpop.permute.xlu0 %8261
      %8263 = vrot.lane.b32.xlu0 %v7243, 96
      %v8264 = vpop.permute.xlu0 %8263
      %8265 = vrot.lane.b32.xlu0 %v7244, 96
      %v8266 = vpop.permute.xlu0 %8265
      %8267 = vrot.lane.b32.xlu0 %v7245, 96
      %v8268 = vpop.permute.xlu0 %8267
      %8269 = vrot.lane.b32.xlu0 %v7246, 96
      %v8270 = vpop.permute.xlu0 %8269
      %8271 = vrot.lane.b32.xlu0 %v7247, 96
      %v8272 = vpop.permute.xlu0 %8271
      %8273 = vrot.lane.b32.xlu0 %v7248, 96
      %v8274 = vpop.permute.xlu0 %8273
      %8275 = vrot.lane.b32.xlu0 %v7249, 96
      %v8276 = vpop.permute.xlu0 %8275
      %8277 = vrot.lane.b32.xlu0 %v7250, 96
      %v8278 = vpop.permute.xlu0 %8277
      %8279 = vrot.lane.b32.xlu0 %v7251, 96
      %v8280 = vpop.permute.xlu0 %8279
      %8281 = vrot.lane.b32.xlu0 %v7252, 96
      %v8282 = vpop.permute.xlu0 %8281
      %8283 = vrot.lane.b32.xlu0 %v7253, 96
      %v8284 = vpop.permute.xlu0 %8283
      %8285 = vrot.lane.b32.xlu0 %v7254, 96
      %v8286 = vpop.permute.xlu0 %8285
      %8287 = vrot.lane.b32.xlu0 %v7255, 96
      %v8288 = vpop.permute.xlu0 %8287
      %8289 = vrot.lane.b32.xlu0 %v7256, 96
      %v8290 = vpop.permute.xlu0 %8289
      %8291 = vrot.lane.b32.xlu0 %v7257, 96
      %v8292 = vpop.permute.xlu0 %8291
      %8293 = vrot.lane.b32.xlu0 %v7258, 96
      %v8294 = vpop.permute.xlu0 %8293
      %v8295 = vsel %vm764, %v8232, %v8234
      %v8296 = vsel %vm764, %v8234, %v8236
      %v8297 = vsel %vm764, %v8236, %v8238
      %v8298 = vsel %vm764, %v8238, %v8240
      %v8299 = vsel %vm764, %v8240, %v8242
      %v8300 = vsel %vm764, %v8242, %v8244
      %v8301 = vsel %vm764, %v8244, %v8246
      %v8302 = vsel %vm764, %v8248, %v8250
      %v8303 = vsel %vm764, %v8250, %v8252
      %v8304 = vsel %vm764, %v8252, %v8254
      %v8305 = vsel %vm764, %v8254, %v8256
      %v8306 = vsel %vm764, %v8256, %v8258
      %v8307 = vsel %vm764, %v8258, %v8260
      %v8308 = vsel %vm764, %v8260, %v8262
      %v8309 = vsel %vm764, %v8264, %v8266
      %v8310 = vsel %vm764, %v8266, %v8268
      %v8311 = vsel %vm764, %v8268, %v8270
      %v8312 = vsel %vm764, %v8270, %v8272
      %v8313 = vsel %vm764, %v8272, %v8274
      %v8314 = vsel %vm764, %v8274, %v8276
      %v8315 = vsel %vm764, %v8276, %v8278
      %v8316 = vsel %vm764, %v8280, %v8282
      %v8317 = vsel %vm764, %v8282, %v8284
      %v8318 = vsel %vm764, %v8284, %v8286
      %v8319 = vsel %vm764, %v8286, %v8288
      %v8320 = vsel %vm764, %v8288, %v8290
      %v8321 = vsel %vm764, %v8290, %v8292
      %v8322 = vsel %vm764, %v8292, %v8294
      %v8355 = vsel %vm764, %v8246, 0.0
      %v8356 = vsel %vm764, %v8262, 0.0
      %v8357 = vsel %vm764, %v8278, 0.0
      %v8358 = vsel %vm764, %v8294, 0.0
      %8359 = vrot.lane.b32.xlu0 %v7227, 95
      %v8360 = vpop.permute.xlu0 %8359
      %8361 = vrot.lane.b32.xlu0 %v7228, 95
      %v8362 = vpop.permute.xlu0 %8361
      %8363 = vrot.lane.b32.xlu0 %v7229, 95
      %v8364 = vpop.permute.xlu0 %8363
      %8365 = vrot.lane.b32.xlu0 %v7230, 95
      %v8366 = vpop.permute.xlu0 %8365
      %8367 = vrot.lane.b32.xlu0 %v7231, 95
      %v8368 = vpop.permute.xlu0 %8367
      %8369 = vrot.lane.b32.xlu0 %v7232, 95
      %v8370 = vpop.permute.xlu0 %8369
      %8371 = vrot.lane.b32.xlu0 %v7233, 95
      %v8372 = vpop.permute.xlu0 %8371
      %8373 = vrot.lane.b32.xlu0 %v7234, 95
      %v8374 = vpop.permute.xlu0 %8373
      %8375 = vrot.lane.b32.xlu0 %v7235, 95
      %v8376 = vpop.permute.xlu0 %8375
      %8377 = vrot.lane.b32.xlu0 %v7236, 95
      %v8378 = vpop.permute.xlu0 %8377
      %8379 = vrot.lane.b32.xlu0 %v7237, 95
      %v8380 = vpop.permute.xlu0 %8379
      %8381 = vrot.lane.b32.xlu0 %v7238, 95
      %v8382 = vpop.permute.xlu0 %8381
      %8383 = vrot.lane.b32.xlu0 %v7239, 95
      %v8384 = vpop.permute.xlu0 %8383
      %8385 = vrot.lane.b32.xlu0 %v7240, 95
      %v8386 = vpop.permute.xlu0 %8385
      %8387 = vrot.lane.b32.xlu0 %v7241, 95
      %v8388 = vpop.permute.xlu0 %8387
      %8389 = vrot.lane.b32.xlu0 %v7242, 95
      %v8390 = vpop.permute.xlu0 %8389
      %8391 = vrot.lane.b32.xlu0 %v7243, 95
      %v8392 = vpop.permute.xlu0 %8391
      %8393 = vrot.lane.b32.xlu0 %v7244, 95
      %v8394 = vpop.permute.xlu0 %8393
      %8395 = vrot.lane.b32.xlu0 %v7245, 95
      %v8396 = vpop.permute.xlu0 %8395
      %8397 = vrot.lane.b32.xlu0 %v7246, 95
      %v8398 = vpop.permute.xlu0 %8397
      %8399 = vrot.lane.b32.xlu0 %v7247, 95
      %v8400 = vpop.permute.xlu0 %8399
      %8401 = vrot.lane.b32.xlu0 %v7248, 95
      %v8402 = vpop.permute.xlu0 %8401
      %8403 = vrot.lane.b32.xlu0 %v7249, 95
      %v8404 = vpop.permute.xlu0 %8403
      %8405 = vrot.lane.b32.xlu0 %v7250, 95
      %v8406 = vpop.permute.xlu0 %8405
      %8407 = vrot.lane.b32.xlu0 %v7251, 95
      %v8408 = vpop.permute.xlu0 %8407
      %8409 = vrot.lane.b32.xlu0 %v7252, 95
      %v8410 = vpop.permute.xlu0 %8409
      %8411 = vrot.lane.b32.xlu0 %v7253, 95
      %v8412 = vpop.permute.xlu0 %8411
      %8413 = vrot.lane.b32.xlu0 %v7254, 95
      %v8414 = vpop.permute.xlu0 %8413
      %8415 = vrot.lane.b32.xlu0 %v7255, 95
      %v8416 = vpop.permute.xlu0 %8415
      %8417 = vrot.lane.b32.xlu0 %v7256, 95
      %v8418 = vpop.permute.xlu0 %8417
      %8419 = vrot.lane.b32.xlu0 %v7257, 95
      %v8420 = vpop.permute.xlu0 %8419
      %8421 = vrot.lane.b32.xlu0 %v7258, 95
      %v8422 = vpop.permute.xlu0 %8421
      %v8423 = vsel %vm797, %v8360, %v8362
      %v8424 = vsel %vm797, %v8362, %v8364
      %v8425 = vsel %vm797, %v8364, %v8366
      %v8426 = vsel %vm797, %v8366, %v8368
      %v8427 = vsel %vm797, %v8368, %v8370
      %v8428 = vsel %vm797, %v8370, %v8372
      %v8429 = vsel %vm797, %v8372, %v8374
      %v8430 = vsel %vm797, %v8376, %v8378
      %v8431 = vsel %vm797, %v8378, %v8380
      %v8432 = vsel %vm797, %v8380, %v8382
      %v8433 = vsel %vm797, %v8382, %v8384
      %v8434 = vsel %vm797, %v8384, %v8386
      %v8435 = vsel %vm797, %v8386, %v8388
      %v8436 = vsel %vm797, %v8388, %v8390
      %v8437 = vsel %vm797, %v8392, %v8394
      %v8438 = vsel %vm797, %v8394, %v8396
      %v8439 = vsel %vm797, %v8396, %v8398
      %v8440 = vsel %vm797, %v8398, %v8400
      %v8441 = vsel %vm797, %v8400, %v8402
      %v8442 = vsel %vm797, %v8402, %v8404
      %v8443 = vsel %vm797, %v8404, %v8406
      %v8444 = vsel %vm797, %v8408, %v8410
      %v8445 = vsel %vm797, %v8410, %v8412
      %v8446 = vsel %vm797, %v8412, %v8414
      %v8447 = vsel %vm797, %v8414, %v8416
      %v8448 = vsel %vm797, %v8416, %v8418
      %v8449 = vsel %vm797, %v8418, %v8420
      %v8450 = vsel %vm797, %v8420, %v8422
      %v8483 = vsel %vm797, %v8374, 0.0
      %v8484 = vsel %vm797, %v8390, 0.0
      %v8485 = vsel %vm797, %v8406, 0.0
      %v8486 = vsel %vm797, %v8422, 0.0
      %v8487 = vsel %vm609, %v8423, 0.0
      %v8488 = vsel %vm610, %v8424, 0.0
      %v8489 = vsel %vm611, %v8425, 0.0
      %v8490 = vsel %vm612, %v8426, 0.0
      %v8491 = vsel %vm613, %v8427, 0.0
      %v8492 = vsel %vm614, %v8428, 0.0
      %v8493 = vsel %vm615, %v8429, 0.0
      %v8494 = vsel %vm616, %v8483, 0.0
      %v8495 = vsel %vm609, %v8430, 0.0
      %v8496 = vsel %vm610, %v8431, 0.0
      %v8497 = vsel %vm611, %v8432, 0.0
      %v8498 = vsel %vm612, %v8433, 0.0
      %v8499 = vsel %vm613, %v8434, 0.0
      %v8500 = vsel %vm614, %v8435, 0.0
      %v8501 = vsel %vm615, %v8436, 0.0
      %v8502 = vsel %vm616, %v8484, 0.0
      %v8503 = vsel %vm609, %v8437, 0.0
      %v8504 = vsel %vm610, %v8438, 0.0
      %v8505 = vsel %vm611, %v8439, 0.0
      %v8506 = vsel %vm612, %v8440, 0.0
      %v8507 = vsel %vm613, %v8441, 0.0
      %v8508 = vsel %vm614, %v8442, 0.0
      %v8509 = vsel %vm615, %v8443, 0.0
      %v8510 = vsel %vm616, %v8485, 0.0
      %v8511 = vsel %vm609, %v8444, 0.0
      %v8512 = vsel %vm610, %v8445, 0.0
      %v8513 = vsel %vm611, %v8446, 0.0
      %v8514 = vsel %vm612, %v8447, 0.0
      %v8515 = vsel %vm613, %v8448, 0.0
      %v8516 = vsel %vm614, %v8449, 0.0
      %v8517 = vsel %vm615, %v8450, 0.0
      %v8518 = vsel %vm616, %v8486, 0.0
      %v8520 = vsel %vm551, %v7261, 0
      %v8523 = vsel %vm551, %v7264, 0
      %v8526 = vsel %vm551, %v7267, 0
      %v8529 = vsel %vm551, %v7270, 0
      %8531 = vmatprep.subr.mxu0 %v7432
      %8532 = vmatpush1.msra.mxu0 %v7431
      %8533 = vmatprep.subr.mxu0 %v7440
      %8534 = vmatpush1.msra.mxu0 %v7439
      %8535 = vmatprep.subr.mxu0 %v7448
      %8536 = vmatpush1.msra.mxu0 %v7447
      %8537 = vmatprep.subr.mxu0 %v7456
      %8538 = vmatpush1.msra.mxu0 %v7455
      %8539 = vmatprep.subr.mxu0 %v7527
      %8540 = vmatpush1.msra.mxu0 %v7587
      %8541 = vmatprep.subr.mxu0 %v7534
      %8542 = vmatpush1.msra.mxu0 %v7588
      %8543 = vmatprep.subr.mxu0 %v7541
      %8544 = vmatpush1.msra.mxu0 %v7589
      %8545 = vmatprep.subr.mxu0 %v7548
      %8546 = vmatpush1.msra.mxu0 %v7590
      %8547 = vmatprep.subr.mxu0 %v7720
      %8548 = vmatpush1.msra.mxu0 %v7719
      %8549 = vmatprep.subr.mxu0 %v7728
      %8550 = vmatpush1.msra.mxu0 %v7727
      %8551 = vmatprep.subr.mxu0 %v7736
      %8552 = vmatpush1.msra.mxu0 %v7735
      %8553 = vmatprep.subr.mxu0 %v7744
      %8554 = vmatpush1.msra.mxu0 %v7743
      %8555 = vmatprep.subr.mxu0 %v7880
      %8556 = vmatpush1.msra.mxu0 %v7879
      %8557 = vmatprep.subr.mxu0 %v7888
      %8558 = vmatpush1.msra.mxu0 %v7887
      %8559 = vmatprep.subr.mxu0 %v7896
      %8560 = vmatpush1.msra.mxu0 %v7895
      %8561 = vmatprep.subr.mxu0 %v7904
      %8562 = vmatpush1.msra.mxu0 %v7903
      %8563 = vmatprep.subr.mxu0 %v7228
      %8564 = vmatpush1.msra.mxu0 %v7227
      %8565 = vmatprep.subr.mxu0 %v7236
      %8566 = vmatpush1.msra.mxu0 %v7235
      %8567 = vmatprep.subr.mxu0 %v7244
      %8568 = vmatpush1.msra.mxu0 %v7243
      %8569 = vmatprep.subr.mxu0 %v7252
      %8570 = vmatpush1.msra.mxu0 %v7251
      %8571 = vmatprep.subr.mxu0 %v8040
      %8572 = vmatpush1.msra.mxu0 %v8039
      %8573 = vmatprep.subr.mxu0 %v8048
      %8574 = vmatpush1.msra.mxu0 %v8047
      %8575 = vmatprep.subr.mxu0 %v8056
      %8576 = vmatpush1.msra.mxu0 %v8055
      %8577 = vmatprep.subr.mxu0 %v8064
      %8578 = vmatpush1.msra.mxu0 %v8063
      %8579 = vmatprep.subr.mxu0 %v8200
      %8580 = vmatpush1.msra.mxu0 %v8199
      %8581 = vmatprep.subr.mxu0 %v8208
      %8582 = vmatpush1.msra.mxu0 %v8207
      %8583 = vmatprep.subr.mxu0 %v8216
      %8584 = vmatpush1.msra.mxu0 %v8215
      %8585 = vmatprep.subr.mxu0 %v8224
      %8586 = vmatpush1.msra.mxu0 %v8223
      %8587 = vmatprep.subr.mxu0 %v8296
      %8588 = vmatpush1.msra.mxu0 %v8295
      %8589 = vmatprep.subr.mxu0 %v8303
      %8590 = vmatpush1.msra.mxu0 %v8302
      %8591 = vmatprep.subr.mxu0 %v8310
      %8592 = vmatpush1.msra.mxu0 %v8309
      %8593 = vmatprep.subr.mxu0 %v8317
      %8594 = vmatpush1.msra.mxu0 %v8316
      %8595 = vmatprep.mubr.f32.mxu0 %v7260
      %8596 = vmatmul.mubr.f32.gmra.mrb[0].mxu0 %v7259
      %v8597 = vpop.f32.mrb[0].mxu0
      %v8598 = vadd.f32 0.0, %v8597
      %v8599 = vpop.f32.mrb[0].mxu0
      %v8600 = vadd.f32 0.0, %v8599
      %8601 = vmatprep.mubr.f32.mxu0 %v7263
      %8602 = vmatmul.mubr.f32.gmra.mrb[0].mxu0 %v7262
      %v8603 = vpop.f32.mrb[0].mxu0
      %v8604 = vadd.f32 0.0, %v8603
      %v8605 = vpop.f32.mrb[0].mxu0
      %v8606 = vadd.f32 0.0, %v8605
      %8607 = vmatprep.mubr.f32.mxu0 %v7266
      %8608 = vmatmul.mubr.f32.gmra.mrb[0].mxu0 %v7265
      %v8609 = vpop.f32.mrb[0].mxu0
      %v8610 = vadd.f32 0.0, %v8609
      %v8611 = vpop.f32.mrb[0].mxu0
      %v8612 = vadd.f32 0.0, %v8611
      %8613 = vmatprep.mubr.f32.mxu0 %v7269
      %8614 = vmatmul.mubr.f32.gmra.mrb[0].mxu0 %v7268
      %v8615 = vpop.f32.mrb[0].mxu0
      %v8616 = vadd.f32 0.0, %v8615
      %v8617 = vpop.f32.mrb[0].mxu0
      %v8618 = vadd.f32 0.0, %v8617
      %8619 = vdwg.mxu0
      %8620 = vmatprep.subr.mxu0 %v8488
      %8621 = vmatpush1.msra.mxu0 %v8487
      %8622 = vmatprep.subr.mxu0 %v8496
      %8623 = vmatpush1.msra.mxu0 %v8495
      %8624 = vmatprep.subr.mxu0 %v8504
      %8625 = vmatpush1.msra.mxu0 %v8503
      %8626 = vmatprep.subr.mxu0 %v8512
      %8627 = vmatpush1.msra.mxu0 %v8511
      %8628 = vmatprep.subr.mxu0 0.0
      %8629 = vmatpush1.msra.mxu0 0.0
      %8630 = vmatprep.subr.mxu0 0.0
      %8631 = vmatpush1.msra.mxu0 0.0
      %8632 = vmatprep.subr.mxu0 0.0
      %8633 = vmatpush1.msra.mxu0 0.0
      %8634 = vmatprep.subr.mxu0 0.0
      %8635 = vmatpush1.msra.mxu0 0.0
      %8636 = vmatprep.subr.mxu0 0.0
      %8637 = vmatpush1.msra.mxu0 0.0
      %8638 = vmatprep.subr.mxu0 0.0
      %8639 = vmatpush1.msra.mxu0 0.0
      %8640 = vmatprep.subr.mxu0 0.0
      %8641 = vmatpush1.msra.mxu0 0.0
      %8642 = vmatprep.subr.mxu0 0.0
      %8643 = vmatpush1.msra.mxu0 0.0
      %8644 = vmatprep.subr.mxu0 0.0
      %8645 = vmatpush1.msra.mxu0 0.0
      %8646 = vmatprep.subr.mxu0 0.0
      %8647 = vmatpush1.msra.mxu0 0.0
      %8648 = vmatprep.subr.mxu0 0.0
      %8649 = vmatpush1.msra.mxu0 0.0
      %8650 = vmatprep.subr.mxu0 0.0
      %8651 = vmatpush1.msra.mxu0 0.0
      %8652 = vmatprep.subr.mxu0 0.0
      %8653 = vmatpush1.msra.mxu0 0.0
      %8654 = vmatprep.subr.mxu0 0.0
      %8655 = vmatpush1.msra.mxu0 0.0
      %8656 = vmatprep.subr.mxu0 0.0
      %8657 = vmatpush1.msra.mxu0 0.0
      %8658 = vmatprep.subr.mxu0 0.0
      %8659 = vmatpush1.msra.mxu0 0.0
      %8660 = vmatprep.subr.mxu0 0.0
      %8661 = vmatpush1.msra.mxu0 0.0
      %8662 = vmatprep.subr.mxu0 0.0
      %8663 = vmatpush1.msra.mxu0 0.0
      %8664 = vmatprep.subr.mxu0 0.0
      %8665 = vmatpush1.msra.mxu0 0.0
      %8666 = vmatprep.subr.mxu0 0.0
      %8667 = vmatpush1.msra.mxu0 0.0
      %8668 = vmatprep.subr.mxu0 0.0
      %8669 = vmatpush1.msra.mxu0 0.0
      %8670 = vmatprep.subr.mxu0 0.0
      %8671 = vmatpush1.msra.mxu0 0.0
      %8672 = vmatprep.subr.mxu0 0.0
      %8673 = vmatpush1.msra.mxu0 0.0
      %8674 = vmatprep.subr.mxu0 0.0
      %8675 = vmatpush1.msra.mxu0 0.0
      %8676 = vmatprep.subr.mxu0 0.0
      %8677 = vmatpush1.msra.mxu0 0.0
      %8678 = vmatprep.subr.mxu0 0.0
      %8679 = vmatpush1.msra.mxu0 0.0
      %8680 = vmatprep.subr.mxu0 0.0
      %8681 = vmatpush1.msra.mxu0 0.0
      %8682 = vmatprep.subr.mxu0 0.0
      %8683 = vmatpush1.msra.mxu0 0.0
      %8684 = vmatprep.mubr.f32.mxu0 0.0
      %8685 = vmatmul.mubr.f32.gmra.mrb[0].mxu0 %v8520
      %v8686 = vpop.f32.mrb[0].mxu0
      %v8687 = vadd.f32 %v8598, %v8686
      %v8688 = vpop.f32.mrb[0].mxu0
      %v8689 = vadd.f32 %v8600, %v8688
      %8690 = vmatprep.mubr.f32.mxu0 0.0
      %8691 = vmatmul.mubr.f32.gmra.mrb[0].mxu0 %v8523
      %v8692 = vpop.f32.mrb[0].mxu0
      %v8693 = vadd.f32 %v8604, %v8692
      %v8694 = vpop.f32.mrb[0].mxu0
      %v8695 = vadd.f32 %v8606, %v8694
      %8696 = vmatprep.mubr.f32.mxu0 0.0
      %8697 = vmatmul.mubr.f32.gmra.mrb[0].mxu0 %v8526
      %v8698 = vpop.f32.mrb[0].mxu0
      %v8699 = vadd.f32 %v8610, %v8698
      %v8700 = vpop.f32.mrb[0].mxu0
      %v8701 = vadd.f32 %v8612, %v8700
      %8702 = vmatprep.mubr.f32.mxu0 0.0
      %8703 = vmatmul.mubr.f32.gmra.mrb[0].mxu0 %v8529
      %v8704 = vpop.f32.mrb[0].mxu0
      %v8705 = vadd.f32 %v8616, %v8704
      %v8706 = vpop.f32.mrb[0].mxu0
      %v8707 = vadd.f32 %v8618, %v8706
      %8708 = vdwg.mxu0
      %8709 = vmatprep.subr.mxu0 %v7434
      %8710 = vmatpush1.msra.mxu0 %v7433
      %8711 = vmatprep.subr.mxu0 %v7442
      %8712 = vmatpush1.msra.mxu0 %v7441
      %8713 = vmatprep.subr.mxu0 %v7450
      %8714 = vmatpush1.msra.mxu0 %v7449
      %8715 = vmatprep.subr.mxu0 %v7458
      %8716 = vmatpush1.msra.mxu0 %v7457
      %8717 = vmatprep.subr.mxu0 %v7529
      %8718 = vmatpush1.msra.mxu0 %v7528
      %8719 = vmatprep.subr.mxu0 %v7536
      %8720 = vmatpush1.msra.mxu0 %v7535
      %8721 = vmatprep.subr.mxu0 %v7543
      %8722 = vmatpush1.msra.mxu0 %v7542
      %8723 = vmatprep.subr.mxu0 %v7550
      %8724 = vmatpush1.msra.mxu0 %v7549
      %8725 = vmatprep.subr.mxu0 %v7722
      %8726 = vmatpush1.msra.mxu0 %v7721
      %8727 = vmatprep.subr.mxu0 %v7730
      %8728 = vmatpush1.msra.mxu0 %v7729
      %8729 = vmatprep.subr.mxu0 %v7738
      %8730 = vmatpush1.msra.mxu0 %v7737
      %8731 = vmatprep.subr.mxu0 %v7746
      %8732 = vmatpush1.msra.mxu0 %v7745
      %8733 = vmatprep.subr.mxu0 %v7882
      %8734 = vmatpush1.msra.mxu0 %v7881
      %8735 = vmatprep.subr.mxu0 %v7890
      %8736 = vmatpush1.msra.mxu0 %v7889
      %8737 = vmatprep.subr.mxu0 %v7898
      %8738 = vmatpush1.msra.mxu0 %v7897
      %8739 = vmatprep.subr.mxu0 %v7906
      %8740 = vmatpush1.msra.mxu0 %v7905
      %8741 = vmatprep.subr.mxu0 %v7230
      %8742 = vmatpush1.msra.mxu0 %v7229
      %8743 = vmatprep.subr.mxu0 %v7238
      %8744 = vmatpush1.msra.mxu0 %v7237
      %8745 = vmatprep.subr.mxu0 %v7246
      %8746 = vmatpush1.msra.mxu0 %v7245
      %8747 = vmatprep.subr.mxu0 %v7254
      %8748 = vmatpush1.msra.mxu0 %v7253
      %8749 = vmatprep.subr.mxu0 %v8042
      %8750 = vmatpush1.msra.mxu0 %v8041
      %8751 = vmatprep.subr.mxu0 %v8050
      %8752 = vmatpush1.msra.mxu0 %v8049
      %8753 = vmatprep.subr.mxu0 %v8058
      %8754 = vmatpush1.msra.mxu0 %v8057
      %8755 = vmatprep.subr.mxu0 %v8066
      %8756 = vmatpush1.msra.mxu0 %v8065
      %8757 = vmatprep.subr.mxu0 %v8202
      %8758 = vmatpush1.msra.mxu0 %v8201
      %8759 = vmatprep.subr.mxu0 %v8210
      %8760 = vmatpush1.msra.mxu0 %v8209
      %8761 = vmatprep.subr.mxu0 %v8218
      %8762 = vmatpush1.msra.mxu0 %v8217
      %8763 = vmatprep.subr.mxu0 %v8226
      %8764 = vmatpush1.msra.mxu0 %v8225
      %8765 = vmatprep.subr.mxu0 %v8298
      %8766 = vmatpush1.msra.mxu0 %v8297
      %8767 = vmatprep.subr.mxu0 %v8305
      %8768 = vmatpush1.msra.mxu0 %v8304
      %8769 = vmatprep.subr.mxu0 %v8312
      %8770 = vmatpush1.msra.mxu0 %v8311
      %8771 = vmatprep.subr.mxu0 %v8319
      %8772 = vmatpush1.msra.mxu0 %v8318
      %8773 = vmatprep.mubr.f32.mxu0 %v7260
      %8774 = vmatmul.mubr.f32.gmra.mrb[0].mxu0 %v7259
      %v8775 = vpop.f32.mrb[0].mxu0
      %v8776 = vadd.f32 0.0, %v8775
      %v8777 = vpop.f32.mrb[0].mxu0
      %v8778 = vadd.f32 0.0, %v8777
      %8779 = vmatprep.mubr.f32.mxu0 %v7263
      %8780 = vmatmul.mubr.f32.gmra.mrb[0].mxu0 %v7262
      %v8781 = vpop.f32.mrb[0].mxu0
      %v8782 = vadd.f32 0.0, %v8781
      %v8783 = vpop.f32.mrb[0].mxu0
      %v8784 = vadd.f32 0.0, %v8783
      %8785 = vmatprep.mubr.f32.mxu0 %v7266
      %8786 = vmatmul.mubr.f32.gmra.mrb[0].mxu0 %v7265
      %v8787 = vpop.f32.mrb[0].mxu0
      %v8788 = vadd.f32 0.0, %v8787
      %v8789 = vpop.f32.mrb[0].mxu0
      %v8790 = vadd.f32 0.0, %v8789
      %8791 = vmatprep.mubr.f32.mxu0 %v7269
      %8792 = vmatmul.mubr.f32.gmra.mrb[0].mxu0 %v7268
      %v8793 = vpop.f32.mrb[0].mxu0
      %v8794 = vadd.f32 0.0, %v8793
      %v8795 = vpop.f32.mrb[0].mxu0
      %v8796 = vadd.f32 0.0, %v8795
      %8797 = vdwg.mxu0
      %8798 = vmatprep.subr.mxu0 %v8490
      %8799 = vmatpush1.msra.mxu0 %v8489
      %8800 = vmatprep.subr.mxu0 %v8498
      %8801 = vmatpush1.msra.mxu0 %v8497
      %8802 = vmatprep.subr.mxu0 %v8506
      %8803 = vmatpush1.msra.mxu0 %v8505
      %8804 = vmatprep.subr.mxu0 %v8514
      %8805 = vmatpush1.msra.mxu0 %v8513
      %8806 = vmatprep.subr.mxu0 0.0
      %8807 = vmatpush1.msra.mxu0 0.0
      %8808 = vmatprep.subr.mxu0 0.0
      %8809 = vmatpush1.msra.mxu0 0.0
      %8810 = vmatprep.subr.mxu0 0.0
      %8811 = vmatpush1.msra.mxu0 0.0
      %8812 = vmatprep.subr.mxu0 0.0
      %8813 = vmatpush1.msra.mxu0 0.0
      %8814 = vmatprep.subr.mxu0 0.0
      %8815 = vmatpush1.msra.mxu0 0.0
      %8816 = vmatprep.subr.mxu0 0.0
      %8817 = vmatpush1.msra.mxu0 0.0
      %8818 = vmatprep.subr.mxu0 0.0
      %8819 = vmatpush1.msra.mxu0 0.0
      %8820 = vmatprep.subr.mxu0 0.0
      %8821 = vmatpush1.msra.mxu0 0.0
      %8822 = vmatprep.subr.mxu0 0.0
      %8823 = vmatpush1.msra.mxu0 0.0
      %8824 = vmatprep.subr.mxu0 0.0
      %8825 = vmatpush1.msra.mxu0 0.0
      %8826 = vmatprep.subr.mxu0 0.0
      %8827 = vmatpush1.msra.mxu0 0.0
      %8828 = vmatprep.subr.mxu0 0.0
      %8829 = vmatpush1.msra.mxu0 0.0
      %8830 = vmatprep.subr.mxu0 0.0
      %8831 = vmatpush1.msra.mxu0 0.0
      %8832 = vmatprep.subr.mxu0 0.0
      %8833 = vmatpush1.msra.mxu0 0.0
      %8834 = vmatprep.subr.mxu0 0.0
      %8835 = vmatpush1.msra.mxu0 0.0
      %8836 = vmatprep.subr.mxu0 0.0
      %8837 = vmatpush1.msra.mxu0 0.0
      %8838 = vmatprep.subr.mxu0 0.0
      %8839 = vmatpush1.msra.mxu0 0.0
      %8840 = vmatprep.subr.mxu0 0.0
      %8841 = vmatpush1.msra.mxu0 0.0
      %8842 = vmatprep.subr.mxu0 0.0
      %8843 = vmatpush1.msra.mxu0 0.0
      %8844 = vmatprep.subr.mxu0 0.0
      %8845 = vmatpush1.msra.mxu0 0.0
      %8846 = vmatprep.subr.mxu0 0.0
      %8847 = vmatpush1.msra.mxu0 0.0
      %8848 = vmatprep.subr.mxu0 0.0
      %8849 = vmatpush1.msra.mxu0 0.0
      %8850 = vmatprep.subr.mxu0 0.0
      %8851 = vmatpush1.msra.mxu0 0.0
      %8852 = vmatprep.subr.mxu0 0.0
      %8853 = vmatpush1.msra.mxu0 0.0
      %8854 = vmatprep.subr.mxu0 0.0
      %8855 = vmatpush1.msra.mxu0 0.0
      %8856 = vmatprep.subr.mxu0 0.0
      %8857 = vmatpush1.msra.mxu0 0.0
      %8858 = vmatprep.subr.mxu0 0.0
      %8859 = vmatpush1.msra.mxu0 0.0
      %8860 = vmatprep.subr.mxu0 0.0
      %8861 = vmatpush1.msra.mxu0 0.0
      %8862 = vmatprep.mubr.f32.mxu0 0.0
      %8863 = vmatmul.mubr.f32.gmra.mrb[0].mxu0 %v8520
      %v8864 = vpop.f32.mrb[0].mxu0
      %v8865 = vadd.f32 %v8776, %v8864
      %v8866 = vpop.f32.mrb[0].mxu0
      %v8867 = vadd.f32 %v8778, %v8866
      %8868 = vmatprep.mubr.f32.mxu0 0.0
      %8869 = vmatmul.mubr.f32.gmra.mrb[0].mxu0 %v8523
      %v8870 = vpop.f32.mrb[0].mxu0
      %v8871 = vadd.f32 %v8782, %v8870
      %v8872 = vpop.f32.mrb[0].mxu0
      %v8873 = vadd.f32 %v8784, %v8872
      %8874 = vmatprep.mubr.f32.mxu0 0.0
      %8875 = vmatmul.mubr.f32.gmra.mrb[0].mxu0 %v8526
      %v8876 = vpop.f32.mrb[0].mxu0
      %v8877 = vadd.f32 %v8788, %v8876
      %v8878 = vpop.f32.mrb[0].mxu0
      %v8879 = vadd.f32 %v8790, %v8878
      %8880 = vmatprep.mubr.f32.mxu0 0.0
      %8881 = vmatmul.mubr.f32.gmra.mrb[0].mxu0 %v8529
      %v8882 = vpop.f32.mrb[0].mxu0
      %v8883 = vadd.f32 %v8794, %v8882
      %v8884 = vpop.f32.mrb[0].mxu0
      %v8885 = vadd.f32 %v8796, %v8884
      %8886 = vdwg.mxu0
      %8887 = vmatprep.subr.mxu0 %v7436
      %8888 = vmatpush1.msra.mxu0 %v7435
      %8889 = vmatprep.subr.mxu0 %v7444
      %8890 = vmatpush1.msra.mxu0 %v7443
      %8891 = vmatprep.subr.mxu0 %v7452
      %8892 = vmatpush1.msra.mxu0 %v7451
      %8893 = vmatprep.subr.mxu0 %v7460
      %8894 = vmatpush1.msra.mxu0 %v7459
      %8895 = vmatprep.subr.mxu0 %v7531
      %8896 = vmatpush1.msra.mxu0 %v7530
      %8897 = vmatprep.subr.mxu0 %v7538
      %8898 = vmatpush1.msra.mxu0 %v7537
      %8899 = vmatprep.subr.mxu0 %v7545
      %8900 = vmatpush1.msra.mxu0 %v7544
      %8901 = vmatprep.subr.mxu0 %v7552
      %8902 = vmatpush1.msra.mxu0 %v7551
      %8903 = vmatprep.subr.mxu0 %v7724
      %8904 = vmatpush1.msra.mxu0 %v7723
      %8905 = vmatprep.subr.mxu0 %v7732
      %8906 = vmatpush1.msra.mxu0 %v7731
      %8907 = vmatprep.subr.mxu0 %v7740
      %8908 = vmatpush1.msra.mxu0 %v7739
      %8909 = vmatprep.subr.mxu0 %v7748
      %8910 = vmatpush1.msra.mxu0 %v7747
      %8911 = vmatprep.subr.mxu0 %v7884
      %8912 = vmatpush1.msra.mxu0 %v7883
      %8913 = vmatprep.subr.mxu0 %v7892
      %8914 = vmatpush1.msra.mxu0 %v7891
      %8915 = vmatprep.subr.mxu0 %v7900
      %8916 = vmatpush1.msra.mxu0 %v7899
      %8917 = vmatprep.subr.mxu0 %v7908
      %8918 = vmatpush1.msra.mxu0 %v7907
      %8919 = vmatprep.subr.mxu0 %v7232
      %8920 = vmatpush1.msra.mxu0 %v7231
      %8921 = vmatprep.subr.mxu0 %v7240
      %8922 = vmatpush1.msra.mxu0 %v7239
      %8923 = vmatprep.subr.mxu0 %v7248
      %8924 = vmatpush1.msra.mxu0 %v7247
      %8925 = vmatprep.subr.mxu0 %v7256
      %8926 = vmatpush1.msra.mxu0 %v7255
      %8927 = vmatprep.subr.mxu0 %v8044
      %8928 = vmatpush1.msra.mxu0 %v8043
      %8929 = vmatprep.subr.mxu0 %v8052
      %8930 = vmatpush1.msra.mxu0 %v8051
      %8931 = vmatprep.subr.mxu0 %v8060
      %8932 = vmatpush1.msra.mxu0 %v8059
      %8933 = vmatprep.subr.mxu0 %v8068
      %8934 = vmatpush1.msra.mxu0 %v8067
      %8935 = vmatprep.subr.mxu0 %v8204
      %8936 = vmatpush1.msra.mxu0 %v8203
      %8937 = vmatprep.subr.mxu0 %v8212
      %8938 = vmatpush1.msra.mxu0 %v8211
      %8939 = vmatprep.subr.mxu0 %v8220
      %8940 = vmatpush1.msra.mxu0 %v8219
      %8941 = vmatprep.subr.mxu0 %v8228
      %8942 = vmatpush1.msra.mxu0 %v8227
      %8943 = vmatprep.subr.mxu0 %v8300
      %8944 = vmatpush1.msra.mxu0 %v8299
      %8945 = vmatprep.subr.mxu0 %v8307
      %8946 = vmatpush1.msra.mxu0 %v8306
      %8947 = vmatprep.subr.mxu0 %v8314
      %8948 = vmatpush1.msra.mxu0 %v8313
      %8949 = vmatprep.subr.mxu0 %v8321
      %8950 = vmatpush1.msra.mxu0 %v8320
      %8951 = vmatprep.mubr.f32.mxu0 %v7260
      %8952 = vmatmul.mubr.f32.gmra.mrb[0].mxu0 %v7259
      %v8953 = vpop.f32.mrb[0].mxu0
      %v8954 = vadd.f32 0.0, %v8953
      %v8955 = vpop.f32.mrb[0].mxu0
      %v8956 = vadd.f32 0.0, %v8955
      %8957 = vmatprep.mubr.f32.mxu0 %v7263
      %8958 = vmatmul.mubr.f32.gmra.mrb[0].mxu0 %v7262
      %v8959 = vpop.f32.mrb[0].mxu0
      %v8960 = vadd.f32 0.0, %v8959
      %v8961 = vpop.f32.mrb[0].mxu0
      %v8962 = vadd.f32 0.0, %v8961
      %8963 = vmatprep.mubr.f32.mxu0 %v7266
      %8964 = vmatmul.mubr.f32.gmra.mrb[0].mxu0 %v7265
      %v8965 = vpop.f32.mrb[0].mxu0
      %v8966 = vadd.f32 0.0, %v8965
      %v8967 = vpop.f32.mrb[0].mxu0
      %v8968 = vadd.f32 0.0, %v8967
      %8969 = vmatprep.mubr.f32.mxu0 %v7269
      %8970 = vmatmul.mubr.f32.gmra.mrb[0].mxu0 %v7268
      %v8971 = vpop.f32.mrb[0].mxu0
      %v8972 = vadd.f32 0.0, %v8971
      %v8973 = vpop.f32.mrb[0].mxu0
      %v8974 = vadd.f32 0.0, %v8973
      %8975 = vdwg.mxu0
      %8976 = vmatprep.subr.mxu0 %v8492
      %8977 = vmatpush1.msra.mxu0 %v8491
      %8978 = vmatprep.subr.mxu0 %v8500
      %8979 = vmatpush1.msra.mxu0 %v8499
      %8980 = vmatprep.subr.mxu0 %v8508
      %8981 = vmatpush1.msra.mxu0 %v8507
      %8982 = vmatprep.subr.mxu0 %v8516
      %8983 = vmatpush1.msra.mxu0 %v8515
      %8984 = vmatprep.subr.mxu0 0.0
      %8985 = vmatpush1.msra.mxu0 0.0
      %8986 = vmatprep.subr.mxu0 0.0
      %8987 = vmatpush1.msra.mxu0 0.0
      %8988 = vmatprep.subr.mxu0 0.0
      %8989 = vmatpush1.msra.mxu0 0.0
      %8990 = vmatprep.subr.mxu0 0.0
      %8991 = vmatpush1.msra.mxu0 0.0
      %8992 = vmatprep.subr.mxu0 0.0
      %8993 = vmatpush1.msra.mxu0 0.0
      %8994 = vmatprep.subr.mxu0 0.0
      %8995 = vmatpush1.msra.mxu0 0.0
      %8996 = vmatprep.subr.mxu0 0.0
      %8997 = vmatpush1.msra.mxu0 0.0
      %8998 = vmatprep.subr.mxu0 0.0
      %8999 = vmatpush1.msra.mxu0 0.0
      %9000 = vmatprep.subr.mxu0 0.0
      %9001 = vmatpush1.msra.mxu0 0.0
      %9002 = vmatprep.subr.mxu0 0.0
      %9003 = vmatpush1.msra.mxu0 0.0
      %9004 = vmatprep.subr.mxu0 0.0
      %9005 = vmatpush1.msra.mxu0 0.0
      %9006 = vmatprep.subr.mxu0 0.0
      %9007 = vmatpush1.msra.mxu0 0.0
      %9008 = vmatprep.subr.mxu0 0.0
      %9009 = vmatpush1.msra.mxu0 0.0
      %9010 = vmatprep.subr.mxu0 0.0
      %9011 = vmatpush1.msra.mxu0 0.0
      %9012 = vmatprep.subr.mxu0 0.0
      %9013 = vmatpush1.msra.mxu0 0.0
      %9014 = vmatprep.subr.mxu0 0.0
      %9015 = vmatpush1.msra.mxu0 0.0
      %9016 = vmatprep.subr.mxu0 0.0
      %9017 = vmatpush1.msra.mxu0 0.0
      %9018 = vmatprep.subr.mxu0 0.0
      %9019 = vmatpush1.msra.mxu0 0.0
      %9020 = vmatprep.subr.mxu0 0.0
      %9021 = vmatpush1.msra.mxu0 0.0
      %9022 = vmatprep.subr.mxu0 0.0
      %9023 = vmatpush1.msra.mxu0 0.0
      %9024 = vmatprep.subr.mxu0 0.0
      %9025 = vmatpush1.msra.mxu0 0.0
      %9026 = vmatprep.subr.mxu0 0.0
      %9027 = vmatpush1.msra.mxu0 0.0
      %9028 = vmatprep.subr.mxu0 0.0
      %9029 = vmatpush1.msra.mxu0 0.0
      %9030 = vmatprep.subr.mxu0 0.0
      %9031 = vmatpush1.msra.mxu0 0.0
      %9032 = vmatprep.subr.mxu0 0.0
      %9033 = vmatpush1.msra.mxu0 0.0
      %9034 = vmatprep.subr.mxu0 0.0
      %9035 = vmatpush1.msra.mxu0 0.0
      %9036 = vmatprep.subr.mxu0 0.0
      %9037 = vmatpush1.msra.mxu0 0.0
      %9038 = vmatprep.subr.mxu0 0.0
      %9039 = vmatpush1.msra.mxu0 0.0
      %9040 = vmatprep.mubr.f32.mxu0 0.0
      %9041 = vmatmul.mubr.f32.gmra.mrb[0].mxu0 %v8520
      %v9042 = vpop.f32.mrb[0].mxu0
      %v9043 = vadd.f32 %v8954, %v9042
      %v9044 = vpop.f32.mrb[0].mxu0
      %v9045 = vadd.f32 %v8956, %v9044
      %9046 = vmatprep.mubr.f32.mxu0 0.0
      %9047 = vmatmul.mubr.f32.gmra.mrb[0].mxu0 %v8523
      %v9048 = vpop.f32.mrb[0].mxu0
      %v9049 = vadd.f32 %v8960, %v9048
      %v9050 = vpop.f32.mrb[0].mxu0
      %v9051 = vadd.f32 %v8962, %v9050
      %9052 = vmatprep.mubr.f32.mxu0 0.0
      %9053 = vmatmul.mubr.f32.gmra.mrb[0].mxu0 %v8526
      %v9054 = vpop.f32.mrb[0].mxu0
      %v9055 = vadd.f32 %v8966, %v9054
      %v9056 = vpop.f32.mrb[0].mxu0
      %v9057 = vadd.f32 %v8968, %v9056
      %9058 = vmatprep.mubr.f32.mxu0 0.0
      %9059 = vmatmul.mubr.f32.gmra.mrb[0].mxu0 %v8529
      %v9060 = vpop.f32.mrb[0].mxu0
      %v9061 = vadd.f32 %v8972, %v9060
      %v9062 = vpop.f32.mrb[0].mxu0
      %v9063 = vadd.f32 %v8974, %v9062
      %9064 = vdwg.mxu0
      %9065 = vmatprep.subr.mxu0 %v7438
      %9066 = vmatpush1.msra.mxu0 %v7437
      %9067 = vmatprep.subr.mxu0 %v7446
      %9068 = vmatpush1.msra.mxu0 %v7445
      %9069 = vmatprep.subr.mxu0 %v7454
      %9070 = vmatpush1.msra.mxu0 %v7453
      %9071 = vmatprep.subr.mxu0 %v7462
      %9072 = vmatpush1.msra.mxu0 %v7461
      %9073 = vmatprep.subr.mxu0 %v7533
      %9074 = vmatpush1.msra.mxu0 %v7532
      %9075 = vmatprep.subr.mxu0 %v7540
      %9076 = vmatpush1.msra.mxu0 %v7539
      %9077 = vmatprep.subr.mxu0 %v7547
      %9078 = vmatpush1.msra.mxu0 %v7546
      %9079 = vmatprep.subr.mxu0 %v7554
      %9080 = vmatpush1.msra.mxu0 %v7553
      %9081 = vmatprep.subr.mxu0 %v7726
      %9082 = vmatpush1.msra.mxu0 %v7725
      %9083 = vmatprep.subr.mxu0 %v7734
      %9084 = vmatpush1.msra.mxu0 %v7733
      %9085 = vmatprep.subr.mxu0 %v7742
      %9086 = vmatpush1.msra.mxu0 %v7741
      %9087 = vmatprep.subr.mxu0 %v7750
      %9088 = vmatpush1.msra.mxu0 %v7749
      %9089 = vmatprep.subr.mxu0 %v7886
      %9090 = vmatpush1.msra.mxu0 %v7885
      %9091 = vmatprep.subr.mxu0 %v7894
      %9092 = vmatpush1.msra.mxu0 %v7893
      %9093 = vmatprep.subr.mxu0 %v7902
      %9094 = vmatpush1.msra.mxu0 %v7901
      %9095 = vmatprep.subr.mxu0 %v7910
      %9096 = vmatpush1.msra.mxu0 %v7909
      %9097 = vmatprep.subr.mxu0 %v7234
      %9098 = vmatpush1.msra.mxu0 %v7233
      %9099 = vmatprep.subr.mxu0 %v7242
      %9100 = vmatpush1.msra.mxu0 %v7241
      %9101 = vmatprep.subr.mxu0 %v7250
      %9102 = vmatpush1.msra.mxu0 %v7249
      %9103 = vmatprep.subr.mxu0 %v7258
      %9104 = vmatpush1.msra.mxu0 %v7257
      %9105 = vmatprep.subr.mxu0 %v8046
      %9106 = vmatpush1.msra.mxu0 %v8045
      %9107 = vmatprep.subr.mxu0 %v8054
      %9108 = vmatpush1.msra.mxu0 %v8053
      %9109 = vmatprep.subr.mxu0 %v8062
      %9110 = vmatpush1.msra.mxu0 %v8061
      %9111 = vmatprep.subr.mxu0 %v8070
      %9112 = vmatpush1.msra.mxu0 %v8069
      %9113 = vmatprep.subr.mxu0 %v8206
      %9114 = vmatpush1.msra.mxu0 %v8205
      %9115 = vmatprep.subr.mxu0 %v8214
      %9116 = vmatpush1.msra.mxu0 %v8213
      %9117 = vmatprep.subr.mxu0 %v8222
      %9118 = vmatpush1.msra.mxu0 %v8221
      %9119 = vmatprep.subr.mxu0 %v8230
      %9120 = vmatpush1.msra.mxu0 %v8229
      %9121 = vmatprep.subr.mxu0 %v8355
      %9122 = vmatpush1.msra.mxu0 %v8301
      %9123 = vmatprep.subr.mxu0 %v8356
      %9124 = vmatpush1.msra.mxu0 %v8308
      %9125 = vmatprep.subr.mxu0 %v8357
      %9126 = vmatpush1.msra.mxu0 %v8315
      %9127 = vmatprep.subr.mxu0 %v8358
      %9128 = vmatpush1.msra.mxu0 %v8322
      %9129 = vmatprep.mubr.f32.mxu0 %v7260
      %9130 = vmatmul.mubr.f32.gmra.mrb[0].mxu0 %v7259
      %v9131 = vpop.f32.mrb[0].mxu0
      %v9132 = vadd.f32 0.0, %v9131
      %v9133 = vpop.f32.mrb[0].mxu0
      %v9134 = vadd.f32 0.0, %v9133
      %9135 = vmatprep.mubr.f32.mxu0 %v7263
      %9136 = vmatmul.mubr.f32.gmra.mrb[0].mxu0 %v7262
      %v9137 = vpop.f32.mrb[0].mxu0
      %v9138 = vadd.f32 0.0, %v9137
      %v9139 = vpop.f32.mrb[0].mxu0
      %v9140 = vadd.f32 0.0, %v9139
      %9141 = vmatprep.mubr.f32.mxu0 %v7266
      %9142 = vmatmul.mubr.f32.gmra.mrb[0].mxu0 %v7265
      %v9143 = vpop.f32.mrb[0].mxu0
      %v9144 = vadd.f32 0.0, %v9143
      %v9145 = vpop.f32.mrb[0].mxu0
      %v9146 = vadd.f32 0.0, %v9145
      %9147 = vmatprep.mubr.f32.mxu0 %v7269
      %9148 = vmatmul.mubr.f32.gmra.mrb[0].mxu0 %v7268
      %v9149 = vpop.f32.mrb[0].mxu0
      %v9150 = vadd.f32 0.0, %v9149
      %v9151 = vpop.f32.mrb[0].mxu0
      %v9152 = vadd.f32 0.0, %v9151
      %9153 = vdwg.mxu0
      %9154 = vmatprep.subr.mxu0 %v8494
      %9155 = vmatpush1.msra.mxu0 %v8493
      %9156 = vmatprep.subr.mxu0 %v8502
      %9157 = vmatpush1.msra.mxu0 %v8501
      %9158 = vmatprep.subr.mxu0 %v8510
      %9159 = vmatpush1.msra.mxu0 %v8509
      %9160 = vmatprep.subr.mxu0 %v8518
      %9161 = vmatpush1.msra.mxu0 %v8517
      %9162 = vmatprep.subr.mxu0 0.0
      %9163 = vmatpush1.msra.mxu0 0.0
      %9164 = vmatprep.subr.mxu0 0.0
      %9165 = vmatpush1.msra.mxu0 0.0
      %9166 = vmatprep.subr.mxu0 0.0
      %9167 = vmatpush1.msra.mxu0 0.0
      %9168 = vmatprep.subr.mxu0 0.0
      %9169 = vmatpush1.msra.mxu0 0.0
      %9170 = vmatprep.subr.mxu0 0.0
      %9171 = vmatpush1.msra.mxu0 0.0
      %9172 = vmatprep.subr.mxu0 0.0
      %9173 = vmatpush1.msra.mxu0 0.0
      %9174 = vmatprep.subr.mxu0 0.0
      %9175 = vmatpush1.msra.mxu0 0.0
      %9176 = vmatprep.subr.mxu0 0.0
      %9177 = vmatpush1.msra.mxu0 0.0
      %9178 = vmatprep.subr.mxu0 0.0
      %9179 = vmatpush1.msra.mxu0 0.0
      %9180 = vmatprep.subr.mxu0 0.0
      %9181 = vmatpush1.msra.mxu0 0.0
      %9182 = vmatprep.subr.mxu0 0.0
      %9183 = vmatpush1.msra.mxu0 0.0
      %9184 = vmatprep.subr.mxu0 0.0
      %9185 = vmatpush1.msra.mxu0 0.0
      %9186 = vmatprep.subr.mxu0 0.0
      %9187 = vmatpush1.msra.mxu0 0.0
      %9188 = vmatprep.subr.mxu0 0.0
      %9189 = vmatpush1.msra.mxu0 0.0
      %9190 = vmatprep.subr.mxu0 0.0
      %9191 = vmatpush1.msra.mxu0 0.0
      %9192 = vmatprep.subr.mxu0 0.0
      %9193 = vmatpush1.msra.mxu0 0.0
      %9194 = vmatprep.subr.mxu0 0.0
      %9195 = vmatpush1.msra.mxu0 0.0
      %9196 = vmatprep.subr.mxu0 0.0
      %9197 = vmatpush1.msra.mxu0 0.0
      %9198 = vmatprep.subr.mxu0 0.0
      %9199 = vmatpush1.msra.mxu0 0.0
      %9200 = vmatprep.subr.mxu0 0.0
      %9201 = vmatpush1.msra.mxu0 0.0
      %9202 = vmatprep.subr.mxu0 0.0
      %9203 = vmatpush1.msra.mxu0 0.0
      %9204 = vmatprep.subr.mxu0 0.0
      %9205 = vmatpush1.msra.mxu0 0.0
      %9206 = vmatprep.subr.mxu0 0.0
      %9207 = vmatpush1.msra.mxu0 0.0
      %9208 = vmatprep.subr.mxu0 0.0
      %9209 = vmatpush1.msra.mxu0 0.0
      %9210 = vmatprep.subr.mxu0 0.0
      %9211 = vmatpush1.msra.mxu0 0.0
      %9212 = vmatprep.subr.mxu0 0.0
      %9213 = vmatpush1.msra.mxu0 0.0
      %9214 = vmatprep.subr.mxu0 0.0
      %9215 = vmatpush1.msra.mxu0 0.0
      %9216 = vmatprep.subr.mxu0 0.0
      %9217 = vmatpush1.msra.mxu0 0.0
      %9218 = vmatprep.mubr.f32.mxu0 0.0
      %9219 = vmatmul.mubr.f32.gmra.mrb[0].mxu0 %v8520
      %v9220 = vpop.f32.mrb[0].mxu0
      %v9221 = vadd.f32 %v9132, %v9220
      %v9222 = vpop.f32.mrb[0].mxu0
      %v9223 = vadd.f32 %v9134, %v9222
      %9224 = vmatprep.mubr.f32.mxu0 0.0
      %9225 = vmatmul.mubr.f32.gmra.mrb[0].mxu0 %v8523
      %v9226 = vpop.f32.mrb[0].mxu0
      %v9227 = vadd.f32 %v9138, %v9226
      %v9228 = vpop.f32.mrb[0].mxu0
      %v9229 = vadd.f32 %v9140, %v9228
      %9230 = vmatprep.mubr.f32.mxu0 0.0
      %9231 = vmatmul.mubr.f32.gmra.mrb[0].mxu0 %v8526
      %v9232 = vpop.f32.mrb[0].mxu0
      %v9233 = vadd.f32 %v9144, %v9232
      %v9234 = vpop.f32.mrb[0].mxu0
      %v9235 = vadd.f32 %v9146, %v9234
      %9236 = vmatprep.mubr.f32.mxu0 0.0
      %9237 = vmatmul.mubr.f32.gmra.mrb[0].mxu0 %v8529
      %v9238 = vpop.f32.mrb[0].mxu0
      %v9239 = vadd.f32 %v9150, %v9238
      %v9240 = vpop.f32.mrb[0].mxu0
      %v9241 = vadd.f32 %v9152, %v9240
      %9242 = vdwg.mxu0
      %v9243 = vmax.f32 %v8687, 0.0
      %v9244 = vmax.f32 %v8689, 0.0
      %v9245 = vmax.f32 %v8865, 0.0
      %v9246 = vmax.f32 %v8867, 0.0
      %v9247 = vmax.f32 %v9043, 0.0
      %v9248 = vmax.f32 %v9045, 0.0
      %v9249 = vmax.f32 %v9221, 0.0
      %v9250 = vmax.f32 %v9223, 0.0
      %v9251 = vmax.f32 %v8693, 0.0
      %v9252 = vmax.f32 %v8695, 0.0
      %v9253 = vmax.f32 %v8871, 0.0
      %v9254 = vmax.f32 %v8873, 0.0
      %v9255 = vmax.f32 %v9049, 0.0
      %v9256 = vmax.f32 %v9051, 0.0
      %v9257 = vmax.f32 %v9227, 0.0
      %v9258 = vmax.f32 %v9229, 0.0
      %v9259 = vmax.f32 %v8699, 0.0
      %v9260 = vmax.f32 %v8701, 0.0
      %v9261 = vmax.f32 %v8877, 0.0
      %v9262 = vmax.f32 %v8879, 0.0
      %v9263 = vmax.f32 %v9055, 0.0
      %v9264 = vmax.f32 %v9057, 0.0
      %v9265 = vmax.f32 %v9233, 0.0
      %v9266 = vmax.f32 %v9235, 0.0
      %v9267 = vmax.f32 %v8705, 0.0
      %v9268 = vmax.f32 %v8707, 0.0
      %v9269 = vmax.f32 %v8883, 0.0
      %v9270 = vmax.f32 %v8885, 0.0
      %v9271 = vmax.f32 %v9061, 0.0
      %v9272 = vmax.f32 %v9063, 0.0
      %v9273 = vmax.f32 %v9239, 0.0
      %v9274 = vmax.f32 %v9241, 0.0
      %v9275 = vld [vmem:[%s7] sm:$0xff]
      %v9276 = vld [vmem:[%s7 + $0x8] sm:$0xf]
      %v9277 = vld [vmem:[%s8] sm:$0xf]
      %9310 = vrot.lane.b32.xlu0 %v9243, 33
      %v9311 = vpop.permute.xlu0 %9310
      %9312 = vrot.lane.b32.xlu0 %v9244, 33
      %v9313 = vpop.permute.xlu0 %9312
      %9314 = vrot.lane.b32.xlu0 %v9245, 33
      %v9315 = vpop.permute.xlu0 %9314
      %9316 = vrot.lane.b32.xlu0 %v9246, 33
      %v9317 = vpop.permute.xlu0 %9316
      %9318 = vrot.lane.b32.xlu0 %v9247, 33
      %v9319 = vpop.permute.xlu0 %9318
      %9320 = vrot.lane.b32.xlu0 %v9248, 33
      %v9321 = vpop.permute.xlu0 %9320
      %9322 = vrot.lane.b32.xlu0 %v9249, 33
      %v9323 = vpop.permute.xlu0 %9322
      %9324 = vrot.lane.b32.xlu0 %v9250, 33
      %v9325 = vpop.permute.xlu0 %9324
      %9326 = vrot.lane.b32.xlu0 %v9251, 33
      %v9327 = vpop.permute.xlu0 %9326
      %9328 = vrot.lane.b32.xlu0 %v9252, 33
      %v9329 = vpop.permute.xlu0 %9328
      %9330 = vrot.lane.b32.xlu0 %v9253, 33
      %v9331 = vpop.permute.xlu0 %9330
      %9332 = vrot.lane.b32.xlu0 %v9254, 33
      %v9333 = vpop.permute.xlu0 %9332
      %9334 = vrot.lane.b32.xlu0 %v9255, 33
      %v9335 = vpop.permute.xlu0 %9334
      %9336 = vrot.lane.b32.xlu0 %v9256, 33
      %v9337 = vpop.permute.xlu0 %9336
      %9338 = vrot.lane.b32.xlu0 %v9257, 33
      %v9339 = vpop.permute.xlu0 %9338
      %9340 = vrot.lane.b32.xlu0 %v9258, 33
      %v9341 = vpop.permute.xlu0 %9340
      %9342 = vrot.lane.b32.xlu0 %v9259, 33
      %v9343 = vpop.permute.xlu0 %9342
      %9344 = vrot.lane.b32.xlu0 %v9260, 33
      %v9345 = vpop.permute.xlu0 %9344
      %9346 = vrot.lane.b32.xlu0 %v9261, 33
      %v9347 = vpop.permute.xlu0 %9346
      %9348 = vrot.lane.b32.xlu0 %v9262, 33
      %v9349 = vpop.permute.xlu0 %9348
      %9350 = vrot.lane.b32.xlu0 %v9263, 33
      %v9351 = vpop.permute.xlu0 %9350
      %9352 = vrot.lane.b32.xlu0 %v9264, 33
      %v9353 = vpop.permute.xlu0 %9352
      %9354 = vrot.lane.b32.xlu0 %v9265, 33
      %v9355 = vpop.permute.xlu0 %9354
      %9356 = vrot.lane.b32.xlu0 %v9266, 33
      %v9357 = vpop.permute.xlu0 %9356
      %9358 = vrot.lane.b32.xlu0 %v9267, 33
      %v9359 = vpop.permute.xlu0 %9358
      %9360 = vrot.lane.b32.xlu0 %v9268, 33
      %v9361 = vpop.permute.xlu0 %9360
      %9362 = vrot.lane.b32.xlu0 %v9269, 33
      %v9363 = vpop.permute.xlu0 %9362
      %9364 = vrot.lane.b32.xlu0 %v9270, 33
      %v9365 = vpop.permute.xlu0 %9364
      %9366 = vrot.lane.b32.xlu0 %v9271, 33
      %v9367 = vpop.permute.xlu0 %9366
      %9368 = vrot.lane.b32.xlu0 %v9272, 33
      %v9369 = vpop.permute.xlu0 %9368
      %9370 = vrot.lane.b32.xlu0 %v9273, 33
      %v9371 = vpop.permute.xlu0 %9370
      %9372 = vrot.lane.b32.xlu0 %v9274, 33
      %v9373 = vpop.permute.xlu0 %9372
      %v9374 = vsel %vm494, %v9311, %v9313
      %v9375 = vsel %vm494, %v9313, %v9315
      %v9376 = vsel %vm494, %v9315, %v9317
      %v9377 = vsel %vm494, %v9317, %v9319
      %v9378 = vsel %vm494, %v9319, %v9321
      %v9379 = vsel %vm494, %v9321, %v9323
      %v9380 = vsel %vm494, %v9323, %v9325
      %v9381 = vsel %vm494, %v9327, %v9329
      %v9382 = vsel %vm494, %v9329, %v9331
      %v9383 = vsel %vm494, %v9331, %v9333
      %v9384 = vsel %vm494, %v9333, %v9335
      %v9385 = vsel %vm494, %v9335, %v9337
      %v9386 = vsel %vm494, %v9337, %v9339
      %v9387 = vsel %vm494, %v9339, %v9341
      %v9388 = vsel %vm494, %v9343, %v9345
      %v9389 = vsel %vm494, %v9345, %v9347
      %v9390 = vsel %vm494, %v9347, %v9349
      %v9391 = vsel %vm494, %v9349, %v9351
      %v9392 = vsel %vm494, %v9351, %v9353
      %v9393 = vsel %vm494, %v9353, %v9355
      %v9394 = vsel %vm494, %v9355, %v9357
      %v9395 = vsel %vm494, %v9359, %v9361
      %v9396 = vsel %vm494, %v9361, %v9363
      %v9397 = vsel %vm494, %v9363, %v9365
      %v9398 = vsel %vm494, %v9365, %v9367
      %v9399 = vsel %vm494, %v9367, %v9369
      %v9400 = vsel %vm494, %v9369, %v9371
      %v9401 = vsel %vm494, %v9371, %v9373
      %v9434 = vsel %vm494, 0.0, %v9311
      %v9435 = vsel %vm494, 0.0, %v9327
      %v9436 = vsel %vm494, 0.0, %v9343
      %v9437 = vsel %vm494, 0.0, %v9359
      %v9438 = vsel %vm519, %v9434, 0.0
      %v9439 = vsel %vm520, %v9374, 0.0
      %v9440 = vsel %vm521, %v9375, 0.0
      %v9441 = vsel %vm522, %v9376, 0.0
      %v9442 = vsel %vm523, %v9377, 0.0
      %v9443 = vsel %vm524, %v9378, 0.0
      %v9444 = vsel %vm525, %v9379, 0.0
      %v9445 = vsel %vm526, %v9380, 0.0
      %v9446 = vsel %vm519, %v9435, 0.0
      %v9447 = vsel %vm520, %v9381, 0.0
      %v9448 = vsel %vm521, %v9382, 0.0
      %v9449 = vsel %vm522, %v9383, 0.0
      %v9450 = vsel %vm523, %v9384, 0.0
      %v9451 = vsel %vm524, %v9385, 0.0
      %v9452 = vsel %vm525, %v9386, 0.0
      %v9453 = vsel %vm526, %v9387, 0.0
      %v9454 = vsel %vm519, %v9436, 0.0
      %v9455 = vsel %vm520, %v9388, 0.0
      %v9456 = vsel %vm521, %v9389, 0.0
      %v9457 = vsel %vm522, %v9390, 0.0
      %v9458 = vsel %vm523, %v9391, 0.0
      %v9459 = vsel %vm524, %v9392, 0.0
      %v9460 = vsel %vm525, %v9393, 0.0
      %v9461 = vsel %vm526, %v9394, 0.0
      %v9462 = vsel %vm519, %v9437, 0.0
      %v9463 = vsel %vm520, %v9395, 0.0
      %v9464 = vsel %vm521, %v9396, 0.0
      %v9465 = vsel %vm522, %v9397, 0.0
      %v9466 = vsel %vm523, %v9398, 0.0
      %v9467 = vsel %vm524, %v9399, 0.0
      %v9468 = vsel %vm525, %v9400, 0.0
      %v9469 = vsel %vm526, %v9401, 0.0
      %9470 = vrot.lane.b32.xlu0 %v9243, 32
      %v9471 = vpop.permute.xlu0 %9470
      %9472 = vrot.lane.b32.xlu0 %v9244, 32
      %v9473 = vpop.permute.xlu0 %9472
      %9474 = vrot.lane.b32.xlu0 %v9245, 32
      %v9475 = vpop.permute.xlu0 %9474
      %9476 = vrot.lane.b32.xlu0 %v9246, 32
      %v9477 = vpop.permute.xlu0 %9476
      %9478 = vrot.lane.b32.xlu0 %v9247, 32
      %v9479 = vpop.permute.xlu0 %9478
      %9480 = vrot.lane.b32.xlu0 %v9248, 32
      %v9481 = vpop.permute.xlu0 %9480
      %9482 = vrot.lane.b32.xlu0 %v9249, 32
      %v9483 = vpop.permute.xlu0 %9482
      %9484 = vrot.lane.b32.xlu0 %v9250, 32
      %v9485 = vpop.permute.xlu0 %9484
      %9486 = vrot.lane.b32.xlu0 %v9251, 32
      %v9487 = vpop.permute.xlu0 %9486
      %9488 = vrot.lane.b32.xlu0 %v9252, 32
      %v9489 = vpop.permute.xlu0 %9488
      %9490 = vrot.lane.b32.xlu0 %v9253, 32
      %v9491 = vpop.permute.xlu0 %9490
      %9492 = vrot.lane.b32.xlu0 %v9254, 32
      %v9493 = vpop.permute.xlu0 %9492
      %9494 = vrot.lane.b32.xlu0 %v9255, 32
      %v9495 = vpop.permute.xlu0 %9494
      %9496 = vrot.lane.b32.xlu0 %v9256, 32
      %v9497 = vpop.permute.xlu0 %9496
      %9498 = vrot.lane.b32.xlu0 %v9257, 32
      %v9499 = vpop.permute.xlu0 %9498
      %9500 = vrot.lane.b32.xlu0 %v9258, 32
      %v9501 = vpop.permute.xlu0 %9500
      %9502 = vrot.lane.b32.xlu0 %v9259, 32
      %v9503 = vpop.permute.xlu0 %9502
      %9504 = vrot.lane.b32.xlu0 %v9260, 32
      %v9505 = vpop.permute.xlu0 %9504
      %9506 = vrot.lane.b32.xlu0 %v9261, 32
      %v9507 = vpop.permute.xlu0 %9506
      %9508 = vrot.lane.b32.xlu0 %v9262, 32
      %v9509 = vpop.permute.xlu0 %9508
      %9510 = vrot.lane.b32.xlu0 %v9263, 32
      %v9511 = vpop.permute.xlu0 %9510
      %9512 = vrot.lane.b32.xlu0 %v9264, 32
      %v9513 = vpop.permute.xlu0 %9512
      %9514 = vrot.lane.b32.xlu0 %v9265, 32
      %v9515 = vpop.permute.xlu0 %9514
      %9516 = vrot.lane.b32.xlu0 %v9266, 32
      %v9517 = vpop.permute.xlu0 %9516
      %9518 = vrot.lane.b32.xlu0 %v9267, 32
      %v9519 = vpop.permute.xlu0 %9518
      %9520 = vrot.lane.b32.xlu0 %v9268, 32
      %v9521 = vpop.permute.xlu0 %9520
      %9522 = vrot.lane.b32.xlu0 %v9269, 32
      %v9523 = vpop.permute.xlu0 %9522
      %9524 = vrot.lane.b32.xlu0 %v9270, 32
      %v9525 = vpop.permute.xlu0 %9524
      %9526 = vrot.lane.b32.xlu0 %v9271, 32
      %v9527 = vpop.permute.xlu0 %9526
      %9528 = vrot.lane.b32.xlu0 %v9272, 32
      %v9529 = vpop.permute.xlu0 %9528
      %9530 = vrot.lane.b32.xlu0 %v9273, 32
      %v9531 = vpop.permute.xlu0 %9530
      %9532 = vrot.lane.b32.xlu0 %v9274, 32
      %v9533 = vpop.permute.xlu0 %9532
      %v9534 = vsel %vm551, %v9471, %v9473
      %v9535 = vsel %vm551, %v9473, %v9475
      %v9536 = vsel %vm551, %v9475, %v9477
      %v9537 = vsel %vm551, %v9477, %v9479
      %v9538 = vsel %vm551, %v9479, %v9481
      %v9539 = vsel %vm551, %v9481, %v9483
      %v9540 = vsel %vm551, %v9483, %v9485
      %v9541 = vsel %vm551, %v9487, %v9489
      %v9542 = vsel %vm551, %v9489, %v9491
      %v9543 = vsel %vm551, %v9491, %v9493
      %v9544 = vsel %vm551, %v9493, %v9495
      %v9545 = vsel %vm551, %v9495, %v9497
      %v9546 = vsel %vm551, %v9497, %v9499
      %v9547 = vsel %vm551, %v9499, %v9501
      %v9548 = vsel %vm551, %v9503, %v9505
      %v9549 = vsel %vm551, %v9505, %v9507
      %v9550 = vsel %vm551, %v9507, %v9509
      %v9551 = vsel %vm551, %v9509, %v9511
      %v9552 = vsel %vm551, %v9511, %v9513
      %v9553 = vsel %vm551, %v9513, %v9515
      %v9554 = vsel %vm551, %v9515, %v9517
      %v9555 = vsel %vm551, %v9519, %v9521
      %v9556 = vsel %vm551, %v9521, %v9523
      %v9557 = vsel %vm551, %v9523, %v9525
      %v9558 = vsel %vm551, %v9525, %v9527
      %v9559 = vsel %vm551, %v9527, %v9529
      %v9560 = vsel %vm551, %v9529, %v9531
      %v9561 = vsel %vm551, %v9531, %v9533
      %v9594 = vsel %vm551, 0.0, %v9471
      %v9595 = vsel %vm551, 0.0, %v9487
      %v9596 = vsel %vm551, 0.0, %v9503
      %v9597 = vsel %vm551, 0.0, %v9519
      %9598 = vrot.lane.b32.xlu0 %v9243, 31
      %v9599 = vpop.permute.xlu0 %9598
      %9600 = vrot.lane.b32.xlu0 %v9244, 31
      %v9601 = vpop.permute.xlu0 %9600
      %9602 = vrot.lane.b32.xlu0 %v9245, 31
      %v9603 = vpop.permute.xlu0 %9602
      %9604 = vrot.lane.b32.xlu0 %v9246, 31
      %v9605 = vpop.permute.xlu0 %9604
      %9606 = vrot.lane.b32.xlu0 %v9247, 31
      %v9607 = vpop.permute.xlu0 %9606
      %9608 = vrot.lane.b32.xlu0 %v9248, 31
      %v9609 = vpop.permute.xlu0 %9608
      %9610 = vrot.lane.b32.xlu0 %v9249, 31
      %v9611 = vpop.permute.xlu0 %9610
      %9612 = vrot.lane.b32.xlu0 %v9250, 31
      %v9613 = vpop.permute.xlu0 %9612
      %9614 = vrot.lane.b32.xlu0 %v9251, 31
      %v9615 = vpop.permute.xlu0 %9614
      %9616 = vrot.lane.b32.xlu0 %v9252, 31
      %v9617 = vpop.permute.xlu0 %9616
      %9618 = vrot.lane.b32.xlu0 %v9253, 31
      %v9619 = vpop.permute.xlu0 %9618
      %9620 = vrot.lane.b32.xlu0 %v9254, 31
      %v9621 = vpop.permute.xlu0 %9620
      %9622 = vrot.lane.b32.xlu0 %v9255, 31
      %v9623 = vpop.permute.xlu0 %9622
      %9624 = vrot.lane.b32.xlu0 %v9256, 31
      %v9625 = vpop.permute.xlu0 %9624
      %9626 = vrot.lane.b32.xlu0 %v9257, 31
      %v9627 = vpop.permute.xlu0 %9626
      %9628 = vrot.lane.b32.xlu0 %v9258, 31
      %v9629 = vpop.permute.xlu0 %9628
      %9630 = vrot.lane.b32.xlu0 %v9259, 31
      %v9631 = vpop.permute.xlu0 %9630
      %9632 = vrot.lane.b32.xlu0 %v9260, 31
      %v9633 = vpop.permute.xlu0 %9632
      %9634 = vrot.lane.b32.xlu0 %v9261, 31
      %v9635 = vpop.permute.xlu0 %9634
      %9636 = vrot.lane.b32.xlu0 %v9262, 31
      %v9637 = vpop.permute.xlu0 %9636
      %9638 = vrot.lane.b32.xlu0 %v9263, 31
      %v9639 = vpop.permute.xlu0 %9638
      %9640 = vrot.lane.b32.xlu0 %v9264, 31
      %v9641 = vpop.permute.xlu0 %9640
      %9642 = vrot.lane.b32.xlu0 %v9265, 31
      %v9643 = vpop.permute.xlu0 %9642
      %9644 = vrot.lane.b32.xlu0 %v9266, 31
      %v9645 = vpop.permute.xlu0 %9644
      %9646 = vrot.lane.b32.xlu0 %v9267, 31
      %v9647 = vpop.permute.xlu0 %9646
      %9648 = vrot.lane.b32.xlu0 %v9268, 31
      %v9649 = vpop.permute.xlu0 %9648
      %9650 = vrot.lane.b32.xlu0 %v9269, 31
      %v9651 = vpop.permute.xlu0 %9650
      %9652 = vrot.lane.b32.xlu0 %v9270, 31
      %v9653 = vpop.permute.xlu0 %9652
      %9654 = vrot.lane.b32.xlu0 %v9271, 31
      %v9655 = vpop.permute.xlu0 %9654
      %9656 = vrot.lane.b32.xlu0 %v9272, 31
      %v9657 = vpop.permute.xlu0 %9656
      %9658 = vrot.lane.b32.xlu0 %v9273, 31
      %v9659 = vpop.permute.xlu0 %9658
      %9660 = vrot.lane.b32.xlu0 %v9274, 31
      %v9661 = vpop.permute.xlu0 %9660
      %v9662 = vsel %vm584, %v9599, %v9601
      %v9663 = vsel %vm584, %v9601, %v9603
      %v9664 = vsel %vm584, %v9603, %v9605
      %v9665 = vsel %vm584, %v9605, %v9607
      %v9666 = vsel %vm584, %v9607, %v9609
      %v9667 = vsel %vm584, %v9609, %v9611
      %v9668 = vsel %vm584, %v9611, %v9613
      %v9669 = vsel %vm584, %v9615, %v9617
      %v9670 = vsel %vm584, %v9617, %v9619
      %v9671 = vsel %vm584, %v9619, %v9621
      %v9672 = vsel %vm584, %v9621, %v9623
      %v9673 = vsel %vm584, %v9623, %v9625
      %v9674 = vsel %vm584, %v9625, %v9627
      %v9675 = vsel %vm584, %v9627, %v9629
      %v9676 = vsel %vm584, %v9631, %v9633
      %v9677 = vsel %vm584, %v9633, %v9635
      %v9678 = vsel %vm584, %v9635, %v9637
      %v9679 = vsel %vm584, %v9637, %v9639
      %v9680 = vsel %vm584, %v9639, %v9641
      %v9681 = vsel %vm584, %v9641, %v9643
      %v9682 = vsel %vm584, %v9643, %v9645
      %v9683 = vsel %vm584, %v9647, %v9649
      %v9684 = vsel %vm584, %v9649, %v9651
      %v9685 = vsel %vm584, %v9651, %v9653
      %v9686 = vsel %vm584, %v9653, %v9655
      %v9687 = vsel %vm584, %v9655, %v9657
      %v9688 = vsel %vm584, %v9657, %v9659
      %v9689 = vsel %vm584, %v9659, %v9661
      %v9722 = vsel %vm584, 0.0, %v9599
      %v9723 = vsel %vm584, 0.0, %v9615
      %v9724 = vsel %vm584, 0.0, %v9631
      %v9725 = vsel %vm584, 0.0, %v9647
      %v9726 = vsel %vm609, %v9722, 0.0
      %v9727 = vsel %vm610, %v9662, 0.0
      %v9728 = vsel %vm611, %v9663, 0.0
      %v9729 = vsel %vm612, %v9664, 0.0
      %v9730 = vsel %vm613, %v9665, 0.0
      %v9731 = vsel %vm614, %v9666, 0.0
      %v9732 = vsel %vm615, %v9667, 0.0
      %v9733 = vsel %vm616, %v9668, 0.0
      %v9734 = vsel %vm609, %v9723, 0.0
      %v9735 = vsel %vm610, %v9669, 0.0
      %v9736 = vsel %vm611, %v9670, 0.0
      %v9737 = vsel %vm612, %v9671, 0.0
      %v9738 = vsel %vm613, %v9672, 0.0
      %v9739 = vsel %vm614, %v9673, 0.0
      %v9740 = vsel %vm615, %v9674, 0.0
      %v9741 = vsel %vm616, %v9675, 0.0
      %v9742 = vsel %vm609, %v9724, 0.0
      %v9743 = vsel %vm610, %v9676, 0.0
      %v9744 = vsel %vm611, %v9677, 0.0
      %v9745 = vsel %vm612, %v9678, 0.0
      %v9746 = vsel %vm613, %v9679, 0.0
      %v9747 = vsel %vm614, %v9680, 0.0
      %v9748 = vsel %vm615, %v9681, 0.0
      %v9749 = vsel %vm616, %v9682, 0.0
      %v9750 = vsel %vm609, %v9725, 0.0
      %v9751 = vsel %vm610, %v9683, 0.0
      %v9752 = vsel %vm611, %v9684, 0.0
      %v9753 = vsel %vm612, %v9685, 0.0
      %v9754 = vsel %vm613, %v9686, 0.0
      %v9755 = vsel %vm614, %v9687, 0.0
      %v9756 = vsel %vm615, %v9688, 0.0
      %v9757 = vsel %vm616, %v9689, 0.0
      %9758 = vrot.lane.b32.xlu0 %v9243, 1
      %v9759 = vpop.permute.xlu0 %9758
      %9760 = vrot.lane.b32.xlu0 %v9244, 1
      %v9761 = vpop.permute.xlu0 %9760
      %9762 = vrot.lane.b32.xlu0 %v9245, 1
      %v9763 = vpop.permute.xlu0 %9762
      %9764 = vrot.lane.b32.xlu0 %v9246, 1
      %v9765 = vpop.permute.xlu0 %9764
      %9766 = vrot.lane.b32.xlu0 %v9247, 1
      %v9767 = vpop.permute.xlu0 %9766
      %9768 = vrot.lane.b32.xlu0 %v9248, 1
      %v9769 = vpop.permute.xlu0 %9768
      %9770 = vrot.lane.b32.xlu0 %v9249, 1
      %v9771 = vpop.permute.xlu0 %9770
      %9772 = vrot.lane.b32.xlu0 %v9250, 1
      %v9773 = vpop.permute.xlu0 %9772
      %9774 = vrot.lane.b32.xlu0 %v9251, 1
      %v9775 = vpop.permute.xlu0 %9774
      %9776 = vrot.lane.b32.xlu0 %v9252, 1
      %v9777 = vpop.permute.xlu0 %9776
      %9778 = vrot.lane.b32.xlu0 %v9253, 1
      %v9779 = vpop.permute.xlu0 %9778
      %9780 = vrot.lane.b32.xlu0 %v9254, 1
      %v9781 = vpop.permute.xlu0 %9780
      %9782 = vrot.lane.b32.xlu0 %v9255, 1
      %v9783 = vpop.permute.xlu0 %9782
      %9784 = vrot.lane.b32.xlu0 %v9256, 1
      %v9785 = vpop.permute.xlu0 %9784
      %9786 = vrot.lane.b32.xlu0 %v9257, 1
      %v9787 = vpop.permute.xlu0 %9786
      %9788 = vrot.lane.b32.xlu0 %v9258, 1
      %v9789 = vpop.permute.xlu0 %9788
      %9790 = vrot.lane.b32.xlu0 %v9259, 1
      %v9791 = vpop.permute.xlu0 %9790
      %9792 = vrot.lane.b32.xlu0 %v9260, 1
      %v9793 = vpop.permute.xlu0 %9792
      %9794 = vrot.lane.b32.xlu0 %v9261, 1
      %v9795 = vpop.permute.xlu0 %9794
      %9796 = vrot.lane.b32.xlu0 %v9262, 1
      %v9797 = vpop.permute.xlu0 %9796
      %9798 = vrot.lane.b32.xlu0 %v9263, 1
      %v9799 = vpop.permute.xlu0 %9798
      %9800 = vrot.lane.b32.xlu0 %v9264, 1
      %v9801 = vpop.permute.xlu0 %9800
      %9802 = vrot.lane.b32.xlu0 %v9265, 1
      %v9803 = vpop.permute.xlu0 %9802
      %9804 = vrot.lane.b32.xlu0 %v9266, 1
      %v9805 = vpop.permute.xlu0 %9804
      %9806 = vrot.lane.b32.xlu0 %v9267, 1
      %v9807 = vpop.permute.xlu0 %9806
      %9808 = vrot.lane.b32.xlu0 %v9268, 1
      %v9809 = vpop.permute.xlu0 %9808
      %9810 = vrot.lane.b32.xlu0 %v9269, 1
      %v9811 = vpop.permute.xlu0 %9810
      %9812 = vrot.lane.b32.xlu0 %v9270, 1
      %v9813 = vpop.permute.xlu0 %9812
      %9814 = vrot.lane.b32.xlu0 %v9271, 1
      %v9815 = vpop.permute.xlu0 %9814
      %9816 = vrot.lane.b32.xlu0 %v9272, 1
      %v9817 = vpop.permute.xlu0 %9816
      %9818 = vrot.lane.b32.xlu0 %v9273, 1
      %v9819 = vpop.permute.xlu0 %9818
      %9820 = vrot.lane.b32.xlu0 %v9274, 1
      %v9821 = vpop.permute.xlu0 %9820
      %v9822 = vsel %vm641, %v9759, %v9761
      %v9823 = vsel %vm641, %v9761, %v9763
      %v9824 = vsel %vm641, %v9763, %v9765
      %v9825 = vsel %vm641, %v9765, %v9767
      %v9826 = vsel %vm641, %v9767, %v9769
      %v9827 = vsel %vm641, %v9769, %v9771
      %v9828 = vsel %vm641, %v9771, %v9773
      %v9829 = vsel %vm641, %v9775, %v9777
      %v9830 = vsel %vm641, %v9777, %v9779
      %v9831 = vsel %vm641, %v9779, %v9781
      %v9832 = vsel %vm641, %v9781, %v9783
      %v9833 = vsel %vm641, %v9783, %v9785
      %v9834 = vsel %vm641, %v9785, %v9787
      %v9835 = vsel %vm641, %v9787, %v9789
      %v9836 = vsel %vm641, %v9791, %v9793
      %v9837 = vsel %vm641, %v9793, %v9795
      %v9838 = vsel %vm641, %v9795, %v9797
      %v9839 = vsel %vm641, %v9797, %v9799
      %v9840 = vsel %vm641, %v9799, %v9801
      %v9841 = vsel %vm641, %v9801, %v9803
      %v9842 = vsel %vm641, %v9803, %v9805
      %v9843 = vsel %vm641, %v9807, %v9809
      %v9844 = vsel %vm641, %v9809, %v9811
      %v9845 = vsel %vm641, %v9811, %v9813
      %v9846 = vsel %vm641, %v9813, %v9815
      %v9847 = vsel %vm641, %v9815, %v9817
      %v9848 = vsel %vm641, %v9817, %v9819
      %v9849 = vsel %vm641, %v9819, %v9821
      %v9882 = vsel %vm641, 0.0, %v9759
      %v9883 = vsel %vm641, 0.0, %v9775
      %v9884 = vsel %vm641, 0.0, %v9791
      %v9885 = vsel %vm641, 0.0, %v9807
      %v9886 = vsel %vm519, %v9882, 0.0
      %v9887 = vsel %vm520, %v9822, 0.0
      %v9888 = vsel %vm521, %v9823, 0.0
      %v9889 = vsel %vm522, %v9824, 0.0
      %v9890 = vsel %vm523, %v9825, 0.0
      %v9891 = vsel %vm524, %v9826, 0.0
      %v9892 = vsel %vm525, %v9827, 0.0
      %v9893 = vsel %vm526, %v9828, 0.0
      %v9894 = vsel %vm519, %v9883, 0.0
      %v9895 = vsel %vm520, %v9829, 0.0
      %v9896 = vsel %vm521, %v9830, 0.0
      %v9897 = vsel %vm522, %v9831, 0.0
      %v9898 = vsel %vm523, %v9832, 0.0
      %v9899 = vsel %vm524, %v9833, 0.0
      %v9900 = vsel %vm525, %v9834, 0.0
      %v9901 = vsel %vm526, %v9835, 0.0
      %v9902 = vsel %vm519, %v9884, 0.0
      %v9903 = vsel %vm520, %v9836, 0.0
      %v9904 = vsel %vm521, %v9837, 0.0
      %v9905 = vsel %vm522, %v9838, 0.0
      %v9906 = vsel %vm523, %v9839, 0.0
      %v9907 = vsel %vm524, %v9840, 0.0
      %v9908 = vsel %vm525, %v9841, 0.0
      %v9909 = vsel %vm526, %v9842, 0.0
      %v9910 = vsel %vm519, %v9885, 0.0
      %v9911 = vsel %vm520, %v9843, 0.0
      %v9912 = vsel %vm521, %v9844, 0.0
      %v9913 = vsel %vm522, %v9845, 0.0
      %v9914 = vsel %vm523, %v9846, 0.0
      %v9915 = vsel %vm524, %v9847, 0.0
      %v9916 = vsel %vm525, %v9848, 0.0
      %v9917 = vsel %vm526, %v9849, 0.0
      %9918 = vrot.lane.b32.xlu0 %v9243, 127
      %v9919 = vpop.permute.xlu0 %9918
      %9920 = vrot.lane.b32.xlu0 %v9244, 127
      %v9921 = vpop.permute.xlu0 %9920
      %9922 = vrot.lane.b32.xlu0 %v9245, 127
      %v9923 = vpop.permute.xlu0 %9922
      %9924 = vrot.lane.b32.xlu0 %v9246, 127
      %v9925 = vpop.permute.xlu0 %9924
      %9926 = vrot.lane.b32.xlu0 %v9247, 127
      %v9927 = vpop.permute.xlu0 %9926
      %9928 = vrot.lane.b32.xlu0 %v9248, 127
      %v9929 = vpop.permute.xlu0 %9928
      %9930 = vrot.lane.b32.xlu0 %v9249, 127
      %v9931 = vpop.permute.xlu0 %9930
      %9932 = vrot.lane.b32.xlu0 %v9250, 127
      %v9933 = vpop.permute.xlu0 %9932
      %9934 = vrot.lane.b32.xlu0 %v9251, 127
      %v9935 = vpop.permute.xlu0 %9934
      %9936 = vrot.lane.b32.xlu0 %v9252, 127
      %v9937 = vpop.permute.xlu0 %9936
      %9938 = vrot.lane.b32.xlu0 %v9253, 127
      %v9939 = vpop.permute.xlu0 %9938
      %9940 = vrot.lane.b32.xlu0 %v9254, 127
      %v9941 = vpop.permute.xlu0 %9940
      %9942 = vrot.lane.b32.xlu0 %v9255, 127
      %v9943 = vpop.permute.xlu0 %9942
      %9944 = vrot.lane.b32.xlu0 %v9256, 127
      %v9945 = vpop.permute.xlu0 %9944
      %9946 = vrot.lane.b32.xlu0 %v9257, 127
      %v9947 = vpop.permute.xlu0 %9946
      %9948 = vrot.lane.b32.xlu0 %v9258, 127
      %v9949 = vpop.permute.xlu0 %9948
      %9950 = vrot.lane.b32.xlu0 %v9259, 127
      %v9951 = vpop.permute.xlu0 %9950
      %9952 = vrot.lane.b32.xlu0 %v9260, 127
      %v9953 = vpop.permute.xlu0 %9952
      %9954 = vrot.lane.b32.xlu0 %v9261, 127
      %v9955 = vpop.permute.xlu0 %9954
      %9956 = vrot.lane.b32.xlu0 %v9262, 127
      %v9957 = vpop.permute.xlu0 %9956
      %9958 = vrot.lane.b32.xlu0 %v9263, 127
      %v9959 = vpop.permute.xlu0 %9958
      %9960 = vrot.lane.b32.xlu0 %v9264, 127
      %v9961 = vpop.permute.xlu0 %9960
      %9962 = vrot.lane.b32.xlu0 %v9265, 127
      %v9963 = vpop.permute.xlu0 %9962
      %9964 = vrot.lane.b32.xlu0 %v9266, 127
      %v9965 = vpop.permute.xlu0 %9964
      %9966 = vrot.lane.b32.xlu0 %v9267, 127
      %v9967 = vpop.permute.xlu0 %9966
      %9968 = vrot.lane.b32.xlu0 %v9268, 127
      %v9969 = vpop.permute.xlu0 %9968
      %9970 = vrot.lane.b32.xlu0 %v9269, 127
      %v9971 = vpop.permute.xlu0 %9970
      %9972 = vrot.lane.b32.xlu0 %v9270, 127
      %v9973 = vpop.permute.xlu0 %9972
      %9974 = vrot.lane.b32.xlu0 %v9271, 127
      %v9975 = vpop.permute.xlu0 %9974
      %9976 = vrot.lane.b32.xlu0 %v9272, 127
      %v9977 = vpop.permute.xlu0 %9976
      %9978 = vrot.lane.b32.xlu0 %v9273, 127
      %v9979 = vpop.permute.xlu0 %9978
      %9980 = vrot.lane.b32.xlu0 %v9274, 127
      %v9981 = vpop.permute.xlu0 %9980
      %v9982 = vsel %vm682, %v9919, %v9921
      %v9983 = vsel %vm682, %v9921, %v9923
      %v9984 = vsel %vm682, %v9923, %v9925
      %v9985 = vsel %vm682, %v9925, %v9927
      %v9986 = vsel %vm682, %v9927, %v9929
      %v9987 = vsel %vm682, %v9929, %v9931
      %v9988 = vsel %vm682, %v9931, %v9933
      %v9989 = vsel %vm682, %v9935, %v9937
      %v9990 = vsel %vm682, %v9937, %v9939
      %v9991 = vsel %vm682, %v9939, %v9941
      %v9992 = vsel %vm682, %v9941, %v9943
      %v9993 = vsel %vm682, %v9943, %v9945
      %v9994 = vsel %vm682, %v9945, %v9947
      %v9995 = vsel %vm682, %v9947, %v9949
      %v9996 = vsel %vm682, %v9951, %v9953
      %v9997 = vsel %vm682, %v9953, %v9955
      %v9998 = vsel %vm682, %v9955, %v9957
      %v9999 = vsel %vm682, %v9957, %v9959
      %v10000 = vsel %vm682, %v9959, %v9961
      %v10001 = vsel %vm682, %v9961, %v9963
      %v10002 = vsel %vm682, %v9963, %v9965
      %v10003 = vsel %vm682, %v9967, %v9969
      %v10004 = vsel %vm682, %v9969, %v9971
      %v10005 = vsel %vm682, %v9971, %v9973
      %v10006 = vsel %vm682, %v9973, %v9975
      %v10007 = vsel %vm682, %v9975, %v9977
      %v10008 = vsel %vm682, %v9977, %v9979
      %v10009 = vsel %vm682, %v9979, %v9981
      %v10042 = vsel %vm682, %v9933, 0.0
      %v10043 = vsel %vm682, %v9949, 0.0
      %v10044 = vsel %vm682, %v9965, 0.0
      %v10045 = vsel %vm682, %v9981, 0.0
      %v10046 = vsel %vm609, %v9982, 0.0
      %v10047 = vsel %vm610, %v9983, 0.0
      %v10048 = vsel %vm611, %v9984, 0.0
      %v10049 = vsel %vm612, %v9985, 0.0
      %v10050 = vsel %vm613, %v9986, 0.0
      %v10051 = vsel %vm614, %v9987, 0.0
      %v10052 = vsel %vm615, %v9988, 0.0
      %v10053 = vsel %vm616, %v10042, 0.0
      %v10054 = vsel %vm609, %v9989, 0.0
      %v10055 = vsel %vm610, %v9990, 0.0
      %v10056 = vsel %vm611, %v9991, 0.0
      %v10057 = vsel %vm612, %v9992, 0.0
      %v10058 = vsel %vm613, %v9993, 0.0
      %v10059 = vsel %vm614, %v9994, 0.0
      %v10060 = vsel %vm615, %v9995, 0.0
      %v10061 = vsel %vm616, %v10043, 0.0
      %v10062 = vsel %vm609, %v9996, 0.0
      %v10063 = vsel %vm610, %v9997, 0.0
      %v10064 = vsel %vm611, %v9998, 0.0
      %v10065 = vsel %vm612, %v9999, 0.0
      %v10066 = vsel %vm613, %v10000, 0.0
      %v10067 = vsel %vm614, %v10001, 0.0
      %v10068 = vsel %vm615, %v10002, 0.0
      %v10069 = vsel %vm616, %v10044, 0.0
      %v10070 = vsel %vm609, %v10003, 0.0
      %v10071 = vsel %vm610, %v10004, 0.0
      %v10072 = vsel %vm611, %v10005, 0.0
      %v10073 = vsel %vm612, %v10006, 0.0
      %v10074 = vsel %vm613, %v10007, 0.0
      %v10075 = vsel %vm614, %v10008, 0.0
      %v10076 = vsel %vm615, %v10009, 0.0
      %v10077 = vsel %vm616, %v10045, 0.0
      %10078 = vrot.lane.b32.xlu0 %v9243, 97
      %v10079 = vpop.permute.xlu0 %10078
      %10080 = vrot.lane.b32.xlu0 %v9244, 97
      %v10081 = vpop.permute.xlu0 %10080
      %10082 = vrot.lane.b32.xlu0 %v9245, 97
      %v10083 = vpop.permute.xlu0 %10082
      %10084 = vrot.lane.b32.xlu0 %v9246, 97
      %v10085 = vpop.permute.xlu0 %10084
      %10086 = vrot.lane.b32.xlu0 %v9247, 97
      %v10087 = vpop.permute.xlu0 %10086
      %10088 = vrot.lane.b32.xlu0 %v9248, 97
      %v10089 = vpop.permute.xlu0 %10088
      %10090 = vrot.lane.b32.xlu0 %v9249, 97
      %v10091 = vpop.permute.xlu0 %10090
      %10092 = vrot.lane.b32.xlu0 %v9250, 97
      %v10093 = vpop.permute.xlu0 %10092
      %10094 = vrot.lane.b32.xlu0 %v9251, 97
      %v10095 = vpop.permute.xlu0 %10094
      %10096 = vrot.lane.b32.xlu0 %v9252, 97
      %v10097 = vpop.permute.xlu0 %10096
      %10098 = vrot.lane.b32.xlu0 %v9253, 97
      %v10099 = vpop.permute.xlu0 %10098
      %10100 = vrot.lane.b32.xlu0 %v9254, 97
      %v10101 = vpop.permute.xlu0 %10100
      %10102 = vrot.lane.b32.xlu0 %v9255, 97
      %v10103 = vpop.permute.xlu0 %10102
      %10104 = vrot.lane.b32.xlu0 %v9256, 97
      %v10105 = vpop.permute.xlu0 %10104
      %10106 = vrot.lane.b32.xlu0 %v9257, 97
      %v10107 = vpop.permute.xlu0 %10106
      %10108 = vrot.lane.b32.xlu0 %v9258, 97
      %v10109 = vpop.permute.xlu0 %10108
      %10110 = vrot.lane.b32.xlu0 %v9259, 97
      %v10111 = vpop.permute.xlu0 %10110
      %10112 = vrot.lane.b32.xlu0 %v9260, 97
      %v10113 = vpop.permute.xlu0 %10112
      %10114 = vrot.lane.b32.xlu0 %v9261, 97
      %v10115 = vpop.permute.xlu0 %10114
      %10116 = vrot.lane.b32.xlu0 %v9262, 97
      %v10117 = vpop.permute.xlu0 %10116
      %10118 = vrot.lane.b32.xlu0 %v9263, 97
      %v10119 = vpop.permute.xlu0 %10118
      %10120 = vrot.lane.b32.xlu0 %v9264, 97
      %v10121 = vpop.permute.xlu0 %10120
      %10122 = vrot.lane.b32.xlu0 %v9265, 97
      %v10123 = vpop.permute.xlu0 %10122
      %10124 = vrot.lane.b32.xlu0 %v9266, 97
      %v10125 = vpop.permute.xlu0 %10124
      %10126 = vrot.lane.b32.xlu0 %v9267, 97
      %v10127 = vpop.permute.xlu0 %10126
      %10128 = vrot.lane.b32.xlu0 %v9268, 97
      %v10129 = vpop.permute.xlu0 %10128
      %10130 = vrot.lane.b32.xlu0 %v9269, 97
      %v10131 = vpop.permute.xlu0 %10130
      %10132 = vrot.lane.b32.xlu0 %v9270, 97
      %v10133 = vpop.permute.xlu0 %10132
      %10134 = vrot.lane.b32.xlu0 %v9271, 97
      %v10135 = vpop.permute.xlu0 %10134
      %10136 = vrot.lane.b32.xlu0 %v9272, 97
      %v10137 = vpop.permute.xlu0 %10136
      %10138 = vrot.lane.b32.xlu0 %v9273, 97
      %v10139 = vpop.permute.xlu0 %10138
      %10140 = vrot.lane.b32.xlu0 %v9274, 97
      %v10141 = vpop.permute.xlu0 %10140
      %v10142 = vsel %vm723, %v10079, %v10081
      %v10143 = vsel %vm723, %v10081, %v10083
      %v10144 = vsel %vm723, %v10083, %v10085
      %v10145 = vsel %vm723, %v10085, %v10087
      %v10146 = vsel %vm723, %v10087, %v10089
      %v10147 = vsel %vm723, %v10089, %v10091
      %v10148 = vsel %vm723, %v10091, %v10093
      %v10149 = vsel %vm723, %v10095, %v10097
      %v10150 = vsel %vm723, %v10097, %v10099
      %v10151 = vsel %vm723, %v10099, %v10101
      %v10152 = vsel %vm723, %v10101, %v10103
      %v10153 = vsel %vm723, %v10103, %v10105
      %v10154 = vsel %vm723, %v10105, %v10107
      %v10155 = vsel %vm723, %v10107, %v10109
      %v10156 = vsel %vm723, %v10111, %v10113
      %v10157 = vsel %vm723, %v10113, %v10115
      %v10158 = vsel %vm723, %v10115, %v10117
      %v10159 = vsel %vm723, %v10117, %v10119
      %v10160 = vsel %vm723, %v10119, %v10121
      %v10161 = vsel %vm723, %v10121, %v10123
      %v10162 = vsel %vm723, %v10123, %v10125
      %v10163 = vsel %vm723, %v10127, %v10129
      %v10164 = vsel %vm723, %v10129, %v10131
      %v10165 = vsel %vm723, %v10131, %v10133
      %v10166 = vsel %vm723, %v10133, %v10135
      %v10167 = vsel %vm723, %v10135, %v10137
      %v10168 = vsel %vm723, %v10137, %v10139
      %v10169 = vsel %vm723, %v10139, %v10141
      %v10202 = vsel %vm723, %v10093, 0.0
      %v10203 = vsel %vm723, %v10109, 0.0
      %v10204 = vsel %vm723, %v10125, 0.0
      %v10205 = vsel %vm723, %v10141, 0.0
      %v10206 = vsel %vm519, %v10142, 0.0
      %v10207 = vsel %vm520, %v10143, 0.0
      %v10208 = vsel %vm521, %v10144, 0.0
      %v10209 = vsel %vm522, %v10145, 0.0
      %v10210 = vsel %vm523, %v10146, 0.0
      %v10211 = vsel %vm524, %v10147, 0.0
      %v10212 = vsel %vm525, %v10148, 0.0
      %v10213 = vsel %vm526, %v10202, 0.0
      %v10214 = vsel %vm519, %v10149, 0.0
      %v10215 = vsel %vm520, %v10150, 0.0
      %v10216 = vsel %vm521, %v10151, 0.0
      %v10217 = vsel %vm522, %v10152, 0.0
      %v10218 = vsel %vm523, %v10153, 0.0
      %v10219 = vsel %vm524, %v10154, 0.0
      %v10220 = vsel %vm525, %v10155, 0.0
      %v10221 = vsel %vm526, %v10203, 0.0
      %v10222 = vsel %vm519, %v10156, 0.0
      %v10223 = vsel %vm520, %v10157, 0.0
      %v10224 = vsel %vm521, %v10158, 0.0
      %v10225 = vsel %vm522, %v10159, 0.0
      %v10226 = vsel %vm523, %v10160, 0.0
      %v10227 = vsel %vm524, %v10161, 0.0
      %v10228 = vsel %vm525, %v10162, 0.0
      %v10229 = vsel %vm526, %v10204, 0.0
      %v10230 = vsel %vm519, %v10163, 0.0
      %v10231 = vsel %vm520, %v10164, 0.0
      %v10232 = vsel %vm521, %v10165, 0.0
      %v10233 = vsel %vm522, %v10166, 0.0
      %v10234 = vsel %vm523, %v10167, 0.0
      %v10235 = vsel %vm524, %v10168, 0.0
      %v10236 = vsel %vm525, %v10169, 0.0
      %v10237 = vsel %vm526, %v10205, 0.0
      %10238 = vrot.lane.b32.xlu0 %v9243, 96
      %v10239 = vpop.permute.xlu0 %10238
      %10240 = vrot.lane.b32.xlu0 %v9244, 96
      %v10241 = vpop.permute.xlu0 %10240
      %10242 = vrot.lane.b32.xlu0 %v9245, 96
      %v10243 = vpop.permute.xlu0 %10242
      %10244 = vrot.lane.b32.xlu0 %v9246, 96
      %v10245 = vpop.permute.xlu0 %10244
      %10246 = vrot.lane.b32.xlu0 %v9247, 96
      %v10247 = vpop.permute.xlu0 %10246
      %10248 = vrot.lane.b32.xlu0 %v9248, 96
      %v10249 = vpop.permute.xlu0 %10248
      %10250 = vrot.lane.b32.xlu0 %v9249, 96
      %v10251 = vpop.permute.xlu0 %10250
      %10252 = vrot.lane.b32.xlu0 %v9250, 96
      %v10253 = vpop.permute.xlu0 %10252
      %10254 = vrot.lane.b32.xlu0 %v9251, 96
      %v10255 = vpop.permute.xlu0 %10254
      %10256 = vrot.lane.b32.xlu0 %v9252, 96
      %v10257 = vpop.permute.xlu0 %10256
      %10258 = vrot.lane.b32.xlu0 %v9253, 96
      %v10259 = vpop.permute.xlu0 %10258
      %10260 = vrot.lane.b32.xlu0 %v9254, 96
      %v10261 = vpop.permute.xlu0 %10260
      %10262 = vrot.lane.b32.xlu0 %v9255, 96
      %v10263 = vpop.permute.xlu0 %10262
      %10264 = vrot.lane.b32.xlu0 %v9256, 96
      %v10265 = vpop.permute.xlu0 %10264
      %10266 = vrot.lane.b32.xlu0 %v9257, 96
      %v10267 = vpop.permute.xlu0 %10266
      %10268 = vrot.lane.b32.xlu0 %v9258, 96
      %v10269 = vpop.permute.xlu0 %10268
      %10270 = vrot.lane.b32.xlu0 %v9259, 96
      %v10271 = vpop.permute.xlu0 %10270
      %10272 = vrot.lane.b32.xlu0 %v9260, 96
      %v10273 = vpop.permute.xlu0 %10272
      %10274 = vrot.lane.b32.xlu0 %v9261, 96
      %v10275 = vpop.permute.xlu0 %10274
      %10276 = vrot.lane.b32.xlu0 %v9262, 96
      %v10277 = vpop.permute.xlu0 %10276
      %10278 = vrot.lane.b32.xlu0 %v9263, 96
      %v10279 = vpop.permute.xlu0 %10278
      %10280 = vrot.lane.b32.xlu0 %v9264, 96
      %v10281 = vpop.permute.xlu0 %10280
      %10282 = vrot.lane.b32.xlu0 %v9265, 96
      %v10283 = vpop.permute.xlu0 %10282
      %10284 = vrot.lane.b32.xlu0 %v9266, 96
      %v10285 = vpop.permute.xlu0 %10284
      %10286 = vrot.lane.b32.xlu0 %v9267, 96
      %v10287 = vpop.permute.xlu0 %10286
      %10288 = vrot.lane.b32.xlu0 %v9268, 96
      %v10289 = vpop.permute.xlu0 %10288
      %10290 = vrot.lane.b32.xlu0 %v9269, 96
      %v10291 = vpop.permute.xlu0 %10290
      %10292 = vrot.lane.b32.xlu0 %v9270, 96
      %v10293 = vpop.permute.xlu0 %10292
      %10294 = vrot.lane.b32.xlu0 %v9271, 96
      %v10295 = vpop.permute.xlu0 %10294
      %10296 = vrot.lane.b32.xlu0 %v9272, 96
      %v10297 = vpop.permute.xlu0 %10296
      %10298 = vrot.lane.b32.xlu0 %v9273, 96
      %v10299 = vpop.permute.xlu0 %10298
      %10300 = vrot.lane.b32.xlu0 %v9274, 96
      %v10301 = vpop.permute.xlu0 %10300
      %v10302 = vsel %vm764, %v10239, %v10241
      %v10303 = vsel %vm764, %v10241, %v10243
      %v10304 = vsel %vm764, %v10243, %v10245
      %v10305 = vsel %vm764, %v10245, %v10247
      %v10306 = vsel %vm764, %v10247, %v10249
      %v10307 = vsel %vm764, %v10249, %v10251
      %v10308 = vsel %vm764, %v10251, %v10253
      %v10309 = vsel %vm764, %v10255, %v10257
      %v10310 = vsel %vm764, %v10257, %v10259
      %v10311 = vsel %vm764, %v10259, %v10261
      %v10312 = vsel %vm764, %v10261, %v10263
      %v10313 = vsel %vm764, %v10263, %v10265
      %v10314 = vsel %vm764, %v10265, %v10267
      %v10315 = vsel %vm764, %v10267, %v10269
      %v10316 = vsel %vm764, %v10271, %v10273
      %v10317 = vsel %vm764, %v10273, %v10275
      %v10318 = vsel %vm764, %v10275, %v10277
      %v10319 = vsel %vm764, %v10277, %v10279
      %v10320 = vsel %vm764, %v10279, %v10281
      %v10321 = vsel %vm764, %v10281, %v10283
      %v10322 = vsel %vm764, %v10283, %v10285
      %v10323 = vsel %vm764, %v10287, %v10289
      %v10324 = vsel %vm764, %v10289, %v10291
      %v10325 = vsel %vm764, %v10291, %v10293
      %v10326 = vsel %vm764, %v10293, %v10295
      %v10327 = vsel %vm764, %v10295, %v10297
      %v10328 = vsel %vm764, %v10297, %v10299
      %v10329 = vsel %vm764, %v10299, %v10301
      %v10362 = vsel %vm764, %v10253, 0.0
      %v10363 = vsel %vm764, %v10269, 0.0
      %v10364 = vsel %vm764, %v10285, 0.0
      %v10365 = vsel %vm764, %v10301, 0.0
      %10366 = vrot.lane.b32.xlu0 %v9243, 95
      %v10367 = vpop.permute.xlu0 %10366
      %10368 = vrot.lane.b32.xlu0 %v9244, 95
      %v10369 = vpop.permute.xlu0 %10368
      %10370 = vrot.lane.b32.xlu0 %v9245, 95
      %v10371 = vpop.permute.xlu0 %10370
      %10372 = vrot.lane.b32.xlu0 %v9246, 95
      %v10373 = vpop.permute.xlu0 %10372
      %10374 = vrot.lane.b32.xlu0 %v9247, 95
      %v10375 = vpop.permute.xlu0 %10374
      %10376 = vrot.lane.b32.xlu0 %v9248, 95
      %v10377 = vpop.permute.xlu0 %10376
      %10378 = vrot.lane.b32.xlu0 %v9249, 95
      %v10379 = vpop.permute.xlu0 %10378
      %10380 = vrot.lane.b32.xlu0 %v9250, 95
      %v10381 = vpop.permute.xlu0 %10380
      %10382 = vrot.lane.b32.xlu0 %v9251, 95
      %v10383 = vpop.permute.xlu0 %10382
      %10384 = vrot.lane.b32.xlu0 %v9252, 95
      %v10385 = vpop.permute.xlu0 %10384
      %10386 = vrot.lane.b32.xlu0 %v9253, 95
      %v10387 = vpop.permute.xlu0 %10386
      %10388 = vrot.lane.b32.xlu0 %v9254, 95
      %v10389 = vpop.permute.xlu0 %10388
      %10390 = vrot.lane.b32.xlu0 %v9255, 95
      %v10391 = vpop.permute.xlu0 %10390
      %10392 = vrot.lane.b32.xlu0 %v9256, 95
      %v10393 = vpop.permute.xlu0 %10392
      %10394 = vrot.lane.b32.xlu0 %v9257, 95
      %v10395 = vpop.permute.xlu0 %10394
      %10396 = vrot.lane.b32.xlu0 %v9258, 95
      %v10397 = vpop.permute.xlu0 %10396
      %10398 = vrot.lane.b32.xlu0 %v9259, 95
      %v10399 = vpop.permute.xlu0 %10398
      %10400 = vrot.lane.b32.xlu0 %v9260, 95
      %v10401 = vpop.permute.xlu0 %10400
      %10402 = vrot.lane.b32.xlu0 %v9261, 95
      %v10403 = vpop.permute.xlu0 %10402
      %10404 = vrot.lane.b32.xlu0 %v9262, 95
      %v10405 = vpop.permute.xlu0 %10404
      %10406 = vrot.lane.b32.xlu0 %v9263, 95
      %v10407 = vpop.permute.xlu0 %10406
      %10408 = vrot.lane.b32.xlu0 %v9264, 95
      %v10409 = vpop.permute.xlu0 %10408
      %10410 = vrot.lane.b32.xlu0 %v9265, 95
      %v10411 = vpop.permute.xlu0 %10410
      %10412 = vrot.lane.b32.xlu0 %v9266, 95
      %v10413 = vpop.permute.xlu0 %10412
      %10414 = vrot.lane.b32.xlu0 %v9267, 95
      %v10415 = vpop.permute.xlu0 %10414
      %10416 = vrot.lane.b32.xlu0 %v9268, 95
      %v10417 = vpop.permute.xlu0 %10416
      %10418 = vrot.lane.b32.xlu0 %v9269, 95
      %v10419 = vpop.permute.xlu0 %10418
      %10420 = vrot.lane.b32.xlu0 %v9270, 95
      %v10421 = vpop.permute.xlu0 %10420
      %10422 = vrot.lane.b32.xlu0 %v9271, 95
      %v10423 = vpop.permute.xlu0 %10422
      %10424 = vrot.lane.b32.xlu0 %v9272, 95
      %v10425 = vpop.permute.xlu0 %10424
      %10426 = vrot.lane.b32.xlu0 %v9273, 95
      %v10427 = vpop.permute.xlu0 %10426
      %10428 = vrot.lane.b32.xlu0 %v9274, 95
      %v10429 = vpop.permute.xlu0 %10428
      %v10430 = vsel %vm797, %v10367, %v10369
      %v10431 = vsel %vm797, %v10369, %v10371
      %v10432 = vsel %vm797, %v10371, %v10373
      %v10433 = vsel %vm797, %v10373, %v10375
      %v10434 = vsel %vm797, %v10375, %v10377
      %v10435 = vsel %vm797, %v10377, %v10379
      %v10436 = vsel %vm797, %v10379, %v10381
      %v10437 = vsel %vm797, %v10383, %v10385
      %v10438 = vsel %vm797, %v10385, %v10387
      %v10439 = vsel %vm797, %v10387, %v10389
      %v10440 = vsel %vm797, %v10389, %v10391
      %v10441 = vsel %vm797, %v10391, %v10393
      %v10442 = vsel %vm797, %v10393, %v10395
      %v10443 = vsel %vm797, %v10395, %v10397
      %v10444 = vsel %vm797, %v10399, %v10401
      %v10445 = vsel %vm797, %v10401, %v10403
      %v10446 = vsel %vm797, %v10403, %v10405
      %v10447 = vsel %vm797, %v10405, %v10407
      %v10448 = vsel %vm797, %v10407, %v10409
      %v10449 = vsel %vm797, %v10409, %v10411
      %v10450 = vsel %vm797, %v10411, %v10413
      %v10451 = vsel %vm797, %v10415, %v10417
      %v10452 = vsel %vm797, %v10417, %v10419
      %v10453 = vsel %vm797, %v10419, %v10421
      %v10454 = vsel %vm797, %v10421, %v10423
      %v10455 = vsel %vm797, %v10423, %v10425
      %v10456 = vsel %vm797, %v10425, %v10427
      %v10457 = vsel %vm797, %v10427, %v10429
      %v10490 = vsel %vm797, %v10381, 0.0
      %v10491 = vsel %vm797, %v10397, 0.0
      %v10492 = vsel %vm797, %v10413, 0.0
      %v10493 = vsel %vm797, %v10429, 0.0
      %v10494 = vsel %vm609, %v10430, 0.0
      %v10495 = vsel %vm610, %v10431, 0.0
      %v10496 = vsel %vm611, %v10432, 0.0
      %v10497 = vsel %vm612, %v10433, 0.0
      %v10498 = vsel %vm613, %v10434, 0.0
      %v10499 = vsel %vm614, %v10435, 0.0
      %v10500 = vsel %vm615, %v10436, 0.0
      %v10501 = vsel %vm616, %v10490, 0.0
      %v10502 = vsel %vm609, %v10437, 0.0
      %v10503 = vsel %vm610, %v10438, 0.0
      %v10504 = vsel %vm611, %v10439, 0.0
      %v10505 = vsel %vm612, %v10440, 0.0
      %v10506 = vsel %vm613, %v10441, 0.0
      %v10507 = vsel %vm614, %v10442, 0.0
      %v10508 = vsel %vm615, %v10443, 0.0
      %v10509 = vsel %vm616, %v10491, 0.0
      %v10510 = vsel %vm609, %v10444, 0.0
      %v10511 = vsel %vm610, %v10445, 0.0
      %v10512 = vsel %vm611, %v10446, 0.0
      %v10513 = vsel %vm612, %v10447, 0.0
      %v10514 = vsel %vm613, %v10448, 0.0
      %v10515 = vsel %vm614, %v10449, 0.0
      %v10516 = vsel %vm615, %v10450, 0.0
      %v10517 = vsel %vm616, %v10492, 0.0
      %v10518 = vsel %vm609, %v10451, 0.0
      %v10519 = vsel %vm610, %v10452, 0.0
      %v10520 = vsel %vm611, %v10453, 0.0
      %v10521 = vsel %vm612, %v10454, 0.0
      %v10522 = vsel %vm613, %v10455, 0.0
      %v10523 = vsel %vm614, %v10456, 0.0
      %v10524 = vsel %vm615, %v10457, 0.0
      %v10525 = vsel %vm616, %v10493, 0.0
      %10527 = vset.pattern.permute.xlu0 0
      %10528 = vperm.xlu0 %10527, %v9277
      %v10529 = vpop.permute.xlu0 %10528
      %v10533 = vcombine.high %v9275, %v9275
      %v10535 = vsel %vm551, %v9276, 0
      %10537 = vmatprep.subr.mxu0 %v9439
      %10538 = vmatpush1.msra.mxu0 %v9438
      %10539 = vmatprep.subr.mxu0 %v9447
      %10540 = vmatpush1.msra.mxu0 %v9446
      %10541 = vmatprep.subr.mxu0 %v9455
      %10542 = vmatpush1.msra.mxu0 %v9454
      %10543 = vmatprep.subr.mxu0 %v9463
      %10544 = vmatpush1.msra.mxu0 %v9462
      %10545 = vmatprep.subr.mxu0 %v9534
      %10546 = vmatpush1.msra.mxu0 %v9594
      %10547 = vmatprep.subr.mxu0 %v9541
      %10548 = vmatpush1.msra.mxu0 %v9595
      %10549 = vmatprep.subr.mxu0 %v9548
      %10550 = vmatpush1.msra.mxu0 %v9596
      %10551 = vmatprep.subr.mxu0 %v9555
      %10552 = vmatpush1.msra.mxu0 %v9597
      %10553 = vmatprep.subr.mxu0 %v9727
      %10554 = vmatpush1.msra.mxu0 %v9726
      %10555 = vmatprep.subr.mxu0 %v9735
      %10556 = vmatpush1.msra.mxu0 %v9734
      %10557 = vmatprep.subr.mxu0 %v9743
      %10558 = vmatpush1.msra.mxu0 %v9742
      %10559 = vmatprep.subr.mxu0 %v9751
      %10560 = vmatpush1.msra.mxu0 %v9750
      %10561 = vmatprep.subr.mxu0 %v9887
      %10562 = vmatpush1.msra.mxu0 %v9886
      %10563 = vmatprep.subr.mxu0 %v9895
      %10564 = vmatpush1.msra.mxu0 %v9894
      %10565 = vmatprep.subr.mxu0 %v9903
      %10566 = vmatpush1.msra.mxu0 %v9902
      %10567 = vmatprep.subr.mxu0 %v9911
      %10568 = vmatpush1.msra.mxu0 %v9910
      %10569 = vmatprep.subr.mxu0 %v9244
      %10570 = vmatpush1.msra.mxu0 %v9243
      %10571 = vmatprep.subr.mxu0 %v9252
      %10572 = vmatpush1.msra.mxu0 %v9251
      %10573 = vmatprep.subr.mxu0 %v9260
      %10574 = vmatpush1.msra.mxu0 %v9259
      %10575 = vmatprep.subr.mxu0 %v9268
      %10576 = vmatpush1.msra.mxu0 %v9267
      %10577 = vmatprep.subr.mxu0 %v10047
      %10578 = vmatpush1.msra.mxu0 %v10046
      %10579 = vmatprep.subr.mxu0 %v10055
      %10580 = vmatpush1.msra.mxu0 %v10054
      %10581 = vmatprep.subr.mxu0 %v10063
      %10582 = vmatpush1.msra.mxu0 %v10062
      %10583 = vmatprep.subr.mxu0 %v10071
      %10584 = vmatpush1.msra.mxu0 %v10070
      %10585 = vmatprep.subr.mxu0 %v10207
      %10586 = vmatpush1.msra.mxu0 %v10206
      %10587 = vmatprep.subr.mxu0 %v10215
      %10588 = vmatpush1.msra.mxu0 %v10214
      %10589 = vmatprep.subr.mxu0 %v10223
      %10590 = vmatpush1.msra.mxu0 %v10222
      %10591 = vmatprep.subr.mxu0 %v10231
      %10592 = vmatpush1.msra.mxu0 %v10230
      %10593 = vmatprep.subr.mxu0 %v10303
      %10594 = vmatpush1.msra.mxu0 %v10302
      %10595 = vmatprep.subr.mxu0 %v10310
      %10596 = vmatpush1.msra.mxu0 %v10309
      %10597 = vmatprep.subr.mxu0 %v10317
      %10598 = vmatpush1.msra.mxu0 %v10316
      %10599 = vmatprep.subr.mxu0 %v10324
      %10600 = vmatpush1.msra.mxu0 %v10323
      %10601 = vmatprep.mubr.f32.mxu0 %v10533
      %10602 = vmatmul.mubr.f32.gmra.mrb[0].mxu0 %v9275
      %v10603 = vpop.f32.mrb[0].mxu0
      %v10604 = vadd.f32 %v10529, %v10603
      %v10605 = vpop.f32.mrb[0].mxu0
      %v10606 = vadd.f32 %v10529, %v10605
      %10607 = vdwg.mxu0
      %10608 = vmatprep.subr.mxu0 %v10495
      %10609 = vmatpush1.msra.mxu0 %v10494
      %10610 = vmatprep.subr.mxu0 %v10503
      %10611 = vmatpush1.msra.mxu0 %v10502
      %10612 = vmatprep.subr.mxu0 %v10511
      %10613 = vmatpush1.msra.mxu0 %v10510
      %10614 = vmatprep.subr.mxu0 %v10519
      %10615 = vmatpush1.msra.mxu0 %v10518
      %10616 = vmatprep.subr.mxu0 0.0
      %10617 = vmatpush1.msra.mxu0 0.0
      %10618 = vmatprep.subr.mxu0 0.0
      %10619 = vmatpush1.msra.mxu0 0.0
      %10620 = vmatprep.subr.mxu0 0.0
      %10621 = vmatpush1.msra.mxu0 0.0
      %10622 = vmatprep.subr.mxu0 0.0
      %10623 = vmatpush1.msra.mxu0 0.0
      %10624 = vmatprep.subr.mxu0 0.0
      %10625 = vmatpush1.msra.mxu0 0.0
      %10626 = vmatprep.subr.mxu0 0.0
      %10627 = vmatpush1.msra.mxu0 0.0
      %10628 = vmatprep.subr.mxu0 0.0
      %10629 = vmatpush1.msra.mxu0 0.0
      %10630 = vmatprep.subr.mxu0 0.0
      %10631 = vmatpush1.msra.mxu0 0.0
      %10632 = vmatprep.subr.mxu0 0.0
      %10633 = vmatpush1.msra.mxu0 0.0
      %10634 = vmatprep.subr.mxu0 0.0
      %10635 = vmatpush1.msra.mxu0 0.0
      %10636 = vmatprep.subr.mxu0 0.0
      %10637 = vmatpush1.msra.mxu0 0.0
      %10638 = vmatprep.subr.mxu0 0.0
      %10639 = vmatpush1.msra.mxu0 0.0
      %10640 = vmatprep.subr.mxu0 0.0
      %10641 = vmatpush1.msra.mxu0 0.0
      %10642 = vmatprep.subr.mxu0 0.0
      %10643 = vmatpush1.msra.mxu0 0.0
      %10644 = vmatprep.subr.mxu0 0.0
      %10645 = vmatpush1.msra.mxu0 0.0
      %10646 = vmatprep.subr.mxu0 0.0
      %10647 = vmatpush1.msra.mxu0 0.0
      %10648 = vmatprep.subr.mxu0 0.0
      %10649 = vmatpush1.msra.mxu0 0.0
      %10650 = vmatprep.subr.mxu0 0.0
      %10651 = vmatpush1.msra.mxu0 0.0
      %10652 = vmatprep.subr.mxu0 0.0
      %10653 = vmatpush1.msra.mxu0 0.0
      %10654 = vmatprep.subr.mxu0 0.0
      %10655 = vmatpush1.msra.mxu0 0.0
      %10656 = vmatprep.subr.mxu0 0.0
      %10657 = vmatpush1.msra.mxu0 0.0
      %10658 = vmatprep.subr.mxu0 0.0
      %10659 = vmatpush1.msra.mxu0 0.0
      %10660 = vmatprep.subr.mxu0 0.0
      %10661 = vmatpush1.msra.mxu0 0.0
      %10662 = vmatprep.subr.mxu0 0.0
      %10663 = vmatpush1.msra.mxu0 0.0
      %10664 = vmatprep.subr.mxu0 0.0
      %10665 = vmatpush1.msra.mxu0 0.0
      %10666 = vmatprep.subr.mxu0 0.0
      %10667 = vmatpush1.msra.mxu0 0.0
      %10668 = vmatprep.subr.mxu0 0.0
      %10669 = vmatpush1.msra.mxu0 0.0
      %10670 = vmatprep.subr.mxu0 0.0
      %10671 = vmatpush1.msra.mxu0 0.0
      %10672 = vmatprep.mubr.f32.mxu0 0.0
      %10673 = vmatmul.mubr.f32.gmra.mrb[0].mxu0 %v10535
      %v10674 = vpop.f32.mrb[0].mxu0
      %v10675 = vadd.f32 %v10604, %v10674
      %v10676 = vpop.f32.mrb[0].mxu0
      %v10677 = vadd.f32 %v10606, %v10676
      %10678 = vdwg.mxu0
      %10679 = vmatprep.subr.mxu0 %v9441
      %10680 = vmatpush1.msra.mxu0 %v9440
      %10681 = vmatprep.subr.mxu0 %v9449
      %10682 = vmatpush1.msra.mxu0 %v9448
      %10683 = vmatprep.subr.mxu0 %v9457
      %10684 = vmatpush1.msra.mxu0 %v9456
      %10685 = vmatprep.subr.mxu0 %v9465
      %10686 = vmatpush1.msra.mxu0 %v9464
      %10687 = vmatprep.subr.mxu0 %v9536
      %10688 = vmatpush1.msra.mxu0 %v9535
      %10689 = vmatprep.subr.mxu0 %v9543
      %10690 = vmatpush1.msra.mxu0 %v9542
      %10691 = vmatprep.subr.mxu0 %v9550
      %10692 = vmatpush1.msra.mxu0 %v9549
      %10693 = vmatprep.subr.mxu0 %v9557
      %10694 = vmatpush1.msra.mxu0 %v9556
      %10695 = vmatprep.subr.mxu0 %v9729
      %10696 = vmatpush1.msra.mxu0 %v9728
      %10697 = vmatprep.subr.mxu0 %v9737
      %10698 = vmatpush1.msra.mxu0 %v9736
      %10699 = vmatprep.subr.mxu0 %v9745
      %10700 = vmatpush1.msra.mxu0 %v9744
      %10701 = vmatprep.subr.mxu0 %v9753
      %10702 = vmatpush1.msra.mxu0 %v9752
      %10703 = vmatprep.subr.mxu0 %v9889
      %10704 = vmatpush1.msra.mxu0 %v9888
      %10705 = vmatprep.subr.mxu0 %v9897
      %10706 = vmatpush1.msra.mxu0 %v9896
      %10707 = vmatprep.subr.mxu0 %v9905
      %10708 = vmatpush1.msra.mxu0 %v9904
      %10709 = vmatprep.subr.mxu0 %v9913
      %10710 = vmatpush1.msra.mxu0 %v9912
      %10711 = vmatprep.subr.mxu0 %v9246
      %10712 = vmatpush1.msra.mxu0 %v9245
      %10713 = vmatprep.subr.mxu0 %v9254
      %10714 = vmatpush1.msra.mxu0 %v9253
      %10715 = vmatprep.subr.mxu0 %v9262
      %10716 = vmatpush1.msra.mxu0 %v9261
      %10717 = vmatprep.subr.mxu0 %v9270
      %10718 = vmatpush1.msra.mxu0 %v9269
      %10719 = vmatprep.subr.mxu0 %v10049
      %10720 = vmatpush1.msra.mxu0 %v10048
      %10721 = vmatprep.subr.mxu0 %v10057
      %10722 = vmatpush1.msra.mxu0 %v10056
      %10723 = vmatprep.subr.mxu0 %v10065
      %10724 = vmatpush1.msra.mxu0 %v10064
      %10725 = vmatprep.subr.mxu0 %v10073
      %10726 = vmatpush1.msra.mxu0 %v10072
      %10727 = vmatprep.subr.mxu0 %v10209
      %10728 = vmatpush1.msra.mxu0 %v10208
      %10729 = vmatprep.subr.mxu0 %v10217
      %10730 = vmatpush1.msra.mxu0 %v10216
      %10731 = vmatprep.subr.mxu0 %v10225
      %10732 = vmatpush1.msra.mxu0 %v10224
      %10733 = vmatprep.subr.mxu0 %v10233
      %10734 = vmatpush1.msra.mxu0 %v10232
      %10735 = vmatprep.subr.mxu0 %v10305
      %10736 = vmatpush1.msra.mxu0 %v10304
      %10737 = vmatprep.subr.mxu0 %v10312
      %10738 = vmatpush1.msra.mxu0 %v10311
      %10739 = vmatprep.subr.mxu0 %v10319
      %10740 = vmatpush1.msra.mxu0 %v10318
      %10741 = vmatprep.subr.mxu0 %v10326
      %10742 = vmatpush1.msra.mxu0 %v10325
      %10743 = vmatprep.mubr.f32.mxu0 %v10533
      %10744 = vmatmul.mubr.f32.gmra.mrb[0].mxu0 %v9275
      %v10745 = vpop.f32.mrb[0].mxu0
      %v10746 = vadd.f32 %v10529, %v10745
      %v10747 = vpop.f32.mrb[0].mxu0
      %v10748 = vadd.f32 %v10529, %v10747
      %10749 = vdwg.mxu0
      %10750 = vmatprep.subr.mxu0 %v10497
      %10751 = vmatpush1.msra.mxu0 %v10496
      %10752 = vmatprep.subr.mxu0 %v10505
      %10753 = vmatpush1.msra.mxu0 %v10504
      %10754 = vmatprep.subr.mxu0 %v10513
      %10755 = vmatpush1.msra.mxu0 %v10512
      %10756 = vmatprep.subr.mxu0 %v10521
      %10757 = vmatpush1.msra.mxu0 %v10520
      %10758 = vmatprep.subr.mxu0 0.0
      %10759 = vmatpush1.msra.mxu0 0.0
      %10760 = vmatprep.subr.mxu0 0.0
      %10761 = vmatpush1.msra.mxu0 0.0
      %10762 = vmatprep.subr.mxu0 0.0
      %10763 = vmatpush1.msra.mxu0 0.0
      %10764 = vmatprep.subr.mxu0 0.0
      %10765 = vmatpush1.msra.mxu0 0.0
      %10766 = vmatprep.subr.mxu0 0.0
      %10767 = vmatpush1.msra.mxu0 0.0
      %10768 = vmatprep.subr.mxu0 0.0
      %10769 = vmatpush1.msra.mxu0 0.0
      %10770 = vmatprep.subr.mxu0 0.0
      %10771 = vmatpush1.msra.mxu0 0.0
      %10772 = vmatprep.subr.mxu0 0.0
      %10773 = vmatpush1.msra.mxu0 0.0
      %10774 = vmatprep.subr.mxu0 0.0
      %10775 = vmatpush1.msra.mxu0 0.0
      %10776 = vmatprep.subr.mxu0 0.0
      %10777 = vmatpush1.msra.mxu0 0.0
      %10778 = vmatprep.subr.mxu0 0.0
      %10779 = vmatpush1.msra.mxu0 0.0
      %10780 = vmatprep.subr.mxu0 0.0
      %10781 = vmatpush1.msra.mxu0 0.0
      %10782 = vmatprep.subr.mxu0 0.0
      %10783 = vmatpush1.msra.mxu0 0.0
      %10784 = vmatprep.subr.mxu0 0.0
      %10785 = vmatpush1.msra.mxu0 0.0
      %10786 = vmatprep.subr.mxu0 0.0
      %10787 = vmatpush1.msra.mxu0 0.0
      %10788 = vmatprep.subr.mxu0 0.0
      %10789 = vmatpush1.msra.mxu0 0.0
      %10790 = vmatprep.subr.mxu0 0.0
      %10791 = vmatpush1.msra.mxu0 0.0
      %10792 = vmatprep.subr.mxu0 0.0
      %10793 = vmatpush1.msra.mxu0 0.0
      %10794 = vmatprep.subr.mxu0 0.0
      %10795 = vmatpush1.msra.mxu0 0.0
      %10796 = vmatprep.subr.mxu0 0.0
      %10797 = vmatpush1.msra.mxu0 0.0
      %10798 = vmatprep.subr.mxu0 0.0
      %10799 = vmatpush1.msra.mxu0 0.0
      %10800 = vmatprep.subr.mxu0 0.0
      %10801 = vmatpush1.msra.mxu0 0.0
      %10802 = vmatprep.subr.mxu0 0.0
      %10803 = vmatpush1.msra.mxu0 0.0
      %10804 = vmatprep.subr.mxu0 0.0
      %10805 = vmatpush1.msra.mxu0 0.0
      %10806 = vmatprep.subr.mxu0 0.0
      %10807 = vmatpush1.msra.mxu0 0.0
      %10808 = vmatprep.subr.mxu0 0.0
      %10809 = vmatpush1.msra.mxu0 0.0
      %10810 = vmatprep.subr.mxu0 0.0
      %10811 = vmatpush1.msra.mxu0 0.0
      %10812 = vmatprep.subr.mxu0 0.0
      %10813 = vmatpush1.msra.mxu0 0.0
      %10814 = vmatprep.mubr.f32.mxu0 0.0
      %10815 = vmatmul.mubr.f32.gmra.mrb[0].mxu0 %v10535
      %v10816 = vpop.f32.mrb[0].mxu0
      %v10817 = vadd.f32 %v10746, %v10816
      %v10818 = vpop.f32.mrb[0].mxu0
      %v10819 = vadd.f32 %v10748, %v10818
      %10820 = vdwg.mxu0
      %10821 = vmatprep.subr.mxu0 %v9443
      %10822 = vmatpush1.msra.mxu0 %v9442
      %10823 = vmatprep.subr.mxu0 %v9451
      %10824 = vmatpush1.msra.mxu0 %v9450
      %10825 = vmatprep.subr.mxu0 %v9459
      %10826 = vmatpush1.msra.mxu0 %v9458
      %10827 = vmatprep.subr.mxu0 %v9467
      %10828 = vmatpush1.msra.mxu0 %v9466
      %10829 = vmatprep.subr.mxu0 %v9538
      %10830 = vmatpush1.msra.mxu0 %v9537
      %10831 = vmatprep.subr.mxu0 %v9545
      %10832 = vmatpush1.msra.mxu0 %v9544
      %10833 = vmatprep.subr.mxu0 %v9552
      %10834 = vmatpush1.msra.mxu0 %v9551
      %10835 = vmatprep.subr.mxu0 %v9559
      %10836 = vmatpush1.msra.mxu0 %v9558
      %10837 = vmatprep.subr.mxu0 %v9731
      %10838 = vmatpush1.msra.mxu0 %v9730
      %10839 = vmatprep.subr.mxu0 %v9739
      %10840 = vmatpush1.msra.mxu0 %v9738
      %10841 = vmatprep.subr.mxu0 %v9747
      %10842 = vmatpush1.msra.mxu0 %v9746
      %10843 = vmatprep.subr.mxu0 %v9755
      %10844 = vmatpush1.msra.mxu0 %v9754
      %10845 = vmatprep.subr.mxu0 %v9891
      %10846 = vmatpush1.msra.mxu0 %v9890
      %10847 = vmatprep.subr.mxu0 %v9899
      %10848 = vmatpush1.msra.mxu0 %v9898
      %10849 = vmatprep.subr.mxu0 %v9907
      %10850 = vmatpush1.msra.mxu0 %v9906
      %10851 = vmatprep.subr.mxu0 %v9915
      %10852 = vmatpush1.msra.mxu0 %v9914
      %10853 = vmatprep.subr.mxu0 %v9248
      %10854 = vmatpush1.msra.mxu0 %v9247
      %10855 = vmatprep.subr.mxu0 %v9256
      %10856 = vmatpush1.msra.mxu0 %v9255
      %10857 = vmatprep.subr.mxu0 %v9264
      %10858 = vmatpush1.msra.mxu0 %v9263
      %10859 = vmatprep.subr.mxu0 %v9272
      %10860 = vmatpush1.msra.mxu0 %v9271
      %10861 = vmatprep.subr.mxu0 %v10051
      %10862 = vmatpush1.msra.mxu0 %v10050
      %10863 = vmatprep.subr.mxu0 %v10059
      %10864 = vmatpush1.msra.mxu0 %v10058
      %10865 = vmatprep.subr.mxu0 %v10067
      %10866 = vmatpush1.msra.mxu0 %v10066
      %10867 = vmatprep.subr.mxu0 %v10075
      %10868 = vmatpush1.msra.mxu0 %v10074
      %10869 = vmatprep.subr.mxu0 %v10211
      %10870 = vmatpush1.msra.mxu0 %v10210
      %10871 = vmatprep.subr.mxu0 %v10219
      %10872 = vmatpush1.msra.mxu0 %v10218
      %10873 = vmatprep.subr.mxu0 %v10227
      %10874 = vmatpush1.msra.mxu0 %v10226
      %10875 = vmatprep.subr.mxu0 %v10235
      %10876 = vmatpush1.msra.mxu0 %v10234
      %10877 = vmatprep.subr.mxu0 %v10307
      %10878 = vmatpush1.msra.mxu0 %v10306
      %10879 = vmatprep.subr.mxu0 %v10314
      %10880 = vmatpush1.msra.mxu0 %v10313
      %10881 = vmatprep.subr.mxu0 %v10321
      %10882 = vmatpush1.msra.mxu0 %v10320
      %10883 = vmatprep.subr.mxu0 %v10328
      %10884 = vmatpush1.msra.mxu0 %v10327
      %10885 = vmatprep.mubr.f32.mxu0 %v10533
      %10886 = vmatmul.mubr.f32.gmra.mrb[0].mxu0 %v9275
      %v10887 = vpop.f32.mrb[0].mxu0
      %v10888 = vadd.f32 %v10529, %v10887
      %v10889 = vpop.f32.mrb[0].mxu0
      %v10890 = vadd.f32 %v10529, %v10889
      %10891 = vdwg.mxu0
      %10892 = vmatprep.subr.mxu0 %v10499
      %10893 = vmatpush1.msra.mxu0 %v10498
      %10894 = vmatprep.subr.mxu0 %v10507
      %10895 = vmatpush1.msra.mxu0 %v10506
      %10896 = vmatprep.subr.mxu0 %v10515
      %10897 = vmatpush1.msra.mxu0 %v10514
      %10898 = vmatprep.subr.mxu0 %v10523
      %10899 = vmatpush1.msra.mxu0 %v10522
      %10900 = vmatprep.subr.mxu0 0.0
      %10901 = vmatpush1.msra.mxu0 0.0
      %10902 = vmatprep.subr.mxu0 0.0
      %10903 = vmatpush1.msra.mxu0 0.0
      %10904 = vmatprep.subr.mxu0 0.0
      %10905 = vmatpush1.msra.mxu0 0.0
      %10906 = vmatprep.subr.mxu0 0.0
      %10907 = vmatpush1.msra.mxu0 0.0
      %10908 = vmatprep.subr.mxu0 0.0
      %10909 = vmatpush1.msra.mxu0 0.0
      %10910 = vmatprep.subr.mxu0 0.0
      %10911 = vmatpush1.msra.mxu0 0.0
      %10912 = vmatprep.subr.mxu0 0.0
      %10913 = vmatpush1.msra.mxu0 0.0
      %10914 = vmatprep.subr.mxu0 0.0
      %10915 = vmatpush1.msra.mxu0 0.0
      %10916 = vmatprep.subr.mxu0 0.0
      %10917 = vmatpush1.msra.mxu0 0.0
      %10918 = vmatprep.subr.mxu0 0.0
      %10919 = vmatpush1.msra.mxu0 0.0
      %10920 = vmatprep.subr.mxu0 0.0
      %10921 = vmatpush1.msra.mxu0 0.0
      %10922 = vmatprep.subr.mxu0 0.0
      %10923 = vmatpush1.msra.mxu0 0.0
      %10924 = vmatprep.subr.mxu0 0.0
      %10925 = vmatpush1.msra.mxu0 0.0
      %10926 = vmatprep.subr.mxu0 0.0
      %10927 = vmatpush1.msra.mxu0 0.0
      %10928 = vmatprep.subr.mxu0 0.0
      %10929 = vmatpush1.msra.mxu0 0.0
      %10930 = vmatprep.subr.mxu0 0.0
      %10931 = vmatpush1.msra.mxu0 0.0
      %10932 = vmatprep.subr.mxu0 0.0
      %10933 = vmatpush1.msra.mxu0 0.0
      %10934 = vmatprep.subr.mxu0 0.0
      %10935 = vmatpush1.msra.mxu0 0.0
      %10936 = vmatprep.subr.mxu0 0.0
      %10937 = vmatpush1.msra.mxu0 0.0
      %10938 = vmatprep.subr.mxu0 0.0
      %10939 = vmatpush1.msra.mxu0 0.0
      %10940 = vmatprep.subr.mxu0 0.0
      %10941 = vmatpush1.msra.mxu0 0.0
      %10942 = vmatprep.subr.mxu0 0.0
      %10943 = vmatpush1.msra.mxu0 0.0
      %10944 = vmatprep.subr.mxu0 0.0
      %10945 = vmatpush1.msra.mxu0 0.0
      %10946 = vmatprep.subr.mxu0 0.0
      %10947 = vmatpush1.msra.mxu0 0.0
      %10948 = vmatprep.subr.mxu0 0.0
      %10949 = vmatpush1.msra.mxu0 0.0
      %10950 = vmatprep.subr.mxu0 0.0
      %10951 = vmatpush1.msra.mxu0 0.0
      %10952 = vmatprep.subr.mxu0 0.0
      %10953 = vmatpush1.msra.mxu0 0.0
      %10954 = vmatprep.subr.mxu0 0.0
      %10955 = vmatpush1.msra.mxu0 0.0
      %10956 = vmatprep.mubr.f32.mxu0 0.0
      %10957 = vmatmul.mubr.f32.gmra.mrb[0].mxu0 %v10535
      %v10958 = vpop.f32.mrb[0].mxu0
      %v10959 = vadd.f32 %v10888, %v10958
      %v10960 = vpop.f32.mrb[0].mxu0
      %v10961 = vadd.f32 %v10890, %v10960
      %10962 = vdwg.mxu0
      %10963 = vmatprep.subr.mxu0 %v9445
      %10964 = vmatpush1.msra.mxu0 %v9444
      %10965 = vmatprep.subr.mxu0 %v9453
      %10966 = vmatpush1.msra.mxu0 %v9452
      %10967 = vmatprep.subr.mxu0 %v9461
      %10968 = vmatpush1.msra.mxu0 %v9460
      %10969 = vmatprep.subr.mxu0 %v9469
      %10970 = vmatpush1.msra.mxu0 %v9468
      %10971 = vmatprep.subr.mxu0 %v9540
      %10972 = vmatpush1.msra.mxu0 %v9539
      %10973 = vmatprep.subr.mxu0 %v9547
      %10974 = vmatpush1.msra.mxu0 %v9546
      %10975 = vmatprep.subr.mxu0 %v9554
      %10976 = vmatpush1.msra.mxu0 %v9553
      %10977 = vmatprep.subr.mxu0 %v9561
      %10978 = vmatpush1.msra.mxu0 %v9560
      %10979 = vmatprep.subr.mxu0 %v9733
      %10980 = vmatpush1.msra.mxu0 %v9732
      %10981 = vmatprep.subr.mxu0 %v9741
      %10982 = vmatpush1.msra.mxu0 %v9740
      %10983 = vmatprep.subr.mxu0 %v9749
      %10984 = vmatpush1.msra.mxu0 %v9748
      %10985 = vmatprep.subr.mxu0 %v9757
      %10986 = vmatpush1.msra.mxu0 %v9756
      %10987 = vmatprep.subr.mxu0 %v9893
      %10988 = vmatpush1.msra.mxu0 %v9892
      %10989 = vmatprep.subr.mxu0 %v9901
      %10990 = vmatpush1.msra.mxu0 %v9900
      %10991 = vmatprep.subr.mxu0 %v9909
      %10992 = vmatpush1.msra.mxu0 %v9908
      %10993 = vmatprep.subr.mxu0 %v9917
      %10994 = vmatpush1.msra.mxu0 %v9916
      %10995 = vmatprep.subr.mxu0 %v9250
      %10996 = vmatpush1.msra.mxu0 %v9249
      %10997 = vmatprep.subr.mxu0 %v9258
      %10998 = vmatpush1.msra.mxu0 %v9257
      %10999 = vmatprep.subr.mxu0 %v9266
      %11000 = vmatpush1.msra.mxu0 %v9265
      %11001 = vmatprep.subr.mxu0 %v9274
      %11002 = vmatpush1.msra.mxu0 %v9273
      %11003 = vmatprep.subr.mxu0 %v10053
      %11004 = vmatpush1.msra.mxu0 %v10052
      %11005 = vmatprep.subr.mxu0 %v10061
      %11006 = vmatpush1.msra.mxu0 %v10060
      %11007 = vmatprep.subr.mxu0 %v10069
      %11008 = vmatpush1.msra.mxu0 %v10068
      %11009 = vmatprep.subr.mxu0 %v10077
      %11010 = vmatpush1.msra.mxu0 %v10076
      %11011 = vmatprep.subr.mxu0 %v10213
      %11012 = vmatpush1.msra.mxu0 %v10212
      %11013 = vmatprep.subr.mxu0 %v10221
      %11014 = vmatpush1.msra.mxu0 %v10220
      %11015 = vmatprep.subr.mxu0 %v10229
      %11016 = vmatpush1.msra.mxu0 %v10228
      %11017 = vmatprep.subr.mxu0 %v10237
      %11018 = vmatpush1.msra.mxu0 %v10236
      %11019 = vmatprep.subr.mxu0 %v10362
      %11020 = vmatpush1.msra.mxu0 %v10308
      %11021 = vmatprep.subr.mxu0 %v10363
      %11022 = vmatpush1.msra.mxu0 %v10315
      %11023 = vmatprep.subr.mxu0 %v10364
      %11024 = vmatpush1.msra.mxu0 %v10322
      %11025 = vmatprep.subr.mxu0 %v10365
      %11026 = vmatpush1.msra.mxu0 %v10329
      %11027 = vmatprep.mubr.f32.mxu0 %v10533
      %11028 = vmatmul.mubr.f32.gmra.mrb[0].mxu0 %v9275
      %v11029 = vpop.f32.mrb[0].mxu0
      %v11030 = vadd.f32 %v10529, %v11029
      %v11031 = vpop.f32.mrb[0].mxu0
      %v11032 = vadd.f32 %v10529, %v11031
      %11033 = vdwg.mxu0
      %11034 = vmatprep.subr.mxu0 %v10501
      %11035 = vmatpush1.msra.mxu0 %v10500
      %11036 = vmatprep.subr.mxu0 %v10509
      %11037 = vmatpush1.msra.mxu0 %v10508
      %11038 = vmatprep.subr.mxu0 %v10517
      %11039 = vmatpush1.msra.mxu0 %v10516
      %11040 = vmatprep.subr.mxu0 %v10525
      %11041 = vmatpush1.msra.mxu0 %v10524
      %11042 = vmatprep.subr.mxu0 0.0
      %11043 = vmatpush1.msra.mxu0 0.0
      %11044 = vmatprep.subr.mxu0 0.0
      %11045 = vmatpush1.msra.mxu0 0.0
      %11046 = vmatprep.subr.mxu0 0.0
      %11047 = vmatpush1.msra.mxu0 0.0
      %11048 = vmatprep.subr.mxu0 0.0
      %11049 = vmatpush1.msra.mxu0 0.0
      %11050 = vmatprep.subr.mxu0 0.0
      %11051 = vmatpush1.msra.mxu0 0.0
      %11052 = vmatprep.subr.mxu0 0.0
      %11053 = vmatpush1.msra.mxu0 0.0
      %11054 = vmatprep.subr.mxu0 0.0
      %11055 = vmatpush1.msra.mxu0 0.0
      %11056 = vmatprep.subr.mxu0 0.0
      %11057 = vmatpush1.msra.mxu0 0.0
      %11058 = vmatprep.subr.mxu0 0.0
      %11059 = vmatpush1.msra.mxu0 0.0
      %11060 = vmatprep.subr.mxu0 0.0
      %11061 = vmatpush1.msra.mxu0 0.0
      %11062 = vmatprep.subr.mxu0 0.0
      %11063 = vmatpush1.msra.mxu0 0.0
      %11064 = vmatprep.subr.mxu0 0.0
      %11065 = vmatpush1.msra.mxu0 0.0
      %11066 = vmatprep.subr.mxu0 0.0
      %11067 = vmatpush1.msra.mxu0 0.0
      %11068 = vmatprep.subr.mxu0 0.0
      %11069 = vmatpush1.msra.mxu0 0.0
      %11070 = vmatprep.subr.mxu0 0.0
      %11071 = vmatpush1.msra.mxu0 0.0
      %11072 = vmatprep.subr.mxu0 0.0
      %11073 = vmatpush1.msra.mxu0 0.0
      %11074 = vmatprep.subr.mxu0 0.0
      %11075 = vmatpush1.msra.mxu0 0.0
      %11076 = vmatprep.subr.mxu0 0.0
      %11077 = vmatpush1.msra.mxu0 0.0
      %11078 = vmatprep.subr.mxu0 0.0
      %11079 = vmatpush1.msra.mxu0 0.0
      %11080 = vmatprep.subr.mxu0 0.0
      %11081 = vmatpush1.msra.mxu0 0.0
      %11082 = vmatprep.subr.mxu0 0.0
      %11083 = vmatpush1.msra.mxu0 0.0
      %11084 = vmatprep.subr.mxu0 0.0
      %11085 = vmatpush1.msra.mxu0 0.0
      %11086 = vmatprep.subr.mxu0 0.0
      %11087 = vmatpush1.msra.mxu0 0.0
      %11088 = vmatprep.subr.mxu0 0.0
      %11089 = vmatpush1.msra.mxu0 0.0
      %11090 = vmatprep.subr.mxu0 0.0
      %11091 = vmatpush1.msra.mxu0 0.0
      %11092 = vmatprep.subr.mxu0 0.0
      %11093 = vmatpush1.msra.mxu0 0.0
      %11094 = vmatprep.subr.mxu0 0.0
      %11095 = vmatpush1.msra.mxu0 0.0
      %11096 = vmatprep.subr.mxu0 0.0
      %11097 = vmatpush1.msra.mxu0 0.0
      %11098 = vmatprep.mubr.f32.mxu0 0.0
      %11099 = vmatmul.mubr.f32.gmra.mrb[0].mxu0 %v10535
      %v11100 = vpop.f32.mrb[0].mxu0
      %v11101 = vadd.f32 %v11030, %v11100
      %v11102 = vpop.f32.mrb[0].mxu0
      %v11103 = vadd.f32 %v11032, %v11102
      %11104 = vdwg.mxu0
      %v11113 = vcombine.low %v10675, %v10677
      %v11114 = vcombine.low %v10817, %v10819
      %v11115 = vcombine.low %v10959, %v10961
      %v11116 = vcombine.low %v11101, %v11103
      %11121 = vst [vmem:[%s332] sm:$0xff] %v11113
      %11122 = vst [vmem:[%s332 + $0x8] sm:$0xff] %v11114
      %11123 = vst [vmem:[%s332 + $0x10] sm:$0xff] %v11115
      %11124 = vst [vmem:[%s332 + $0x18] sm:$0xff] %v11116
      %p11125 = scmp.lt.s32.totalorder %s20, 1
      %s11126 = scalar_select %p11125, %s20, 1
      %s11127 = smul.addr %s11126, 8
      %s11128 = smul.addr %s11127, 4
      %s11129 = scalar_lea.vmem %s9, %s11128
      // Predicated region
      $region57: #{decrease_vdsr_forward.3} parent=55 // pred_check
        %p11130 = pneg %p232
      $region58: #{decrease_vdsr_forward.3} parent=55 // pred_check_branch
        %11132 = sbr.rel (%p11130) target = $region60
      $region59: #{decrease_vdsr_forward.3} parent=55 // pred_region
        _
      $region60: #{decrease_vdsr_forward.3} parent=55 // pred_fallthru
        _
    $region56: #{decrease_vdsr_forward.3} parent=5 // pred_fallthru
      _
    %p11133 = scmp.le.s32.totalorder 2, %s15
    // Predicated region
    $region61: #{decrease_vdsr_forward.3} parent=5 // pred_check
      %p11134 = pneg %p11133
    $region62: #{decrease_vdsr_forward.3} parent=5 // pred_check_branch
      %11136 = sbr.rel (%p11134) target = $region64
    $region63: #{decrease_vdsr_forward.3} parent=5 // pred_region
      %s11137 = ssub.s32 %s15, 2
      // Predicated region
      $region65: #{decrease_vdsr_forward.3} parent=63 // pred_check
        %p11138 = pneg %p238
      $region66: #{decrease_vdsr_forward.3} parent=63 // pred_check_branch
        %11140 = sbr.rel (%p11138) target = $region68
      $region67: #{decrease_vdsr_forward.3} parent=63 // pred_region
        %p11141 = scmp.lt.s32.totalorder %s21, 1
        %s11142 = scalar_select %p11141, %s21, 1
        %s11143 = smul.addr %s11142, 8
        %s11144 = smul.addr %s11143, 4
        %s11145 = scalar_lea.vmem %s9, %s11144
      $region68: #{decrease_vdsr_forward.3} parent=63 // pred_fallthru
        _
    $region64: #{decrease_vdsr_forward.3} parent=5 // pred_fallthru
      _
  $region6: #{decrease_vdsr_forward.3} parent=0 // loop_footer
    %s19 = sadd.s32 1, %s15
  $region7: #{decrease_vdsr_forward.3} parent=0 // loop_footer_branch
    %14 = sbr.rel target = $region3
  $region8: #{decrease_vdsr_forward.3} parent=0 // loop_exit
    _

</llo_original>
